<compile_context>
chip_gen: v7x
topology: tpu7x:2x2x1
jax: 0.10.0
libtpu: 0.0.40
codegen_flags: <defaults>
</compile_context>

<pallas_src>
import functools

import numpy as np
import jax
import jax.numpy as jnp
from jax.experimental import pallas as pl
from jax.experimental.pallas import tpu as pltpu

# 3x3 taps in (dy, dx) order matching a (kh, kw) row-major flatten of the conv weights.
_TAPS = tuple((dy, dx) for dy in (-1, 0, 1) for dx in (-1, 0, 1))


def _residual_block_kernel(x_ref, mask_ref, w1_ref, g1_ref, be1_ref,
                           w2_ref, g2_ref, be2_ref, o_ref, *, W, eps):
    """Fused ResidualBlock forward.

    x_ref    : (N, C, H*W)  VMEM f32 -- NCHW input, spatial dims flattened onto lanes
    mask_ref : (9, H*W)     VMEM f32 -- per-tap zero-padding masks (host precomputed)
    w*_ref   : (9*C*C,)     SMEM f32 -- conv weights flattened as [kh, kw, cin, cout]
    g*_ref   : (1, C, 1)    VMEM f32 -- BatchNorm gamma
    be*_ref  : (1, C, 1)    VMEM f32 -- BatchNorm beta
    o_ref    : (N, C, H*W)  VMEM f32
    """
    N, C, HW = x_ref.shape
    x = x_ref[...]

    def shift_lanes(a, d):
        # b[..., i] = a[..., (i + d) mod HW]; wrapped entries are zeroed by the tap mask.
        if d == 0:
            return a
        return jnp.concatenate([a[..., d:], a[..., :d]], axis=-1)

    def conv3x3_bn(xin, w_ref, g_ref, be_ref, use_act):
        # xin: (N, C, HW).  Returns (N, C, HW).
        accs = [jnp.zeros((N, 1, HW), jnp.float32) for _ in range(C)]
        for t, (dy, dx) in enumerate(_TAPS):
            d = dy * W + dx
            m = mask_ref[t:t + 1, :][None]                 # (1, 1, HW)
            s = shift_lanes(xin, d) * m                    # (N, C, HW): one shift+mask per tap
            for ci in range(C):
                s_ci = s[:, ci:ci + 1, :]                  # (N, 1, HW) sublane select
                for co in range(C):
                    wv = w_ref[(t * C + ci) * C + co]      # SMEM scalar
                    accs[co] = accs[co] + wv * s_ci
        y = jnp.concatenate(accs, axis=1)                  # (N, C, HW)

        # BatchNorm2d, training-mode batch stats over (N, H, W), biased variance.
        inv_cnt = 1.0 / (N * HW)
        ssum = jnp.sum(jnp.sum(y, axis=2, keepdims=True), axis=0, keepdims=True)       # (1,C,1)
        ssq = jnp.sum(jnp.sum(y * y, axis=2, keepdims=True), axis=0, keepdims=True)    # (1,C,1)
        mean = ssum * inv_cnt
        var = ssq * inv_cnt - mean * mean
        scale = g_ref[...] * jax.lax.rsqrt(var + eps)      # gamma folded into the scale
        shift = be_ref[...] - mean * scale
        y = y * scale + shift
        if use_act:
            y = jnp.where(y >= 0, y, 0.2 * y)              # LeakyReLU(0.2)
        return y

    y1 = conv3x3_bn(x, w1_ref, g1_ref, be1_ref, use_act=True)
    y2 = conv3x3_bn(y1, w2_ref, g2_ref, be2_ref, use_act=False)
    o_ref[...] = (y2 + x).astype(o_ref.dtype)


def _tap_masks(H, W):
    """(9, H*W) float masks: 1 where the (dy, dx) tap reads inside the image, else 0."""
    masks = np.zeros((9, H * W), np.float32)
    for t, (dy, dx) in enumerate(_TAPS):
        m = np.zeros((H, W), np.float32)
        m[max(0, -dy):min(H, H - dy), max(0, -dx):min(W, W - dx)] = 1.0
        masks[t] = m.reshape(-1)
    return masks


def _flatten_conv_weight(w_oihw):
    # (Cout, Cin, 3, 3) -> flat [kh, kw, cin, cout], matching the kernel's indexing.
    return jnp.transpose(w_oihw, (2, 3, 1, 0)).reshape(-1)


def residual_block(x_nchw, params):
    """ResidualBlock.forward: b2(b1(x)) + x, with x in PyTorch NCHW layout."""
    N, C, H, W = x_nchw.shape
    (w1, _b1, g1, be1), (w2, _b2, g2, be2) = params
    # Conv bias (_b1/_b2) is exactly cancelled by training-mode BatchNorm's mean
    # subtraction, so it is intentionally not fed to the kernel.

    x_flat = x_nchw.reshape(N, C, H * W)      # contiguous reshape: free, no HBM copy
    masks = jnp.asarray(_tap_masks(H, W))

    vmem = pl.BlockSpec(memory_space=pltpu.MemorySpace.VMEM)
    smem = pl.BlockSpec(memory_space=pltpu.MemorySpace.SMEM)

    flops = 2 * (2 * N * H * W * C * C * 9) + 12 * N * C * H * W
    bytes_accessed = 4 * (2 * N * C * H * W + 9 * H * W + 2 * 9 * C * C + 4 * C)

    out = pl.pallas_call(
        functools.partial(_residual_block_kernel, W=W, eps=1e-5),
        out_shape=jax.ShapeDtypeStruct((N, C, H * W), jnp.float32),
        in_specs=[vmem, vmem, smem, vmem, vmem, smem, vmem, vmem],
        out_specs=vmem,
        compiler_params=pltpu.CompilerParams(vmem_limit_bytes=32 * 1024 * 1024),
        cost_estimate=pl.CostEstimate(flops=flops, transcendentals=2 * C,
                                      bytes_accessed=bytes_accessed),
    )(x_flat, masks,
      _flatten_conv_weight(w1), g1.reshape(1, C, 1), be1.reshape(1, C, 1),
      _flatten_conv_weight(w2), g2.reshape(1, C, 1), be2.reshape(1, C, 1))
    return out.reshape(N, C, H, W)


def init_params(key, channels):
    """Synthetic parameters with nn.Conv2d(C, C, 3) / nn.BatchNorm2d(C) shapes."""
    def one_block(k):
        kw, kb = jax.random.split(k)
        w = 0.1 * jax.random.normal(kw, (channels, channels, 3, 3), jnp.float32)  # OIHW
        b = 0.1 * jax.random.normal(kb, (channels,), jnp.float32)                 # conv bias
        gamma = jnp.ones((channels,), jnp.float32)    # BN weight at init
        beta = jnp.zeros((channels,), jnp.float32)    # BN bias at init
        return (w, b, gamma, beta)

    k1, k2 = jax.random.split(key)
    return (one_block(k1), one_block(k2))


def _reference_forward(x, params):
    """Pure-JAX reference matching the PyTorch module (training-mode BN)."""
    def conv_bn(x, w, b, g, be, act):
        y = jax.lax.conv_general_dilated(
            x, w, window_strides=(1, 1), padding=((1, 1), (1, 1)),
            dimension_numbers=("NCHW", "OIHW", "NCHW"),
            precision=jax.lax.Precision.HIGHEST)
        y = y + b[None, :, None, None]
        mean = jnp.mean(y, axis=(0, 2, 3), keepdims=True)
        var = jnp.mean((y - mean) ** 2, axis=(0, 2, 3), keepdims=True)
        y = (y - mean) * jax.lax.rsqrt(var + 1e-5)
        y = y * g[None, :, None, None] + be[None, :, None, None]
        return jnp.where(y >= 0, y, 0.2 * y) if act else y

    (w1, b1, g1, be1), (w2, b2, g2, be2) = params
    y1 = conv_bn(x, w1, b1, g1, be1, True)
    y2 = conv_bn(y1, w2, b2, g2, be2, False)
    return y2 + x


if __name__ == "__main__":
    key = jax.random.PRNGKey(0)
    kx, kp = jax.random.split(key)

    N, C, H, W = 2, 4, 16, 16                       # small NCHW input
    x = jax.random.normal(kx, (N, C, H, W), jnp.float32)
    params = init_params(kp, C)

    out = jax.block_until_ready(jax.jit(residual_block)(x, params))
    assert out.shape == (N, C, H, W)

    ref = jax.block_until_ready(_reference_forward(x, params))
    err = float(jnp.max(jnp.abs(out - ref)))
    assert err < 2e-3, f"mismatch vs reference: max abs err = {err}"
    print("KERNEL_OK")
</pallas_src>

<mosaic_0001>
module attributes {stable_mosaic.version = 11 : i64} {
  func.func @_residual_block_kernel(%arg0: memref<2x4x256xf32, #tpu.memory_space<vmem>>, %arg1: memref<9x256xf32, #tpu.memory_space<vmem>>, %arg2: memref<144xf32, #tpu.memory_space<smem>>, %arg3: memref<1x4x1xf32, #tpu.memory_space<vmem>>, %arg4: memref<1x4x1xf32, #tpu.memory_space<vmem>>, %arg5: memref<144xf32, #tpu.memory_space<smem>>, %arg6: memref<1x4x1xf32, #tpu.memory_space<vmem>>, %arg7: memref<1x4x1xf32, #tpu.memory_space<vmem>>, %arg8: memref<2x4x256xf32, #tpu.memory_space<vmem>>) attributes {dimension_semantics = [], scalar_prefetch = 0 : i64, scratch_operands = 0 : i64, tpu.core_type = #tpu.core_type<tc>} {
    %c0 = arith.constant 0 : index
    %c0_0 = arith.constant 0 : index
    %c0_1 = arith.constant 0 : index
    %0 = vector.load %arg0[%c0, %c0_0, %c0_1] : memref<2x4x256xf32, #tpu.memory_space<vmem>>, vector<2x4x256xf32>
    %cst = arith.constant 0.000000e+00 : f32
    %1 = vector.broadcast %cst : f32 to vector<2x1x256xf32>
    %cst_2 = arith.constant 0.000000e+00 : f32
    %2 = vector.broadcast %cst_2 : f32 to vector<2x1x256xf32>
    %cst_3 = arith.constant 0.000000e+00 : f32
    %3 = vector.broadcast %cst_3 : f32 to vector<2x1x256xf32>
    %cst_4 = arith.constant 0.000000e+00 : f32
    %4 = vector.broadcast %cst_4 : f32 to vector<2x1x256xf32>
    %c0_5 = arith.constant 0 : index
    %c0_6 = arith.constant 0 : index
    %5 = vector.load %arg1[%c0_5, %c0_6] : memref<9x256xf32, #tpu.memory_space<vmem>>, vector<1x256xf32>
    %6 = vector.shape_cast %5 : vector<1x256xf32> to vector<1x1x256xf32>
    %7 = vector.extract_strided_slice %0 {offsets = [0, 0, 239], sizes = [2, 4, 17], strides = [1, 1, 1]} : vector<2x4x256xf32> to vector<2x4x17xf32>
    %8 = vector.extract_strided_slice %0 {offsets = [0, 0, 0], sizes = [2, 4, 239], strides = [1, 1, 1]} : vector<2x4x256xf32> to vector<2x4x239xf32>
    %9 = tpu.concatenate %7, %8 in 2 : vector<2x4x17xf32>, vector<2x4x239xf32> -> vector<2x4x256xf32>
    %10 = vector.broadcast %6 : vector<1x1x256xf32> to vector<2x4x256xf32>
    %11 = arith.mulf %9, %10 : vector<2x4x256xf32>
    %12 = vector.extract_strided_slice %11 {offsets = [0, 0, 0], sizes = [2, 1, 256], strides = [1, 1, 1]} : vector<2x4x256xf32> to vector<2x1x256xf32>
    %c0_7 = arith.constant 0 : index
    %13 = memref.load %arg2[%c0_7] : memref<144xf32, #tpu.memory_space<smem>>
    %14 = vector.broadcast %13 : f32 to vector<2x1x256xf32>
    %15 = arith.mulf %14, %12 : vector<2x1x256xf32>
    %16 = arith.addf %1, %15 : vector<2x1x256xf32>
    %c1 = arith.constant 1 : index
    %17 = memref.load %arg2[%c1] : memref<144xf32, #tpu.memory_space<smem>>
    %18 = vector.broadcast %17 : f32 to vector<2x1x256xf32>
    %19 = arith.mulf %18, %12 : vector<2x1x256xf32>
    %20 = arith.addf %2, %19 : vector<2x1x256xf32>
    %c2 = arith.constant 2 : index
    %21 = memref.load %arg2[%c2] : memref<144xf32, #tpu.memory_space<smem>>
    %22 = vector.broadcast %21 : f32 to vector<2x1x256xf32>
    %23 = arith.mulf %22, %12 : vector<2x1x256xf32>
    %24 = arith.addf %3, %23 : vector<2x1x256xf32>
    %c3 = arith.constant 3 : index
    %25 = memref.load %arg2[%c3] : memref<144xf32, #tpu.memory_space<smem>>
    %26 = vector.broadcast %25 : f32 to vector<2x1x256xf32>
    %27 = arith.mulf %26, %12 : vector<2x1x256xf32>
    %28 = arith.addf %4, %27 : vector<2x1x256xf32>
    %29 = vector.extract_strided_slice %11 {offsets = [0, 1, 0], sizes = [2, 1, 256], strides = [1, 1, 1]} : vector<2x4x256xf32> to vector<2x1x256xf32>
    %c4 = arith.constant 4 : index
    %30 = memref.load %arg2[%c4] : memref<144xf32, #tpu.memory_space<smem>>
    %31 = vector.broadcast %30 : f32 to vector<2x1x256xf32>
    %32 = arith.mulf %31, %29 : vector<2x1x256xf32>
    %33 = arith.addf %16, %32 : vector<2x1x256xf32>
    %c5 = arith.constant 5 : index
    %34 = memref.load %arg2[%c5] : memref<144xf32, #tpu.memory_space<smem>>
    %35 = vector.broadcast %34 : f32 to vector<2x1x256xf32>
    %36 = arith.mulf %35, %29 : vector<2x1x256xf32>
    %37 = arith.addf %20, %36 : vector<2x1x256xf32>
    %c6 = arith.constant 6 : index
    %38 = memref.load %arg2[%c6] : memref<144xf32, #tpu.memory_space<smem>>
    %39 = vector.broadcast %38 : f32 to vector<2x1x256xf32>
    %40 = arith.mulf %39, %29 : vector<2x1x256xf32>
    %41 = arith.addf %24, %40 : vector<2x1x256xf32>
    %c7 = arith.constant 7 : index
    %42 = memref.load %arg2[%c7] : memref<144xf32, #tpu.memory_space<smem>>
    %43 = vector.broadcast %42 : f32 to vector<2x1x256xf32>
    %44 = arith.mulf %43, %29 : vector<2x1x256xf32>
    %45 = arith.addf %28, %44 : vector<2x1x256xf32>
    %46 = vector.extract_strided_slice %11 {offsets = [0, 2, 0], sizes = [2, 1, 256], strides = [1, 1, 1]} : vector<2x4x256xf32> to vector<2x1x256xf32>
    %c8 = arith.constant 8 : index
    %47 = memref.load %arg2[%c8] : memref<144xf32, #tpu.memory_space<smem>>
    %48 = vector.broadcast %47 : f32 to vector<2x1x256xf32>
    %49 = arith.mulf %48, %46 : vector<2x1x256xf32>
    %50 = arith.addf %33, %49 : vector<2x1x256xf32>
    %c9 = arith.constant 9 : index
    %51 = memref.load %arg2[%c9] : memref<144xf32, #tpu.memory_space<smem>>
    %52 = vector.broadcast %51 : f32 to vector<2x1x256xf32>
    %53 = arith.mulf %52, %46 : vector<2x1x256xf32>
    %54 = arith.addf %37, %53 : vector<2x1x256xf32>
    %c10 = arith.constant 10 : index
    %55 = memref.load %arg2[%c10] : memref<144xf32, #tpu.memory_space<smem>>
    %56 = vector.broadcast %55 : f32 to vector<2x1x256xf32>
    %57 = arith.mulf %56, %46 : vector<2x1x256xf32>
    %58 = arith.addf %41, %57 : vector<2x1x256xf32>
    %c11 = arith.constant 11 : index
    %59 = memref.load %arg2[%c11] : memref<144xf32, #tpu.memory_space<smem>>
    %60 = vector.broadcast %59 : f32 to vector<2x1x256xf32>
    %61 = arith.mulf %60, %46 : vector<2x1x256xf32>
    %62 = arith.addf %45, %61 : vector<2x1x256xf32>
    %63 = vector.extract_strided_slice %11 {offsets = [0, 3, 0], sizes = [2, 1, 256], strides = [1, 1, 1]} : vector<2x4x256xf32> to vector<2x1x256xf32>
    %c12 = arith.constant 12 : index
    %64 = memref.load %arg2[%c12] : memref<144xf32, #tpu.memory_space<smem>>
    %65 = vector.broadcast %64 : f32 to vector<2x1x256xf32>
    %66 = arith.mulf %65, %63 : vector<2x1x256xf32>
    %67 = arith.addf %50, %66 : vector<2x1x256xf32>
    %c13 = arith.constant 13 : index
    %68 = memref.load %arg2[%c13] : memref<144xf32, #tpu.memory_space<smem>>
    %69 = vector.broadcast %68 : f32 to vector<2x1x256xf32>
    %70 = arith.mulf %69, %63 : vector<2x1x256xf32>
    %71 = arith.addf %54, %70 : vector<2x1x256xf32>
    %c14 = arith.constant 14 : index
    %72 = memref.load %arg2[%c14] : memref<144xf32, #tpu.memory_space<smem>>
    %73 = vector.broadcast %72 : f32 to vector<2x1x256xf32>
    %74 = arith.mulf %73, %63 : vector<2x1x256xf32>
    %75 = arith.addf %58, %74 : vector<2x1x256xf32>
    %c15 = arith.constant 15 : index
    %76 = memref.load %arg2[%c15] : memref<144xf32, #tpu.memory_space<smem>>
    %77 = vector.broadcast %76 : f32 to vector<2x1x256xf32>
    %78 = arith.mulf %77, %63 : vector<2x1x256xf32>
    %79 = arith.addf %62, %78 : vector<2x1x256xf32>
    %c1_8 = arith.constant 1 : index
    %c0_9 = arith.constant 0 : index
    %80 = vector.load %arg1[%c1_8, %c0_9] : memref<9x256xf32, #tpu.memory_space<vmem>>, vector<1x256xf32>
    %81 = vector.shape_cast %80 : vector<1x256xf32> to vector<1x1x256xf32>
    %82 = vector.extract_strided_slice %0 {offsets = [0, 0, 240], sizes = [2, 4, 16], strides = [1, 1, 1]} : vector<2x4x256xf32> to vector<2x4x16xf32>
    %83 = vector.extract_strided_slice %0 {offsets = [0, 0, 0], sizes = [2, 4, 240], strides = [1, 1, 1]} : vector<2x4x256xf32> to vector<2x4x240xf32>
    %84 = tpu.concatenate %82, %83 in 2 : vector<2x4x16xf32>, vector<2x4x240xf32> -> vector<2x4x256xf32>
    %85 = vector.broadcast %81 : vector<1x1x256xf32> to vector<2x4x256xf32>
    %86 = arith.mulf %84, %85 : vector<2x4x256xf32>
    %87 = vector.extract_strided_slice %86 {offsets = [0, 0, 0], sizes = [2, 1, 256], strides = [1, 1, 1]} : vector<2x4x256xf32> to vector<2x1x256xf32>
    %c16 = arith.constant 16 : index
    %88 = memref.load %arg2[%c16] : memref<144xf32, #tpu.memory_space<smem>>
    %89 = vector.broadcast %88 : f32 to vector<2x1x256xf32>
    %90 = arith.mulf %89, %87 : vector<2x1x256xf32>
    %91 = arith.addf %67, %90 : vector<2x1x256xf32>
    %c17 = arith.constant 17 : index
    %92 = memref.load %arg2[%c17] : memref<144xf32, #tpu.memory_space<smem>>
    %93 = vector.broadcast %92 : f32 to vector<2x1x256xf32>
    %94 = arith.mulf %93, %87 : vector<2x1x256xf32>
    %95 = arith.addf %71, %94 : vector<2x1x256xf32>
    %c18 = arith.constant 18 : index
    %96 = memref.load %arg2[%c18] : memref<144xf32, #tpu.memory_space<smem>>
    %97 = vector.broadcast %96 : f32 to vector<2x1x256xf32>
    %98 = arith.mulf %97, %87 : vector<2x1x256xf32>
    %99 = arith.addf %75, %98 : vector<2x1x256xf32>
    %c19 = arith.constant 19 : index
    %100 = memref.load %arg2[%c19] : memref<144xf32, #tpu.memory_space<smem>>
    %101 = vector.broadcast %100 : f32 to vector<2x1x256xf32>
    %102 = arith.mulf %101, %87 : vector<2x1x256xf32>
    %103 = arith.addf %79, %102 : vector<2x1x256xf32>
    %104 = vector.extract_strided_slice %86 {offsets = [0, 1, 0], sizes = [2, 1, 256], strides = [1, 1, 1]} : vector<2x4x256xf32> to vector<2x1x256xf32>
    %c20 = arith.constant 20 : index
    %105 = memref.load %arg2[%c20] : memref<144xf32, #tpu.memory_space<smem>>
    %106 = vector.broadcast %105 : f32 to vector<2x1x256xf32>
    %107 = arith.mulf %106, %104 : vector<2x1x256xf32>
    %108 = arith.addf %91, %107 : vector<2x1x256xf32>
    %c21 = arith.constant 21 : index
    %109 = memref.load %arg2[%c21] : memref<144xf32, #tpu.memory_space<smem>>
    %110 = vector.broadcast %109 : f32 to vector<2x1x256xf32>
    %111 = arith.mulf %110, %104 : vector<2x1x256xf32>
    %112 = arith.addf %95, %111 : vector<2x1x256xf32>
    %c22 = arith.constant 22 : index
    %113 = memref.load %arg2[%c22] : memref<144xf32, #tpu.memory_space<smem>>
    %114 = vector.broadcast %113 : f32 to vector<2x1x256xf32>
    %115 = arith.mulf %114, %104 : vector<2x1x256xf32>
    %116 = arith.addf %99, %115 : vector<2x1x256xf32>
    %c23 = arith.constant 23 : index
    %117 = memref.load %arg2[%c23] : memref<144xf32, #tpu.memory_space<smem>>
    %118 = vector.broadcast %117 : f32 to vector<2x1x256xf32>
    %119 = arith.mulf %118, %104 : vector<2x1x256xf32>
    %120 = arith.addf %103, %119 : vector<2x1x256xf32>
    %121 = vector.extract_strided_slice %86 {offsets = [0, 2, 0], sizes = [2, 1, 256], strides = [1, 1, 1]} : vector<2x4x256xf32> to vector<2x1x256xf32>
    %c24 = arith.constant 24 : index
    %122 = memref.load %arg2[%c24] : memref<144xf32, #tpu.memory_space<smem>>
    %123 = vector.broadcast %122 : f32 to vector<2x1x256xf32>
    %124 = arith.mulf %123, %121 : vector<2x1x256xf32>
    %125 = arith.addf %108, %124 : vector<2x1x256xf32>
    %c25 = arith.constant 25 : index
    %126 = memref.load %arg2[%c25] : memref<144xf32, #tpu.memory_space<smem>>
    %127 = vector.broadcast %126 : f32 to vector<2x1x256xf32>
    %128 = arith.mulf %127, %121 : vector<2x1x256xf32>
    %129 = arith.addf %112, %128 : vector<2x1x256xf32>
    %c26 = arith.constant 26 : index
    %130 = memref.load %arg2[%c26] : memref<144xf32, #tpu.memory_space<smem>>
    %131 = vector.broadcast %130 : f32 to vector<2x1x256xf32>
    %132 = arith.mulf %131, %121 : vector<2x1x256xf32>
    %133 = arith.addf %116, %132 : vector<2x1x256xf32>
    %c27 = arith.constant 27 : index
    %134 = memref.load %arg2[%c27] : memref<144xf32, #tpu.memory_space<smem>>
    %135 = vector.broadcast %134 : f32 to vector<2x1x256xf32>
    %136 = arith.mulf %135, %121 : vector<2x1x256xf32>
    %137 = arith.addf %120, %136 : vector<2x1x256xf32>
    %138 = vector.extract_strided_slice %86 {offsets = [0, 3, 0], sizes = [2, 1, 256], strides = [1, 1, 1]} : vector<2x4x256xf32> to vector<2x1x256xf32>
    %c28 = arith.constant 28 : index
    %139 = memref.load %arg2[%c28] : memref<144xf32, #tpu.memory_space<smem>>
    %140 = vector.broadcast %139 : f32 to vector<2x1x256xf32>
    %141 = arith.mulf %140, %138 : vector<2x1x256xf32>
    %142 = arith.addf %125, %141 : vector<2x1x256xf32>
    %c29 = arith.constant 29 : index
    %143 = memref.load %arg2[%c29] : memref<144xf32, #tpu.memory_space<smem>>
    %144 = vector.broadcast %143 : f32 to vector<2x1x256xf32>
    %145 = arith.mulf %144, %138 : vector<2x1x256xf32>
    %146 = arith.addf %129, %145 : vector<2x1x256xf32>
    %c30 = arith.constant 30 : index
    %147 = memref.load %arg2[%c30] : memref<144xf32, #tpu.memory_space<smem>>
    %148 = vector.broadcast %147 : f32 to vector<2x1x256xf32>
    %149 = arith.mulf %148, %138 : vector<2x1x256xf32>
    %150 = arith.addf %133, %149 : vector<2x1x256xf32>
    %c31 = arith.constant 31 : index
    %151 = memref.load %arg2[%c31] : memref<144xf32, #tpu.memory_space<smem>>
    %152 = vector.broadcast %151 : f32 to vector<2x1x256xf32>
    %153 = arith.mulf %152, %138 : vector<2x1x256xf32>
    %154 = arith.addf %137, %153 : vector<2x1x256xf32>
    %c2_10 = arith.constant 2 : index
    %c0_11 = arith.constant 0 : index
    %155 = vector.load %arg1[%c2_10, %c0_11] : memref<9x256xf32, #tpu.memory_space<vmem>>, vector<1x256xf32>
    %156 = vector.shape_cast %155 : vector<1x256xf32> to vector<1x1x256xf32>
    %157 = vector.extract_strided_slice %0 {offsets = [0, 0, 241], sizes = [2, 4, 15], strides = [1, 1, 1]} : vector<2x4x256xf32> to vector<2x4x15xf32>
    %158 = vector.extract_strided_slice %0 {offsets = [0, 0, 0], sizes = [2, 4, 241], strides = [1, 1, 1]} : vector<2x4x256xf32> to vector<2x4x241xf32>
    %159 = tpu.concatenate %157, %158 in 2 : vector<2x4x15xf32>, vector<2x4x241xf32> -> vector<2x4x256xf32>
    %160 = vector.broadcast %156 : vector<1x1x256xf32> to vector<2x4x256xf32>
    %161 = arith.mulf %159, %160 : vector<2x4x256xf32>
    %162 = vector.extract_strided_slice %161 {offsets = [0, 0, 0], sizes = [2, 1, 256], strides = [1, 1, 1]} : vector<2x4x256xf32> to vector<2x1x256xf32>
    %c32 = arith.constant 32 : index
    %163 = memref.load %arg2[%c32] : memref<144xf32, #tpu.memory_space<smem>>
    %164 = vector.broadcast %163 : f32 to vector<2x1x256xf32>
    %165 = arith.mulf %164, %162 : vector<2x1x256xf32>
    %166 = arith.addf %142, %165 : vector<2x1x256xf32>
    %c33 = arith.constant 33 : index
    %167 = memref.load %arg2[%c33] : memref<144xf32, #tpu.memory_space<smem>>
    %168 = vector.broadcast %167 : f32 to vector<2x1x256xf32>
    %169 = arith.mulf %168, %162 : vector<2x1x256xf32>
    %170 = arith.addf %146, %169 : vector<2x1x256xf32>
    %c34 = arith.constant 34 : index
    %171 = memref.load %arg2[%c34] : memref<144xf32, #tpu.memory_space<smem>>
    %172 = vector.broadcast %171 : f32 to vector<2x1x256xf32>
    %173 = arith.mulf %172, %162 : vector<2x1x256xf32>
    %174 = arith.addf %150, %173 : vector<2x1x256xf32>
    %c35 = arith.constant 35 : index
    %175 = memref.load %arg2[%c35] : memref<144xf32, #tpu.memory_space<smem>>
    %176 = vector.broadcast %175 : f32 to vector<2x1x256xf32>
    %177 = arith.mulf %176, %162 : vector<2x1x256xf32>
    %178 = arith.addf %154, %177 : vector<2x1x256xf32>
    %179 = vector.extract_strided_slice %161 {offsets = [0, 1, 0], sizes = [2, 1, 256], strides = [1, 1, 1]} : vector<2x4x256xf32> to vector<2x1x256xf32>
    %c36 = arith.constant 36 : index
    %180 = memref.load %arg2[%c36] : memref<144xf32, #tpu.memory_space<smem>>
    %181 = vector.broadcast %180 : f32 to vector<2x1x256xf32>
    %182 = arith.mulf %181, %179 : vector<2x1x256xf32>
    %183 = arith.addf %166, %182 : vector<2x1x256xf32>
    %c37 = arith.constant 37 : index
    %184 = memref.load %arg2[%c37] : memref<144xf32, #tpu.memory_space<smem>>
    %185 = vector.broadcast %184 : f32 to vector<2x1x256xf32>
    %186 = arith.mulf %185, %179 : vector<2x1x256xf32>
    %187 = arith.addf %170, %186 : vector<2x1x256xf32>
    %c38 = arith.constant 38 : index
    %188 = memref.load %arg2[%c38] : memref<144xf32, #tpu.memory_space<smem>>
    %189 = vector.broadcast %188 : f32 to vector<2x1x256xf32>
    %190 = arith.mulf %189, %179 : vector<2x1x256xf32>
    %191 = arith.addf %174, %190 : vector<2x1x256xf32>
    %c39 = arith.constant 39 : index
    %192 = memref.load %arg2[%c39] : memref<144xf32, #tpu.memory_space<smem>>
    %193 = vector.broadcast %192 : f32 to vector<2x1x256xf32>
    %194 = arith.mulf %193, %179 : vector<2x1x256xf32>
    %195 = arith.addf %178, %194 : vector<2x1x256xf32>
    %196 = vector.extract_strided_slice %161 {offsets = [0, 2, 0], sizes = [2, 1, 256], strides = [1, 1, 1]} : vector<2x4x256xf32> to vector<2x1x256xf32>
    %c40 = arith.constant 40 : index
    %197 = memref.load %arg2[%c40] : memref<144xf32, #tpu.memory_space<smem>>
    %198 = vector.broadcast %197 : f32 to vector<2x1x256xf32>
    %199 = arith.mulf %198, %196 : vector<2x1x256xf32>
    %200 = arith.addf %183, %199 : vector<2x1x256xf32>
    %c41 = arith.constant 41 : index
    %201 = memref.load %arg2[%c41] : memref<144xf32, #tpu.memory_space<smem>>
    %202 = vector.broadcast %201 : f32 to vector<2x1x256xf32>
    %203 = arith.mulf %202, %196 : vector<2x1x256xf32>
    %204 = arith.addf %187, %203 : vector<2x1x256xf32>
    %c42 = arith.constant 42 : index
    %205 = memref.load %arg2[%c42] : memref<144xf32, #tpu.memory_space<smem>>
    %206 = vector.broadcast %205 : f32 to vector<2x1x256xf32>
    %207 = arith.mulf %206, %196 : vector<2x1x256xf32>
    %208 = arith.addf %191, %207 : vector<2x1x256xf32>
    %c43 = arith.constant 43 : index
    %209 = memref.load %arg2[%c43] : memref<144xf32, #tpu.memory_space<smem>>
    %210 = vector.broadcast %209 : f32 to vector<2x1x256xf32>
    %211 = arith.mulf %210, %196 : vector<2x1x256xf32>
    %212 = arith.addf %195, %211 : vector<2x1x256xf32>
    %213 = vector.extract_strided_slice %161 {offsets = [0, 3, 0], sizes = [2, 1, 256], strides = [1, 1, 1]} : vector<2x4x256xf32> to vector<2x1x256xf32>
    %c44 = arith.constant 44 : index
    %214 = memref.load %arg2[%c44] : memref<144xf32, #tpu.memory_space<smem>>
    %215 = vector.broadcast %214 : f32 to vector<2x1x256xf32>
    %216 = arith.mulf %215, %213 : vector<2x1x256xf32>
    %217 = arith.addf %200, %216 : vector<2x1x256xf32>
    %c45 = arith.constant 45 : index
    %218 = memref.load %arg2[%c45] : memref<144xf32, #tpu.memory_space<smem>>
    %219 = vector.broadcast %218 : f32 to vector<2x1x256xf32>
    %220 = arith.mulf %219, %213 : vector<2x1x256xf32>
    %221 = arith.addf %204, %220 : vector<2x1x256xf32>
    %c46 = arith.constant 46 : index
    %222 = memref.load %arg2[%c46] : memref<144xf32, #tpu.memory_space<smem>>
    %223 = vector.broadcast %222 : f32 to vector<2x1x256xf32>
    %224 = arith.mulf %223, %213 : vector<2x1x256xf32>
    %225 = arith.addf %208, %224 : vector<2x1x256xf32>
    %c47 = arith.constant 47 : index
    %226 = memref.load %arg2[%c47] : memref<144xf32, #tpu.memory_space<smem>>
    %227 = vector.broadcast %226 : f32 to vector<2x1x256xf32>
    %228 = arith.mulf %227, %213 : vector<2x1x256xf32>
    %229 = arith.addf %212, %228 : vector<2x1x256xf32>
    %c3_12 = arith.constant 3 : index
    %c0_13 = arith.constant 0 : index
    %230 = vector.load %arg1[%c3_12, %c0_13] : memref<9x256xf32, #tpu.memory_space<vmem>>, vector<1x256xf32>
    %231 = vector.shape_cast %230 : vector<1x256xf32> to vector<1x1x256xf32>
    %232 = vector.extract_strided_slice %0 {offsets = [0, 0, 255], sizes = [2, 4, 1], strides = [1, 1, 1]} : vector<2x4x256xf32> to vector<2x4x1xf32>
    %233 = vector.extract_strided_slice %0 {offsets = [0, 0, 0], sizes = [2, 4, 255], strides = [1, 1, 1]} : vector<2x4x256xf32> to vector<2x4x255xf32>
    %234 = tpu.concatenate %232, %233 in 2 : vector<2x4x1xf32>, vector<2x4x255xf32> -> vector<2x4x256xf32>
    %235 = vector.broadcast %231 : vector<1x1x256xf32> to vector<2x4x256xf32>
    %236 = arith.mulf %234, %235 : vector<2x4x256xf32>
    %237 = vector.extract_strided_slice %236 {offsets = [0, 0, 0], sizes = [2, 1, 256], strides = [1, 1, 1]} : vector<2x4x256xf32> to vector<2x1x256xf32>
    %c48 = arith.constant 48 : index
    %238 = memref.load %arg2[%c48] : memref<144xf32, #tpu.memory_space<smem>>
    %239 = vector.broadcast %238 : f32 to vector<2x1x256xf32>
    %240 = arith.mulf %239, %237 : vector<2x1x256xf32>
    %241 = arith.addf %217, %240 : vector<2x1x256xf32>
    %c49 = arith.constant 49 : index
    %242 = memref.load %arg2[%c49] : memref<144xf32, #tpu.memory_space<smem>>
    %243 = vector.broadcast %242 : f32 to vector<2x1x256xf32>
    %244 = arith.mulf %243, %237 : vector<2x1x256xf32>
    %245 = arith.addf %221, %244 : vector<2x1x256xf32>
    %c50 = arith.constant 50 : index
    %246 = memref.load %arg2[%c50] : memref<144xf32, #tpu.memory_space<smem>>
    %247 = vector.broadcast %246 : f32 to vector<2x1x256xf32>
    %248 = arith.mulf %247, %237 : vector<2x1x256xf32>
    %249 = arith.addf %225, %248 : vector<2x1x256xf32>
    %c51 = arith.constant 51 : index
    %250 = memref.load %arg2[%c51] : memref<144xf32, #tpu.memory_space<smem>>
    %251 = vector.broadcast %250 : f32 to vector<2x1x256xf32>
    %252 = arith.mulf %251, %237 : vector<2x1x256xf32>
    %253 = arith.addf %229, %252 : vector<2x1x256xf32>
    %254 = vector.extract_strided_slice %236 {offsets = [0, 1, 0], sizes = [2, 1, 256], strides = [1, 1, 1]} : vector<2x4x256xf32> to vector<2x1x256xf32>
    %c52 = arith.constant 52 : index
    %255 = memref.load %arg2[%c52] : memref<144xf32, #tpu.memory_space<smem>>
    %256 = vector.broadcast %255 : f32 to vector<2x1x256xf32>
    %257 = arith.mulf %256, %254 : vector<2x1x256xf32>
    %258 = arith.addf %241, %257 : vector<2x1x256xf32>
    %c53 = arith.constant 53 : index
    %259 = memref.load %arg2[%c53] : memref<144xf32, #tpu.memory_space<smem>>
    %260 = vector.broadcast %259 : f32 to vector<2x1x256xf32>
    %261 = arith.mulf %260, %254 : vector<2x1x256xf32>
    %262 = arith.addf %245, %261 : vector<2x1x256xf32>
    %c54 = arith.constant 54 : index
    %263 = memref.load %arg2[%c54] : memref<144xf32, #tpu.memory_space<smem>>
    %264 = vector.broadcast %263 : f32 to vector<2x1x256xf32>
    %265 = arith.mulf %264, %254 : vector<2x1x256xf32>
    %266 = arith.addf %249, %265 : vector<2x1x256xf32>
    %c55 = arith.constant 55 : index
    %267 = memref.load %arg2[%c55] : memref<144xf32, #tpu.memory_space<smem>>
    %268 = vector.broadcast %267 : f32 to vector<2x1x256xf32>
    %269 = arith.mulf %268, %254 : vector<2x1x256xf32>
    %270 = arith.addf %253, %269 : vector<2x1x256xf32>
    %271 = vector.extract_strided_slice %236 {offsets = [0, 2, 0], sizes = [2, 1, 256], strides = [1, 1, 1]} : vector<2x4x256xf32> to vector<2x1x256xf32>
    %c56 = arith.constant 56 : index
    %272 = memref.load %arg2[%c56] : memref<144xf32, #tpu.memory_space<smem>>
    %273 = vector.broadcast %272 : f32 to vector<2x1x256xf32>
    %274 = arith.mulf %273, %271 : vector<2x1x256xf32>
    %275 = arith.addf %258, %274 : vector<2x1x256xf32>
    %c57 = arith.constant 57 : index
    %276 = memref.load %arg2[%c57] : memref<144xf32, #tpu.memory_space<smem>>
    %277 = vector.broadcast %276 : f32 to vector<2x1x256xf32>
    %278 = arith.mulf %277, %271 : vector<2x1x256xf32>
    %279 = arith.addf %262, %278 : vector<2x1x256xf32>
    %c58 = arith.constant 58 : index
    %280 = memref.load %arg2[%c58] : memref<144xf32, #tpu.memory_space<smem>>
    %281 = vector.broadcast %280 : f32 to vector<2x1x256xf32>
    %282 = arith.mulf %281, %271 : vector<2x1x256xf32>
    %283 = arith.addf %266, %282 : vector<2x1x256xf32>
    %c59 = arith.constant 59 : index
    %284 = memref.load %arg2[%c59] : memref<144xf32, #tpu.memory_space<smem>>
    %285 = vector.broadcast %284 : f32 to vector<2x1x256xf32>
    %286 = arith.mulf %285, %271 : vector<2x1x256xf32>
    %287 = arith.addf %270, %286 : vector<2x1x256xf32>
    %288 = vector.extract_strided_slice %236 {offsets = [0, 3, 0], sizes = [2, 1, 256], strides = [1, 1, 1]} : vector<2x4x256xf32> to vector<2x1x256xf32>
    %c60 = arith.constant 60 : index
    %289 = memref.load %arg2[%c60] : memref<144xf32, #tpu.memory_space<smem>>
    %290 = vector.broadcast %289 : f32 to vector<2x1x256xf32>
    %291 = arith.mulf %290, %288 : vector<2x1x256xf32>
    %292 = arith.addf %275, %291 : vector<2x1x256xf32>
    %c61 = arith.constant 61 : index
    %293 = memref.load %arg2[%c61] : memref<144xf32, #tpu.memory_space<smem>>
    %294 = vector.broadcast %293 : f32 to vector<2x1x256xf32>
    %295 = arith.mulf %294, %288 : vector<2x1x256xf32>
    %296 = arith.addf %279, %295 : vector<2x1x256xf32>
    %c62 = arith.constant 62 : index
    %297 = memref.load %arg2[%c62] : memref<144xf32, #tpu.memory_space<smem>>
    %298 = vector.broadcast %297 : f32 to vector<2x1x256xf32>
    %299 = arith.mulf %298, %288 : vector<2x1x256xf32>
    %300 = arith.addf %283, %299 : vector<2x1x256xf32>
    %c63 = arith.constant 63 : index
    %301 = memref.load %arg2[%c63] : memref<144xf32, #tpu.memory_space<smem>>
    %302 = vector.broadcast %301 : f32 to vector<2x1x256xf32>
    %303 = arith.mulf %302, %288 : vector<2x1x256xf32>
    %304 = arith.addf %287, %303 : vector<2x1x256xf32>
    %c4_14 = arith.constant 4 : index
    %c0_15 = arith.constant 0 : index
    %305 = vector.load %arg1[%c4_14, %c0_15] : memref<9x256xf32, #tpu.memory_space<vmem>>, vector<1x256xf32>
    %306 = vector.shape_cast %305 : vector<1x256xf32> to vector<1x1x256xf32>
    %307 = vector.broadcast %306 : vector<1x1x256xf32> to vector<2x4x256xf32>
    %308 = arith.mulf %0, %307 : vector<2x4x256xf32>
    %309 = vector.extract_strided_slice %308 {offsets = [0, 0, 0], sizes = [2, 1, 256], strides = [1, 1, 1]} : vector<2x4x256xf32> to vector<2x1x256xf32>
    %c64 = arith.constant 64 : index
    %310 = memref.load %arg2[%c64] : memref<144xf32, #tpu.memory_space<smem>>
    %311 = vector.broadcast %310 : f32 to vector<2x1x256xf32>
    %312 = arith.mulf %311, %309 : vector<2x1x256xf32>
    %313 = arith.addf %292, %312 : vector<2x1x256xf32>
    %c65 = arith.constant 65 : index
    %314 = memref.load %arg2[%c65] : memref<144xf32, #tpu.memory_space<smem>>
    %315 = vector.broadcast %314 : f32 to vector<2x1x256xf32>
    %316 = arith.mulf %315, %309 : vector<2x1x256xf32>
    %317 = arith.addf %296, %316 : vector<2x1x256xf32>
    %c66 = arith.constant 66 : index
    %318 = memref.load %arg2[%c66] : memref<144xf32, #tpu.memory_space<smem>>
    %319 = vector.broadcast %318 : f32 to vector<2x1x256xf32>
    %320 = arith.mulf %319, %309 : vector<2x1x256xf32>
    %321 = arith.addf %300, %320 : vector<2x1x256xf32>
    %c67 = arith.constant 67 : index
    %322 = memref.load %arg2[%c67] : memref<144xf32, #tpu.memory_space<smem>>
    %323 = vector.broadcast %322 : f32 to vector<2x1x256xf32>
    %324 = arith.mulf %323, %309 : vector<2x1x256xf32>
    %325 = arith.addf %304, %324 : vector<2x1x256xf32>
    %326 = vector.extract_strided_slice %308 {offsets = [0, 1, 0], sizes = [2, 1, 256], strides = [1, 1, 1]} : vector<2x4x256xf32> to vector<2x1x256xf32>
    %c68 = arith.constant 68 : index
    %327 = memref.load %arg2[%c68] : memref<144xf32, #tpu.memory_space<smem>>
    %328 = vector.broadcast %327 : f32 to vector<2x1x256xf32>
    %329 = arith.mulf %328, %326 : vector<2x1x256xf32>
    %330 = arith.addf %313, %329 : vector<2x1x256xf32>
    %c69 = arith.constant 69 : index
    %331 = memref.load %arg2[%c69] : memref<144xf32, #tpu.memory_space<smem>>
    %332 = vector.broadcast %331 : f32 to vector<2x1x256xf32>
    %333 = arith.mulf %332, %326 : vector<2x1x256xf32>
    %334 = arith.addf %317, %333 : vector<2x1x256xf32>
    %c70 = arith.constant 70 : index
    %335 = memref.load %arg2[%c70] : memref<144xf32, #tpu.memory_space<smem>>
    %336 = vector.broadcast %335 : f32 to vector<2x1x256xf32>
    %337 = arith.mulf %336, %326 : vector<2x1x256xf32>
    %338 = arith.addf %321, %337 : vector<2x1x256xf32>
    %c71 = arith.constant 71 : index
    %339 = memref.load %arg2[%c71] : memref<144xf32, #tpu.memory_space<smem>>
    %340 = vector.broadcast %339 : f32 to vector<2x1x256xf32>
    %341 = arith.mulf %340, %326 : vector<2x1x256xf32>
    %342 = arith.addf %325, %341 : vector<2x1x256xf32>
    %343 = vector.extract_strided_slice %308 {offsets = [0, 2, 0], sizes = [2, 1, 256], strides = [1, 1, 1]} : vector<2x4x256xf32> to vector<2x1x256xf32>
    %c72 = arith.constant 72 : index
    %344 = memref.load %arg2[%c72] : memref<144xf32, #tpu.memory_space<smem>>
    %345 = vector.broadcast %344 : f32 to vector<2x1x256xf32>
    %346 = arith.mulf %345, %343 : vector<2x1x256xf32>
    %347 = arith.addf %330, %346 : vector<2x1x256xf32>
    %c73 = arith.constant 73 : index
    %348 = memref.load %arg2[%c73] : memref<144xf32, #tpu.memory_space<smem>>
    %349 = vector.broadcast %348 : f32 to vector<2x1x256xf32>
    %350 = arith.mulf %349, %343 : vector<2x1x256xf32>
    %351 = arith.addf %334, %350 : vector<2x1x256xf32>
    %c74 = arith.constant 74 : index
    %352 = memref.load %arg2[%c74] : memref<144xf32, #tpu.memory_space<smem>>
    %353 = vector.broadcast %352 : f32 to vector<2x1x256xf32>
    %354 = arith.mulf %353, %343 : vector<2x1x256xf32>
    %355 = arith.addf %338, %354 : vector<2x1x256xf32>
    %c75 = arith.constant 75 : index
    %356 = memref.load %arg2[%c75] : memref<144xf32, #tpu.memory_space<smem>>
    %357 = vector.broadcast %356 : f32 to vector<2x1x256xf32>
    %358 = arith.mulf %357, %343 : vector<2x1x256xf32>
    %359 = arith.addf %342, %358 : vector<2x1x256xf32>
    %360 = vector.extract_strided_slice %308 {offsets = [0, 3, 0], sizes = [2, 1, 256], strides = [1, 1, 1]} : vector<2x4x256xf32> to vector<2x1x256xf32>
    %c76 = arith.constant 76 : index
    %361 = memref.load %arg2[%c76] : memref<144xf32, #tpu.memory_space<smem>>
    %362 = vector.broadcast %361 : f32 to vector<2x1x256xf32>
    %363 = arith.mulf %362, %360 : vector<2x1x256xf32>
    %364 = arith.addf %347, %363 : vector<2x1x256xf32>
    %c77 = arith.constant 77 : index
    %365 = memref.load %arg2[%c77] : memref<144xf32, #tpu.memory_space<smem>>
    %366 = vector.broadcast %365 : f32 to vector<2x1x256xf32>
    %367 = arith.mulf %366, %360 : vector<2x1x256xf32>
    %368 = arith.addf %351, %367 : vector<2x1x256xf32>
    %c78 = arith.constant 78 : index
    %369 = memref.load %arg2[%c78] : memref<144xf32, #tpu.memory_space<smem>>
    %370 = vector.broadcast %369 : f32 to vector<2x1x256xf32>
    %371 = arith.mulf %370, %360 : vector<2x1x256xf32>
    %372 = arith.addf %355, %371 : vector<2x1x256xf32>
    %c79 = arith.constant 79 : index
    %373 = memref.load %arg2[%c79] : memref<144xf32, #tpu.memory_space<smem>>
    %374 = vector.broadcast %373 : f32 to vector<2x1x256xf32>
    %375 = arith.mulf %374, %360 : vector<2x1x256xf32>
    %376 = arith.addf %359, %375 : vector<2x1x256xf32>
    %c5_16 = arith.constant 5 : index
    %c0_17 = arith.constant 0 : index
    %377 = vector.load %arg1[%c5_16, %c0_17] : memref<9x256xf32, #tpu.memory_space<vmem>>, vector<1x256xf32>
    %378 = vector.shape_cast %377 : vector<1x256xf32> to vector<1x1x256xf32>
    %379 = vector.extract_strided_slice %0 {offsets = [0, 0, 1], sizes = [2, 4, 255], strides = [1, 1, 1]} : vector<2x4x256xf32> to vector<2x4x255xf32>
    %380 = vector.extract_strided_slice %0 {offsets = [0, 0, 0], sizes = [2, 4, 1], strides = [1, 1, 1]} : vector<2x4x256xf32> to vector<2x4x1xf32>
    %381 = tpu.concatenate %379, %380 in 2 : vector<2x4x255xf32>, vector<2x4x1xf32> -> vector<2x4x256xf32>
    %382 = vector.broadcast %378 : vector<1x1x256xf32> to vector<2x4x256xf32>
    %383 = arith.mulf %381, %382 : vector<2x4x256xf32>
    %384 = vector.extract_strided_slice %383 {offsets = [0, 0, 0], sizes = [2, 1, 256], strides = [1, 1, 1]} : vector<2x4x256xf32> to vector<2x1x256xf32>
    %c80 = arith.constant 80 : index
    %385 = memref.load %arg2[%c80] : memref<144xf32, #tpu.memory_space<smem>>
    %386 = vector.broadcast %385 : f32 to vector<2x1x256xf32>
    %387 = arith.mulf %386, %384 : vector<2x1x256xf32>
    %388 = arith.addf %364, %387 : vector<2x1x256xf32>
    %c81 = arith.constant 81 : index
    %389 = memref.load %arg2[%c81] : memref<144xf32, #tpu.memory_space<smem>>
    %390 = vector.broadcast %389 : f32 to vector<2x1x256xf32>
    %391 = arith.mulf %390, %384 : vector<2x1x256xf32>
    %392 = arith.addf %368, %391 : vector<2x1x256xf32>
    %c82 = arith.constant 82 : index
    %393 = memref.load %arg2[%c82] : memref<144xf32, #tpu.memory_space<smem>>
    %394 = vector.broadcast %393 : f32 to vector<2x1x256xf32>
    %395 = arith.mulf %394, %384 : vector<2x1x256xf32>
    %396 = arith.addf %372, %395 : vector<2x1x256xf32>
    %c83 = arith.constant 83 : index
    %397 = memref.load %arg2[%c83] : memref<144xf32, #tpu.memory_space<smem>>
    %398 = vector.broadcast %397 : f32 to vector<2x1x256xf32>
    %399 = arith.mulf %398, %384 : vector<2x1x256xf32>
    %400 = arith.addf %376, %399 : vector<2x1x256xf32>
    %401 = vector.extract_strided_slice %383 {offsets = [0, 1, 0], sizes = [2, 1, 256], strides = [1, 1, 1]} : vector<2x4x256xf32> to vector<2x1x256xf32>
    %c84 = arith.constant 84 : index
    %402 = memref.load %arg2[%c84] : memref<144xf32, #tpu.memory_space<smem>>
    %403 = vector.broadcast %402 : f32 to vector<2x1x256xf32>
    %404 = arith.mulf %403, %401 : vector<2x1x256xf32>
    %405 = arith.addf %388, %404 : vector<2x1x256xf32>
    %c85 = arith.constant 85 : index
    %406 = memref.load %arg2[%c85] : memref<144xf32, #tpu.memory_space<smem>>
    %407 = vector.broadcast %406 : f32 to vector<2x1x256xf32>
    %408 = arith.mulf %407, %401 : vector<2x1x256xf32>
    %409 = arith.addf %392, %408 : vector<2x1x256xf32>
    %c86 = arith.constant 86 : index
    %410 = memref.load %arg2[%c86] : memref<144xf32, #tpu.memory_space<smem>>
    %411 = vector.broadcast %410 : f32 to vector<2x1x256xf32>
    %412 = arith.mulf %411, %401 : vector<2x1x256xf32>
    %413 = arith.addf %396, %412 : vector<2x1x256xf32>
    %c87 = arith.constant 87 : index
    %414 = memref.load %arg2[%c87] : memref<144xf32, #tpu.memory_space<smem>>
    %415 = vector.broadcast %414 : f32 to vector<2x1x256xf32>
    %416 = arith.mulf %415, %401 : vector<2x1x256xf32>
    %417 = arith.addf %400, %416 : vector<2x1x256xf32>
    %418 = vector.extract_strided_slice %383 {offsets = [0, 2, 0], sizes = [2, 1, 256], strides = [1, 1, 1]} : vector<2x4x256xf32> to vector<2x1x256xf32>
    %c88 = arith.constant 88 : index
    %419 = memref.load %arg2[%c88] : memref<144xf32, #tpu.memory_space<smem>>
    %420 = vector.broadcast %419 : f32 to vector<2x1x256xf32>
    %421 = arith.mulf %420, %418 : vector<2x1x256xf32>
    %422 = arith.addf %405, %421 : vector<2x1x256xf32>
    %c89 = arith.constant 89 : index
    %423 = memref.load %arg2[%c89] : memref<144xf32, #tpu.memory_space<smem>>
    %424 = vector.broadcast %423 : f32 to vector<2x1x256xf32>
    %425 = arith.mulf %424, %418 : vector<2x1x256xf32>
    %426 = arith.addf %409, %425 : vector<2x1x256xf32>
    %c90 = arith.constant 90 : index
    %427 = memref.load %arg2[%c90] : memref<144xf32, #tpu.memory_space<smem>>
    %428 = vector.broadcast %427 : f32 to vector<2x1x256xf32>
    %429 = arith.mulf %428, %418 : vector<2x1x256xf32>
    %430 = arith.addf %413, %429 : vector<2x1x256xf32>
    %c91 = arith.constant 91 : index
    %431 = memref.load %arg2[%c91] : memref<144xf32, #tpu.memory_space<smem>>
    %432 = vector.broadcast %431 : f32 to vector<2x1x256xf32>
    %433 = arith.mulf %432, %418 : vector<2x1x256xf32>
    %434 = arith.addf %417, %433 : vector<2x1x256xf32>
    %435 = vector.extract_strided_slice %383 {offsets = [0, 3, 0], sizes = [2, 1, 256], strides = [1, 1, 1]} : vector<2x4x256xf32> to vector<2x1x256xf32>
    %c92 = arith.constant 92 : index
    %436 = memref.load %arg2[%c92] : memref<144xf32, #tpu.memory_space<smem>>
    %437 = vector.broadcast %436 : f32 to vector<2x1x256xf32>
    %438 = arith.mulf %437, %435 : vector<2x1x256xf32>
    %439 = arith.addf %422, %438 : vector<2x1x256xf32>
    %c93 = arith.constant 93 : index
    %440 = memref.load %arg2[%c93] : memref<144xf32, #tpu.memory_space<smem>>
    %441 = vector.broadcast %440 : f32 to vector<2x1x256xf32>
    %442 = arith.mulf %441, %435 : vector<2x1x256xf32>
    %443 = arith.addf %426, %442 : vector<2x1x256xf32>
    %c94 = arith.constant 94 : index
    %444 = memref.load %arg2[%c94] : memref<144xf32, #tpu.memory_space<smem>>
    %445 = vector.broadcast %444 : f32 to vector<2x1x256xf32>
    %446 = arith.mulf %445, %435 : vector<2x1x256xf32>
    %447 = arith.addf %430, %446 : vector<2x1x256xf32>
    %c95 = arith.constant 95 : index
    %448 = memref.load %arg2[%c95] : memref<144xf32, #tpu.memory_space<smem>>
    %449 = vector.broadcast %448 : f32 to vector<2x1x256xf32>
    %450 = arith.mulf %449, %435 : vector<2x1x256xf32>
    %451 = arith.addf %434, %450 : vector<2x1x256xf32>
    %c6_18 = arith.constant 6 : index
    %c0_19 = arith.constant 0 : index
    %452 = vector.load %arg1[%c6_18, %c0_19] : memref<9x256xf32, #tpu.memory_space<vmem>>, vector<1x256xf32>
    %453 = vector.shape_cast %452 : vector<1x256xf32> to vector<1x1x256xf32>
    %454 = vector.extract_strided_slice %0 {offsets = [0, 0, 15], sizes = [2, 4, 241], strides = [1, 1, 1]} : vector<2x4x256xf32> to vector<2x4x241xf32>
    %455 = vector.extract_strided_slice %0 {offsets = [0, 0, 0], sizes = [2, 4, 15], strides = [1, 1, 1]} : vector<2x4x256xf32> to vector<2x4x15xf32>
    %456 = tpu.concatenate %454, %455 in 2 : vector<2x4x241xf32>, vector<2x4x15xf32> -> vector<2x4x256xf32>
    %457 = vector.broadcast %453 : vector<1x1x256xf32> to vector<2x4x256xf32>
    %458 = arith.mulf %456, %457 : vector<2x4x256xf32>
    %459 = vector.extract_strided_slice %458 {offsets = [0, 0, 0], sizes = [2, 1, 256], strides = [1, 1, 1]} : vector<2x4x256xf32> to vector<2x1x256xf32>
    %c96 = arith.constant 96 : index
    %460 = memref.load %arg2[%c96] : memref<144xf32, #tpu.memory_space<smem>>
    %461 = vector.broadcast %460 : f32 to vector<2x1x256xf32>
    %462 = arith.mulf %461, %459 : vector<2x1x256xf32>
    %463 = arith.addf %439, %462 : vector<2x1x256xf32>
    %c97 = arith.constant 97 : index
    %464 = memref.load %arg2[%c97] : memref<144xf32, #tpu.memory_space<smem>>
    %465 = vector.broadcast %464 : f32 to vector<2x1x256xf32>
    %466 = arith.mulf %465, %459 : vector<2x1x256xf32>
    %467 = arith.addf %443, %466 : vector<2x1x256xf32>
    %c98 = arith.constant 98 : index
    %468 = memref.load %arg2[%c98] : memref<144xf32, #tpu.memory_space<smem>>
    %469 = vector.broadcast %468 : f32 to vector<2x1x256xf32>
    %470 = arith.mulf %469, %459 : vector<2x1x256xf32>
    %471 = arith.addf %447, %470 : vector<2x1x256xf32>
    %c99 = arith.constant 99 : index
    %472 = memref.load %arg2[%c99] : memref<144xf32, #tpu.memory_space<smem>>
    %473 = vector.broadcast %472 : f32 to vector<2x1x256xf32>
    %474 = arith.mulf %473, %459 : vector<2x1x256xf32>
    %475 = arith.addf %451, %474 : vector<2x1x256xf32>
    %476 = vector.extract_strided_slice %458 {offsets = [0, 1, 0], sizes = [2, 1, 256], strides = [1, 1, 1]} : vector<2x4x256xf32> to vector<2x1x256xf32>
    %c100 = arith.constant 100 : index
    %477 = memref.load %arg2[%c100] : memref<144xf32, #tpu.memory_space<smem>>
    %478 = vector.broadcast %477 : f32 to vector<2x1x256xf32>
    %479 = arith.mulf %478, %476 : vector<2x1x256xf32>
    %480 = arith.addf %463, %479 : vector<2x1x256xf32>
    %c101 = arith.constant 101 : index
    %481 = memref.load %arg2[%c101] : memref<144xf32, #tpu.memory_space<smem>>
    %482 = vector.broadcast %481 : f32 to vector<2x1x256xf32>
    %483 = arith.mulf %482, %476 : vector<2x1x256xf32>
    %484 = arith.addf %467, %483 : vector<2x1x256xf32>
    %c102 = arith.constant 102 : index
    %485 = memref.load %arg2[%c102] : memref<144xf32, #tpu.memory_space<smem>>
    %486 = vector.broadcast %485 : f32 to vector<2x1x256xf32>
    %487 = arith.mulf %486, %476 : vector<2x1x256xf32>
    %488 = arith.addf %471, %487 : vector<2x1x256xf32>
    %c103 = arith.constant 103 : index
    %489 = memref.load %arg2[%c103] : memref<144xf32, #tpu.memory_space<smem>>
    %490 = vector.broadcast %489 : f32 to vector<2x1x256xf32>
    %491 = arith.mulf %490, %476 : vector<2x1x256xf32>
    %492 = arith.addf %475, %491 : vector<2x1x256xf32>
    %493 = vector.extract_strided_slice %458 {offsets = [0, 2, 0], sizes = [2, 1, 256], strides = [1, 1, 1]} : vector<2x4x256xf32> to vector<2x1x256xf32>
    %c104 = arith.constant 104 : index
    %494 = memref.load %arg2[%c104] : memref<144xf32, #tpu.memory_space<smem>>
    %495 = vector.broadcast %494 : f32 to vector<2x1x256xf32>
    %496 = arith.mulf %495, %493 : vector<2x1x256xf32>
    %497 = arith.addf %480, %496 : vector<2x1x256xf32>
    %c105 = arith.constant 105 : index
    %498 = memref.load %arg2[%c105] : memref<144xf32, #tpu.memory_space<smem>>
    %499 = vector.broadcast %498 : f32 to vector<2x1x256xf32>
    %500 = arith.mulf %499, %493 : vector<2x1x256xf32>
    %501 = arith.addf %484, %500 : vector<2x1x256xf32>
    %c106 = arith.constant 106 : index
    %502 = memref.load %arg2[%c106] : memref<144xf32, #tpu.memory_space<smem>>
    %503 = vector.broadcast %502 : f32 to vector<2x1x256xf32>
    %504 = arith.mulf %503, %493 : vector<2x1x256xf32>
    %505 = arith.addf %488, %504 : vector<2x1x256xf32>
    %c107 = arith.constant 107 : index
    %506 = memref.load %arg2[%c107] : memref<144xf32, #tpu.memory_space<smem>>
    %507 = vector.broadcast %506 : f32 to vector<2x1x256xf32>
    %508 = arith.mulf %507, %493 : vector<2x1x256xf32>
    %509 = arith.addf %492, %508 : vector<2x1x256xf32>
    %510 = vector.extract_strided_slice %458 {offsets = [0, 3, 0], sizes = [2, 1, 256], strides = [1, 1, 1]} : vector<2x4x256xf32> to vector<2x1x256xf32>
    %c108 = arith.constant 108 : index
    %511 = memref.load %arg2[%c108] : memref<144xf32, #tpu.memory_space<smem>>
    %512 = vector.broadcast %511 : f32 to vector<2x1x256xf32>
    %513 = arith.mulf %512, %510 : vector<2x1x256xf32>
    %514 = arith.addf %497, %513 : vector<2x1x256xf32>
    %c109 = arith.constant 109 : index
    %515 = memref.load %arg2[%c109] : memref<144xf32, #tpu.memory_space<smem>>
    %516 = vector.broadcast %515 : f32 to vector<2x1x256xf32>
    %517 = arith.mulf %516, %510 : vector<2x1x256xf32>
    %518 = arith.addf %501, %517 : vector<2x1x256xf32>
    %c110 = arith.constant 110 : index
    %519 = memref.load %arg2[%c110] : memref<144xf32, #tpu.memory_space<smem>>
    %520 = vector.broadcast %519 : f32 to vector<2x1x256xf32>
    %521 = arith.mulf %520, %510 : vector<2x1x256xf32>
    %522 = arith.addf %505, %521 : vector<2x1x256xf32>
    %c111 = arith.constant 111 : index
    %523 = memref.load %arg2[%c111] : memref<144xf32, #tpu.memory_space<smem>>
    %524 = vector.broadcast %523 : f32 to vector<2x1x256xf32>
    %525 = arith.mulf %524, %510 : vector<2x1x256xf32>
    %526 = arith.addf %509, %525 : vector<2x1x256xf32>
    %c7_20 = arith.constant 7 : index
    %c0_21 = arith.constant 0 : index
    %527 = vector.load %arg1[%c7_20, %c0_21] : memref<9x256xf32, #tpu.memory_space<vmem>>, vector<1x256xf32>
    %528 = vector.shape_cast %527 : vector<1x256xf32> to vector<1x1x256xf32>
    %529 = vector.extract_strided_slice %0 {offsets = [0, 0, 16], sizes = [2, 4, 240], strides = [1, 1, 1]} : vector<2x4x256xf32> to vector<2x4x240xf32>
    %530 = vector.extract_strided_slice %0 {offsets = [0, 0, 0], sizes = [2, 4, 16], strides = [1, 1, 1]} : vector<2x4x256xf32> to vector<2x4x16xf32>
    %531 = tpu.concatenate %529, %530 in 2 : vector<2x4x240xf32>, vector<2x4x16xf32> -> vector<2x4x256xf32>
    %532 = vector.broadcast %528 : vector<1x1x256xf32> to vector<2x4x256xf32>
    %533 = arith.mulf %531, %532 : vector<2x4x256xf32>
    %534 = vector.extract_strided_slice %533 {offsets = [0, 0, 0], sizes = [2, 1, 256], strides = [1, 1, 1]} : vector<2x4x256xf32> to vector<2x1x256xf32>
    %c112 = arith.constant 112 : index
    %535 = memref.load %arg2[%c112] : memref<144xf32, #tpu.memory_space<smem>>
    %536 = vector.broadcast %535 : f32 to vector<2x1x256xf32>
    %537 = arith.mulf %536, %534 : vector<2x1x256xf32>
    %538 = arith.addf %514, %537 : vector<2x1x256xf32>
    %c113 = arith.constant 113 : index
    %539 = memref.load %arg2[%c113] : memref<144xf32, #tpu.memory_space<smem>>
    %540 = vector.broadcast %539 : f32 to vector<2x1x256xf32>
    %541 = arith.mulf %540, %534 : vector<2x1x256xf32>
    %542 = arith.addf %518, %541 : vector<2x1x256xf32>
    %c114 = arith.constant 114 : index
    %543 = memref.load %arg2[%c114] : memref<144xf32, #tpu.memory_space<smem>>
    %544 = vector.broadcast %543 : f32 to vector<2x1x256xf32>
    %545 = arith.mulf %544, %534 : vector<2x1x256xf32>
    %546 = arith.addf %522, %545 : vector<2x1x256xf32>
    %c115 = arith.constant 115 : index
    %547 = memref.load %arg2[%c115] : memref<144xf32, #tpu.memory_space<smem>>
    %548 = vector.broadcast %547 : f32 to vector<2x1x256xf32>
    %549 = arith.mulf %548, %534 : vector<2x1x256xf32>
    %550 = arith.addf %526, %549 : vector<2x1x256xf32>
    %551 = vector.extract_strided_slice %533 {offsets = [0, 1, 0], sizes = [2, 1, 256], strides = [1, 1, 1]} : vector<2x4x256xf32> to vector<2x1x256xf32>
    %c116 = arith.constant 116 : index
    %552 = memref.load %arg2[%c116] : memref<144xf32, #tpu.memory_space<smem>>
    %553 = vector.broadcast %552 : f32 to vector<2x1x256xf32>
    %554 = arith.mulf %553, %551 : vector<2x1x256xf32>
    %555 = arith.addf %538, %554 : vector<2x1x256xf32>
    %c117 = arith.constant 117 : index
    %556 = memref.load %arg2[%c117] : memref<144xf32, #tpu.memory_space<smem>>
    %557 = vector.broadcast %556 : f32 to vector<2x1x256xf32>
    %558 = arith.mulf %557, %551 : vector<2x1x256xf32>
    %559 = arith.addf %542, %558 : vector<2x1x256xf32>
    %c118 = arith.constant 118 : index
    %560 = memref.load %arg2[%c118] : memref<144xf32, #tpu.memory_space<smem>>
    %561 = vector.broadcast %560 : f32 to vector<2x1x256xf32>
    %562 = arith.mulf %561, %551 : vector<2x1x256xf32>
    %563 = arith.addf %546, %562 : vector<2x1x256xf32>
    %c119 = arith.constant 119 : index
    %564 = memref.load %arg2[%c119] : memref<144xf32, #tpu.memory_space<smem>>
    %565 = vector.broadcast %564 : f32 to vector<2x1x256xf32>
    %566 = arith.mulf %565, %551 : vector<2x1x256xf32>
    %567 = arith.addf %550, %566 : vector<2x1x256xf32>
    %568 = vector.extract_strided_slice %533 {offsets = [0, 2, 0], sizes = [2, 1, 256], strides = [1, 1, 1]} : vector<2x4x256xf32> to vector<2x1x256xf32>
    %c120 = arith.constant 120 : index
    %569 = memref.load %arg2[%c120] : memref<144xf32, #tpu.memory_space<smem>>
    %570 = vector.broadcast %569 : f32 to vector<2x1x256xf32>
    %571 = arith.mulf %570, %568 : vector<2x1x256xf32>
    %572 = arith.addf %555, %571 : vector<2x1x256xf32>
    %c121 = arith.constant 121 : index
    %573 = memref.load %arg2[%c121] : memref<144xf32, #tpu.memory_space<smem>>
    %574 = vector.broadcast %573 : f32 to vector<2x1x256xf32>
    %575 = arith.mulf %574, %568 : vector<2x1x256xf32>
    %576 = arith.addf %559, %575 : vector<2x1x256xf32>
    %c122 = arith.constant 122 : index
    %577 = memref.load %arg2[%c122] : memref<144xf32, #tpu.memory_space<smem>>
    %578 = vector.broadcast %577 : f32 to vector<2x1x256xf32>
    %579 = arith.mulf %578, %568 : vector<2x1x256xf32>
    %580 = arith.addf %563, %579 : vector<2x1x256xf32>
    %c123 = arith.constant 123 : index
    %581 = memref.load %arg2[%c123] : memref<144xf32, #tpu.memory_space<smem>>
    %582 = vector.broadcast %581 : f32 to vector<2x1x256xf32>
    %583 = arith.mulf %582, %568 : vector<2x1x256xf32>
    %584 = arith.addf %567, %583 : vector<2x1x256xf32>
    %585 = vector.extract_strided_slice %533 {offsets = [0, 3, 0], sizes = [2, 1, 256], strides = [1, 1, 1]} : vector<2x4x256xf32> to vector<2x1x256xf32>
    %c124 = arith.constant 124 : index
    %586 = memref.load %arg2[%c124] : memref<144xf32, #tpu.memory_space<smem>>
    %587 = vector.broadcast %586 : f32 to vector<2x1x256xf32>
    %588 = arith.mulf %587, %585 : vector<2x1x256xf32>
    %589 = arith.addf %572, %588 : vector<2x1x256xf32>
    %c125 = arith.constant 125 : index
    %590 = memref.load %arg2[%c125] : memref<144xf32, #tpu.memory_space<smem>>
    %591 = vector.broadcast %590 : f32 to vector<2x1x256xf32>
    %592 = arith.mulf %591, %585 : vector<2x1x256xf32>
    %593 = arith.addf %576, %592 : vector<2x1x256xf32>
    %c126 = arith.constant 126 : index
    %594 = memref.load %arg2[%c126] : memref<144xf32, #tpu.memory_space<smem>>
    %595 = vector.broadcast %594 : f32 to vector<2x1x256xf32>
    %596 = arith.mulf %595, %585 : vector<2x1x256xf32>
    %597 = arith.addf %580, %596 : vector<2x1x256xf32>
    %c127 = arith.constant 127 : index
    %598 = memref.load %arg2[%c127] : memref<144xf32, #tpu.memory_space<smem>>
    %599 = vector.broadcast %598 : f32 to vector<2x1x256xf32>
    %600 = arith.mulf %599, %585 : vector<2x1x256xf32>
    %601 = arith.addf %584, %600 : vector<2x1x256xf32>
    %c8_22 = arith.constant 8 : index
    %c0_23 = arith.constant 0 : index
    %602 = vector.load %arg1[%c8_22, %c0_23] : memref<9x256xf32, #tpu.memory_space<vmem>>, vector<1x256xf32>
    %603 = vector.shape_cast %602 : vector<1x256xf32> to vector<1x1x256xf32>
    %604 = vector.extract_strided_slice %0 {offsets = [0, 0, 17], sizes = [2, 4, 239], strides = [1, 1, 1]} : vector<2x4x256xf32> to vector<2x4x239xf32>
    %605 = vector.extract_strided_slice %0 {offsets = [0, 0, 0], sizes = [2, 4, 17], strides = [1, 1, 1]} : vector<2x4x256xf32> to vector<2x4x17xf32>
    %606 = tpu.concatenate %604, %605 in 2 : vector<2x4x239xf32>, vector<2x4x17xf32> -> vector<2x4x256xf32>
    %607 = vector.broadcast %603 : vector<1x1x256xf32> to vector<2x4x256xf32>
    %608 = arith.mulf %606, %607 : vector<2x4x256xf32>
    %609 = vector.extract_strided_slice %608 {offsets = [0, 0, 0], sizes = [2, 1, 256], strides = [1, 1, 1]} : vector<2x4x256xf32> to vector<2x1x256xf32>
    %c128 = arith.constant 128 : index
    %610 = memref.load %arg2[%c128] : memref<144xf32, #tpu.memory_space<smem>>
    %611 = vector.broadcast %610 : f32 to vector<2x1x256xf32>
    %612 = arith.mulf %611, %609 : vector<2x1x256xf32>
    %613 = arith.addf %589, %612 : vector<2x1x256xf32>
    %c129 = arith.constant 129 : index
    %614 = memref.load %arg2[%c129] : memref<144xf32, #tpu.memory_space<smem>>
    %615 = vector.broadcast %614 : f32 to vector<2x1x256xf32>
    %616 = arith.mulf %615, %609 : vector<2x1x256xf32>
    %617 = arith.addf %593, %616 : vector<2x1x256xf32>
    %c130 = arith.constant 130 : index
    %618 = memref.load %arg2[%c130] : memref<144xf32, #tpu.memory_space<smem>>
    %619 = vector.broadcast %618 : f32 to vector<2x1x256xf32>
    %620 = arith.mulf %619, %609 : vector<2x1x256xf32>
    %621 = arith.addf %597, %620 : vector<2x1x256xf32>
    %c131 = arith.constant 131 : index
    %622 = memref.load %arg2[%c131] : memref<144xf32, #tpu.memory_space<smem>>
    %623 = vector.broadcast %622 : f32 to vector<2x1x256xf32>
    %624 = arith.mulf %623, %609 : vector<2x1x256xf32>
    %625 = arith.addf %601, %624 : vector<2x1x256xf32>
    %626 = vector.extract_strided_slice %608 {offsets = [0, 1, 0], sizes = [2, 1, 256], strides = [1, 1, 1]} : vector<2x4x256xf32> to vector<2x1x256xf32>
    %c132 = arith.constant 132 : index
    %627 = memref.load %arg2[%c132] : memref<144xf32, #tpu.memory_space<smem>>
    %628 = vector.broadcast %627 : f32 to vector<2x1x256xf32>
    %629 = arith.mulf %628, %626 : vector<2x1x256xf32>
    %630 = arith.addf %613, %629 : vector<2x1x256xf32>
    %c133 = arith.constant 133 : index
    %631 = memref.load %arg2[%c133] : memref<144xf32, #tpu.memory_space<smem>>
    %632 = vector.broadcast %631 : f32 to vector<2x1x256xf32>
    %633 = arith.mulf %632, %626 : vector<2x1x256xf32>
    %634 = arith.addf %617, %633 : vector<2x1x256xf32>
    %c134 = arith.constant 134 : index
    %635 = memref.load %arg2[%c134] : memref<144xf32, #tpu.memory_space<smem>>
    %636 = vector.broadcast %635 : f32 to vector<2x1x256xf32>
    %637 = arith.mulf %636, %626 : vector<2x1x256xf32>
    %638 = arith.addf %621, %637 : vector<2x1x256xf32>
    %c135 = arith.constant 135 : index
    %639 = memref.load %arg2[%c135] : memref<144xf32, #tpu.memory_space<smem>>
    %640 = vector.broadcast %639 : f32 to vector<2x1x256xf32>
    %641 = arith.mulf %640, %626 : vector<2x1x256xf32>
    %642 = arith.addf %625, %641 : vector<2x1x256xf32>
    %643 = vector.extract_strided_slice %608 {offsets = [0, 2, 0], sizes = [2, 1, 256], strides = [1, 1, 1]} : vector<2x4x256xf32> to vector<2x1x256xf32>
    %c136 = arith.constant 136 : index
    %644 = memref.load %arg2[%c136] : memref<144xf32, #tpu.memory_space<smem>>
    %645 = vector.broadcast %644 : f32 to vector<2x1x256xf32>
    %646 = arith.mulf %645, %643 : vector<2x1x256xf32>
    %647 = arith.addf %630, %646 : vector<2x1x256xf32>
    %c137 = arith.constant 137 : index
    %648 = memref.load %arg2[%c137] : memref<144xf32, #tpu.memory_space<smem>>
    %649 = vector.broadcast %648 : f32 to vector<2x1x256xf32>
    %650 = arith.mulf %649, %643 : vector<2x1x256xf32>
    %651 = arith.addf %634, %650 : vector<2x1x256xf32>
    %c138 = arith.constant 138 : index
    %652 = memref.load %arg2[%c138] : memref<144xf32, #tpu.memory_space<smem>>
    %653 = vector.broadcast %652 : f32 to vector<2x1x256xf32>
    %654 = arith.mulf %653, %643 : vector<2x1x256xf32>
    %655 = arith.addf %638, %654 : vector<2x1x256xf32>
    %c139 = arith.constant 139 : index
    %656 = memref.load %arg2[%c139] : memref<144xf32, #tpu.memory_space<smem>>
    %657 = vector.broadcast %656 : f32 to vector<2x1x256xf32>
    %658 = arith.mulf %657, %643 : vector<2x1x256xf32>
    %659 = arith.addf %642, %658 : vector<2x1x256xf32>
    %660 = vector.extract_strided_slice %608 {offsets = [0, 3, 0], sizes = [2, 1, 256], strides = [1, 1, 1]} : vector<2x4x256xf32> to vector<2x1x256xf32>
    %c140 = arith.constant 140 : index
    %661 = memref.load %arg2[%c140] : memref<144xf32, #tpu.memory_space<smem>>
    %662 = vector.broadcast %661 : f32 to vector<2x1x256xf32>
    %663 = arith.mulf %662, %660 : vector<2x1x256xf32>
    %664 = arith.addf %647, %663 : vector<2x1x256xf32>
    %c141 = arith.constant 141 : index
    %665 = memref.load %arg2[%c141] : memref<144xf32, #tpu.memory_space<smem>>
    %666 = vector.broadcast %665 : f32 to vector<2x1x256xf32>
    %667 = arith.mulf %666, %660 : vector<2x1x256xf32>
    %668 = arith.addf %651, %667 : vector<2x1x256xf32>
    %c142 = arith.constant 142 : index
    %669 = memref.load %arg2[%c142] : memref<144xf32, #tpu.memory_space<smem>>
    %670 = vector.broadcast %669 : f32 to vector<2x1x256xf32>
    %671 = arith.mulf %670, %660 : vector<2x1x256xf32>
    %672 = arith.addf %655, %671 : vector<2x1x256xf32>
    %c143 = arith.constant 143 : index
    %673 = memref.load %arg2[%c143] : memref<144xf32, #tpu.memory_space<smem>>
    %674 = vector.broadcast %673 : f32 to vector<2x1x256xf32>
    %675 = arith.mulf %674, %660 : vector<2x1x256xf32>
    %676 = arith.addf %659, %675 : vector<2x1x256xf32>
    %677 = tpu.concatenate %664, %668, %672, %676 in 1 : vector<2x1x256xf32>, vector<2x1x256xf32>, vector<2x1x256xf32>, vector<2x1x256xf32> -> vector<2x4x256xf32>
    %cst_24 = arith.constant dense<0.000000e+00> : vector<2x4xf32>
    %678 = vector.multi_reduction <add>, %677, %cst_24 [2] : vector<2x4x256xf32> to vector<2x4xf32>
    %679 = vector.shape_cast %678 : vector<2x4xf32> to vector<2x4x1xf32>
    %cst_25 = arith.constant dense<0.000000e+00> : vector<4x1xf32>
    %680 = vector.multi_reduction <add>, %679, %cst_25 [0] : vector<2x4x1xf32> to vector<4x1xf32>
    %681 = vector.shape_cast %680 : vector<4x1xf32> to vector<1x4x1xf32>
    %682 = arith.mulf %677, %677 : vector<2x4x256xf32>
    %cst_26 = arith.constant dense<0.000000e+00> : vector<2x4xf32>
    %683 = vector.multi_reduction <add>, %682, %cst_26 [2] : vector<2x4x256xf32> to vector<2x4xf32>
    %684 = vector.shape_cast %683 : vector<2x4xf32> to vector<2x4x1xf32>
    %cst_27 = arith.constant dense<0.000000e+00> : vector<4x1xf32>
    %685 = vector.multi_reduction <add>, %684, %cst_27 [0] : vector<2x4x1xf32> to vector<4x1xf32>
    %686 = vector.shape_cast %685 : vector<4x1xf32> to vector<1x4x1xf32>
    %cst_28 = arith.constant 0.001953125 : f32
    %687 = vector.broadcast %cst_28 : f32 to vector<1x4x1xf32>
    %688 = arith.mulf %681, %687 : vector<1x4x1xf32>
    %cst_29 = arith.constant 0.001953125 : f32
    %689 = vector.broadcast %cst_29 : f32 to vector<1x4x1xf32>
    %690 = arith.mulf %686, %689 : vector<1x4x1xf32>
    %691 = arith.mulf %688, %688 : vector<1x4x1xf32>
    %692 = arith.subf %690, %691 : vector<1x4x1xf32>
    %c0_30 = arith.constant 0 : index
    %c0_31 = arith.constant 0 : index
    %c0_32 = arith.constant 0 : index
    %693 = vector.load %arg3[%c0_30, %c0_31, %c0_32] : memref<1x4x1xf32, #tpu.memory_space<vmem>>, vector<1x4x1xf32>
    %cst_33 = arith.constant 9.99999974E-6 : f32
    %694 = vector.broadcast %cst_33 : f32 to vector<1x4x1xf32>
    %695 = arith.addf %692, %694 : vector<1x4x1xf32>
    %696 = math.rsqrt %695 : vector<1x4x1xf32>
    %697 = arith.mulf %693, %696 : vector<1x4x1xf32>
    %c0_34 = arith.constant 0 : index
    %c0_35 = arith.constant 0 : index
    %c0_36 = arith.constant 0 : index
    %698 = vector.load %arg4[%c0_34, %c0_35, %c0_36] : memref<1x4x1xf32, #tpu.memory_space<vmem>>, vector<1x4x1xf32>
    %699 = arith.mulf %688, %697 : vector<1x4x1xf32>
    %700 = arith.subf %698, %699 : vector<1x4x1xf32>
    %701 = vector.broadcast %697 : vector<1x4x1xf32> to vector<2x4x256xf32>
    %702 = arith.mulf %677, %701 : vector<2x4x256xf32>
    %703 = vector.broadcast %700 : vector<1x4x1xf32> to vector<2x4x256xf32>
    %704 = arith.addf %702, %703 : vector<2x4x256xf32>
    %cst_37 = arith.constant 0.000000e+00 : f32
    %705 = vector.broadcast %cst_37 : f32 to vector<2x4x256xf32>
    %706 = arith.cmpf oge, %704, %705 : vector<2x4x256xf32>
    %cst_38 = arith.constant 2.000000e-01 : f32
    %707 = vector.broadcast %cst_38 : f32 to vector<2x4x256xf32>
    %708 = arith.mulf %707, %704 : vector<2x4x256xf32>
    %709 = arith.select %706, %704, %708 : vector<2x4x256xi1>, vector<2x4x256xf32>
    %cst_39 = arith.constant 0.000000e+00 : f32
    %710 = vector.broadcast %cst_39 : f32 to vector<2x1x256xf32>
    %cst_40 = arith.constant 0.000000e+00 : f32
    %711 = vector.broadcast %cst_40 : f32 to vector<2x1x256xf32>
    %cst_41 = arith.constant 0.000000e+00 : f32
    %712 = vector.broadcast %cst_41 : f32 to vector<2x1x256xf32>
    %cst_42 = arith.constant 0.000000e+00 : f32
    %713 = vector.broadcast %cst_42 : f32 to vector<2x1x256xf32>
    %c0_43 = arith.constant 0 : index
    %c0_44 = arith.constant 0 : index
    %714 = vector.load %arg1[%c0_43, %c0_44] : memref<9x256xf32, #tpu.memory_space<vmem>>, vector<1x256xf32>
    %715 = vector.shape_cast %714 : vector<1x256xf32> to vector<1x1x256xf32>
    %716 = vector.extract_strided_slice %709 {offsets = [0, 0, 239], sizes = [2, 4, 17], strides = [1, 1, 1]} : vector<2x4x256xf32> to vector<2x4x17xf32>
    %717 = vector.extract_strided_slice %709 {offsets = [0, 0, 0], sizes = [2, 4, 239], strides = [1, 1, 1]} : vector<2x4x256xf32> to vector<2x4x239xf32>
    %718 = tpu.concatenate %716, %717 in 2 : vector<2x4x17xf32>, vector<2x4x239xf32> -> vector<2x4x256xf32>
    %719 = vector.broadcast %715 : vector<1x1x256xf32> to vector<2x4x256xf32>
    %720 = arith.mulf %718, %719 : vector<2x4x256xf32>
    %721 = vector.extract_strided_slice %720 {offsets = [0, 0, 0], sizes = [2, 1, 256], strides = [1, 1, 1]} : vector<2x4x256xf32> to vector<2x1x256xf32>
    %c0_45 = arith.constant 0 : index
    %722 = memref.load %arg5[%c0_45] : memref<144xf32, #tpu.memory_space<smem>>
    %723 = vector.broadcast %722 : f32 to vector<2x1x256xf32>
    %724 = arith.mulf %723, %721 : vector<2x1x256xf32>
    %725 = arith.addf %710, %724 : vector<2x1x256xf32>
    %c1_46 = arith.constant 1 : index
    %726 = memref.load %arg5[%c1_46] : memref<144xf32, #tpu.memory_space<smem>>
    %727 = vector.broadcast %726 : f32 to vector<2x1x256xf32>
    %728 = arith.mulf %727, %721 : vector<2x1x256xf32>
    %729 = arith.addf %711, %728 : vector<2x1x256xf32>
    %c2_47 = arith.constant 2 : index
    %730 = memref.load %arg5[%c2_47] : memref<144xf32, #tpu.memory_space<smem>>
    %731 = vector.broadcast %730 : f32 to vector<2x1x256xf32>
    %732 = arith.mulf %731, %721 : vector<2x1x256xf32>
    %733 = arith.addf %712, %732 : vector<2x1x256xf32>
    %c3_48 = arith.constant 3 : index
    %734 = memref.load %arg5[%c3_48] : memref<144xf32, #tpu.memory_space<smem>>
    %735 = vector.broadcast %734 : f32 to vector<2x1x256xf32>
    %736 = arith.mulf %735, %721 : vector<2x1x256xf32>
    %737 = arith.addf %713, %736 : vector<2x1x256xf32>
    %738 = vector.extract_strided_slice %720 {offsets = [0, 1, 0], sizes = [2, 1, 256], strides = [1, 1, 1]} : vector<2x4x256xf32> to vector<2x1x256xf32>
    %c4_49 = arith.constant 4 : index
    %739 = memref.load %arg5[%c4_49] : memref<144xf32, #tpu.memory_space<smem>>
    %740 = vector.broadcast %739 : f32 to vector<2x1x256xf32>
    %741 = arith.mulf %740, %738 : vector<2x1x256xf32>
    %742 = arith.addf %725, %741 : vector<2x1x256xf32>
    %c5_50 = arith.constant 5 : index
    %743 = memref.load %arg5[%c5_50] : memref<144xf32, #tpu.memory_space<smem>>
    %744 = vector.broadcast %743 : f32 to vector<2x1x256xf32>
    %745 = arith.mulf %744, %738 : vector<2x1x256xf32>
    %746 = arith.addf %729, %745 : vector<2x1x256xf32>
    %c6_51 = arith.constant 6 : index
    %747 = memref.load %arg5[%c6_51] : memref<144xf32, #tpu.memory_space<smem>>
    %748 = vector.broadcast %747 : f32 to vector<2x1x256xf32>
    %749 = arith.mulf %748, %738 : vector<2x1x256xf32>
    %750 = arith.addf %733, %749 : vector<2x1x256xf32>
    %c7_52 = arith.constant 7 : index
    %751 = memref.load %arg5[%c7_52] : memref<144xf32, #tpu.memory_space<smem>>
    %752 = vector.broadcast %751 : f32 to vector<2x1x256xf32>
    %753 = arith.mulf %752, %738 : vector<2x1x256xf32>
    %754 = arith.addf %737, %753 : vector<2x1x256xf32>
    %755 = vector.extract_strided_slice %720 {offsets = [0, 2, 0], sizes = [2, 1, 256], strides = [1, 1, 1]} : vector<2x4x256xf32> to vector<2x1x256xf32>
    %c8_53 = arith.constant 8 : index
    %756 = memref.load %arg5[%c8_53] : memref<144xf32, #tpu.memory_space<smem>>
    %757 = vector.broadcast %756 : f32 to vector<2x1x256xf32>
    %758 = arith.mulf %757, %755 : vector<2x1x256xf32>
    %759 = arith.addf %742, %758 : vector<2x1x256xf32>
    %c9_54 = arith.constant 9 : index
    %760 = memref.load %arg5[%c9_54] : memref<144xf32, #tpu.memory_space<smem>>
    %761 = vector.broadcast %760 : f32 to vector<2x1x256xf32>
    %762 = arith.mulf %761, %755 : vector<2x1x256xf32>
    %763 = arith.addf %746, %762 : vector<2x1x256xf32>
    %c10_55 = arith.constant 10 : index
    %764 = memref.load %arg5[%c10_55] : memref<144xf32, #tpu.memory_space<smem>>
    %765 = vector.broadcast %764 : f32 to vector<2x1x256xf32>
    %766 = arith.mulf %765, %755 : vector<2x1x256xf32>
    %767 = arith.addf %750, %766 : vector<2x1x256xf32>
    %c11_56 = arith.constant 11 : index
    %768 = memref.load %arg5[%c11_56] : memref<144xf32, #tpu.memory_space<smem>>
    %769 = vector.broadcast %768 : f32 to vector<2x1x256xf32>
    %770 = arith.mulf %769, %755 : vector<2x1x256xf32>
    %771 = arith.addf %754, %770 : vector<2x1x256xf32>
    %772 = vector.extract_strided_slice %720 {offsets = [0, 3, 0], sizes = [2, 1, 256], strides = [1, 1, 1]} : vector<2x4x256xf32> to vector<2x1x256xf32>
    %c12_57 = arith.constant 12 : index
    %773 = memref.load %arg5[%c12_57] : memref<144xf32, #tpu.memory_space<smem>>
    %774 = vector.broadcast %773 : f32 to vector<2x1x256xf32>
    %775 = arith.mulf %774, %772 : vector<2x1x256xf32>
    %776 = arith.addf %759, %775 : vector<2x1x256xf32>
    %c13_58 = arith.constant 13 : index
    %777 = memref.load %arg5[%c13_58] : memref<144xf32, #tpu.memory_space<smem>>
    %778 = vector.broadcast %777 : f32 to vector<2x1x256xf32>
    %779 = arith.mulf %778, %772 : vector<2x1x256xf32>
    %780 = arith.addf %763, %779 : vector<2x1x256xf32>
    %c14_59 = arith.constant 14 : index
    %781 = memref.load %arg5[%c14_59] : memref<144xf32, #tpu.memory_space<smem>>
    %782 = vector.broadcast %781 : f32 to vector<2x1x256xf32>
    %783 = arith.mulf %782, %772 : vector<2x1x256xf32>
    %784 = arith.addf %767, %783 : vector<2x1x256xf32>
    %c15_60 = arith.constant 15 : index
    %785 = memref.load %arg5[%c15_60] : memref<144xf32, #tpu.memory_space<smem>>
    %786 = vector.broadcast %785 : f32 to vector<2x1x256xf32>
    %787 = arith.mulf %786, %772 : vector<2x1x256xf32>
    %788 = arith.addf %771, %787 : vector<2x1x256xf32>
    %c1_61 = arith.constant 1 : index
    %c0_62 = arith.constant 0 : index
    %789 = vector.load %arg1[%c1_61, %c0_62] : memref<9x256xf32, #tpu.memory_space<vmem>>, vector<1x256xf32>
    %790 = vector.shape_cast %789 : vector<1x256xf32> to vector<1x1x256xf32>
    %791 = vector.extract_strided_slice %709 {offsets = [0, 0, 240], sizes = [2, 4, 16], strides = [1, 1, 1]} : vector<2x4x256xf32> to vector<2x4x16xf32>
    %792 = vector.extract_strided_slice %709 {offsets = [0, 0, 0], sizes = [2, 4, 240], strides = [1, 1, 1]} : vector<2x4x256xf32> to vector<2x4x240xf32>
    %793 = tpu.concatenate %791, %792 in 2 : vector<2x4x16xf32>, vector<2x4x240xf32> -> vector<2x4x256xf32>
    %794 = vector.broadcast %790 : vector<1x1x256xf32> to vector<2x4x256xf32>
    %795 = arith.mulf %793, %794 : vector<2x4x256xf32>
    %796 = vector.extract_strided_slice %795 {offsets = [0, 0, 0], sizes = [2, 1, 256], strides = [1, 1, 1]} : vector<2x4x256xf32> to vector<2x1x256xf32>
    %c16_63 = arith.constant 16 : index
    %797 = memref.load %arg5[%c16_63] : memref<144xf32, #tpu.memory_space<smem>>
    %798 = vector.broadcast %797 : f32 to vector<2x1x256xf32>
    %799 = arith.mulf %798, %796 : vector<2x1x256xf32>
    %800 = arith.addf %776, %799 : vector<2x1x256xf32>
    %c17_64 = arith.constant 17 : index
    %801 = memref.load %arg5[%c17_64] : memref<144xf32, #tpu.memory_space<smem>>
    %802 = vector.broadcast %801 : f32 to vector<2x1x256xf32>
    %803 = arith.mulf %802, %796 : vector<2x1x256xf32>
    %804 = arith.addf %780, %803 : vector<2x1x256xf32>
    %c18_65 = arith.constant 18 : index
    %805 = memref.load %arg5[%c18_65] : memref<144xf32, #tpu.memory_space<smem>>
    %806 = vector.broadcast %805 : f32 to vector<2x1x256xf32>
    %807 = arith.mulf %806, %796 : vector<2x1x256xf32>
    %808 = arith.addf %784, %807 : vector<2x1x256xf32>
    %c19_66 = arith.constant 19 : index
    %809 = memref.load %arg5[%c19_66] : memref<144xf32, #tpu.memory_space<smem>>
    %810 = vector.broadcast %809 : f32 to vector<2x1x256xf32>
    %811 = arith.mulf %810, %796 : vector<2x1x256xf32>
    %812 = arith.addf %788, %811 : vector<2x1x256xf32>
    %813 = vector.extract_strided_slice %795 {offsets = [0, 1, 0], sizes = [2, 1, 256], strides = [1, 1, 1]} : vector<2x4x256xf32> to vector<2x1x256xf32>
    %c20_67 = arith.constant 20 : index
    %814 = memref.load %arg5[%c20_67] : memref<144xf32, #tpu.memory_space<smem>>
    %815 = vector.broadcast %814 : f32 to vector<2x1x256xf32>
    %816 = arith.mulf %815, %813 : vector<2x1x256xf32>
    %817 = arith.addf %800, %816 : vector<2x1x256xf32>
    %c21_68 = arith.constant 21 : index
    %818 = memref.load %arg5[%c21_68] : memref<144xf32, #tpu.memory_space<smem>>
    %819 = vector.broadcast %818 : f32 to vector<2x1x256xf32>
    %820 = arith.mulf %819, %813 : vector<2x1x256xf32>
    %821 = arith.addf %804, %820 : vector<2x1x256xf32>
    %c22_69 = arith.constant 22 : index
    %822 = memref.load %arg5[%c22_69] : memref<144xf32, #tpu.memory_space<smem>>
    %823 = vector.broadcast %822 : f32 to vector<2x1x256xf32>
    %824 = arith.mulf %823, %813 : vector<2x1x256xf32>
    %825 = arith.addf %808, %824 : vector<2x1x256xf32>
    %c23_70 = arith.constant 23 : index
    %826 = memref.load %arg5[%c23_70] : memref<144xf32, #tpu.memory_space<smem>>
    %827 = vector.broadcast %826 : f32 to vector<2x1x256xf32>
    %828 = arith.mulf %827, %813 : vector<2x1x256xf32>
    %829 = arith.addf %812, %828 : vector<2x1x256xf32>
    %830 = vector.extract_strided_slice %795 {offsets = [0, 2, 0], sizes = [2, 1, 256], strides = [1, 1, 1]} : vector<2x4x256xf32> to vector<2x1x256xf32>
    %c24_71 = arith.constant 24 : index
    %831 = memref.load %arg5[%c24_71] : memref<144xf32, #tpu.memory_space<smem>>
    %832 = vector.broadcast %831 : f32 to vector<2x1x256xf32>
    %833 = arith.mulf %832, %830 : vector<2x1x256xf32>
    %834 = arith.addf %817, %833 : vector<2x1x256xf32>
    %c25_72 = arith.constant 25 : index
    %835 = memref.load %arg5[%c25_72] : memref<144xf32, #tpu.memory_space<smem>>
    %836 = vector.broadcast %835 : f32 to vector<2x1x256xf32>
    %837 = arith.mulf %836, %830 : vector<2x1x256xf32>
    %838 = arith.addf %821, %837 : vector<2x1x256xf32>
    %c26_73 = arith.constant 26 : index
    %839 = memref.load %arg5[%c26_73] : memref<144xf32, #tpu.memory_space<smem>>
    %840 = vector.broadcast %839 : f32 to vector<2x1x256xf32>
    %841 = arith.mulf %840, %830 : vector<2x1x256xf32>
    %842 = arith.addf %825, %841 : vector<2x1x256xf32>
    %c27_74 = arith.constant 27 : index
    %843 = memref.load %arg5[%c27_74] : memref<144xf32, #tpu.memory_space<smem>>
    %844 = vector.broadcast %843 : f32 to vector<2x1x256xf32>
    %845 = arith.mulf %844, %830 : vector<2x1x256xf32>
    %846 = arith.addf %829, %845 : vector<2x1x256xf32>
    %847 = vector.extract_strided_slice %795 {offsets = [0, 3, 0], sizes = [2, 1, 256], strides = [1, 1, 1]} : vector<2x4x256xf32> to vector<2x1x256xf32>
    %c28_75 = arith.constant 28 : index
    %848 = memref.load %arg5[%c28_75] : memref<144xf32, #tpu.memory_space<smem>>
    %849 = vector.broadcast %848 : f32 to vector<2x1x256xf32>
    %850 = arith.mulf %849, %847 : vector<2x1x256xf32>
    %851 = arith.addf %834, %850 : vector<2x1x256xf32>
    %c29_76 = arith.constant 29 : index
    %852 = memref.load %arg5[%c29_76] : memref<144xf32, #tpu.memory_space<smem>>
    %853 = vector.broadcast %852 : f32 to vector<2x1x256xf32>
    %854 = arith.mulf %853, %847 : vector<2x1x256xf32>
    %855 = arith.addf %838, %854 : vector<2x1x256xf32>
    %c30_77 = arith.constant 30 : index
    %856 = memref.load %arg5[%c30_77] : memref<144xf32, #tpu.memory_space<smem>>
    %857 = vector.broadcast %856 : f32 to vector<2x1x256xf32>
    %858 = arith.mulf %857, %847 : vector<2x1x256xf32>
    %859 = arith.addf %842, %858 : vector<2x1x256xf32>
    %c31_78 = arith.constant 31 : index
    %860 = memref.load %arg5[%c31_78] : memref<144xf32, #tpu.memory_space<smem>>
    %861 = vector.broadcast %860 : f32 to vector<2x1x256xf32>
    %862 = arith.mulf %861, %847 : vector<2x1x256xf32>
    %863 = arith.addf %846, %862 : vector<2x1x256xf32>
    %c2_79 = arith.constant 2 : index
    %c0_80 = arith.constant 0 : index
    %864 = vector.load %arg1[%c2_79, %c0_80] : memref<9x256xf32, #tpu.memory_space<vmem>>, vector<1x256xf32>
    %865 = vector.shape_cast %864 : vector<1x256xf32> to vector<1x1x256xf32>
    %866 = vector.extract_strided_slice %709 {offsets = [0, 0, 241], sizes = [2, 4, 15], strides = [1, 1, 1]} : vector<2x4x256xf32> to vector<2x4x15xf32>
    %867 = vector.extract_strided_slice %709 {offsets = [0, 0, 0], sizes = [2, 4, 241], strides = [1, 1, 1]} : vector<2x4x256xf32> to vector<2x4x241xf32>
    %868 = tpu.concatenate %866, %867 in 2 : vector<2x4x15xf32>, vector<2x4x241xf32> -> vector<2x4x256xf32>
    %869 = vector.broadcast %865 : vector<1x1x256xf32> to vector<2x4x256xf32>
    %870 = arith.mulf %868, %869 : vector<2x4x256xf32>
    %871 = vector.extract_strided_slice %870 {offsets = [0, 0, 0], sizes = [2, 1, 256], strides = [1, 1, 1]} : vector<2x4x256xf32> to vector<2x1x256xf32>
    %c32_81 = arith.constant 32 : index
    %872 = memref.load %arg5[%c32_81] : memref<144xf32, #tpu.memory_space<smem>>
    %873 = vector.broadcast %872 : f32 to vector<2x1x256xf32>
    %874 = arith.mulf %873, %871 : vector<2x1x256xf32>
    %875 = arith.addf %851, %874 : vector<2x1x256xf32>
    %c33_82 = arith.constant 33 : index
    %876 = memref.load %arg5[%c33_82] : memref<144xf32, #tpu.memory_space<smem>>
    %877 = vector.broadcast %876 : f32 to vector<2x1x256xf32>
    %878 = arith.mulf %877, %871 : vector<2x1x256xf32>
    %879 = arith.addf %855, %878 : vector<2x1x256xf32>
    %c34_83 = arith.constant 34 : index
    %880 = memref.load %arg5[%c34_83] : memref<144xf32, #tpu.memory_space<smem>>
    %881 = vector.broadcast %880 : f32 to vector<2x1x256xf32>
    %882 = arith.mulf %881, %871 : vector<2x1x256xf32>
    %883 = arith.addf %859, %882 : vector<2x1x256xf32>
    %c35_84 = arith.constant 35 : index
    %884 = memref.load %arg5[%c35_84] : memref<144xf32, #tpu.memory_space<smem>>
    %885 = vector.broadcast %884 : f32 to vector<2x1x256xf32>
    %886 = arith.mulf %885, %871 : vector<2x1x256xf32>
    %887 = arith.addf %863, %886 : vector<2x1x256xf32>
    %888 = vector.extract_strided_slice %870 {offsets = [0, 1, 0], sizes = [2, 1, 256], strides = [1, 1, 1]} : vector<2x4x256xf32> to vector<2x1x256xf32>
    %c36_85 = arith.constant 36 : index
    %889 = memref.load %arg5[%c36_85] : memref<144xf32, #tpu.memory_space<smem>>
    %890 = vector.broadcast %889 : f32 to vector<2x1x256xf32>
    %891 = arith.mulf %890, %888 : vector<2x1x256xf32>
    %892 = arith.addf %875, %891 : vector<2x1x256xf32>
    %c37_86 = arith.constant 37 : index
    %893 = memref.load %arg5[%c37_86] : memref<144xf32, #tpu.memory_space<smem>>
    %894 = vector.broadcast %893 : f32 to vector<2x1x256xf32>
    %895 = arith.mulf %894, %888 : vector<2x1x256xf32>
    %896 = arith.addf %879, %895 : vector<2x1x256xf32>
    %c38_87 = arith.constant 38 : index
    %897 = memref.load %arg5[%c38_87] : memref<144xf32, #tpu.memory_space<smem>>
    %898 = vector.broadcast %897 : f32 to vector<2x1x256xf32>
    %899 = arith.mulf %898, %888 : vector<2x1x256xf32>
    %900 = arith.addf %883, %899 : vector<2x1x256xf32>
    %c39_88 = arith.constant 39 : index
    %901 = memref.load %arg5[%c39_88] : memref<144xf32, #tpu.memory_space<smem>>
    %902 = vector.broadcast %901 : f32 to vector<2x1x256xf32>
    %903 = arith.mulf %902, %888 : vector<2x1x256xf32>
    %904 = arith.addf %887, %903 : vector<2x1x256xf32>
    %905 = vector.extract_strided_slice %870 {offsets = [0, 2, 0], sizes = [2, 1, 256], strides = [1, 1, 1]} : vector<2x4x256xf32> to vector<2x1x256xf32>
    %c40_89 = arith.constant 40 : index
    %906 = memref.load %arg5[%c40_89] : memref<144xf32, #tpu.memory_space<smem>>
    %907 = vector.broadcast %906 : f32 to vector<2x1x256xf32>
    %908 = arith.mulf %907, %905 : vector<2x1x256xf32>
    %909 = arith.addf %892, %908 : vector<2x1x256xf32>
    %c41_90 = arith.constant 41 : index
    %910 = memref.load %arg5[%c41_90] : memref<144xf32, #tpu.memory_space<smem>>
    %911 = vector.broadcast %910 : f32 to vector<2x1x256xf32>
    %912 = arith.mulf %911, %905 : vector<2x1x256xf32>
    %913 = arith.addf %896, %912 : vector<2x1x256xf32>
    %c42_91 = arith.constant 42 : index
    %914 = memref.load %arg5[%c42_91] : memref<144xf32, #tpu.memory_space<smem>>
    %915 = vector.broadcast %914 : f32 to vector<2x1x256xf32>
    %916 = arith.mulf %915, %905 : vector<2x1x256xf32>
    %917 = arith.addf %900, %916 : vector<2x1x256xf32>
    %c43_92 = arith.constant 43 : index
    %918 = memref.load %arg5[%c43_92] : memref<144xf32, #tpu.memory_space<smem>>
    %919 = vector.broadcast %918 : f32 to vector<2x1x256xf32>
    %920 = arith.mulf %919, %905 : vector<2x1x256xf32>
    %921 = arith.addf %904, %920 : vector<2x1x256xf32>
    %922 = vector.extract_strided_slice %870 {offsets = [0, 3, 0], sizes = [2, 1, 256], strides = [1, 1, 1]} : vector<2x4x256xf32> to vector<2x1x256xf32>
    %c44_93 = arith.constant 44 : index
    %923 = memref.load %arg5[%c44_93] : memref<144xf32, #tpu.memory_space<smem>>
    %924 = vector.broadcast %923 : f32 to vector<2x1x256xf32>
    %925 = arith.mulf %924, %922 : vector<2x1x256xf32>
    %926 = arith.addf %909, %925 : vector<2x1x256xf32>
    %c45_94 = arith.constant 45 : index
    %927 = memref.load %arg5[%c45_94] : memref<144xf32, #tpu.memory_space<smem>>
    %928 = vector.broadcast %927 : f32 to vector<2x1x256xf32>
    %929 = arith.mulf %928, %922 : vector<2x1x256xf32>
    %930 = arith.addf %913, %929 : vector<2x1x256xf32>
    %c46_95 = arith.constant 46 : index
    %931 = memref.load %arg5[%c46_95] : memref<144xf32, #tpu.memory_space<smem>>
    %932 = vector.broadcast %931 : f32 to vector<2x1x256xf32>
    %933 = arith.mulf %932, %922 : vector<2x1x256xf32>
    %934 = arith.addf %917, %933 : vector<2x1x256xf32>
    %c47_96 = arith.constant 47 : index
    %935 = memref.load %arg5[%c47_96] : memref<144xf32, #tpu.memory_space<smem>>
    %936 = vector.broadcast %935 : f32 to vector<2x1x256xf32>
    %937 = arith.mulf %936, %922 : vector<2x1x256xf32>
    %938 = arith.addf %921, %937 : vector<2x1x256xf32>
    %c3_97 = arith.constant 3 : index
    %c0_98 = arith.constant 0 : index
    %939 = vector.load %arg1[%c3_97, %c0_98] : memref<9x256xf32, #tpu.memory_space<vmem>>, vector<1x256xf32>
    %940 = vector.shape_cast %939 : vector<1x256xf32> to vector<1x1x256xf32>
    %941 = vector.extract_strided_slice %709 {offsets = [0, 0, 255], sizes = [2, 4, 1], strides = [1, 1, 1]} : vector<2x4x256xf32> to vector<2x4x1xf32>
    %942 = vector.extract_strided_slice %709 {offsets = [0, 0, 0], sizes = [2, 4, 255], strides = [1, 1, 1]} : vector<2x4x256xf32> to vector<2x4x255xf32>
    %943 = tpu.concatenate %941, %942 in 2 : vector<2x4x1xf32>, vector<2x4x255xf32> -> vector<2x4x256xf32>
    %944 = vector.broadcast %940 : vector<1x1x256xf32> to vector<2x4x256xf32>
    %945 = arith.mulf %943, %944 : vector<2x4x256xf32>
    %946 = vector.extract_strided_slice %945 {offsets = [0, 0, 0], sizes = [2, 1, 256], strides = [1, 1, 1]} : vector<2x4x256xf32> to vector<2x1x256xf32>
    %c48_99 = arith.constant 48 : index
    %947 = memref.load %arg5[%c48_99] : memref<144xf32, #tpu.memory_space<smem>>
    %948 = vector.broadcast %947 : f32 to vector<2x1x256xf32>
    %949 = arith.mulf %948, %946 : vector<2x1x256xf32>
    %950 = arith.addf %926, %949 : vector<2x1x256xf32>
    %c49_100 = arith.constant 49 : index
    %951 = memref.load %arg5[%c49_100] : memref<144xf32, #tpu.memory_space<smem>>
    %952 = vector.broadcast %951 : f32 to vector<2x1x256xf32>
    %953 = arith.mulf %952, %946 : vector<2x1x256xf32>
    %954 = arith.addf %930, %953 : vector<2x1x256xf32>
    %c50_101 = arith.constant 50 : index
    %955 = memref.load %arg5[%c50_101] : memref<144xf32, #tpu.memory_space<smem>>
    %956 = vector.broadcast %955 : f32 to vector<2x1x256xf32>
    %957 = arith.mulf %956, %946 : vector<2x1x256xf32>
    %958 = arith.addf %934, %957 : vector<2x1x256xf32>
    %c51_102 = arith.constant 51 : index
    %959 = memref.load %arg5[%c51_102] : memref<144xf32, #tpu.memory_space<smem>>
    %960 = vector.broadcast %959 : f32 to vector<2x1x256xf32>
    %961 = arith.mulf %960, %946 : vector<2x1x256xf32>
    %962 = arith.addf %938, %961 : vector<2x1x256xf32>
    %963 = vector.extract_strided_slice %945 {offsets = [0, 1, 0], sizes = [2, 1, 256], strides = [1, 1, 1]} : vector<2x4x256xf32> to vector<2x1x256xf32>
    %c52_103 = arith.constant 52 : index
    %964 = memref.load %arg5[%c52_103] : memref<144xf32, #tpu.memory_space<smem>>
    %965 = vector.broadcast %964 : f32 to vector<2x1x256xf32>
    %966 = arith.mulf %965, %963 : vector<2x1x256xf32>
    %967 = arith.addf %950, %966 : vector<2x1x256xf32>
    %c53_104 = arith.constant 53 : index
    %968 = memref.load %arg5[%c53_104] : memref<144xf32, #tpu.memory_space<smem>>
    %969 = vector.broadcast %968 : f32 to vector<2x1x256xf32>
    %970 = arith.mulf %969, %963 : vector<2x1x256xf32>
    %971 = arith.addf %954, %970 : vector<2x1x256xf32>
    %c54_105 = arith.constant 54 : index
    %972 = memref.load %arg5[%c54_105] : memref<144xf32, #tpu.memory_space<smem>>
    %973 = vector.broadcast %972 : f32 to vector<2x1x256xf32>
    %974 = arith.mulf %973, %963 : vector<2x1x256xf32>
    %975 = arith.addf %958, %974 : vector<2x1x256xf32>
    %c55_106 = arith.constant 55 : index
    %976 = memref.load %arg5[%c55_106] : memref<144xf32, #tpu.memory_space<smem>>
    %977 = vector.broadcast %976 : f32 to vector<2x1x256xf32>
    %978 = arith.mulf %977, %963 : vector<2x1x256xf32>
    %979 = arith.addf %962, %978 : vector<2x1x256xf32>
    %980 = vector.extract_strided_slice %945 {offsets = [0, 2, 0], sizes = [2, 1, 256], strides = [1, 1, 1]} : vector<2x4x256xf32> to vector<2x1x256xf32>
    %c56_107 = arith.constant 56 : index
    %981 = memref.load %arg5[%c56_107] : memref<144xf32, #tpu.memory_space<smem>>
    %982 = vector.broadcast %981 : f32 to vector<2x1x256xf32>
    %983 = arith.mulf %982, %980 : vector<2x1x256xf32>
    %984 = arith.addf %967, %983 : vector<2x1x256xf32>
    %c57_108 = arith.constant 57 : index
    %985 = memref.load %arg5[%c57_108] : memref<144xf32, #tpu.memory_space<smem>>
    %986 = vector.broadcast %985 : f32 to vector<2x1x256xf32>
    %987 = arith.mulf %986, %980 : vector<2x1x256xf32>
    %988 = arith.addf %971, %987 : vector<2x1x256xf32>
    %c58_109 = arith.constant 58 : index
    %989 = memref.load %arg5[%c58_109] : memref<144xf32, #tpu.memory_space<smem>>
    %990 = vector.broadcast %989 : f32 to vector<2x1x256xf32>
    %991 = arith.mulf %990, %980 : vector<2x1x256xf32>
    %992 = arith.addf %975, %991 : vector<2x1x256xf32>
    %c59_110 = arith.constant 59 : index
    %993 = memref.load %arg5[%c59_110] : memref<144xf32, #tpu.memory_space<smem>>
    %994 = vector.broadcast %993 : f32 to vector<2x1x256xf32>
    %995 = arith.mulf %994, %980 : vector<2x1x256xf32>
    %996 = arith.addf %979, %995 : vector<2x1x256xf32>
    %997 = vector.extract_strided_slice %945 {offsets = [0, 3, 0], sizes = [2, 1, 256], strides = [1, 1, 1]} : vector<2x4x256xf32> to vector<2x1x256xf32>
    %c60_111 = arith.constant 60 : index
    %998 = memref.load %arg5[%c60_111] : memref<144xf32, #tpu.memory_space<smem>>
    %999 = vector.broadcast %998 : f32 to vector<2x1x256xf32>
    %1000 = arith.mulf %999, %997 : vector<2x1x256xf32>
    %1001 = arith.addf %984, %1000 : vector<2x1x256xf32>
    %c61_112 = arith.constant 61 : index
    %1002 = memref.load %arg5[%c61_112] : memref<144xf32, #tpu.memory_space<smem>>
    %1003 = vector.broadcast %1002 : f32 to vector<2x1x256xf32>
    %1004 = arith.mulf %1003, %997 : vector<2x1x256xf32>
    %1005 = arith.addf %988, %1004 : vector<2x1x256xf32>
    %c62_113 = arith.constant 62 : index
    %1006 = memref.load %arg5[%c62_113] : memref<144xf32, #tpu.memory_space<smem>>
    %1007 = vector.broadcast %1006 : f32 to vector<2x1x256xf32>
    %1008 = arith.mulf %1007, %997 : vector<2x1x256xf32>
    %1009 = arith.addf %992, %1008 : vector<2x1x256xf32>
    %c63_114 = arith.constant 63 : index
    %1010 = memref.load %arg5[%c63_114] : memref<144xf32, #tpu.memory_space<smem>>
    %1011 = vector.broadcast %1010 : f32 to vector<2x1x256xf32>
    %1012 = arith.mulf %1011, %997 : vector<2x1x256xf32>
    %1013 = arith.addf %996, %1012 : vector<2x1x256xf32>
    %c4_115 = arith.constant 4 : index
    %c0_116 = arith.constant 0 : index
    %1014 = vector.load %arg1[%c4_115, %c0_116] : memref<9x256xf32, #tpu.memory_space<vmem>>, vector<1x256xf32>
    %1015 = vector.shape_cast %1014 : vector<1x256xf32> to vector<1x1x256xf32>
    %1016 = vector.broadcast %1015 : vector<1x1x256xf32> to vector<2x4x256xf32>
    %1017 = arith.mulf %709, %1016 : vector<2x4x256xf32>
    %1018 = vector.extract_strided_slice %1017 {offsets = [0, 0, 0], sizes = [2, 1, 256], strides = [1, 1, 1]} : vector<2x4x256xf32> to vector<2x1x256xf32>
    %c64_117 = arith.constant 64 : index
    %1019 = memref.load %arg5[%c64_117] : memref<144xf32, #tpu.memory_space<smem>>
    %1020 = vector.broadcast %1019 : f32 to vector<2x1x256xf32>
    %1021 = arith.mulf %1020, %1018 : vector<2x1x256xf32>
    %1022 = arith.addf %1001, %1021 : vector<2x1x256xf32>
    %c65_118 = arith.constant 65 : index
    %1023 = memref.load %arg5[%c65_118] : memref<144xf32, #tpu.memory_space<smem>>
    %1024 = vector.broadcast %1023 : f32 to vector<2x1x256xf32>
    %1025 = arith.mulf %1024, %1018 : vector<2x1x256xf32>
    %1026 = arith.addf %1005, %1025 : vector<2x1x256xf32>
    %c66_119 = arith.constant 66 : index
    %1027 = memref.load %arg5[%c66_119] : memref<144xf32, #tpu.memory_space<smem>>
    %1028 = vector.broadcast %1027 : f32 to vector<2x1x256xf32>
    %1029 = arith.mulf %1028, %1018 : vector<2x1x256xf32>
    %1030 = arith.addf %1009, %1029 : vector<2x1x256xf32>
    %c67_120 = arith.constant 67 : index
    %1031 = memref.load %arg5[%c67_120] : memref<144xf32, #tpu.memory_space<smem>>
    %1032 = vector.broadcast %1031 : f32 to vector<2x1x256xf32>
    %1033 = arith.mulf %1032, %1018 : vector<2x1x256xf32>
    %1034 = arith.addf %1013, %1033 : vector<2x1x256xf32>
    %1035 = vector.extract_strided_slice %1017 {offsets = [0, 1, 0], sizes = [2, 1, 256], strides = [1, 1, 1]} : vector<2x4x256xf32> to vector<2x1x256xf32>
    %c68_121 = arith.constant 68 : index
    %1036 = memref.load %arg5[%c68_121] : memref<144xf32, #tpu.memory_space<smem>>
    %1037 = vector.broadcast %1036 : f32 to vector<2x1x256xf32>
    %1038 = arith.mulf %1037, %1035 : vector<2x1x256xf32>
    %1039 = arith.addf %1022, %1038 : vector<2x1x256xf32>
    %c69_122 = arith.constant 69 : index
    %1040 = memref.load %arg5[%c69_122] : memref<144xf32, #tpu.memory_space<smem>>
    %1041 = vector.broadcast %1040 : f32 to vector<2x1x256xf32>
    %1042 = arith.mulf %1041, %1035 : vector<2x1x256xf32>
    %1043 = arith.addf %1026, %1042 : vector<2x1x256xf32>
    %c70_123 = arith.constant 70 : index
    %1044 = memref.load %arg5[%c70_123] : memref<144xf32, #tpu.memory_space<smem>>
    %1045 = vector.broadcast %1044 : f32 to vector<2x1x256xf32>
    %1046 = arith.mulf %1045, %1035 : vector<2x1x256xf32>
    %1047 = arith.addf %1030, %1046 : vector<2x1x256xf32>
    %c71_124 = arith.constant 71 : index
    %1048 = memref.load %arg5[%c71_124] : memref<144xf32, #tpu.memory_space<smem>>
    %1049 = vector.broadcast %1048 : f32 to vector<2x1x256xf32>
    %1050 = arith.mulf %1049, %1035 : vector<2x1x256xf32>
    %1051 = arith.addf %1034, %1050 : vector<2x1x256xf32>
    %1052 = vector.extract_strided_slice %1017 {offsets = [0, 2, 0], sizes = [2, 1, 256], strides = [1, 1, 1]} : vector<2x4x256xf32> to vector<2x1x256xf32>
    %c72_125 = arith.constant 72 : index
    %1053 = memref.load %arg5[%c72_125] : memref<144xf32, #tpu.memory_space<smem>>
    %1054 = vector.broadcast %1053 : f32 to vector<2x1x256xf32>
    %1055 = arith.mulf %1054, %1052 : vector<2x1x256xf32>
    %1056 = arith.addf %1039, %1055 : vector<2x1x256xf32>
    %c73_126 = arith.constant 73 : index
    %1057 = memref.load %arg5[%c73_126] : memref<144xf32, #tpu.memory_space<smem>>
    %1058 = vector.broadcast %1057 : f32 to vector<2x1x256xf32>
    %1059 = arith.mulf %1058, %1052 : vector<2x1x256xf32>
    %1060 = arith.addf %1043, %1059 : vector<2x1x256xf32>
    %c74_127 = arith.constant 74 : index
    %1061 = memref.load %arg5[%c74_127] : memref<144xf32, #tpu.memory_space<smem>>
    %1062 = vector.broadcast %1061 : f32 to vector<2x1x256xf32>
    %1063 = arith.mulf %1062, %1052 : vector<2x1x256xf32>
    %1064 = arith.addf %1047, %1063 : vector<2x1x256xf32>
    %c75_128 = arith.constant 75 : index
    %1065 = memref.load %arg5[%c75_128] : memref<144xf32, #tpu.memory_space<smem>>
    %1066 = vector.broadcast %1065 : f32 to vector<2x1x256xf32>
    %1067 = arith.mulf %1066, %1052 : vector<2x1x256xf32>
    %1068 = arith.addf %1051, %1067 : vector<2x1x256xf32>
    %1069 = vector.extract_strided_slice %1017 {offsets = [0, 3, 0], sizes = [2, 1, 256], strides = [1, 1, 1]} : vector<2x4x256xf32> to vector<2x1x256xf32>
    %c76_129 = arith.constant 76 : index
    %1070 = memref.load %arg5[%c76_129] : memref<144xf32, #tpu.memory_space<smem>>
    %1071 = vector.broadcast %1070 : f32 to vector<2x1x256xf32>
    %1072 = arith.mulf %1071, %1069 : vector<2x1x256xf32>
    %1073 = arith.addf %1056, %1072 : vector<2x1x256xf32>
    %c77_130 = arith.constant 77 : index
    %1074 = memref.load %arg5[%c77_130] : memref<144xf32, #tpu.memory_space<smem>>
    %1075 = vector.broadcast %1074 : f32 to vector<2x1x256xf32>
    %1076 = arith.mulf %1075, %1069 : vector<2x1x256xf32>
    %1077 = arith.addf %1060, %1076 : vector<2x1x256xf32>
    %c78_131 = arith.constant 78 : index
    %1078 = memref.load %arg5[%c78_131] : memref<144xf32, #tpu.memory_space<smem>>
    %1079 = vector.broadcast %1078 : f32 to vector<2x1x256xf32>
    %1080 = arith.mulf %1079, %1069 : vector<2x1x256xf32>
    %1081 = arith.addf %1064, %1080 : vector<2x1x256xf32>
    %c79_132 = arith.constant 79 : index
    %1082 = memref.load %arg5[%c79_132] : memref<144xf32, #tpu.memory_space<smem>>
    %1083 = vector.broadcast %1082 : f32 to vector<2x1x256xf32>
    %1084 = arith.mulf %1083, %1069 : vector<2x1x256xf32>
    %1085 = arith.addf %1068, %1084 : vector<2x1x256xf32>
    %c5_133 = arith.constant 5 : index
    %c0_134 = arith.constant 0 : index
    %1086 = vector.load %arg1[%c5_133, %c0_134] : memref<9x256xf32, #tpu.memory_space<vmem>>, vector<1x256xf32>
    %1087 = vector.shape_cast %1086 : vector<1x256xf32> to vector<1x1x256xf32>
    %1088 = vector.extract_strided_slice %709 {offsets = [0, 0, 1], sizes = [2, 4, 255], strides = [1, 1, 1]} : vector<2x4x256xf32> to vector<2x4x255xf32>
    %1089 = vector.extract_strided_slice %709 {offsets = [0, 0, 0], sizes = [2, 4, 1], strides = [1, 1, 1]} : vector<2x4x256xf32> to vector<2x4x1xf32>
    %1090 = tpu.concatenate %1088, %1089 in 2 : vector<2x4x255xf32>, vector<2x4x1xf32> -> vector<2x4x256xf32>
    %1091 = vector.broadcast %1087 : vector<1x1x256xf32> to vector<2x4x256xf32>
    %1092 = arith.mulf %1090, %1091 : vector<2x4x256xf32>
    %1093 = vector.extract_strided_slice %1092 {offsets = [0, 0, 0], sizes = [2, 1, 256], strides = [1, 1, 1]} : vector<2x4x256xf32> to vector<2x1x256xf32>
    %c80_135 = arith.constant 80 : index
    %1094 = memref.load %arg5[%c80_135] : memref<144xf32, #tpu.memory_space<smem>>
    %1095 = vector.broadcast %1094 : f32 to vector<2x1x256xf32>
    %1096 = arith.mulf %1095, %1093 : vector<2x1x256xf32>
    %1097 = arith.addf %1073, %1096 : vector<2x1x256xf32>
    %c81_136 = arith.constant 81 : index
    %1098 = memref.load %arg5[%c81_136] : memref<144xf32, #tpu.memory_space<smem>>
    %1099 = vector.broadcast %1098 : f32 to vector<2x1x256xf32>
    %1100 = arith.mulf %1099, %1093 : vector<2x1x256xf32>
    %1101 = arith.addf %1077, %1100 : vector<2x1x256xf32>
    %c82_137 = arith.constant 82 : index
    %1102 = memref.load %arg5[%c82_137] : memref<144xf32, #tpu.memory_space<smem>>
    %1103 = vector.broadcast %1102 : f32 to vector<2x1x256xf32>
    %1104 = arith.mulf %1103, %1093 : vector<2x1x256xf32>
    %1105 = arith.addf %1081, %1104 : vector<2x1x256xf32>
    %c83_138 = arith.constant 83 : index
    %1106 = memref.load %arg5[%c83_138] : memref<144xf32, #tpu.memory_space<smem>>
    %1107 = vector.broadcast %1106 : f32 to vector<2x1x256xf32>
    %1108 = arith.mulf %1107, %1093 : vector<2x1x256xf32>
    %1109 = arith.addf %1085, %1108 : vector<2x1x256xf32>
    %1110 = vector.extract_strided_slice %1092 {offsets = [0, 1, 0], sizes = [2, 1, 256], strides = [1, 1, 1]} : vector<2x4x256xf32> to vector<2x1x256xf32>
    %c84_139 = arith.constant 84 : index
    %1111 = memref.load %arg5[%c84_139] : memref<144xf32, #tpu.memory_space<smem>>
    %1112 = vector.broadcast %1111 : f32 to vector<2x1x256xf32>
    %1113 = arith.mulf %1112, %1110 : vector<2x1x256xf32>
    %1114 = arith.addf %1097, %1113 : vector<2x1x256xf32>
    %c85_140 = arith.constant 85 : index
    %1115 = memref.load %arg5[%c85_140] : memref<144xf32, #tpu.memory_space<smem>>
    %1116 = vector.broadcast %1115 : f32 to vector<2x1x256xf32>
    %1117 = arith.mulf %1116, %1110 : vector<2x1x256xf32>
    %1118 = arith.addf %1101, %1117 : vector<2x1x256xf32>
    %c86_141 = arith.constant 86 : index
    %1119 = memref.load %arg5[%c86_141] : memref<144xf32, #tpu.memory_space<smem>>
    %1120 = vector.broadcast %1119 : f32 to vector<2x1x256xf32>
    %1121 = arith.mulf %1120, %1110 : vector<2x1x256xf32>
    %1122 = arith.addf %1105, %1121 : vector<2x1x256xf32>
    %c87_142 = arith.constant 87 : index
    %1123 = memref.load %arg5[%c87_142] : memref<144xf32, #tpu.memory_space<smem>>
    %1124 = vector.broadcast %1123 : f32 to vector<2x1x256xf32>
    %1125 = arith.mulf %1124, %1110 : vector<2x1x256xf32>
    %1126 = arith.addf %1109, %1125 : vector<2x1x256xf32>
    %1127 = vector.extract_strided_slice %1092 {offsets = [0, 2, 0], sizes = [2, 1, 256], strides = [1, 1, 1]} : vector<2x4x256xf32> to vector<2x1x256xf32>
    %c88_143 = arith.constant 88 : index
    %1128 = memref.load %arg5[%c88_143] : memref<144xf32, #tpu.memory_space<smem>>
    %1129 = vector.broadcast %1128 : f32 to vector<2x1x256xf32>
    %1130 = arith.mulf %1129, %1127 : vector<2x1x256xf32>
    %1131 = arith.addf %1114, %1130 : vector<2x1x256xf32>
    %c89_144 = arith.constant 89 : index
    %1132 = memref.load %arg5[%c89_144] : memref<144xf32, #tpu.memory_space<smem>>
    %1133 = vector.broadcast %1132 : f32 to vector<2x1x256xf32>
    %1134 = arith.mulf %1133, %1127 : vector<2x1x256xf32>
    %1135 = arith.addf %1118, %1134 : vector<2x1x256xf32>
    %c90_145 = arith.constant 90 : index
    %1136 = memref.load %arg5[%c90_145] : memref<144xf32, #tpu.memory_space<smem>>
    %1137 = vector.broadcast %1136 : f32 to vector<2x1x256xf32>
    %1138 = arith.mulf %1137, %1127 : vector<2x1x256xf32>
    %1139 = arith.addf %1122, %1138 : vector<2x1x256xf32>
    %c91_146 = arith.constant 91 : index
    %1140 = memref.load %arg5[%c91_146] : memref<144xf32, #tpu.memory_space<smem>>
    %1141 = vector.broadcast %1140 : f32 to vector<2x1x256xf32>
    %1142 = arith.mulf %1141, %1127 : vector<2x1x256xf32>
    %1143 = arith.addf %1126, %1142 : vector<2x1x256xf32>
    %1144 = vector.extract_strided_slice %1092 {offsets = [0, 3, 0], sizes = [2, 1, 256], strides = [1, 1, 1]} : vector<2x4x256xf32> to vector<2x1x256xf32>
    %c92_147 = arith.constant 92 : index
    %1145 = memref.load %arg5[%c92_147] : memref<144xf32, #tpu.memory_space<smem>>
    %1146 = vector.broadcast %1145 : f32 to vector<2x1x256xf32>
    %1147 = arith.mulf %1146, %1144 : vector<2x1x256xf32>
    %1148 = arith.addf %1131, %1147 : vector<2x1x256xf32>
    %c93_148 = arith.constant 93 : index
    %1149 = memref.load %arg5[%c93_148] : memref<144xf32, #tpu.memory_space<smem>>
    %1150 = vector.broadcast %1149 : f32 to vector<2x1x256xf32>
    %1151 = arith.mulf %1150, %1144 : vector<2x1x256xf32>
    %1152 = arith.addf %1135, %1151 : vector<2x1x256xf32>
    %c94_149 = arith.constant 94 : index
    %1153 = memref.load %arg5[%c94_149] : memref<144xf32, #tpu.memory_space<smem>>
    %1154 = vector.broadcast %1153 : f32 to vector<2x1x256xf32>
    %1155 = arith.mulf %1154, %1144 : vector<2x1x256xf32>
    %1156 = arith.addf %1139, %1155 : vector<2x1x256xf32>
    %c95_150 = arith.constant 95 : index
    %1157 = memref.load %arg5[%c95_150] : memref<144xf32, #tpu.memory_space<smem>>
    %1158 = vector.broadcast %1157 : f32 to vector<2x1x256xf32>
    %1159 = arith.mulf %1158, %1144 : vector<2x1x256xf32>
    %1160 = arith.addf %1143, %1159 : vector<2x1x256xf32>
    %c6_151 = arith.constant 6 : index
    %c0_152 = arith.constant 0 : index
    %1161 = vector.load %arg1[%c6_151, %c0_152] : memref<9x256xf32, #tpu.memory_space<vmem>>, vector<1x256xf32>
    %1162 = vector.shape_cast %1161 : vector<1x256xf32> to vector<1x1x256xf32>
    %1163 = vector.extract_strided_slice %709 {offsets = [0, 0, 15], sizes = [2, 4, 241], strides = [1, 1, 1]} : vector<2x4x256xf32> to vector<2x4x241xf32>
    %1164 = vector.extract_strided_slice %709 {offsets = [0, 0, 0], sizes = [2, 4, 15], strides = [1, 1, 1]} : vector<2x4x256xf32> to vector<2x4x15xf32>
    %1165 = tpu.concatenate %1163, %1164 in 2 : vector<2x4x241xf32>, vector<2x4x15xf32> -> vector<2x4x256xf32>
    %1166 = vector.broadcast %1162 : vector<1x1x256xf32> to vector<2x4x256xf32>
    %1167 = arith.mulf %1165, %1166 : vector<2x4x256xf32>
    %1168 = vector.extract_strided_slice %1167 {offsets = [0, 0, 0], sizes = [2, 1, 256], strides = [1, 1, 1]} : vector<2x4x256xf32> to vector<2x1x256xf32>
    %c96_153 = arith.constant 96 : index
    %1169 = memref.load %arg5[%c96_153] : memref<144xf32, #tpu.memory_space<smem>>
    %1170 = vector.broadcast %1169 : f32 to vector<2x1x256xf32>
    %1171 = arith.mulf %1170, %1168 : vector<2x1x256xf32>
    %1172 = arith.addf %1148, %1171 : vector<2x1x256xf32>
    %c97_154 = arith.constant 97 : index
    %1173 = memref.load %arg5[%c97_154] : memref<144xf32, #tpu.memory_space<smem>>
    %1174 = vector.broadcast %1173 : f32 to vector<2x1x256xf32>
    %1175 = arith.mulf %1174, %1168 : vector<2x1x256xf32>
    %1176 = arith.addf %1152, %1175 : vector<2x1x256xf32>
    %c98_155 = arith.constant 98 : index
    %1177 = memref.load %arg5[%c98_155] : memref<144xf32, #tpu.memory_space<smem>>
    %1178 = vector.broadcast %1177 : f32 to vector<2x1x256xf32>
    %1179 = arith.mulf %1178, %1168 : vector<2x1x256xf32>
    %1180 = arith.addf %1156, %1179 : vector<2x1x256xf32>
    %c99_156 = arith.constant 99 : index
    %1181 = memref.load %arg5[%c99_156] : memref<144xf32, #tpu.memory_space<smem>>
    %1182 = vector.broadcast %1181 : f32 to vector<2x1x256xf32>
    %1183 = arith.mulf %1182, %1168 : vector<2x1x256xf32>
    %1184 = arith.addf %1160, %1183 : vector<2x1x256xf32>
    %1185 = vector.extract_strided_slice %1167 {offsets = [0, 1, 0], sizes = [2, 1, 256], strides = [1, 1, 1]} : vector<2x4x256xf32> to vector<2x1x256xf32>
    %c100_157 = arith.constant 100 : index
    %1186 = memref.load %arg5[%c100_157] : memref<144xf32, #tpu.memory_space<smem>>
    %1187 = vector.broadcast %1186 : f32 to vector<2x1x256xf32>
    %1188 = arith.mulf %1187, %1185 : vector<2x1x256xf32>
    %1189 = arith.addf %1172, %1188 : vector<2x1x256xf32>
    %c101_158 = arith.constant 101 : index
    %1190 = memref.load %arg5[%c101_158] : memref<144xf32, #tpu.memory_space<smem>>
    %1191 = vector.broadcast %1190 : f32 to vector<2x1x256xf32>
    %1192 = arith.mulf %1191, %1185 : vector<2x1x256xf32>
    %1193 = arith.addf %1176, %1192 : vector<2x1x256xf32>
    %c102_159 = arith.constant 102 : index
    %1194 = memref.load %arg5[%c102_159] : memref<144xf32, #tpu.memory_space<smem>>
    %1195 = vector.broadcast %1194 : f32 to vector<2x1x256xf32>
    %1196 = arith.mulf %1195, %1185 : vector<2x1x256xf32>
    %1197 = arith.addf %1180, %1196 : vector<2x1x256xf32>
    %c103_160 = arith.constant 103 : index
    %1198 = memref.load %arg5[%c103_160] : memref<144xf32, #tpu.memory_space<smem>>
    %1199 = vector.broadcast %1198 : f32 to vector<2x1x256xf32>
    %1200 = arith.mulf %1199, %1185 : vector<2x1x256xf32>
    %1201 = arith.addf %1184, %1200 : vector<2x1x256xf32>
    %1202 = vector.extract_strided_slice %1167 {offsets = [0, 2, 0], sizes = [2, 1, 256], strides = [1, 1, 1]} : vector<2x4x256xf32> to vector<2x1x256xf32>
    %c104_161 = arith.constant 104 : index
    %1203 = memref.load %arg5[%c104_161] : memref<144xf32, #tpu.memory_space<smem>>
    %1204 = vector.broadcast %1203 : f32 to vector<2x1x256xf32>
    %1205 = arith.mulf %1204, %1202 : vector<2x1x256xf32>
    %1206 = arith.addf %1189, %1205 : vector<2x1x256xf32>
    %c105_162 = arith.constant 105 : index
    %1207 = memref.load %arg5[%c105_162] : memref<144xf32, #tpu.memory_space<smem>>
    %1208 = vector.broadcast %1207 : f32 to vector<2x1x256xf32>
    %1209 = arith.mulf %1208, %1202 : vector<2x1x256xf32>
    %1210 = arith.addf %1193, %1209 : vector<2x1x256xf32>
    %c106_163 = arith.constant 106 : index
    %1211 = memref.load %arg5[%c106_163] : memref<144xf32, #tpu.memory_space<smem>>
    %1212 = vector.broadcast %1211 : f32 to vector<2x1x256xf32>
    %1213 = arith.mulf %1212, %1202 : vector<2x1x256xf32>
    %1214 = arith.addf %1197, %1213 : vector<2x1x256xf32>
    %c107_164 = arith.constant 107 : index
    %1215 = memref.load %arg5[%c107_164] : memref<144xf32, #tpu.memory_space<smem>>
    %1216 = vector.broadcast %1215 : f32 to vector<2x1x256xf32>
    %1217 = arith.mulf %1216, %1202 : vector<2x1x256xf32>
    %1218 = arith.addf %1201, %1217 : vector<2x1x256xf32>
    %1219 = vector.extract_strided_slice %1167 {offsets = [0, 3, 0], sizes = [2, 1, 256], strides = [1, 1, 1]} : vector<2x4x256xf32> to vector<2x1x256xf32>
    %c108_165 = arith.constant 108 : index
    %1220 = memref.load %arg5[%c108_165] : memref<144xf32, #tpu.memory_space<smem>>
    %1221 = vector.broadcast %1220 : f32 to vector<2x1x256xf32>
    %1222 = arith.mulf %1221, %1219 : vector<2x1x256xf32>
    %1223 = arith.addf %1206, %1222 : vector<2x1x256xf32>
    %c109_166 = arith.constant 109 : index
    %1224 = memref.load %arg5[%c109_166] : memref<144xf32, #tpu.memory_space<smem>>
    %1225 = vector.broadcast %1224 : f32 to vector<2x1x256xf32>
    %1226 = arith.mulf %1225, %1219 : vector<2x1x256xf32>
    %1227 = arith.addf %1210, %1226 : vector<2x1x256xf32>
    %c110_167 = arith.constant 110 : index
    %1228 = memref.load %arg5[%c110_167] : memref<144xf32, #tpu.memory_space<smem>>
    %1229 = vector.broadcast %1228 : f32 to vector<2x1x256xf32>
    %1230 = arith.mulf %1229, %1219 : vector<2x1x256xf32>
    %1231 = arith.addf %1214, %1230 : vector<2x1x256xf32>
    %c111_168 = arith.constant 111 : index
    %1232 = memref.load %arg5[%c111_168] : memref<144xf32, #tpu.memory_space<smem>>
    %1233 = vector.broadcast %1232 : f32 to vector<2x1x256xf32>
    %1234 = arith.mulf %1233, %1219 : vector<2x1x256xf32>
    %1235 = arith.addf %1218, %1234 : vector<2x1x256xf32>
    %c7_169 = arith.constant 7 : index
    %c0_170 = arith.constant 0 : index
    %1236 = vector.load %arg1[%c7_169, %c0_170] : memref<9x256xf32, #tpu.memory_space<vmem>>, vector<1x256xf32>
    %1237 = vector.shape_cast %1236 : vector<1x256xf32> to vector<1x1x256xf32>
    %1238 = vector.extract_strided_slice %709 {offsets = [0, 0, 16], sizes = [2, 4, 240], strides = [1, 1, 1]} : vector<2x4x256xf32> to vector<2x4x240xf32>
    %1239 = vector.extract_strided_slice %709 {offsets = [0, 0, 0], sizes = [2, 4, 16], strides = [1, 1, 1]} : vector<2x4x256xf32> to vector<2x4x16xf32>
    %1240 = tpu.concatenate %1238, %1239 in 2 : vector<2x4x240xf32>, vector<2x4x16xf32> -> vector<2x4x256xf32>
    %1241 = vector.broadcast %1237 : vector<1x1x256xf32> to vector<2x4x256xf32>
    %1242 = arith.mulf %1240, %1241 : vector<2x4x256xf32>
    %1243 = vector.extract_strided_slice %1242 {offsets = [0, 0, 0], sizes = [2, 1, 256], strides = [1, 1, 1]} : vector<2x4x256xf32> to vector<2x1x256xf32>
    %c112_171 = arith.constant 112 : index
    %1244 = memref.load %arg5[%c112_171] : memref<144xf32, #tpu.memory_space<smem>>
    %1245 = vector.broadcast %1244 : f32 to vector<2x1x256xf32>
    %1246 = arith.mulf %1245, %1243 : vector<2x1x256xf32>
    %1247 = arith.addf %1223, %1246 : vector<2x1x256xf32>
    %c113_172 = arith.constant 113 : index
    %1248 = memref.load %arg5[%c113_172] : memref<144xf32, #tpu.memory_space<smem>>
    %1249 = vector.broadcast %1248 : f32 to vector<2x1x256xf32>
    %1250 = arith.mulf %1249, %1243 : vector<2x1x256xf32>
    %1251 = arith.addf %1227, %1250 : vector<2x1x256xf32>
    %c114_173 = arith.constant 114 : index
    %1252 = memref.load %arg5[%c114_173] : memref<144xf32, #tpu.memory_space<smem>>
    %1253 = vector.broadcast %1252 : f32 to vector<2x1x256xf32>
    %1254 = arith.mulf %1253, %1243 : vector<2x1x256xf32>
    %1255 = arith.addf %1231, %1254 : vector<2x1x256xf32>
    %c115_174 = arith.constant 115 : index
    %1256 = memref.load %arg5[%c115_174] : memref<144xf32, #tpu.memory_space<smem>>
    %1257 = vector.broadcast %1256 : f32 to vector<2x1x256xf32>
    %1258 = arith.mulf %1257, %1243 : vector<2x1x256xf32>
    %1259 = arith.addf %1235, %1258 : vector<2x1x256xf32>
    %1260 = vector.extract_strided_slice %1242 {offsets = [0, 1, 0], sizes = [2, 1, 256], strides = [1, 1, 1]} : vector<2x4x256xf32> to vector<2x1x256xf32>
    %c116_175 = arith.constant 116 : index
    %1261 = memref.load %arg5[%c116_175] : memref<144xf32, #tpu.memory_space<smem>>
    %1262 = vector.broadcast %1261 : f32 to vector<2x1x256xf32>
    %1263 = arith.mulf %1262, %1260 : vector<2x1x256xf32>
    %1264 = arith.addf %1247, %1263 : vector<2x1x256xf32>
    %c117_176 = arith.constant 117 : index
    %1265 = memref.load %arg5[%c117_176] : memref<144xf32, #tpu.memory_space<smem>>
    %1266 = vector.broadcast %1265 : f32 to vector<2x1x256xf32>
    %1267 = arith.mulf %1266, %1260 : vector<2x1x256xf32>
    %1268 = arith.addf %1251, %1267 : vector<2x1x256xf32>
    %c118_177 = arith.constant 118 : index
    %1269 = memref.load %arg5[%c118_177] : memref<144xf32, #tpu.memory_space<smem>>
    %1270 = vector.broadcast %1269 : f32 to vector<2x1x256xf32>
    %1271 = arith.mulf %1270, %1260 : vector<2x1x256xf32>
    %1272 = arith.addf %1255, %1271 : vector<2x1x256xf32>
    %c119_178 = arith.constant 119 : index
    %1273 = memref.load %arg5[%c119_178] : memref<144xf32, #tpu.memory_space<smem>>
    %1274 = vector.broadcast %1273 : f32 to vector<2x1x256xf32>
    %1275 = arith.mulf %1274, %1260 : vector<2x1x256xf32>
    %1276 = arith.addf %1259, %1275 : vector<2x1x256xf32>
    %1277 = vector.extract_strided_slice %1242 {offsets = [0, 2, 0], sizes = [2, 1, 256], strides = [1, 1, 1]} : vector<2x4x256xf32> to vector<2x1x256xf32>
    %c120_179 = arith.constant 120 : index
    %1278 = memref.load %arg5[%c120_179] : memref<144xf32, #tpu.memory_space<smem>>
    %1279 = vector.broadcast %1278 : f32 to vector<2x1x256xf32>
    %1280 = arith.mulf %1279, %1277 : vector<2x1x256xf32>
    %1281 = arith.addf %1264, %1280 : vector<2x1x256xf32>
    %c121_180 = arith.constant 121 : index
    %1282 = memref.load %arg5[%c121_180] : memref<144xf32, #tpu.memory_space<smem>>
    %1283 = vector.broadcast %1282 : f32 to vector<2x1x256xf32>
    %1284 = arith.mulf %1283, %1277 : vector<2x1x256xf32>
    %1285 = arith.addf %1268, %1284 : vector<2x1x256xf32>
    %c122_181 = arith.constant 122 : index
    %1286 = memref.load %arg5[%c122_181] : memref<144xf32, #tpu.memory_space<smem>>
    %1287 = vector.broadcast %1286 : f32 to vector<2x1x256xf32>
    %1288 = arith.mulf %1287, %1277 : vector<2x1x256xf32>
    %1289 = arith.addf %1272, %1288 : vector<2x1x256xf32>
    %c123_182 = arith.constant 123 : index
    %1290 = memref.load %arg5[%c123_182] : memref<144xf32, #tpu.memory_space<smem>>
    %1291 = vector.broadcast %1290 : f32 to vector<2x1x256xf32>
    %1292 = arith.mulf %1291, %1277 : vector<2x1x256xf32>
    %1293 = arith.addf %1276, %1292 : vector<2x1x256xf32>
    %1294 = vector.extract_strided_slice %1242 {offsets = [0, 3, 0], sizes = [2, 1, 256], strides = [1, 1, 1]} : vector<2x4x256xf32> to vector<2x1x256xf32>
    %c124_183 = arith.constant 124 : index
    %1295 = memref.load %arg5[%c124_183] : memref<144xf32, #tpu.memory_space<smem>>
    %1296 = vector.broadcast %1295 : f32 to vector<2x1x256xf32>
    %1297 = arith.mulf %1296, %1294 : vector<2x1x256xf32>
    %1298 = arith.addf %1281, %1297 : vector<2x1x256xf32>
    %c125_184 = arith.constant 125 : index
    %1299 = memref.load %arg5[%c125_184] : memref<144xf32, #tpu.memory_space<smem>>
    %1300 = vector.broadcast %1299 : f32 to vector<2x1x256xf32>
    %1301 = arith.mulf %1300, %1294 : vector<2x1x256xf32>
    %1302 = arith.addf %1285, %1301 : vector<2x1x256xf32>
    %c126_185 = arith.constant 126 : index
    %1303 = memref.load %arg5[%c126_185] : memref<144xf32, #tpu.memory_space<smem>>
    %1304 = vector.broadcast %1303 : f32 to vector<2x1x256xf32>
    %1305 = arith.mulf %1304, %1294 : vector<2x1x256xf32>
    %1306 = arith.addf %1289, %1305 : vector<2x1x256xf32>
    %c127_186 = arith.constant 127 : index
    %1307 = memref.load %arg5[%c127_186] : memref<144xf32, #tpu.memory_space<smem>>
    %1308 = vector.broadcast %1307 : f32 to vector<2x1x256xf32>
    %1309 = arith.mulf %1308, %1294 : vector<2x1x256xf32>
    %1310 = arith.addf %1293, %1309 : vector<2x1x256xf32>
    %c8_187 = arith.constant 8 : index
    %c0_188 = arith.constant 0 : index
    %1311 = vector.load %arg1[%c8_187, %c0_188] : memref<9x256xf32, #tpu.memory_space<vmem>>, vector<1x256xf32>
    %1312 = vector.shape_cast %1311 : vector<1x256xf32> to vector<1x1x256xf32>
    %1313 = vector.extract_strided_slice %709 {offsets = [0, 0, 17], sizes = [2, 4, 239], strides = [1, 1, 1]} : vector<2x4x256xf32> to vector<2x4x239xf32>
    %1314 = vector.extract_strided_slice %709 {offsets = [0, 0, 0], sizes = [2, 4, 17], strides = [1, 1, 1]} : vector<2x4x256xf32> to vector<2x4x17xf32>
    %1315 = tpu.concatenate %1313, %1314 in 2 : vector<2x4x239xf32>, vector<2x4x17xf32> -> vector<2x4x256xf32>
    %1316 = vector.broadcast %1312 : vector<1x1x256xf32> to vector<2x4x256xf32>
    %1317 = arith.mulf %1315, %1316 : vector<2x4x256xf32>
    %1318 = vector.extract_strided_slice %1317 {offsets = [0, 0, 0], sizes = [2, 1, 256], strides = [1, 1, 1]} : vector<2x4x256xf32> to vector<2x1x256xf32>
    %c128_189 = arith.constant 128 : index
    %1319 = memref.load %arg5[%c128_189] : memref<144xf32, #tpu.memory_space<smem>>
    %1320 = vector.broadcast %1319 : f32 to vector<2x1x256xf32>
    %1321 = arith.mulf %1320, %1318 : vector<2x1x256xf32>
    %1322 = arith.addf %1298, %1321 : vector<2x1x256xf32>
    %c129_190 = arith.constant 129 : index
    %1323 = memref.load %arg5[%c129_190] : memref<144xf32, #tpu.memory_space<smem>>
    %1324 = vector.broadcast %1323 : f32 to vector<2x1x256xf32>
    %1325 = arith.mulf %1324, %1318 : vector<2x1x256xf32>
    %1326 = arith.addf %1302, %1325 : vector<2x1x256xf32>
    %c130_191 = arith.constant 130 : index
    %1327 = memref.load %arg5[%c130_191] : memref<144xf32, #tpu.memory_space<smem>>
    %1328 = vector.broadcast %1327 : f32 to vector<2x1x256xf32>
    %1329 = arith.mulf %1328, %1318 : vector<2x1x256xf32>
    %1330 = arith.addf %1306, %1329 : vector<2x1x256xf32>
    %c131_192 = arith.constant 131 : index
    %1331 = memref.load %arg5[%c131_192] : memref<144xf32, #tpu.memory_space<smem>>
    %1332 = vector.broadcast %1331 : f32 to vector<2x1x256xf32>
    %1333 = arith.mulf %1332, %1318 : vector<2x1x256xf32>
    %1334 = arith.addf %1310, %1333 : vector<2x1x256xf32>
    %1335 = vector.extract_strided_slice %1317 {offsets = [0, 1, 0], sizes = [2, 1, 256], strides = [1, 1, 1]} : vector<2x4x256xf32> to vector<2x1x256xf32>
    %c132_193 = arith.constant 132 : index
    %1336 = memref.load %arg5[%c132_193] : memref<144xf32, #tpu.memory_space<smem>>
    %1337 = vector.broadcast %1336 : f32 to vector<2x1x256xf32>
    %1338 = arith.mulf %1337, %1335 : vector<2x1x256xf32>
    %1339 = arith.addf %1322, %1338 : vector<2x1x256xf32>
    %c133_194 = arith.constant 133 : index
    %1340 = memref.load %arg5[%c133_194] : memref<144xf32, #tpu.memory_space<smem>>
    %1341 = vector.broadcast %1340 : f32 to vector<2x1x256xf32>
    %1342 = arith.mulf %1341, %1335 : vector<2x1x256xf32>
    %1343 = arith.addf %1326, %1342 : vector<2x1x256xf32>
    %c134_195 = arith.constant 134 : index
    %1344 = memref.load %arg5[%c134_195] : memref<144xf32, #tpu.memory_space<smem>>
    %1345 = vector.broadcast %1344 : f32 to vector<2x1x256xf32>
    %1346 = arith.mulf %1345, %1335 : vector<2x1x256xf32>
    %1347 = arith.addf %1330, %1346 : vector<2x1x256xf32>
    %c135_196 = arith.constant 135 : index
    %1348 = memref.load %arg5[%c135_196] : memref<144xf32, #tpu.memory_space<smem>>
    %1349 = vector.broadcast %1348 : f32 to vector<2x1x256xf32>
    %1350 = arith.mulf %1349, %1335 : vector<2x1x256xf32>
    %1351 = arith.addf %1334, %1350 : vector<2x1x256xf32>
    %1352 = vector.extract_strided_slice %1317 {offsets = [0, 2, 0], sizes = [2, 1, 256], strides = [1, 1, 1]} : vector<2x4x256xf32> to vector<2x1x256xf32>
    %c136_197 = arith.constant 136 : index
    %1353 = memref.load %arg5[%c136_197] : memref<144xf32, #tpu.memory_space<smem>>
    %1354 = vector.broadcast %1353 : f32 to vector<2x1x256xf32>
    %1355 = arith.mulf %1354, %1352 : vector<2x1x256xf32>
    %1356 = arith.addf %1339, %1355 : vector<2x1x256xf32>
    %c137_198 = arith.constant 137 : index
    %1357 = memref.load %arg5[%c137_198] : memref<144xf32, #tpu.memory_space<smem>>
    %1358 = vector.broadcast %1357 : f32 to vector<2x1x256xf32>
    %1359 = arith.mulf %1358, %1352 : vector<2x1x256xf32>
    %1360 = arith.addf %1343, %1359 : vector<2x1x256xf32>
    %c138_199 = arith.constant 138 : index
    %1361 = memref.load %arg5[%c138_199] : memref<144xf32, #tpu.memory_space<smem>>
    %1362 = vector.broadcast %1361 : f32 to vector<2x1x256xf32>
    %1363 = arith.mulf %1362, %1352 : vector<2x1x256xf32>
    %1364 = arith.addf %1347, %1363 : vector<2x1x256xf32>
    %c139_200 = arith.constant 139 : index
    %1365 = memref.load %arg5[%c139_200] : memref<144xf32, #tpu.memory_space<smem>>
    %1366 = vector.broadcast %1365 : f32 to vector<2x1x256xf32>
    %1367 = arith.mulf %1366, %1352 : vector<2x1x256xf32>
    %1368 = arith.addf %1351, %1367 : vector<2x1x256xf32>
    %1369 = vector.extract_strided_slice %1317 {offsets = [0, 3, 0], sizes = [2, 1, 256], strides = [1, 1, 1]} : vector<2x4x256xf32> to vector<2x1x256xf32>
    %c140_201 = arith.constant 140 : index
    %1370 = memref.load %arg5[%c140_201] : memref<144xf32, #tpu.memory_space<smem>>
    %1371 = vector.broadcast %1370 : f32 to vector<2x1x256xf32>
    %1372 = arith.mulf %1371, %1369 : vector<2x1x256xf32>
    %1373 = arith.addf %1356, %1372 : vector<2x1x256xf32>
    %c141_202 = arith.constant 141 : index
    %1374 = memref.load %arg5[%c141_202] : memref<144xf32, #tpu.memory_space<smem>>
    %1375 = vector.broadcast %1374 : f32 to vector<2x1x256xf32>
    %1376 = arith.mulf %1375, %1369 : vector<2x1x256xf32>
    %1377 = arith.addf %1360, %1376 : vector<2x1x256xf32>
    %c142_203 = arith.constant 142 : index
    %1378 = memref.load %arg5[%c142_203] : memref<144xf32, #tpu.memory_space<smem>>
    %1379 = vector.broadcast %1378 : f32 to vector<2x1x256xf32>
    %1380 = arith.mulf %1379, %1369 : vector<2x1x256xf32>
    %1381 = arith.addf %1364, %1380 : vector<2x1x256xf32>
    %c143_204 = arith.constant 143 : index
    %1382 = memref.load %arg5[%c143_204] : memref<144xf32, #tpu.memory_space<smem>>
    %1383 = vector.broadcast %1382 : f32 to vector<2x1x256xf32>
    %1384 = arith.mulf %1383, %1369 : vector<2x1x256xf32>
    %1385 = arith.addf %1368, %1384 : vector<2x1x256xf32>
    %1386 = tpu.concatenate %1373, %1377, %1381, %1385 in 1 : vector<2x1x256xf32>, vector<2x1x256xf32>, vector<2x1x256xf32>, vector<2x1x256xf32> -> vector<2x4x256xf32>
    %cst_205 = arith.constant dense<0.000000e+00> : vector<2x4xf32>
    %1387 = vector.multi_reduction <add>, %1386, %cst_205 [2] : vector<2x4x256xf32> to vector<2x4xf32>
    %1388 = vector.shape_cast %1387 : vector<2x4xf32> to vector<2x4x1xf32>
    %cst_206 = arith.constant dense<0.000000e+00> : vector<4x1xf32>
    %1389 = vector.multi_reduction <add>, %1388, %cst_206 [0] : vector<2x4x1xf32> to vector<4x1xf32>
    %1390 = vector.shape_cast %1389 : vector<4x1xf32> to vector<1x4x1xf32>
    %1391 = arith.mulf %1386, %1386 : vector<2x4x256xf32>
    %cst_207 = arith.constant dense<0.000000e+00> : vector<2x4xf32>
    %1392 = vector.multi_reduction <add>, %1391, %cst_207 [2] : vector<2x4x256xf32> to vector<2x4xf32>
    %1393 = vector.shape_cast %1392 : vector<2x4xf32> to vector<2x4x1xf32>
    %cst_208 = arith.constant dense<0.000000e+00> : vector<4x1xf32>
    %1394 = vector.multi_reduction <add>, %1393, %cst_208 [0] : vector<2x4x1xf32> to vector<4x1xf32>
    %1395 = vector.shape_cast %1394 : vector<4x1xf32> to vector<1x4x1xf32>
    %cst_209 = arith.constant 0.001953125 : f32
    %1396 = vector.broadcast %cst_209 : f32 to vector<1x4x1xf32>
    %1397 = arith.mulf %1390, %1396 : vector<1x4x1xf32>
    %cst_210 = arith.constant 0.001953125 : f32
    %1398 = vector.broadcast %cst_210 : f32 to vector<1x4x1xf32>
    %1399 = arith.mulf %1395, %1398 : vector<1x4x1xf32>
    %1400 = arith.mulf %1397, %1397 : vector<1x4x1xf32>
    %1401 = arith.subf %1399, %1400 : vector<1x4x1xf32>
    %c0_211 = arith.constant 0 : index
    %c0_212 = arith.constant 0 : index
    %c0_213 = arith.constant 0 : index
    %1402 = vector.load %arg6[%c0_211, %c0_212, %c0_213] : memref<1x4x1xf32, #tpu.memory_space<vmem>>, vector<1x4x1xf32>
    %cst_214 = arith.constant 9.99999974E-6 : f32
    %1403 = vector.broadcast %cst_214 : f32 to vector<1x4x1xf32>
    %1404 = arith.addf %1401, %1403 : vector<1x4x1xf32>
    %1405 = math.rsqrt %1404 : vector<1x4x1xf32>
    %1406 = arith.mulf %1402, %1405 : vector<1x4x1xf32>
    %c0_215 = arith.constant 0 : index
    %c0_216 = arith.constant 0 : index
    %c0_217 = arith.constant 0 : index
    %1407 = vector.load %arg7[%c0_215, %c0_216, %c0_217] : memref<1x4x1xf32, #tpu.memory_space<vmem>>, vector<1x4x1xf32>
    %1408 = arith.mulf %1397, %1406 : vector<1x4x1xf32>
    %1409 = arith.subf %1407, %1408 : vector<1x4x1xf32>
    %1410 = vector.broadcast %1406 : vector<1x4x1xf32> to vector<2x4x256xf32>
    %1411 = arith.mulf %1386, %1410 : vector<2x4x256xf32>
    %1412 = vector.broadcast %1409 : vector<1x4x1xf32> to vector<2x4x256xf32>
    %1413 = arith.addf %1411, %1412 : vector<2x4x256xf32>
    %1414 = arith.addf %1413, %0 : vector<2x4x256xf32>
    %c0_218 = arith.constant 0 : index
    %c0_219 = arith.constant 0 : index
    %c0_220 = arith.constant 0 : index
    %1415 = vector.load %arg8[%c0_218, %c0_219, %c0_220] : memref<2x4x256xf32, #tpu.memory_space<vmem>>, vector<2x4x256xf32>
    tpu.vector_store %arg8[%c0_218, %c0_219, %c0_220], %1414 {strides = array<i32>} : memref<2x4x256xf32, #tpu.memory_space<vmem>>, vector<2x4x256xf32>,
    return
  }
}

</mosaic_0001>

<llo_original>
// kernel: residual_block.1
$region0: #{residual_block.1}
  #allocation0 [shape = 'u32[]', space=smem, size = 0x4, offset = 0x4, fixed_abs, tag = 'smem constant byte address 0x4 - core index']
  #allocation1 [shape = 'u32[144,128]{1,0:T(1,128)}', space=vmem, size = 0x12000, scoped, tag = 'internal scratch']
  %s0 = inlined_call_operand.vmem [shape: f32[2,4,256], index: 0, kind: input, shape index: {}]
  %s1 = inlined_call_operand.vmem [shape: f32[9,256], index: 1, kind: input, shape index: {}]
  %s2 = inlined_call_operand.vmem [shape: f32[144], index: 2, kind: input, shape index: {}]
  %s3 = inlined_call_operand.vmem [shape: f32[1,4,1], index: 3, kind: input, shape index: {}]
  %s4 = inlined_call_operand.vmem [shape: f32[1,4,1], index: 4, kind: input, shape index: {}]
  %s5 = inlined_call_operand.vmem [shape: f32[144], index: 5, kind: input, shape index: {}]
  %s6 = inlined_call_operand.vmem [shape: f32[1,4,1], index: 6, kind: input, shape index: {}]
  %s7 = inlined_call_operand.vmem [shape: f32[1,4,1], index: 7, kind: input, shape index: {}]
  %s8 = inlined_call_operand.vmem [shape: f32[2,4,256], index: 8, kind: output, shape index: {}]
  %s9 = sld [smem:[#allocation0]]
  $region50: #{residual_block.1} parent=0
    _
  %s11 = ssub.s32 1, %s9
  %s12 = scalar_select 0, %s11, %s9
  $region1: #{residual_block.1} parent=0
    #allocation2 [shape = 'u8[1024]{0}', space=smem, size = 0x400, scoped, tag = 'input window, operand 2, single buffered']
    #allocation3 [shape = 's32[1]{0}', space=sflag, size = 0x4, scoped, tag = 'scoped memory for residual_block.1']
    #allocation4 [shape = 'u8[1024]{0}', space=smem, size = 0x400, scoped, tag = 'input window, operand 5, single buffered']
    #allocation5 [shape = 's32[1]{0}', space=sflag, size = 0x4, scoped, tag = 'scoped memory for residual_block.1']
    %13 = vsyncpa [#allocation3], 0
    %14 = vsyncpa [#allocation5], 0
    // Predicated region
    $region2: #{residual_block.1} parent=1 // pred_check
      _
    $region3: #{residual_block.1} parent=1 // pred_check_branch
      %16 = sbr.rel (0) target = $region5
    $region4: #{residual_block.1} parent=1 // pred_region
      _
    $region5: #{residual_block.1} parent=1 // pred_fallthru
      _
    // Predicated region
    $region6: #{residual_block.1} parent=1 // pred_check
      _
    $region7: #{residual_block.1} parent=1 // pred_check_branch
      %18 = sbr.rel (0) target = $region9
    $region8: #{residual_block.1} parent=1 // pred_region
      _
    $region9: #{residual_block.1} parent=1 // pred_fallthru
      _
    // Predicated region
    $region10: #{residual_block.1} parent=1 // pred_check
      _
    $region11: #{residual_block.1} parent=1 // pred_check_branch
      %20 = sbr.rel (0) target = $region13
    $region12: #{residual_block.1} parent=1 // pred_region
      %s22 = ssub.s32 32, 32
      %23 = vsyncadd [#allocation3], %s22
      %s25 = sshll.u32 %s2, 4
      %s26 = int_to_ptr.vmem [resolvable:$true] %s25
      %28 = dma.vmem_to_smem %s26, 32, [#allocation2], [#allocation3]
    $region13: #{residual_block.1} parent=1 // pred_fallthru
      _
    // Predicated region
    $region14: #{residual_block.1} parent=1 // pred_check
      _
    $region15: #{residual_block.1} parent=1 // pred_check_branch
      %30 = sbr.rel (0) target = $region17
    $region16: #{residual_block.1} parent=1 // pred_region
      _
    $region17: #{residual_block.1} parent=1 // pred_fallthru
      _
    // Predicated region
    $region18: #{residual_block.1} parent=1 // pred_check
      _
    $region19: #{residual_block.1} parent=1 // pred_check_branch
      %32 = sbr.rel (0) target = $region21
    $region20: #{residual_block.1} parent=1 // pred_region
      _
    $region21: #{residual_block.1} parent=1 // pred_fallthru
      _
    // Predicated region
    $region22: #{residual_block.1} parent=1 // pred_check
      _
    $region23: #{residual_block.1} parent=1 // pred_check_branch
      %34 = sbr.rel (0) target = $region25
    $region24: #{residual_block.1} parent=1 // pred_region
      %s36 = ssub.s32 32, 32
      %37 = vsyncadd [#allocation5], %s36
      %s39 = sshll.u32 %s5, 4
      %s40 = int_to_ptr.vmem [resolvable:$true] %s39
      %42 = dma.vmem_to_smem %s40, 32, [#allocation4], [#allocation5]
    $region25: #{residual_block.1} parent=1 // pred_fallthru
      _
    // Predicated region
    $region26: #{residual_block.1} parent=1 // pred_check
      _
    $region27: #{residual_block.1} parent=1 // pred_check_branch
      %44 = sbr.rel (0) target = $region29
    $region28: #{residual_block.1} parent=1 // pred_region
      _
    $region29: #{residual_block.1} parent=1 // pred_fallthru
      _
    // Predicated region
    $region30: #{residual_block.1} parent=1 // pred_check
      _
    $region31: #{residual_block.1} parent=1 // pred_check_branch
      %46 = sbr.rel (0) target = $region33
    $region32: #{residual_block.1} parent=1 // pred_region
      _
    $region33: #{residual_block.1} parent=1 // pred_fallthru
      _
    // Predicated region
    $region34: #{residual_block.1} parent=1 // pred_check
      _
    $region35: #{residual_block.1} parent=1 // pred_check_branch
      %48 = sbr.rel (0) target = $region37
    $region36: #{residual_block.1} parent=1 // pred_region
      %49 = dma.done [#allocation3], 32
    $region37: #{residual_block.1} parent=1 // pred_fallthru
      _
    // Predicated region
    $region38: #{residual_block.1} parent=1 // pred_check
      _
    $region39: #{residual_block.1} parent=1 // pred_check_branch
      %51 = sbr.rel (0) target = $region41
    $region40: #{residual_block.1} parent=1 // pred_region
      %52 = dma.done [#allocation5], 32
    $region41: #{residual_block.1} parent=1 // pred_fallthru
      _
    %53 = sfence
    %v54 = vld [vmem:[%s0] sm:$0xff]
    %v55 = vld [vmem:[%s0 + $0x8] sm:$0xff]
    %v56 = vld [vmem:[%s1] ss:$8 sm:$0x3]
    %v59 = vcombine.high %v54, %v54
    %v60 = vcombine.high %v55, %v55
    %61 = vrot.lane.b32.xlu0 %v59, 17
    %v62 = vpop.permute.xlu0 %61
    %63 = vrot.lane.b32.xlu0 %v60, 17
    %v64 = vpop.permute.xlu0 %63
    %67 = vrot.lane.b32.xlu0 %v54, 17
    %v68 = vpop.permute.xlu0 %67
    %69 = vrot.lane.b32.xlu0 %v55, 17
    %v70 = vpop.permute.xlu0 %69
    %vm71 = vcmask 138240
    %v72 = vsel %vm71, %v68, %v62
    %v73 = vsel %vm71, %v70, %v64
    %v78 = vsel %vm71, %v62, %v68
    %v79 = vsel %vm71, %v64, %v70
    %v81 = vlaneseq
    %v82 = vshrl.u32 %v81, 7
    %v83 = vsub.s32 0, %v82
    %v84 = vrot.slane %v56, %v83
    %v85 = vlaneseq
    %v86 = vshrl.u32 %v85, 7
    %v87 = vsub.s32 1, %v86
    %v88 = vrot.slane %v56, %v87
    %v91 = vmul.f32 %v78, %v84
    %v92 = vmul.f32 %v72, %v88
    %v93 = vmul.f32 %v79, %v84
    %v94 = vmul.f32 %v73, %v88
    %s95 = sld [smem:[#allocation2]]
    %v96 = vstv %s95
    %v97 = vmul.f32 %v96, %v91
    %v98 = vmul.f32 %v96, %v92
    %v99 = vmul.f32 %v96, %v93
    %v100 = vmul.f32 %v96, %v94
    %v101 = vadd.f32 %v97, 0.0
    %v102 = vadd.f32 %v98, 0.0
    %v103 = vadd.f32 %v99, 0.0
    %v104 = vadd.f32 %v100, 0.0
    %s105 = sld [smem:[#allocation2 + $0x1]]
    %v106 = vstv %s105
    %v107 = vmul.f32 %v106, %v91
    %v108 = vmul.f32 %v106, %v92
    %v109 = vmul.f32 %v106, %v93
    %v110 = vmul.f32 %v106, %v94
    %v111 = vadd.f32 %v107, 0.0
    %v112 = vadd.f32 %v108, 0.0
    %v113 = vadd.f32 %v109, 0.0
    %v114 = vadd.f32 %v110, 0.0
    %s115 = sld [smem:[#allocation2 + $0x2]]
    %v116 = vstv %s115
    %v117 = vmul.f32 %v116, %v91
    %v118 = vmul.f32 %v116, %v92
    %v119 = vmul.f32 %v116, %v93
    %v120 = vmul.f32 %v116, %v94
    %v121 = vadd.f32 %v117, 0.0
    %v122 = vadd.f32 %v118, 0.0
    %v123 = vadd.f32 %v119, 0.0
    %v124 = vadd.f32 %v120, 0.0
    %s125 = sld [smem:[#allocation2 + $0x3]]
    %v126 = vstv %s125
    %v127 = vmul.f32 %v126, %v91
    %v128 = vmul.f32 %v126, %v92
    %v129 = vmul.f32 %v126, %v93
    %v130 = vmul.f32 %v126, %v94
    %v131 = vadd.f32 %v127, 0.0
    %v132 = vadd.f32 %v128, 0.0
    %v133 = vadd.f32 %v129, 0.0
    %v134 = vadd.f32 %v130, 0.0
    %s135 = sld [smem:[#allocation2 + $0x4]]
    %v136 = vstv %s135
    %v137 = vmul.f32 %v136, %v91
    %v138 = vmul.f32 %v136, %v92
    %v139 = vmul.f32 %v136, %v93
    %v140 = vmul.f32 %v136, %v94
    %v145 = vrot.slane %v137, 1
    %v146 = vrot.slane %v138, 1
    %v147 = vrot.slane %v139, 1
    %v148 = vrot.slane %v140, 1
    %v153 = vadd.f32 %v101, %v145
    %v154 = vadd.f32 %v102, %v146
    %v155 = vadd.f32 %v103, %v147
    %v156 = vadd.f32 %v104, %v148
    %s157 = sld [smem:[#allocation2 + $0x5]]
    %v158 = vstv %s157
    %v159 = vmul.f32 %v158, %v91
    %v160 = vmul.f32 %v158, %v92
    %v161 = vmul.f32 %v158, %v93
    %v162 = vmul.f32 %v158, %v94
    %v167 = vrot.slane %v159, 1
    %v168 = vrot.slane %v160, 1
    %v169 = vrot.slane %v161, 1
    %v170 = vrot.slane %v162, 1
    %v175 = vadd.f32 %v111, %v167
    %v176 = vadd.f32 %v112, %v168
    %v177 = vadd.f32 %v113, %v169
    %v178 = vadd.f32 %v114, %v170
    %s179 = sld [smem:[#allocation2 + $0x6]]
    %v180 = vstv %s179
    %v181 = vmul.f32 %v180, %v91
    %v182 = vmul.f32 %v180, %v92
    %v183 = vmul.f32 %v180, %v93
    %v184 = vmul.f32 %v180, %v94
    %v189 = vrot.slane %v181, 1
    %v190 = vrot.slane %v182, 1
    %v191 = vrot.slane %v183, 1
    %v192 = vrot.slane %v184, 1
    %v197 = vadd.f32 %v121, %v189
    %v198 = vadd.f32 %v122, %v190
    %v199 = vadd.f32 %v123, %v191
    %v200 = vadd.f32 %v124, %v192
    %s201 = sld [smem:[#allocation2 + $0x7]]
    %v202 = vstv %s201
    %v203 = vmul.f32 %v202, %v91
    %v204 = vmul.f32 %v202, %v92
    %v205 = vmul.f32 %v202, %v93
    %v206 = vmul.f32 %v202, %v94
    %v211 = vrot.slane %v203, 1
    %v212 = vrot.slane %v204, 1
    %v213 = vrot.slane %v205, 1
    %v214 = vrot.slane %v206, 1
    %v219 = vadd.f32 %v131, %v211
    %v220 = vadd.f32 %v132, %v212
    %v221 = vadd.f32 %v133, %v213
    %v222 = vadd.f32 %v134, %v214
    %s223 = sld [smem:[#allocation2 + $0x8]]
    %v224 = vstv %s223
    %v225 = vmul.f32 %v224, %v91
    %v226 = vmul.f32 %v224, %v92
    %v227 = vmul.f32 %v224, %v93
    %v228 = vmul.f32 %v224, %v94
    %v233 = vrot.slane %v225, 2
    %v234 = vrot.slane %v226, 2
    %v235 = vrot.slane %v227, 2
    %v236 = vrot.slane %v228, 2
    %v241 = vadd.f32 %v153, %v233
    %v242 = vadd.f32 %v154, %v234
    %v243 = vadd.f32 %v155, %v235
    %v244 = vadd.f32 %v156, %v236
    %s245 = sld [smem:[#allocation2 + $0x9]]
    %v246 = vstv %s245
    %v247 = vmul.f32 %v246, %v91
    %v248 = vmul.f32 %v246, %v92
    %v249 = vmul.f32 %v246, %v93
    %v250 = vmul.f32 %v246, %v94
    %v255 = vrot.slane %v247, 2
    %v256 = vrot.slane %v248, 2
    %v257 = vrot.slane %v249, 2
    %v258 = vrot.slane %v250, 2
    %v263 = vadd.f32 %v175, %v255
    %v264 = vadd.f32 %v176, %v256
    %v265 = vadd.f32 %v177, %v257
    %v266 = vadd.f32 %v178, %v258
    %s267 = sld [smem:[#allocation2 + $0xa]]
    %v268 = vstv %s267
    %v269 = vmul.f32 %v268, %v91
    %v270 = vmul.f32 %v268, %v92
    %v271 = vmul.f32 %v268, %v93
    %v272 = vmul.f32 %v268, %v94
    %v277 = vrot.slane %v269, 2
    %v278 = vrot.slane %v270, 2
    %v279 = vrot.slane %v271, 2
    %v280 = vrot.slane %v272, 2
    %v285 = vadd.f32 %v197, %v277
    %v286 = vadd.f32 %v198, %v278
    %v287 = vadd.f32 %v199, %v279
    %v288 = vadd.f32 %v200, %v280
    %s289 = sld [smem:[#allocation2 + $0xb]]
    %v290 = vstv %s289
    %v291 = vmul.f32 %v290, %v91
    %v292 = vmul.f32 %v290, %v92
    %v293 = vmul.f32 %v290, %v93
    %v294 = vmul.f32 %v290, %v94
    %v299 = vrot.slane %v291, 2
    %v300 = vrot.slane %v292, 2
    %v301 = vrot.slane %v293, 2
    %v302 = vrot.slane %v294, 2
    %v307 = vadd.f32 %v219, %v299
    %v308 = vadd.f32 %v220, %v300
    %v309 = vadd.f32 %v221, %v301
    %v310 = vadd.f32 %v222, %v302
    %s311 = sld [smem:[#allocation2 + $0xc]]
    %v312 = vstv %s311
    %v313 = vmul.f32 %v312, %v91
    %v314 = vmul.f32 %v312, %v92
    %v315 = vmul.f32 %v312, %v93
    %v316 = vmul.f32 %v312, %v94
    %v321 = vrot.slane %v313, 3
    %v322 = vrot.slane %v314, 3
    %v323 = vrot.slane %v315, 3
    %v324 = vrot.slane %v316, 3
    %v329 = vadd.f32 %v241, %v321
    %v330 = vadd.f32 %v242, %v322
    %v331 = vadd.f32 %v243, %v323
    %v332 = vadd.f32 %v244, %v324
    %s333 = sld [smem:[#allocation2 + $0xd]]
    %v334 = vstv %s333
    %v335 = vmul.f32 %v334, %v91
    %v336 = vmul.f32 %v334, %v92
    %v337 = vmul.f32 %v334, %v93
    %v338 = vmul.f32 %v334, %v94
    %v343 = vrot.slane %v335, 3
    %v344 = vrot.slane %v336, 3
    %v345 = vrot.slane %v337, 3
    %v346 = vrot.slane %v338, 3
    %v351 = vadd.f32 %v263, %v343
    %v352 = vadd.f32 %v264, %v344
    %v353 = vadd.f32 %v265, %v345
    %v354 = vadd.f32 %v266, %v346
    %s355 = sld [smem:[#allocation2 + $0xe]]
    %v356 = vstv %s355
    %v357 = vmul.f32 %v356, %v91
    %v358 = vmul.f32 %v356, %v92
    %v359 = vmul.f32 %v356, %v93
    %v360 = vmul.f32 %v356, %v94
    %v365 = vrot.slane %v357, 3
    %v366 = vrot.slane %v358, 3
    %v367 = vrot.slane %v359, 3
    %v368 = vrot.slane %v360, 3
    %v373 = vadd.f32 %v285, %v365
    %v374 = vadd.f32 %v286, %v366
    %v375 = vadd.f32 %v287, %v367
    %v376 = vadd.f32 %v288, %v368
    %s377 = sld [smem:[#allocation2 + $0xf]]
    %v378 = vstv %s377
    %v379 = vmul.f32 %v378, %v91
    %v380 = vmul.f32 %v378, %v92
    %v381 = vmul.f32 %v378, %v93
    %v382 = vmul.f32 %v378, %v94
    %v387 = vrot.slane %v379, 3
    %v388 = vrot.slane %v380, 3
    %v389 = vrot.slane %v381, 3
    %v390 = vrot.slane %v382, 3
    %v395 = vadd.f32 %v307, %v387
    %v396 = vadd.f32 %v308, %v388
    %v397 = vadd.f32 %v309, %v389
    %v398 = vadd.f32 %v310, %v390
    %s399 = scalar_lea.vmem %s1, 1
    %v400 = vld [vmem:[%s399] ss:$8 sm:$0x3]
    %401 = vrot.lane.b32.xlu0 %v59, 16
    %v402 = vpop.permute.xlu0 %401
    %403 = vrot.lane.b32.xlu0 %v60, 16
    %v404 = vpop.permute.xlu0 %403
    %407 = vrot.lane.b32.xlu0 %v54, 16
    %v408 = vpop.permute.xlu0 %407
    %409 = vrot.lane.b32.xlu0 %v55, 16
    %v410 = vpop.permute.xlu0 %409
    %vm411 = vcmask 130048
    %v412 = vsel %vm411, %v408, %v402
    %v413 = vsel %vm411, %v410, %v404
    %v418 = vsel %vm411, %v402, %v408
    %v419 = vsel %vm411, %v404, %v410
    %v421 = vlaneseq
    %v422 = vshrl.u32 %v421, 7
    %v423 = vsub.s32 0, %v422
    %v424 = vrot.slane %v400, %v423
    %v425 = vlaneseq
    %v426 = vshrl.u32 %v425, 7
    %v427 = vsub.s32 1, %v426
    %v428 = vrot.slane %v400, %v427
    %v431 = vmul.f32 %v418, %v424
    %v432 = vmul.f32 %v412, %v428
    %v433 = vmul.f32 %v419, %v424
    %v434 = vmul.f32 %v413, %v428
    %s435 = sld [smem:[#allocation2 + $0x10]]
    %v436 = vstv %s435
    %v437 = vmul.f32 %v436, %v431
    %v438 = vmul.f32 %v436, %v432
    %v439 = vmul.f32 %v436, %v433
    %v440 = vmul.f32 %v436, %v434
    %v441 = vadd.f32 %v329, %v437
    %v442 = vadd.f32 %v330, %v438
    %v443 = vadd.f32 %v331, %v439
    %v444 = vadd.f32 %v332, %v440
    %s445 = sld [smem:[#allocation2 + $0x11]]
    %v446 = vstv %s445
    %v447 = vmul.f32 %v446, %v431
    %v448 = vmul.f32 %v446, %v432
    %v449 = vmul.f32 %v446, %v433
    %v450 = vmul.f32 %v446, %v434
    %v451 = vadd.f32 %v351, %v447
    %v452 = vadd.f32 %v352, %v448
    %v453 = vadd.f32 %v353, %v449
    %v454 = vadd.f32 %v354, %v450
    %s455 = sld [smem:[#allocation2 + $0x12]]
    %v456 = vstv %s455
    %v457 = vmul.f32 %v456, %v431
    %v458 = vmul.f32 %v456, %v432
    %v459 = vmul.f32 %v456, %v433
    %v460 = vmul.f32 %v456, %v434
    %v461 = vadd.f32 %v373, %v457
    %v462 = vadd.f32 %v374, %v458
    %v463 = vadd.f32 %v375, %v459
    %v464 = vadd.f32 %v376, %v460
    %s465 = sld [smem:[#allocation2 + $0x13]]
    %v466 = vstv %s465
    %v467 = vmul.f32 %v466, %v431
    %v468 = vmul.f32 %v466, %v432
    %v469 = vmul.f32 %v466, %v433
    %v470 = vmul.f32 %v466, %v434
    %v471 = vadd.f32 %v395, %v467
    %v472 = vadd.f32 %v396, %v468
    %v473 = vadd.f32 %v397, %v469
    %v474 = vadd.f32 %v398, %v470
    %s475 = sld [smem:[#allocation2 + $0x14]]
    %v476 = vstv %s475
    %v477 = vmul.f32 %v476, %v431
    %v478 = vmul.f32 %v476, %v432
    %v479 = vmul.f32 %v476, %v433
    %v480 = vmul.f32 %v476, %v434
    %v485 = vrot.slane %v477, 1
    %v486 = vrot.slane %v478, 1
    %v487 = vrot.slane %v479, 1
    %v488 = vrot.slane %v480, 1
    %v493 = vadd.f32 %v441, %v485
    %v494 = vadd.f32 %v442, %v486
    %v495 = vadd.f32 %v443, %v487
    %v496 = vadd.f32 %v444, %v488
    %s497 = sld [smem:[#allocation2 + $0x15]]
    %v498 = vstv %s497
    %v499 = vmul.f32 %v498, %v431
    %v500 = vmul.f32 %v498, %v432
    %v501 = vmul.f32 %v498, %v433
    %v502 = vmul.f32 %v498, %v434
    %v507 = vrot.slane %v499, 1
    %v508 = vrot.slane %v500, 1
    %v509 = vrot.slane %v501, 1
    %v510 = vrot.slane %v502, 1
    %v515 = vadd.f32 %v451, %v507
    %v516 = vadd.f32 %v452, %v508
    %v517 = vadd.f32 %v453, %v509
    %v518 = vadd.f32 %v454, %v510
    %s519 = sld [smem:[#allocation2 + $0x16]]
    %v520 = vstv %s519
    %v521 = vmul.f32 %v520, %v431
    %v522 = vmul.f32 %v520, %v432
    %v523 = vmul.f32 %v520, %v433
    %v524 = vmul.f32 %v520, %v434
    %v529 = vrot.slane %v521, 1
    %v530 = vrot.slane %v522, 1
    %v531 = vrot.slane %v523, 1
    %v532 = vrot.slane %v524, 1
    %v537 = vadd.f32 %v461, %v529
    %v538 = vadd.f32 %v462, %v530
    %v539 = vadd.f32 %v463, %v531
    %v540 = vadd.f32 %v464, %v532
    %s541 = sld [smem:[#allocation2 + $0x17]]
    %v542 = vstv %s541
    %v543 = vmul.f32 %v542, %v431
    %v544 = vmul.f32 %v542, %v432
    %v545 = vmul.f32 %v542, %v433
    %v546 = vmul.f32 %v542, %v434
    %v551 = vrot.slane %v543, 1
    %v552 = vrot.slane %v544, 1
    %v553 = vrot.slane %v545, 1
    %v554 = vrot.slane %v546, 1
    %v559 = vadd.f32 %v471, %v551
    %v560 = vadd.f32 %v472, %v552
    %v561 = vadd.f32 %v473, %v553
    %v562 = vadd.f32 %v474, %v554
    %s563 = sld [smem:[#allocation2 + $0x18]]
    %v564 = vstv %s563
    %v565 = vmul.f32 %v564, %v431
    %v566 = vmul.f32 %v564, %v432
    %v567 = vmul.f32 %v564, %v433
    %v568 = vmul.f32 %v564, %v434
    %v573 = vrot.slane %v565, 2
    %v574 = vrot.slane %v566, 2
    %v575 = vrot.slane %v567, 2
    %v576 = vrot.slane %v568, 2
    %v581 = vadd.f32 %v493, %v573
    %v582 = vadd.f32 %v494, %v574
    %v583 = vadd.f32 %v495, %v575
    %v584 = vadd.f32 %v496, %v576
    %s585 = sld [smem:[#allocation2 + $0x19]]
    %v586 = vstv %s585
    %v587 = vmul.f32 %v586, %v431
    %v588 = vmul.f32 %v586, %v432
    %v589 = vmul.f32 %v586, %v433
    %v590 = vmul.f32 %v586, %v434
    %v595 = vrot.slane %v587, 2
    %v596 = vrot.slane %v588, 2
    %v597 = vrot.slane %v589, 2
    %v598 = vrot.slane %v590, 2
    %v603 = vadd.f32 %v515, %v595
    %v604 = vadd.f32 %v516, %v596
    %v605 = vadd.f32 %v517, %v597
    %v606 = vadd.f32 %v518, %v598
    %s607 = sld [smem:[#allocation2 + $0x1a]]
    %v608 = vstv %s607
    %v609 = vmul.f32 %v608, %v431
    %v610 = vmul.f32 %v608, %v432
    %v611 = vmul.f32 %v608, %v433
    %v612 = vmul.f32 %v608, %v434
    %v617 = vrot.slane %v609, 2
    %v618 = vrot.slane %v610, 2
    %v619 = vrot.slane %v611, 2
    %v620 = vrot.slane %v612, 2
    %v625 = vadd.f32 %v537, %v617
    %v626 = vadd.f32 %v538, %v618
    %v627 = vadd.f32 %v539, %v619
    %v628 = vadd.f32 %v540, %v620
    %s629 = sld [smem:[#allocation2 + $0x1b]]
    %v630 = vstv %s629
    %v631 = vmul.f32 %v630, %v431
    %v632 = vmul.f32 %v630, %v432
    %v633 = vmul.f32 %v630, %v433
    %v634 = vmul.f32 %v630, %v434
    %v639 = vrot.slane %v631, 2
    %v640 = vrot.slane %v632, 2
    %v641 = vrot.slane %v633, 2
    %v642 = vrot.slane %v634, 2
    %v647 = vadd.f32 %v559, %v639
    %v648 = vadd.f32 %v560, %v640
    %v649 = vadd.f32 %v561, %v641
    %v650 = vadd.f32 %v562, %v642
    %s651 = sld [smem:[#allocation2 + $0x1c]]
    %v652 = vstv %s651
    %v653 = vmul.f32 %v652, %v431
    %v654 = vmul.f32 %v652, %v432
    %v655 = vmul.f32 %v652, %v433
    %v656 = vmul.f32 %v652, %v434
    %v661 = vrot.slane %v653, 3
    %v662 = vrot.slane %v654, 3
    %v663 = vrot.slane %v655, 3
    %v664 = vrot.slane %v656, 3
    %v669 = vadd.f32 %v581, %v661
    %v670 = vadd.f32 %v582, %v662
    %v671 = vadd.f32 %v583, %v663
    %v672 = vadd.f32 %v584, %v664
    %s673 = sld [smem:[#allocation2 + $0x1d]]
    %v674 = vstv %s673
    %v675 = vmul.f32 %v674, %v431
    %v676 = vmul.f32 %v674, %v432
    %v677 = vmul.f32 %v674, %v433
    %v678 = vmul.f32 %v674, %v434
    %v683 = vrot.slane %v675, 3
    %v684 = vrot.slane %v676, 3
    %v685 = vrot.slane %v677, 3
    %v686 = vrot.slane %v678, 3
    %v691 = vadd.f32 %v603, %v683
    %v692 = vadd.f32 %v604, %v684
    %v693 = vadd.f32 %v605, %v685
    %v694 = vadd.f32 %v606, %v686
    %s695 = sld [smem:[#allocation2 + $0x1e]]
    %v696 = vstv %s695
    %v697 = vmul.f32 %v696, %v431
    %v698 = vmul.f32 %v696, %v432
    %v699 = vmul.f32 %v696, %v433
    %v700 = vmul.f32 %v696, %v434
    %v705 = vrot.slane %v697, 3
    %v706 = vrot.slane %v698, 3
    %v707 = vrot.slane %v699, 3
    %v708 = vrot.slane %v700, 3
    %v713 = vadd.f32 %v625, %v705
    %v714 = vadd.f32 %v626, %v706
    %v715 = vadd.f32 %v627, %v707
    %v716 = vadd.f32 %v628, %v708
    %s717 = sld [smem:[#allocation2 + $0x1f]]
    %v718 = vstv %s717
    %v719 = vmul.f32 %v718, %v431
    %v720 = vmul.f32 %v718, %v432
    %v721 = vmul.f32 %v718, %v433
    %v722 = vmul.f32 %v718, %v434
    %v727 = vrot.slane %v719, 3
    %v728 = vrot.slane %v720, 3
    %v729 = vrot.slane %v721, 3
    %v730 = vrot.slane %v722, 3
    %v735 = vadd.f32 %v647, %v727
    %v736 = vadd.f32 %v648, %v728
    %v737 = vadd.f32 %v649, %v729
    %v738 = vadd.f32 %v650, %v730
    %s739 = scalar_lea.vmem %s1, 2
    %v740 = vld [vmem:[%s739] ss:$8 sm:$0x3]
    %741 = vrot.lane.b32.xlu0 %v59, 15
    %v742 = vpop.permute.xlu0 %741
    %743 = vrot.lane.b32.xlu0 %v60, 15
    %v744 = vpop.permute.xlu0 %743
    %747 = vrot.lane.b32.xlu0 %v54, 15
    %v748 = vpop.permute.xlu0 %747
    %749 = vrot.lane.b32.xlu0 %v55, 15
    %v750 = vpop.permute.xlu0 %749
    %vm751 = vcmask 121856
    %v752 = vsel %vm751, %v748, %v742
    %v753 = vsel %vm751, %v750, %v744
    %v758 = vsel %vm751, %v742, %v748
    %v759 = vsel %vm751, %v744, %v750
    %v761 = vlaneseq
    %v762 = vshrl.u32 %v761, 7
    %v763 = vsub.s32 0, %v762
    %v764 = vrot.slane %v740, %v763
    %v765 = vlaneseq
    %v766 = vshrl.u32 %v765, 7
    %v767 = vsub.s32 1, %v766
    %v768 = vrot.slane %v740, %v767
    %v771 = vmul.f32 %v758, %v764
    %v772 = vmul.f32 %v752, %v768
    %v773 = vmul.f32 %v759, %v764
    %v774 = vmul.f32 %v753, %v768
    %s775 = sld [smem:[#allocation2 + $0x20]]
    %v776 = vstv %s775
    %v777 = vmul.f32 %v776, %v771
    %v778 = vmul.f32 %v776, %v772
    %v779 = vmul.f32 %v776, %v773
    %v780 = vmul.f32 %v776, %v774
    %v781 = vadd.f32 %v669, %v777
    %v782 = vadd.f32 %v670, %v778
    %v783 = vadd.f32 %v671, %v779
    %v784 = vadd.f32 %v672, %v780
    %s785 = sld [smem:[#allocation2 + $0x21]]
    %v786 = vstv %s785
    %v787 = vmul.f32 %v786, %v771
    %v788 = vmul.f32 %v786, %v772
    %v789 = vmul.f32 %v786, %v773
    %v790 = vmul.f32 %v786, %v774
    %v791 = vadd.f32 %v691, %v787
    %v792 = vadd.f32 %v692, %v788
    %v793 = vadd.f32 %v693, %v789
    %v794 = vadd.f32 %v694, %v790
    %s795 = sld [smem:[#allocation2 + $0x22]]
    %v796 = vstv %s795
    %v797 = vmul.f32 %v796, %v771
    %v798 = vmul.f32 %v796, %v772
    %v799 = vmul.f32 %v796, %v773
    %v800 = vmul.f32 %v796, %v774
    %v801 = vadd.f32 %v713, %v797
    %v802 = vadd.f32 %v714, %v798
    %v803 = vadd.f32 %v715, %v799
    %v804 = vadd.f32 %v716, %v800
    %s805 = sld [smem:[#allocation2 + $0x23]]
    %v806 = vstv %s805
    %v807 = vmul.f32 %v806, %v771
    %v808 = vmul.f32 %v806, %v772
    %v809 = vmul.f32 %v806, %v773
    %v810 = vmul.f32 %v806, %v774
    %v811 = vadd.f32 %v735, %v807
    %v812 = vadd.f32 %v736, %v808
    %v813 = vadd.f32 %v737, %v809
    %v814 = vadd.f32 %v738, %v810
    %s815 = sld [smem:[#allocation2 + $0x24]]
    %v816 = vstv %s815
    %v817 = vmul.f32 %v816, %v771
    %v818 = vmul.f32 %v816, %v772
    %v819 = vmul.f32 %v816, %v773
    %v820 = vmul.f32 %v816, %v774
    %v825 = vrot.slane %v817, 1
    %v826 = vrot.slane %v818, 1
    %v827 = vrot.slane %v819, 1
    %v828 = vrot.slane %v820, 1
    %v833 = vadd.f32 %v781, %v825
    %v834 = vadd.f32 %v782, %v826
    %v835 = vadd.f32 %v783, %v827
    %v836 = vadd.f32 %v784, %v828
    %s837 = sld [smem:[#allocation2 + $0x25]]
    %v838 = vstv %s837
    %v839 = vmul.f32 %v838, %v771
    %v840 = vmul.f32 %v838, %v772
    %v841 = vmul.f32 %v838, %v773
    %v842 = vmul.f32 %v838, %v774
    %v847 = vrot.slane %v839, 1
    %v848 = vrot.slane %v840, 1
    %v849 = vrot.slane %v841, 1
    %v850 = vrot.slane %v842, 1
    %v855 = vadd.f32 %v791, %v847
    %v856 = vadd.f32 %v792, %v848
    %v857 = vadd.f32 %v793, %v849
    %v858 = vadd.f32 %v794, %v850
    %s859 = sld [smem:[#allocation2 + $0x26]]
    %v860 = vstv %s859
    %v861 = vmul.f32 %v860, %v771
    %v862 = vmul.f32 %v860, %v772
    %v863 = vmul.f32 %v860, %v773
    %v864 = vmul.f32 %v860, %v774
    %v869 = vrot.slane %v861, 1
    %v870 = vrot.slane %v862, 1
    %v871 = vrot.slane %v863, 1
    %v872 = vrot.slane %v864, 1
    %v877 = vadd.f32 %v801, %v869
    %v878 = vadd.f32 %v802, %v870
    %v879 = vadd.f32 %v803, %v871
    %v880 = vadd.f32 %v804, %v872
    %s881 = sld [smem:[#allocation2 + $0x27]]
    %v882 = vstv %s881
    %v883 = vmul.f32 %v882, %v771
    %v884 = vmul.f32 %v882, %v772
    %v885 = vmul.f32 %v882, %v773
    %v886 = vmul.f32 %v882, %v774
    %v891 = vrot.slane %v883, 1
    %v892 = vrot.slane %v884, 1
    %v893 = vrot.slane %v885, 1
    %v894 = vrot.slane %v886, 1
    %v899 = vadd.f32 %v811, %v891
    %v900 = vadd.f32 %v812, %v892
    %v901 = vadd.f32 %v813, %v893
    %v902 = vadd.f32 %v814, %v894
    %s903 = sld [smem:[#allocation2 + $0x28]]
    %v904 = vstv %s903
    %v905 = vmul.f32 %v904, %v771
    %v906 = vmul.f32 %v904, %v772
    %v907 = vmul.f32 %v904, %v773
    %v908 = vmul.f32 %v904, %v774
    %v913 = vrot.slane %v905, 2
    %v914 = vrot.slane %v906, 2
    %v915 = vrot.slane %v907, 2
    %v916 = vrot.slane %v908, 2
    %v921 = vadd.f32 %v833, %v913
    %v922 = vadd.f32 %v834, %v914
    %v923 = vadd.f32 %v835, %v915
    %v924 = vadd.f32 %v836, %v916
    %s925 = sld [smem:[#allocation2 + $0x29]]
    %v926 = vstv %s925
    %v927 = vmul.f32 %v926, %v771
    %v928 = vmul.f32 %v926, %v772
    %v929 = vmul.f32 %v926, %v773
    %v930 = vmul.f32 %v926, %v774
    %v935 = vrot.slane %v927, 2
    %v936 = vrot.slane %v928, 2
    %v937 = vrot.slane %v929, 2
    %v938 = vrot.slane %v930, 2
    %v943 = vadd.f32 %v855, %v935
    %v944 = vadd.f32 %v856, %v936
    %v945 = vadd.f32 %v857, %v937
    %v946 = vadd.f32 %v858, %v938
    %s947 = sld [smem:[#allocation2 + $0x2a]]
    %v948 = vstv %s947
    %v949 = vmul.f32 %v948, %v771
    %v950 = vmul.f32 %v948, %v772
    %v951 = vmul.f32 %v948, %v773
    %v952 = vmul.f32 %v948, %v774
    %v957 = vrot.slane %v949, 2
    %v958 = vrot.slane %v950, 2
    %v959 = vrot.slane %v951, 2
    %v960 = vrot.slane %v952, 2
    %v965 = vadd.f32 %v877, %v957
    %v966 = vadd.f32 %v878, %v958
    %v967 = vadd.f32 %v879, %v959
    %v968 = vadd.f32 %v880, %v960
    %s969 = sld [smem:[#allocation2 + $0x2b]]
    %v970 = vstv %s969
    %v971 = vmul.f32 %v970, %v771
    %v972 = vmul.f32 %v970, %v772
    %v973 = vmul.f32 %v970, %v773
    %v974 = vmul.f32 %v970, %v774
    %v979 = vrot.slane %v971, 2
    %v980 = vrot.slane %v972, 2
    %v981 = vrot.slane %v973, 2
    %v982 = vrot.slane %v974, 2
    %v987 = vadd.f32 %v899, %v979
    %v988 = vadd.f32 %v900, %v980
    %v989 = vadd.f32 %v901, %v981
    %v990 = vadd.f32 %v902, %v982
    %s991 = sld [smem:[#allocation2 + $0x2c]]
    %v992 = vstv %s991
    %v993 = vmul.f32 %v992, %v771
    %v994 = vmul.f32 %v992, %v772
    %v995 = vmul.f32 %v992, %v773
    %v996 = vmul.f32 %v992, %v774
    %v1001 = vrot.slane %v993, 3
    %v1002 = vrot.slane %v994, 3
    %v1003 = vrot.slane %v995, 3
    %v1004 = vrot.slane %v996, 3
    %v1009 = vadd.f32 %v921, %v1001
    %v1010 = vadd.f32 %v922, %v1002
    %v1011 = vadd.f32 %v923, %v1003
    %v1012 = vadd.f32 %v924, %v1004
    %s1013 = sld [smem:[#allocation2 + $0x2d]]
    %v1014 = vstv %s1013
    %v1015 = vmul.f32 %v1014, %v771
    %v1016 = vmul.f32 %v1014, %v772
    %v1017 = vmul.f32 %v1014, %v773
    %v1018 = vmul.f32 %v1014, %v774
    %v1023 = vrot.slane %v1015, 3
    %v1024 = vrot.slane %v1016, 3
    %v1025 = vrot.slane %v1017, 3
    %v1026 = vrot.slane %v1018, 3
    %v1031 = vadd.f32 %v943, %v1023
    %v1032 = vadd.f32 %v944, %v1024
    %v1033 = vadd.f32 %v945, %v1025
    %v1034 = vadd.f32 %v946, %v1026
    %s1035 = sld [smem:[#allocation2 + $0x2e]]
    %v1036 = vstv %s1035
    %v1037 = vmul.f32 %v1036, %v771
    %v1038 = vmul.f32 %v1036, %v772
    %v1039 = vmul.f32 %v1036, %v773
    %v1040 = vmul.f32 %v1036, %v774
    %v1045 = vrot.slane %v1037, 3
    %v1046 = vrot.slane %v1038, 3
    %v1047 = vrot.slane %v1039, 3
    %v1048 = vrot.slane %v1040, 3
    %v1053 = vadd.f32 %v965, %v1045
    %v1054 = vadd.f32 %v966, %v1046
    %v1055 = vadd.f32 %v967, %v1047
    %v1056 = vadd.f32 %v968, %v1048
    %s1057 = sld [smem:[#allocation2 + $0x2f]]
    %v1058 = vstv %s1057
    %v1059 = vmul.f32 %v1058, %v771
    %v1060 = vmul.f32 %v1058, %v772
    %v1061 = vmul.f32 %v1058, %v773
    %v1062 = vmul.f32 %v1058, %v774
    %v1067 = vrot.slane %v1059, 3
    %v1068 = vrot.slane %v1060, 3
    %v1069 = vrot.slane %v1061, 3
    %v1070 = vrot.slane %v1062, 3
    %v1075 = vadd.f32 %v987, %v1067
    %v1076 = vadd.f32 %v988, %v1068
    %v1077 = vadd.f32 %v989, %v1069
    %v1078 = vadd.f32 %v990, %v1070
    %s1079 = scalar_lea.vmem %s1, 3
    %v1080 = vld [vmem:[%s1079] ss:$8 sm:$0x3]
    %1081 = vrot.lane.b32.xlu0 %v59, 1
    %v1082 = vpop.permute.xlu0 %1081
    %1083 = vrot.lane.b32.xlu0 %v60, 1
    %v1084 = vpop.permute.xlu0 %1083
    %1087 = vrot.lane.b32.xlu0 %v54, 1
    %v1088 = vpop.permute.xlu0 %1087
    %1089 = vrot.lane.b32.xlu0 %v55, 1
    %v1090 = vpop.permute.xlu0 %1089
    %vm1091 = vcmask 7168
    %v1092 = vsel %vm1091, %v1088, %v1082
    %v1093 = vsel %vm1091, %v1090, %v1084
    %v1098 = vsel %vm1091, %v1082, %v1088
    %v1099 = vsel %vm1091, %v1084, %v1090
    %v1101 = vlaneseq
    %v1102 = vshrl.u32 %v1101, 7
    %v1103 = vsub.s32 0, %v1102
    %v1104 = vrot.slane %v1080, %v1103
    %v1105 = vlaneseq
    %v1106 = vshrl.u32 %v1105, 7
    %v1107 = vsub.s32 1, %v1106
    %v1108 = vrot.slane %v1080, %v1107
    %v1111 = vmul.f32 %v1098, %v1104
    %v1112 = vmul.f32 %v1092, %v1108
    %v1113 = vmul.f32 %v1099, %v1104
    %v1114 = vmul.f32 %v1093, %v1108
    %s1115 = sld [smem:[#allocation2 + $0x30]]
    %v1116 = vstv %s1115
    %v1117 = vmul.f32 %v1116, %v1111
    %v1118 = vmul.f32 %v1116, %v1112
    %v1119 = vmul.f32 %v1116, %v1113
    %v1120 = vmul.f32 %v1116, %v1114
    %v1121 = vadd.f32 %v1009, %v1117
    %v1122 = vadd.f32 %v1010, %v1118
    %v1123 = vadd.f32 %v1011, %v1119
    %v1124 = vadd.f32 %v1012, %v1120
    %s1125 = sld [smem:[#allocation2 + $0x31]]
    %v1126 = vstv %s1125
    %v1127 = vmul.f32 %v1126, %v1111
    %v1128 = vmul.f32 %v1126, %v1112
    %v1129 = vmul.f32 %v1126, %v1113
    %v1130 = vmul.f32 %v1126, %v1114
    %v1131 = vadd.f32 %v1031, %v1127
    %v1132 = vadd.f32 %v1032, %v1128
    %v1133 = vadd.f32 %v1033, %v1129
    %v1134 = vadd.f32 %v1034, %v1130
    %s1135 = sld [smem:[#allocation2 + $0x32]]
    %v1136 = vstv %s1135
    %v1137 = vmul.f32 %v1136, %v1111
    %v1138 = vmul.f32 %v1136, %v1112
    %v1139 = vmul.f32 %v1136, %v1113
    %v1140 = vmul.f32 %v1136, %v1114
    %v1141 = vadd.f32 %v1053, %v1137
    %v1142 = vadd.f32 %v1054, %v1138
    %v1143 = vadd.f32 %v1055, %v1139
    %v1144 = vadd.f32 %v1056, %v1140
    %s1145 = sld [smem:[#allocation2 + $0x33]]
    %v1146 = vstv %s1145
    %v1147 = vmul.f32 %v1146, %v1111
    %v1148 = vmul.f32 %v1146, %v1112
    %v1149 = vmul.f32 %v1146, %v1113
    %v1150 = vmul.f32 %v1146, %v1114
    %v1151 = vadd.f32 %v1075, %v1147
    %v1152 = vadd.f32 %v1076, %v1148
    %v1153 = vadd.f32 %v1077, %v1149
    %v1154 = vadd.f32 %v1078, %v1150
    %s1155 = sld [smem:[#allocation2 + $0x34]]
    %v1156 = vstv %s1155
    %v1157 = vmul.f32 %v1156, %v1111
    %v1158 = vmul.f32 %v1156, %v1112
    %v1159 = vmul.f32 %v1156, %v1113
    %v1160 = vmul.f32 %v1156, %v1114
    %v1165 = vrot.slane %v1157, 1
    %v1166 = vrot.slane %v1158, 1
    %v1167 = vrot.slane %v1159, 1
    %v1168 = vrot.slane %v1160, 1
    %v1173 = vadd.f32 %v1121, %v1165
    %v1174 = vadd.f32 %v1122, %v1166
    %v1175 = vadd.f32 %v1123, %v1167
    %v1176 = vadd.f32 %v1124, %v1168
    %s1177 = sld [smem:[#allocation2 + $0x35]]
    %v1178 = vstv %s1177
    %v1179 = vmul.f32 %v1178, %v1111
    %v1180 = vmul.f32 %v1178, %v1112
    %v1181 = vmul.f32 %v1178, %v1113
    %v1182 = vmul.f32 %v1178, %v1114
    %v1187 = vrot.slane %v1179, 1
    %v1188 = vrot.slane %v1180, 1
    %v1189 = vrot.slane %v1181, 1
    %v1190 = vrot.slane %v1182, 1
    %v1195 = vadd.f32 %v1131, %v1187
    %v1196 = vadd.f32 %v1132, %v1188
    %v1197 = vadd.f32 %v1133, %v1189
    %v1198 = vadd.f32 %v1134, %v1190
    %s1199 = sld [smem:[#allocation2 + $0x36]]
    %v1200 = vstv %s1199
    %v1201 = vmul.f32 %v1200, %v1111
    %v1202 = vmul.f32 %v1200, %v1112
    %v1203 = vmul.f32 %v1200, %v1113
    %v1204 = vmul.f32 %v1200, %v1114
    %v1209 = vrot.slane %v1201, 1
    %v1210 = vrot.slane %v1202, 1
    %v1211 = vrot.slane %v1203, 1
    %v1212 = vrot.slane %v1204, 1
    %v1217 = vadd.f32 %v1141, %v1209
    %v1218 = vadd.f32 %v1142, %v1210
    %v1219 = vadd.f32 %v1143, %v1211
    %v1220 = vadd.f32 %v1144, %v1212
    %s1221 = sld [smem:[#allocation2 + $0x37]]
    %v1222 = vstv %s1221
    %v1223 = vmul.f32 %v1222, %v1111
    %v1224 = vmul.f32 %v1222, %v1112
    %v1225 = vmul.f32 %v1222, %v1113
    %v1226 = vmul.f32 %v1222, %v1114
    %v1231 = vrot.slane %v1223, 1
    %v1232 = vrot.slane %v1224, 1
    %v1233 = vrot.slane %v1225, 1
    %v1234 = vrot.slane %v1226, 1
    %v1239 = vadd.f32 %v1151, %v1231
    %v1240 = vadd.f32 %v1152, %v1232
    %v1241 = vadd.f32 %v1153, %v1233
    %v1242 = vadd.f32 %v1154, %v1234
    %s1243 = sld [smem:[#allocation2 + $0x38]]
    %v1244 = vstv %s1243
    %v1245 = vmul.f32 %v1244, %v1111
    %v1246 = vmul.f32 %v1244, %v1112
    %v1247 = vmul.f32 %v1244, %v1113
    %v1248 = vmul.f32 %v1244, %v1114
    %v1253 = vrot.slane %v1245, 2
    %v1254 = vrot.slane %v1246, 2
    %v1255 = vrot.slane %v1247, 2
    %v1256 = vrot.slane %v1248, 2
    %v1261 = vadd.f32 %v1173, %v1253
    %v1262 = vadd.f32 %v1174, %v1254
    %v1263 = vadd.f32 %v1175, %v1255
    %v1264 = vadd.f32 %v1176, %v1256
    %s1265 = sld [smem:[#allocation2 + $0x39]]
    %v1266 = vstv %s1265
    %v1267 = vmul.f32 %v1266, %v1111
    %v1268 = vmul.f32 %v1266, %v1112
    %v1269 = vmul.f32 %v1266, %v1113
    %v1270 = vmul.f32 %v1266, %v1114
    %v1275 = vrot.slane %v1267, 2
    %v1276 = vrot.slane %v1268, 2
    %v1277 = vrot.slane %v1269, 2
    %v1278 = vrot.slane %v1270, 2
    %v1283 = vadd.f32 %v1195, %v1275
    %v1284 = vadd.f32 %v1196, %v1276
    %v1285 = vadd.f32 %v1197, %v1277
    %v1286 = vadd.f32 %v1198, %v1278
    %s1287 = sld [smem:[#allocation2 + $0x3a]]
    %v1288 = vstv %s1287
    %v1289 = vmul.f32 %v1288, %v1111
    %v1290 = vmul.f32 %v1288, %v1112
    %v1291 = vmul.f32 %v1288, %v1113
    %v1292 = vmul.f32 %v1288, %v1114
    %v1297 = vrot.slane %v1289, 2
    %v1298 = vrot.slane %v1290, 2
    %v1299 = vrot.slane %v1291, 2
    %v1300 = vrot.slane %v1292, 2
    %v1305 = vadd.f32 %v1217, %v1297
    %v1306 = vadd.f32 %v1218, %v1298
    %v1307 = vadd.f32 %v1219, %v1299
    %v1308 = vadd.f32 %v1220, %v1300
    %s1309 = sld [smem:[#allocation2 + $0x3b]]
    %v1310 = vstv %s1309
    %v1311 = vmul.f32 %v1310, %v1111
    %v1312 = vmul.f32 %v1310, %v1112
    %v1313 = vmul.f32 %v1310, %v1113
    %v1314 = vmul.f32 %v1310, %v1114
    %v1319 = vrot.slane %v1311, 2
    %v1320 = vrot.slane %v1312, 2
    %v1321 = vrot.slane %v1313, 2
    %v1322 = vrot.slane %v1314, 2
    %v1327 = vadd.f32 %v1239, %v1319
    %v1328 = vadd.f32 %v1240, %v1320
    %v1329 = vadd.f32 %v1241, %v1321
    %v1330 = vadd.f32 %v1242, %v1322
    %s1331 = sld [smem:[#allocation2 + $0x3c]]
    %v1332 = vstv %s1331
    %v1333 = vmul.f32 %v1332, %v1111
    %v1334 = vmul.f32 %v1332, %v1112
    %v1335 = vmul.f32 %v1332, %v1113
    %v1336 = vmul.f32 %v1332, %v1114
    %v1341 = vrot.slane %v1333, 3
    %v1342 = vrot.slane %v1334, 3
    %v1343 = vrot.slane %v1335, 3
    %v1344 = vrot.slane %v1336, 3
    %v1349 = vadd.f32 %v1261, %v1341
    %v1350 = vadd.f32 %v1262, %v1342
    %v1351 = vadd.f32 %v1263, %v1343
    %v1352 = vadd.f32 %v1264, %v1344
    %s1353 = sld [smem:[#allocation2 + $0x3d]]
    %v1354 = vstv %s1353
    %v1355 = vmul.f32 %v1354, %v1111
    %v1356 = vmul.f32 %v1354, %v1112
    %v1357 = vmul.f32 %v1354, %v1113
    %v1358 = vmul.f32 %v1354, %v1114
    %v1363 = vrot.slane %v1355, 3
    %v1364 = vrot.slane %v1356, 3
    %v1365 = vrot.slane %v1357, 3
    %v1366 = vrot.slane %v1358, 3
    %v1371 = vadd.f32 %v1283, %v1363
    %v1372 = vadd.f32 %v1284, %v1364
    %v1373 = vadd.f32 %v1285, %v1365
    %v1374 = vadd.f32 %v1286, %v1366
    %s1375 = sld [smem:[#allocation2 + $0x3e]]
    %v1376 = vstv %s1375
    %v1377 = vmul.f32 %v1376, %v1111
    %v1378 = vmul.f32 %v1376, %v1112
    %v1379 = vmul.f32 %v1376, %v1113
    %v1380 = vmul.f32 %v1376, %v1114
    %v1385 = vrot.slane %v1377, 3
    %v1386 = vrot.slane %v1378, 3
    %v1387 = vrot.slane %v1379, 3
    %v1388 = vrot.slane %v1380, 3
    %v1393 = vadd.f32 %v1305, %v1385
    %v1394 = vadd.f32 %v1306, %v1386
    %v1395 = vadd.f32 %v1307, %v1387
    %v1396 = vadd.f32 %v1308, %v1388
    %s1397 = sld [smem:[#allocation2 + $0x3f]]
    %v1398 = vstv %s1397
    %v1399 = vmul.f32 %v1398, %v1111
    %v1400 = vmul.f32 %v1398, %v1112
    %v1401 = vmul.f32 %v1398, %v1113
    %v1402 = vmul.f32 %v1398, %v1114
    %v1407 = vrot.slane %v1399, 3
    %v1408 = vrot.slane %v1400, 3
    %v1409 = vrot.slane %v1401, 3
    %v1410 = vrot.slane %v1402, 3
    %v1415 = vadd.f32 %v1327, %v1407
    %v1416 = vadd.f32 %v1328, %v1408
    %v1417 = vadd.f32 %v1329, %v1409
    %v1418 = vadd.f32 %v1330, %v1410
    %s1419 = scalar_lea.vmem %s1, 4
    %v1420 = vld [vmem:[%s1419] ss:$8 sm:$0x3]
    %v1422 = vlaneseq
    %v1423 = vshrl.u32 %v1422, 7
    %v1424 = vsub.s32 0, %v1423
    %v1425 = vrot.slane %v1420, %v1424
    %v1426 = vlaneseq
    %v1427 = vshrl.u32 %v1426, 7
    %v1428 = vsub.s32 1, %v1427
    %v1429 = vrot.slane %v1420, %v1428
    %v1432 = vcombine.low %v1425, %v1429
    %v1434 = vmul.f32 %v54, %v1432
    %v1435 = vmul.f32 %v55, %v1432
    %s1436 = sld [smem:[#allocation2 + $0x40]]
    %v1437 = vstv %s1436
    %v1438 = vmul.f32 %v1437, %v1434
    %v1439 = vmul.f32 %v1437, %v1435
    %v1442 = vlaneseq
    %v1443 = vshrl.u32 %v1442, 7
    %v1444 = vsub.s32 0, %v1443
    %v1445 = vrot.slane %v1438, %v1444
    %v1446 = vlaneseq
    %v1447 = vshrl.u32 %v1446, 7
    %v1448 = vsub.s32 4, %v1447
    %v1449 = vrot.slane %v1438, %v1448
    %v1450 = vlaneseq
    %v1451 = vshrl.u32 %v1450, 7
    %v1452 = vsub.s32 0, %v1451
    %v1453 = vrot.slane %v1439, %v1452
    %v1454 = vlaneseq
    %v1455 = vshrl.u32 %v1454, 7
    %v1456 = vsub.s32 4, %v1455
    %v1457 = vrot.slane %v1439, %v1456
    %v1462 = vadd.f32 %v1349, %v1445
    %v1463 = vadd.f32 %v1350, %v1449
    %v1464 = vadd.f32 %v1351, %v1453
    %v1465 = vadd.f32 %v1352, %v1457
    %s1466 = sld [smem:[#allocation2 + $0x41]]
    %v1467 = vstv %s1466
    %v1468 = vmul.f32 %v1467, %v1434
    %v1469 = vmul.f32 %v1467, %v1435
    %v1472 = vlaneseq
    %v1473 = vshrl.u32 %v1472, 7
    %v1474 = vsub.s32 0, %v1473
    %v1475 = vrot.slane %v1468, %v1474
    %v1476 = vlaneseq
    %v1477 = vshrl.u32 %v1476, 7
    %v1478 = vsub.s32 4, %v1477
    %v1479 = vrot.slane %v1468, %v1478
    %v1480 = vlaneseq
    %v1481 = vshrl.u32 %v1480, 7
    %v1482 = vsub.s32 0, %v1481
    %v1483 = vrot.slane %v1469, %v1482
    %v1484 = vlaneseq
    %v1485 = vshrl.u32 %v1484, 7
    %v1486 = vsub.s32 4, %v1485
    %v1487 = vrot.slane %v1469, %v1486
    %v1492 = vadd.f32 %v1371, %v1475
    %v1493 = vadd.f32 %v1372, %v1479
    %v1494 = vadd.f32 %v1373, %v1483
    %v1495 = vadd.f32 %v1374, %v1487
    %s1496 = sld [smem:[#allocation2 + $0x42]]
    %v1497 = vstv %s1496
    %v1498 = vmul.f32 %v1497, %v1434
    %v1499 = vmul.f32 %v1497, %v1435
    %v1502 = vlaneseq
    %v1503 = vshrl.u32 %v1502, 7
    %v1504 = vsub.s32 0, %v1503
    %v1505 = vrot.slane %v1498, %v1504
    %v1506 = vlaneseq
    %v1507 = vshrl.u32 %v1506, 7
    %v1508 = vsub.s32 4, %v1507
    %v1509 = vrot.slane %v1498, %v1508
    %v1510 = vlaneseq
    %v1511 = vshrl.u32 %v1510, 7
    %v1512 = vsub.s32 0, %v1511
    %v1513 = vrot.slane %v1499, %v1512
    %v1514 = vlaneseq
    %v1515 = vshrl.u32 %v1514, 7
    %v1516 = vsub.s32 4, %v1515
    %v1517 = vrot.slane %v1499, %v1516
    %v1522 = vadd.f32 %v1393, %v1505
    %v1523 = vadd.f32 %v1394, %v1509
    %v1524 = vadd.f32 %v1395, %v1513
    %v1525 = vadd.f32 %v1396, %v1517
    %s1526 = sld [smem:[#allocation2 + $0x43]]
    %v1527 = vstv %s1526
    %v1528 = vmul.f32 %v1527, %v1434
    %v1529 = vmul.f32 %v1527, %v1435
    %v1532 = vlaneseq
    %v1533 = vshrl.u32 %v1532, 7
    %v1534 = vsub.s32 0, %v1533
    %v1535 = vrot.slane %v1528, %v1534
    %v1536 = vlaneseq
    %v1537 = vshrl.u32 %v1536, 7
    %v1538 = vsub.s32 4, %v1537
    %v1539 = vrot.slane %v1528, %v1538
    %v1540 = vlaneseq
    %v1541 = vshrl.u32 %v1540, 7
    %v1542 = vsub.s32 0, %v1541
    %v1543 = vrot.slane %v1529, %v1542
    %v1544 = vlaneseq
    %v1545 = vshrl.u32 %v1544, 7
    %v1546 = vsub.s32 4, %v1545
    %v1547 = vrot.slane %v1529, %v1546
    %v1552 = vadd.f32 %v1415, %v1535
    %v1553 = vadd.f32 %v1416, %v1539
    %v1554 = vadd.f32 %v1417, %v1543
    %v1555 = vadd.f32 %v1418, %v1547
    %s1556 = sld [smem:[#allocation2 + $0x44]]
    %v1557 = vstv %s1556
    %v1558 = vmul.f32 %v1557, %v1434
    %v1559 = vmul.f32 %v1557, %v1435
    %v1562 = vlaneseq
    %v1563 = vshrl.u32 %v1562, 7
    %v1564 = vsub.s32 1, %v1563
    %v1565 = vrot.slane %v1558, %v1564
    %v1566 = vlaneseq
    %v1567 = vshrl.u32 %v1566, 7
    %v1568 = vsub.s32 5, %v1567
    %v1569 = vrot.slane %v1558, %v1568
    %v1570 = vlaneseq
    %v1571 = vshrl.u32 %v1570, 7
    %v1572 = vsub.s32 1, %v1571
    %v1573 = vrot.slane %v1559, %v1572
    %v1574 = vlaneseq
    %v1575 = vshrl.u32 %v1574, 7
    %v1576 = vsub.s32 5, %v1575
    %v1577 = vrot.slane %v1559, %v1576
    %v1582 = vadd.f32 %v1462, %v1565
    %v1583 = vadd.f32 %v1463, %v1569
    %v1584 = vadd.f32 %v1464, %v1573
    %v1585 = vadd.f32 %v1465, %v1577
    %s1586 = sld [smem:[#allocation2 + $0x45]]
    %v1587 = vstv %s1586
    %v1588 = vmul.f32 %v1587, %v1434
    %v1589 = vmul.f32 %v1587, %v1435
    %v1592 = vlaneseq
    %v1593 = vshrl.u32 %v1592, 7
    %v1594 = vsub.s32 1, %v1593
    %v1595 = vrot.slane %v1588, %v1594
    %v1596 = vlaneseq
    %v1597 = vshrl.u32 %v1596, 7
    %v1598 = vsub.s32 5, %v1597
    %v1599 = vrot.slane %v1588, %v1598
    %v1600 = vlaneseq
    %v1601 = vshrl.u32 %v1600, 7
    %v1602 = vsub.s32 1, %v1601
    %v1603 = vrot.slane %v1589, %v1602
    %v1604 = vlaneseq
    %v1605 = vshrl.u32 %v1604, 7
    %v1606 = vsub.s32 5, %v1605
    %v1607 = vrot.slane %v1589, %v1606
    %v1612 = vadd.f32 %v1492, %v1595
    %v1613 = vadd.f32 %v1493, %v1599
    %v1614 = vadd.f32 %v1494, %v1603
    %v1615 = vadd.f32 %v1495, %v1607
    %s1616 = sld [smem:[#allocation2 + $0x46]]
    %v1617 = vstv %s1616
    %v1618 = vmul.f32 %v1617, %v1434
    %v1619 = vmul.f32 %v1617, %v1435
    %v1622 = vlaneseq
    %v1623 = vshrl.u32 %v1622, 7
    %v1624 = vsub.s32 1, %v1623
    %v1625 = vrot.slane %v1618, %v1624
    %v1626 = vlaneseq
    %v1627 = vshrl.u32 %v1626, 7
    %v1628 = vsub.s32 5, %v1627
    %v1629 = vrot.slane %v1618, %v1628
    %v1630 = vlaneseq
    %v1631 = vshrl.u32 %v1630, 7
    %v1632 = vsub.s32 1, %v1631
    %v1633 = vrot.slane %v1619, %v1632
    %v1634 = vlaneseq
    %v1635 = vshrl.u32 %v1634, 7
    %v1636 = vsub.s32 5, %v1635
    %v1637 = vrot.slane %v1619, %v1636
    %v1642 = vadd.f32 %v1522, %v1625
    %v1643 = vadd.f32 %v1523, %v1629
    %v1644 = vadd.f32 %v1524, %v1633
    %v1645 = vadd.f32 %v1525, %v1637
    %s1646 = sld [smem:[#allocation2 + $0x47]]
    %v1647 = vstv %s1646
    %v1648 = vmul.f32 %v1647, %v1434
    %v1649 = vmul.f32 %v1647, %v1435
    %v1652 = vlaneseq
    %v1653 = vshrl.u32 %v1652, 7
    %v1654 = vsub.s32 1, %v1653
    %v1655 = vrot.slane %v1648, %v1654
    %v1656 = vlaneseq
    %v1657 = vshrl.u32 %v1656, 7
    %v1658 = vsub.s32 5, %v1657
    %v1659 = vrot.slane %v1648, %v1658
    %v1660 = vlaneseq
    %v1661 = vshrl.u32 %v1660, 7
    %v1662 = vsub.s32 1, %v1661
    %v1663 = vrot.slane %v1649, %v1662
    %v1664 = vlaneseq
    %v1665 = vshrl.u32 %v1664, 7
    %v1666 = vsub.s32 5, %v1665
    %v1667 = vrot.slane %v1649, %v1666
    %v1672 = vadd.f32 %v1552, %v1655
    %v1673 = vadd.f32 %v1553, %v1659
    %v1674 = vadd.f32 %v1554, %v1663
    %v1675 = vadd.f32 %v1555, %v1667
    %s1676 = sld [smem:[#allocation2 + $0x48]]
    %v1677 = vstv %s1676
    %v1678 = vmul.f32 %v1677, %v1434
    %v1679 = vmul.f32 %v1677, %v1435
    %v1682 = vlaneseq
    %v1683 = vshrl.u32 %v1682, 7
    %v1684 = vsub.s32 2, %v1683
    %v1685 = vrot.slane %v1678, %v1684
    %v1686 = vlaneseq
    %v1687 = vshrl.u32 %v1686, 7
    %v1688 = vsub.s32 6, %v1687
    %v1689 = vrot.slane %v1678, %v1688
    %v1690 = vlaneseq
    %v1691 = vshrl.u32 %v1690, 7
    %v1692 = vsub.s32 2, %v1691
    %v1693 = vrot.slane %v1679, %v1692
    %v1694 = vlaneseq
    %v1695 = vshrl.u32 %v1694, 7
    %v1696 = vsub.s32 6, %v1695
    %v1697 = vrot.slane %v1679, %v1696
    %v1702 = vadd.f32 %v1582, %v1685
    %v1703 = vadd.f32 %v1583, %v1689
    %v1704 = vadd.f32 %v1584, %v1693
    %v1705 = vadd.f32 %v1585, %v1697
    %s1706 = sld [smem:[#allocation2 + $0x49]]
    %v1707 = vstv %s1706
    %v1708 = vmul.f32 %v1707, %v1434
    %v1709 = vmul.f32 %v1707, %v1435
    %v1712 = vlaneseq
    %v1713 = vshrl.u32 %v1712, 7
    %v1714 = vsub.s32 2, %v1713
    %v1715 = vrot.slane %v1708, %v1714
    %v1716 = vlaneseq
    %v1717 = vshrl.u32 %v1716, 7
    %v1718 = vsub.s32 6, %v1717
    %v1719 = vrot.slane %v1708, %v1718
    %v1720 = vlaneseq
    %v1721 = vshrl.u32 %v1720, 7
    %v1722 = vsub.s32 2, %v1721
    %v1723 = vrot.slane %v1709, %v1722
    %v1724 = vlaneseq
    %v1725 = vshrl.u32 %v1724, 7
    %v1726 = vsub.s32 6, %v1725
    %v1727 = vrot.slane %v1709, %v1726
    %v1732 = vadd.f32 %v1612, %v1715
    %v1733 = vadd.f32 %v1613, %v1719
    %v1734 = vadd.f32 %v1614, %v1723
    %v1735 = vadd.f32 %v1615, %v1727
    %s1736 = sld [smem:[#allocation2 + $0x4a]]
    %v1737 = vstv %s1736
    %v1738 = vmul.f32 %v1737, %v1434
    %v1739 = vmul.f32 %v1737, %v1435
    %v1742 = vlaneseq
    %v1743 = vshrl.u32 %v1742, 7
    %v1744 = vsub.s32 2, %v1743
    %v1745 = vrot.slane %v1738, %v1744
    %v1746 = vlaneseq
    %v1747 = vshrl.u32 %v1746, 7
    %v1748 = vsub.s32 6, %v1747
    %v1749 = vrot.slane %v1738, %v1748
    %v1750 = vlaneseq
    %v1751 = vshrl.u32 %v1750, 7
    %v1752 = vsub.s32 2, %v1751
    %v1753 = vrot.slane %v1739, %v1752
    %v1754 = vlaneseq
    %v1755 = vshrl.u32 %v1754, 7
    %v1756 = vsub.s32 6, %v1755
    %v1757 = vrot.slane %v1739, %v1756
    %v1762 = vadd.f32 %v1642, %v1745
    %v1763 = vadd.f32 %v1643, %v1749
    %v1764 = vadd.f32 %v1644, %v1753
    %v1765 = vadd.f32 %v1645, %v1757
    %s1766 = sld [smem:[#allocation2 + $0x4b]]
    %v1767 = vstv %s1766
    %v1768 = vmul.f32 %v1767, %v1434
    %v1769 = vmul.f32 %v1767, %v1435
    %v1772 = vlaneseq
    %v1773 = vshrl.u32 %v1772, 7
    %v1774 = vsub.s32 2, %v1773
    %v1775 = vrot.slane %v1768, %v1774
    %v1776 = vlaneseq
    %v1777 = vshrl.u32 %v1776, 7
    %v1778 = vsub.s32 6, %v1777
    %v1779 = vrot.slane %v1768, %v1778
    %v1780 = vlaneseq
    %v1781 = vshrl.u32 %v1780, 7
    %v1782 = vsub.s32 2, %v1781
    %v1783 = vrot.slane %v1769, %v1782
    %v1784 = vlaneseq
    %v1785 = vshrl.u32 %v1784, 7
    %v1786 = vsub.s32 6, %v1785
    %v1787 = vrot.slane %v1769, %v1786
    %v1792 = vadd.f32 %v1672, %v1775
    %v1793 = vadd.f32 %v1673, %v1779
    %v1794 = vadd.f32 %v1674, %v1783
    %v1795 = vadd.f32 %v1675, %v1787
    %s1796 = sld [smem:[#allocation2 + $0x4c]]
    %v1797 = vstv %s1796
    %v1798 = vmul.f32 %v1797, %v1434
    %v1799 = vmul.f32 %v1797, %v1435
    %v1802 = vlaneseq
    %v1803 = vshrl.u32 %v1802, 7
    %v1804 = vsub.s32 3, %v1803
    %v1805 = vrot.slane %v1798, %v1804
    %v1806 = vlaneseq
    %v1807 = vshrl.u32 %v1806, 7
    %v1808 = vsub.s32 7, %v1807
    %v1809 = vrot.slane %v1798, %v1808
    %v1810 = vlaneseq
    %v1811 = vshrl.u32 %v1810, 7
    %v1812 = vsub.s32 3, %v1811
    %v1813 = vrot.slane %v1799, %v1812
    %v1814 = vlaneseq
    %v1815 = vshrl.u32 %v1814, 7
    %v1816 = vsub.s32 7, %v1815
    %v1817 = vrot.slane %v1799, %v1816
    %v1822 = vadd.f32 %v1702, %v1805
    %v1823 = vadd.f32 %v1703, %v1809
    %v1824 = vadd.f32 %v1704, %v1813
    %v1825 = vadd.f32 %v1705, %v1817
    %s1826 = sld [smem:[#allocation2 + $0x4d]]
    %v1827 = vstv %s1826
    %v1828 = vmul.f32 %v1827, %v1434
    %v1829 = vmul.f32 %v1827, %v1435
    %v1832 = vlaneseq
    %v1833 = vshrl.u32 %v1832, 7
    %v1834 = vsub.s32 3, %v1833
    %v1835 = vrot.slane %v1828, %v1834
    %v1836 = vlaneseq
    %v1837 = vshrl.u32 %v1836, 7
    %v1838 = vsub.s32 7, %v1837
    %v1839 = vrot.slane %v1828, %v1838
    %v1840 = vlaneseq
    %v1841 = vshrl.u32 %v1840, 7
    %v1842 = vsub.s32 3, %v1841
    %v1843 = vrot.slane %v1829, %v1842
    %v1844 = vlaneseq
    %v1845 = vshrl.u32 %v1844, 7
    %v1846 = vsub.s32 7, %v1845
    %v1847 = vrot.slane %v1829, %v1846
    %v1852 = vadd.f32 %v1732, %v1835
    %v1853 = vadd.f32 %v1733, %v1839
    %v1854 = vadd.f32 %v1734, %v1843
    %v1855 = vadd.f32 %v1735, %v1847
    %s1856 = sld [smem:[#allocation2 + $0x4e]]
    %v1857 = vstv %s1856
    %v1858 = vmul.f32 %v1857, %v1434
    %v1859 = vmul.f32 %v1857, %v1435
    %v1862 = vlaneseq
    %v1863 = vshrl.u32 %v1862, 7
    %v1864 = vsub.s32 3, %v1863
    %v1865 = vrot.slane %v1858, %v1864
    %v1866 = vlaneseq
    %v1867 = vshrl.u32 %v1866, 7
    %v1868 = vsub.s32 7, %v1867
    %v1869 = vrot.slane %v1858, %v1868
    %v1870 = vlaneseq
    %v1871 = vshrl.u32 %v1870, 7
    %v1872 = vsub.s32 3, %v1871
    %v1873 = vrot.slane %v1859, %v1872
    %v1874 = vlaneseq
    %v1875 = vshrl.u32 %v1874, 7
    %v1876 = vsub.s32 7, %v1875
    %v1877 = vrot.slane %v1859, %v1876
    %v1882 = vadd.f32 %v1762, %v1865
    %v1883 = vadd.f32 %v1763, %v1869
    %v1884 = vadd.f32 %v1764, %v1873
    %v1885 = vadd.f32 %v1765, %v1877
    %s1886 = sld [smem:[#allocation2 + $0x4f]]
    %v1887 = vstv %s1886
    %v1888 = vmul.f32 %v1887, %v1434
    %v1889 = vmul.f32 %v1887, %v1435
    %v1892 = vlaneseq
    %v1893 = vshrl.u32 %v1892, 7
    %v1894 = vsub.s32 3, %v1893
    %v1895 = vrot.slane %v1888, %v1894
    %v1896 = vlaneseq
    %v1897 = vshrl.u32 %v1896, 7
    %v1898 = vsub.s32 7, %v1897
    %v1899 = vrot.slane %v1888, %v1898
    %v1900 = vlaneseq
    %v1901 = vshrl.u32 %v1900, 7
    %v1902 = vsub.s32 3, %v1901
    %v1903 = vrot.slane %v1889, %v1902
    %v1904 = vlaneseq
    %v1905 = vshrl.u32 %v1904, 7
    %v1906 = vsub.s32 7, %v1905
    %v1907 = vrot.slane %v1889, %v1906
    %v1912 = vadd.f32 %v1792, %v1895
    %v1913 = vadd.f32 %v1793, %v1899
    %v1914 = vadd.f32 %v1794, %v1903
    %v1915 = vadd.f32 %v1795, %v1907
    %s1916 = scalar_lea.vmem %s1, 5
    %v1917 = vld [vmem:[%s1916] ss:$8 sm:$0x3]
    %1918 = vrot.lane.b32.xlu0 %v54, 127
    %v1919 = vpop.permute.xlu0 %1918
    %1920 = vrot.lane.b32.xlu0 %v59, 127
    %v1921 = vpop.permute.xlu0 %1920
    %1922 = vrot.lane.b32.xlu0 %v55, 127
    %v1923 = vpop.permute.xlu0 %1922
    %1924 = vrot.lane.b32.xlu0 %v60, 127
    %v1925 = vpop.permute.xlu0 %1924
    %vm1926 = vcmask 1039360
    %v1927 = vsel %vm1926, %v1919, %v1921
    %v1928 = vsel %vm1926, %v1923, %v1925
    %v1935 = vsel %vm1926, %v1921, %v1919
    %v1936 = vsel %vm1926, %v1925, %v1923
    %v1938 = vlaneseq
    %v1939 = vshrl.u32 %v1938, 7
    %v1940 = vsub.s32 0, %v1939
    %v1941 = vrot.slane %v1917, %v1940
    %v1942 = vlaneseq
    %v1943 = vshrl.u32 %v1942, 7
    %v1944 = vsub.s32 1, %v1943
    %v1945 = vrot.slane %v1917, %v1944
    %v1948 = vmul.f32 %v1927, %v1941
    %v1949 = vmul.f32 %v1935, %v1945
    %v1950 = vmul.f32 %v1928, %v1941
    %v1951 = vmul.f32 %v1936, %v1945
    %s1952 = sld [smem:[#allocation2 + $0x50]]
    %v1953 = vstv %s1952
    %v1954 = vmul.f32 %v1953, %v1948
    %v1955 = vmul.f32 %v1953, %v1949
    %v1956 = vmul.f32 %v1953, %v1950
    %v1957 = vmul.f32 %v1953, %v1951
    %v1958 = vadd.f32 %v1822, %v1954
    %v1959 = vadd.f32 %v1823, %v1955
    %v1960 = vadd.f32 %v1824, %v1956
    %v1961 = vadd.f32 %v1825, %v1957
    %s1962 = sld [smem:[#allocation2 + $0x51]]
    %v1963 = vstv %s1962
    %v1964 = vmul.f32 %v1963, %v1948
    %v1965 = vmul.f32 %v1963, %v1949
    %v1966 = vmul.f32 %v1963, %v1950
    %v1967 = vmul.f32 %v1963, %v1951
    %v1968 = vadd.f32 %v1852, %v1964
    %v1969 = vadd.f32 %v1853, %v1965
    %v1970 = vadd.f32 %v1854, %v1966
    %v1971 = vadd.f32 %v1855, %v1967
    %s1972 = sld [smem:[#allocation2 + $0x52]]
    %v1973 = vstv %s1972
    %v1974 = vmul.f32 %v1973, %v1948
    %v1975 = vmul.f32 %v1973, %v1949
    %v1976 = vmul.f32 %v1973, %v1950
    %v1977 = vmul.f32 %v1973, %v1951
    %v1978 = vadd.f32 %v1882, %v1974
    %v1979 = vadd.f32 %v1883, %v1975
    %v1980 = vadd.f32 %v1884, %v1976
    %v1981 = vadd.f32 %v1885, %v1977
    %s1982 = sld [smem:[#allocation2 + $0x53]]
    %v1983 = vstv %s1982
    %v1984 = vmul.f32 %v1983, %v1948
    %v1985 = vmul.f32 %v1983, %v1949
    %v1986 = vmul.f32 %v1983, %v1950
    %v1987 = vmul.f32 %v1983, %v1951
    %v1988 = vadd.f32 %v1912, %v1984
    %v1989 = vadd.f32 %v1913, %v1985
    %v1990 = vadd.f32 %v1914, %v1986
    %v1991 = vadd.f32 %v1915, %v1987
    %s1992 = sld [smem:[#allocation2 + $0x54]]
    %v1993 = vstv %s1992
    %v1994 = vmul.f32 %v1993, %v1948
    %v1995 = vmul.f32 %v1993, %v1949
    %v1996 = vmul.f32 %v1993, %v1950
    %v1997 = vmul.f32 %v1993, %v1951
    %v2002 = vrot.slane %v1994, 1
    %v2003 = vrot.slane %v1995, 1
    %v2004 = vrot.slane %v1996, 1
    %v2005 = vrot.slane %v1997, 1
    %v2010 = vadd.f32 %v1958, %v2002
    %v2011 = vadd.f32 %v1959, %v2003
    %v2012 = vadd.f32 %v1960, %v2004
    %v2013 = vadd.f32 %v1961, %v2005
    %s2014 = sld [smem:[#allocation2 + $0x55]]
    %v2015 = vstv %s2014
    %v2016 = vmul.f32 %v2015, %v1948
    %v2017 = vmul.f32 %v2015, %v1949
    %v2018 = vmul.f32 %v2015, %v1950
    %v2019 = vmul.f32 %v2015, %v1951
    %v2024 = vrot.slane %v2016, 1
    %v2025 = vrot.slane %v2017, 1
    %v2026 = vrot.slane %v2018, 1
    %v2027 = vrot.slane %v2019, 1
    %v2032 = vadd.f32 %v1968, %v2024
    %v2033 = vadd.f32 %v1969, %v2025
    %v2034 = vadd.f32 %v1970, %v2026
    %v2035 = vadd.f32 %v1971, %v2027
    %s2036 = sld [smem:[#allocation2 + $0x56]]
    %v2037 = vstv %s2036
    %v2038 = vmul.f32 %v2037, %v1948
    %v2039 = vmul.f32 %v2037, %v1949
    %v2040 = vmul.f32 %v2037, %v1950
    %v2041 = vmul.f32 %v2037, %v1951
    %v2046 = vrot.slane %v2038, 1
    %v2047 = vrot.slane %v2039, 1
    %v2048 = vrot.slane %v2040, 1
    %v2049 = vrot.slane %v2041, 1
    %v2054 = vadd.f32 %v1978, %v2046
    %v2055 = vadd.f32 %v1979, %v2047
    %v2056 = vadd.f32 %v1980, %v2048
    %v2057 = vadd.f32 %v1981, %v2049
    %s2058 = sld [smem:[#allocation2 + $0x57]]
    %v2059 = vstv %s2058
    %v2060 = vmul.f32 %v2059, %v1948
    %v2061 = vmul.f32 %v2059, %v1949
    %v2062 = vmul.f32 %v2059, %v1950
    %v2063 = vmul.f32 %v2059, %v1951
    %v2068 = vrot.slane %v2060, 1
    %v2069 = vrot.slane %v2061, 1
    %v2070 = vrot.slane %v2062, 1
    %v2071 = vrot.slane %v2063, 1
    %v2076 = vadd.f32 %v1988, %v2068
    %v2077 = vadd.f32 %v1989, %v2069
    %v2078 = vadd.f32 %v1990, %v2070
    %v2079 = vadd.f32 %v1991, %v2071
    %s2080 = sld [smem:[#allocation2 + $0x58]]
    %v2081 = vstv %s2080
    %v2082 = vmul.f32 %v2081, %v1948
    %v2083 = vmul.f32 %v2081, %v1949
    %v2084 = vmul.f32 %v2081, %v1950
    %v2085 = vmul.f32 %v2081, %v1951
    %v2090 = vrot.slane %v2082, 2
    %v2091 = vrot.slane %v2083, 2
    %v2092 = vrot.slane %v2084, 2
    %v2093 = vrot.slane %v2085, 2
    %v2098 = vadd.f32 %v2010, %v2090
    %v2099 = vadd.f32 %v2011, %v2091
    %v2100 = vadd.f32 %v2012, %v2092
    %v2101 = vadd.f32 %v2013, %v2093
    %s2102 = sld [smem:[#allocation2 + $0x59]]
    %v2103 = vstv %s2102
    %v2104 = vmul.f32 %v2103, %v1948
    %v2105 = vmul.f32 %v2103, %v1949
    %v2106 = vmul.f32 %v2103, %v1950
    %v2107 = vmul.f32 %v2103, %v1951
    %v2112 = vrot.slane %v2104, 2
    %v2113 = vrot.slane %v2105, 2
    %v2114 = vrot.slane %v2106, 2
    %v2115 = vrot.slane %v2107, 2
    %v2120 = vadd.f32 %v2032, %v2112
    %v2121 = vadd.f32 %v2033, %v2113
    %v2122 = vadd.f32 %v2034, %v2114
    %v2123 = vadd.f32 %v2035, %v2115
    %s2124 = sld [smem:[#allocation2 + $0x5a]]
    %v2125 = vstv %s2124
    %v2126 = vmul.f32 %v2125, %v1948
    %v2127 = vmul.f32 %v2125, %v1949
    %v2128 = vmul.f32 %v2125, %v1950
    %v2129 = vmul.f32 %v2125, %v1951
    %v2134 = vrot.slane %v2126, 2
    %v2135 = vrot.slane %v2127, 2
    %v2136 = vrot.slane %v2128, 2
    %v2137 = vrot.slane %v2129, 2
    %v2142 = vadd.f32 %v2054, %v2134
    %v2143 = vadd.f32 %v2055, %v2135
    %v2144 = vadd.f32 %v2056, %v2136
    %v2145 = vadd.f32 %v2057, %v2137
    %s2146 = sld [smem:[#allocation2 + $0x5b]]
    %v2147 = vstv %s2146
    %v2148 = vmul.f32 %v2147, %v1948
    %v2149 = vmul.f32 %v2147, %v1949
    %v2150 = vmul.f32 %v2147, %v1950
    %v2151 = vmul.f32 %v2147, %v1951
    %v2156 = vrot.slane %v2148, 2
    %v2157 = vrot.slane %v2149, 2
    %v2158 = vrot.slane %v2150, 2
    %v2159 = vrot.slane %v2151, 2
    %v2164 = vadd.f32 %v2076, %v2156
    %v2165 = vadd.f32 %v2077, %v2157
    %v2166 = vadd.f32 %v2078, %v2158
    %v2167 = vadd.f32 %v2079, %v2159
    %s2168 = sld [smem:[#allocation2 + $0x5c]]
    %v2169 = vstv %s2168
    %v2170 = vmul.f32 %v2169, %v1948
    %v2171 = vmul.f32 %v2169, %v1949
    %v2172 = vmul.f32 %v2169, %v1950
    %v2173 = vmul.f32 %v2169, %v1951
    %v2178 = vrot.slane %v2170, 3
    %v2179 = vrot.slane %v2171, 3
    %v2180 = vrot.slane %v2172, 3
    %v2181 = vrot.slane %v2173, 3
    %v2186 = vadd.f32 %v2098, %v2178
    %v2187 = vadd.f32 %v2099, %v2179
    %v2188 = vadd.f32 %v2100, %v2180
    %v2189 = vadd.f32 %v2101, %v2181
    %s2190 = sld [smem:[#allocation2 + $0x5d]]
    %v2191 = vstv %s2190
    %v2192 = vmul.f32 %v2191, %v1948
    %v2193 = vmul.f32 %v2191, %v1949
    %v2194 = vmul.f32 %v2191, %v1950
    %v2195 = vmul.f32 %v2191, %v1951
    %v2200 = vrot.slane %v2192, 3
    %v2201 = vrot.slane %v2193, 3
    %v2202 = vrot.slane %v2194, 3
    %v2203 = vrot.slane %v2195, 3
    %v2208 = vadd.f32 %v2120, %v2200
    %v2209 = vadd.f32 %v2121, %v2201
    %v2210 = vadd.f32 %v2122, %v2202
    %v2211 = vadd.f32 %v2123, %v2203
    %s2212 = sld [smem:[#allocation2 + $0x5e]]
    %v2213 = vstv %s2212
    %v2214 = vmul.f32 %v2213, %v1948
    %v2215 = vmul.f32 %v2213, %v1949
    %v2216 = vmul.f32 %v2213, %v1950
    %v2217 = vmul.f32 %v2213, %v1951
    %v2222 = vrot.slane %v2214, 3
    %v2223 = vrot.slane %v2215, 3
    %v2224 = vrot.slane %v2216, 3
    %v2225 = vrot.slane %v2217, 3
    %v2230 = vadd.f32 %v2142, %v2222
    %v2231 = vadd.f32 %v2143, %v2223
    %v2232 = vadd.f32 %v2144, %v2224
    %v2233 = vadd.f32 %v2145, %v2225
    %s2234 = sld [smem:[#allocation2 + $0x5f]]
    %v2235 = vstv %s2234
    %v2236 = vmul.f32 %v2235, %v1948
    %v2237 = vmul.f32 %v2235, %v1949
    %v2238 = vmul.f32 %v2235, %v1950
    %v2239 = vmul.f32 %v2235, %v1951
    %v2244 = vrot.slane %v2236, 3
    %v2245 = vrot.slane %v2237, 3
    %v2246 = vrot.slane %v2238, 3
    %v2247 = vrot.slane %v2239, 3
    %v2252 = vadd.f32 %v2164, %v2244
    %v2253 = vadd.f32 %v2165, %v2245
    %v2254 = vadd.f32 %v2166, %v2246
    %v2255 = vadd.f32 %v2167, %v2247
    %s2256 = scalar_lea.vmem %s1, 6
    %v2257 = vld [vmem:[%s2256] ss:$8 sm:$0x3]
    %2258 = vrot.lane.b32.xlu0 %v54, 113
    %v2259 = vpop.permute.xlu0 %2258
    %2260 = vrot.lane.b32.xlu0 %v59, 113
    %v2261 = vpop.permute.xlu0 %2260
    %2262 = vrot.lane.b32.xlu0 %v55, 113
    %v2263 = vpop.permute.xlu0 %2262
    %2264 = vrot.lane.b32.xlu0 %v60, 113
    %v2265 = vpop.permute.xlu0 %2264
    %vm2266 = vcmask 924672
    %v2267 = vsel %vm2266, %v2259, %v2261
    %v2268 = vsel %vm2266, %v2263, %v2265
    %v2275 = vsel %vm2266, %v2261, %v2259
    %v2276 = vsel %vm2266, %v2265, %v2263
    %v2278 = vlaneseq
    %v2279 = vshrl.u32 %v2278, 7
    %v2280 = vsub.s32 0, %v2279
    %v2281 = vrot.slane %v2257, %v2280
    %v2282 = vlaneseq
    %v2283 = vshrl.u32 %v2282, 7
    %v2284 = vsub.s32 1, %v2283
    %v2285 = vrot.slane %v2257, %v2284
    %v2288 = vmul.f32 %v2267, %v2281
    %v2289 = vmul.f32 %v2275, %v2285
    %v2290 = vmul.f32 %v2268, %v2281
    %v2291 = vmul.f32 %v2276, %v2285
    %s2292 = sld [smem:[#allocation2 + $0x60]]
    %v2293 = vstv %s2292
    %v2294 = vmul.f32 %v2293, %v2288
    %v2295 = vmul.f32 %v2293, %v2289
    %v2296 = vmul.f32 %v2293, %v2290
    %v2297 = vmul.f32 %v2293, %v2291
    %v2298 = vadd.f32 %v2186, %v2294
    %v2299 = vadd.f32 %v2187, %v2295
    %v2300 = vadd.f32 %v2188, %v2296
    %v2301 = vadd.f32 %v2189, %v2297
    %s2302 = sld [smem:[#allocation2 + $0x61]]
    %v2303 = vstv %s2302
    %v2304 = vmul.f32 %v2303, %v2288
    %v2305 = vmul.f32 %v2303, %v2289
    %v2306 = vmul.f32 %v2303, %v2290
    %v2307 = vmul.f32 %v2303, %v2291
    %v2308 = vadd.f32 %v2208, %v2304
    %v2309 = vadd.f32 %v2209, %v2305
    %v2310 = vadd.f32 %v2210, %v2306
    %v2311 = vadd.f32 %v2211, %v2307
    %s2312 = sld [smem:[#allocation2 + $0x62]]
    %v2313 = vstv %s2312
    %v2314 = vmul.f32 %v2313, %v2288
    %v2315 = vmul.f32 %v2313, %v2289
    %v2316 = vmul.f32 %v2313, %v2290
    %v2317 = vmul.f32 %v2313, %v2291
    %v2318 = vadd.f32 %v2230, %v2314
    %v2319 = vadd.f32 %v2231, %v2315
    %v2320 = vadd.f32 %v2232, %v2316
    %v2321 = vadd.f32 %v2233, %v2317
    %s2322 = sld [smem:[#allocation2 + $0x63]]
    %v2323 = vstv %s2322
    %v2324 = vmul.f32 %v2323, %v2288
    %v2325 = vmul.f32 %v2323, %v2289
    %v2326 = vmul.f32 %v2323, %v2290
    %v2327 = vmul.f32 %v2323, %v2291
    %v2328 = vadd.f32 %v2252, %v2324
    %v2329 = vadd.f32 %v2253, %v2325
    %v2330 = vadd.f32 %v2254, %v2326
    %v2331 = vadd.f32 %v2255, %v2327
    %s2332 = sld [smem:[#allocation2 + $0x64]]
    %v2333 = vstv %s2332
    %v2334 = vmul.f32 %v2333, %v2288
    %v2335 = vmul.f32 %v2333, %v2289
    %v2336 = vmul.f32 %v2333, %v2290
    %v2337 = vmul.f32 %v2333, %v2291
    %v2342 = vrot.slane %v2334, 1
    %v2343 = vrot.slane %v2335, 1
    %v2344 = vrot.slane %v2336, 1
    %v2345 = vrot.slane %v2337, 1
    %v2350 = vadd.f32 %v2298, %v2342
    %v2351 = vadd.f32 %v2299, %v2343
    %v2352 = vadd.f32 %v2300, %v2344
    %v2353 = vadd.f32 %v2301, %v2345
    %s2354 = sld [smem:[#allocation2 + $0x65]]
    %v2355 = vstv %s2354
    %v2356 = vmul.f32 %v2355, %v2288
    %v2357 = vmul.f32 %v2355, %v2289
    %v2358 = vmul.f32 %v2355, %v2290
    %v2359 = vmul.f32 %v2355, %v2291
    %v2364 = vrot.slane %v2356, 1
    %v2365 = vrot.slane %v2357, 1
    %v2366 = vrot.slane %v2358, 1
    %v2367 = vrot.slane %v2359, 1
    %v2372 = vadd.f32 %v2308, %v2364
    %v2373 = vadd.f32 %v2309, %v2365
    %v2374 = vadd.f32 %v2310, %v2366
    %v2375 = vadd.f32 %v2311, %v2367
    %s2376 = sld [smem:[#allocation2 + $0x66]]
    %v2377 = vstv %s2376
    %v2378 = vmul.f32 %v2377, %v2288
    %v2379 = vmul.f32 %v2377, %v2289
    %v2380 = vmul.f32 %v2377, %v2290
    %v2381 = vmul.f32 %v2377, %v2291
    %v2386 = vrot.slane %v2378, 1
    %v2387 = vrot.slane %v2379, 1
    %v2388 = vrot.slane %v2380, 1
    %v2389 = vrot.slane %v2381, 1
    %v2394 = vadd.f32 %v2318, %v2386
    %v2395 = vadd.f32 %v2319, %v2387
    %v2396 = vadd.f32 %v2320, %v2388
    %v2397 = vadd.f32 %v2321, %v2389
    %s2398 = sld [smem:[#allocation2 + $0x67]]
    %v2399 = vstv %s2398
    %v2400 = vmul.f32 %v2399, %v2288
    %v2401 = vmul.f32 %v2399, %v2289
    %v2402 = vmul.f32 %v2399, %v2290
    %v2403 = vmul.f32 %v2399, %v2291
    %v2408 = vrot.slane %v2400, 1
    %v2409 = vrot.slane %v2401, 1
    %v2410 = vrot.slane %v2402, 1
    %v2411 = vrot.slane %v2403, 1
    %v2416 = vadd.f32 %v2328, %v2408
    %v2417 = vadd.f32 %v2329, %v2409
    %v2418 = vadd.f32 %v2330, %v2410
    %v2419 = vadd.f32 %v2331, %v2411
    %s2420 = sld [smem:[#allocation2 + $0x68]]
    %v2421 = vstv %s2420
    %v2422 = vmul.f32 %v2421, %v2288
    %v2423 = vmul.f32 %v2421, %v2289
    %v2424 = vmul.f32 %v2421, %v2290
    %v2425 = vmul.f32 %v2421, %v2291
    %v2430 = vrot.slane %v2422, 2
    %v2431 = vrot.slane %v2423, 2
    %v2432 = vrot.slane %v2424, 2
    %v2433 = vrot.slane %v2425, 2
    %v2438 = vadd.f32 %v2350, %v2430
    %v2439 = vadd.f32 %v2351, %v2431
    %v2440 = vadd.f32 %v2352, %v2432
    %v2441 = vadd.f32 %v2353, %v2433
    %s2442 = sld [smem:[#allocation2 + $0x69]]
    %v2443 = vstv %s2442
    %v2444 = vmul.f32 %v2443, %v2288
    %v2445 = vmul.f32 %v2443, %v2289
    %v2446 = vmul.f32 %v2443, %v2290
    %v2447 = vmul.f32 %v2443, %v2291
    %v2452 = vrot.slane %v2444, 2
    %v2453 = vrot.slane %v2445, 2
    %v2454 = vrot.slane %v2446, 2
    %v2455 = vrot.slane %v2447, 2
    %v2460 = vadd.f32 %v2372, %v2452
    %v2461 = vadd.f32 %v2373, %v2453
    %v2462 = vadd.f32 %v2374, %v2454
    %v2463 = vadd.f32 %v2375, %v2455
    %s2464 = sld [smem:[#allocation2 + $0x6a]]
    %v2465 = vstv %s2464
    %v2466 = vmul.f32 %v2465, %v2288
    %v2467 = vmul.f32 %v2465, %v2289
    %v2468 = vmul.f32 %v2465, %v2290
    %v2469 = vmul.f32 %v2465, %v2291
    %v2474 = vrot.slane %v2466, 2
    %v2475 = vrot.slane %v2467, 2
    %v2476 = vrot.slane %v2468, 2
    %v2477 = vrot.slane %v2469, 2
    %v2482 = vadd.f32 %v2394, %v2474
    %v2483 = vadd.f32 %v2395, %v2475
    %v2484 = vadd.f32 %v2396, %v2476
    %v2485 = vadd.f32 %v2397, %v2477
    %s2486 = sld [smem:[#allocation2 + $0x6b]]
    %v2487 = vstv %s2486
    %v2488 = vmul.f32 %v2487, %v2288
    %v2489 = vmul.f32 %v2487, %v2289
    %v2490 = vmul.f32 %v2487, %v2290
    %v2491 = vmul.f32 %v2487, %v2291
    %v2496 = vrot.slane %v2488, 2
    %v2497 = vrot.slane %v2489, 2
    %v2498 = vrot.slane %v2490, 2
    %v2499 = vrot.slane %v2491, 2
    %v2504 = vadd.f32 %v2416, %v2496
    %v2505 = vadd.f32 %v2417, %v2497
    %v2506 = vadd.f32 %v2418, %v2498
    %v2507 = vadd.f32 %v2419, %v2499
    %s2508 = sld [smem:[#allocation2 + $0x6c]]
    %v2509 = vstv %s2508
    %v2510 = vmul.f32 %v2509, %v2288
    %v2511 = vmul.f32 %v2509, %v2289
    %v2512 = vmul.f32 %v2509, %v2290
    %v2513 = vmul.f32 %v2509, %v2291
    %v2518 = vrot.slane %v2510, 3
    %v2519 = vrot.slane %v2511, 3
    %v2520 = vrot.slane %v2512, 3
    %v2521 = vrot.slane %v2513, 3
    %v2526 = vadd.f32 %v2438, %v2518
    %v2527 = vadd.f32 %v2439, %v2519
    %v2528 = vadd.f32 %v2440, %v2520
    %v2529 = vadd.f32 %v2441, %v2521
    %s2530 = sld [smem:[#allocation2 + $0x6d]]
    %v2531 = vstv %s2530
    %v2532 = vmul.f32 %v2531, %v2288
    %v2533 = vmul.f32 %v2531, %v2289
    %v2534 = vmul.f32 %v2531, %v2290
    %v2535 = vmul.f32 %v2531, %v2291
    %v2540 = vrot.slane %v2532, 3
    %v2541 = vrot.slane %v2533, 3
    %v2542 = vrot.slane %v2534, 3
    %v2543 = vrot.slane %v2535, 3
    %v2548 = vadd.f32 %v2460, %v2540
    %v2549 = vadd.f32 %v2461, %v2541
    %v2550 = vadd.f32 %v2462, %v2542
    %v2551 = vadd.f32 %v2463, %v2543
    %s2552 = sld [smem:[#allocation2 + $0x6e]]
    %v2553 = vstv %s2552
    %v2554 = vmul.f32 %v2553, %v2288
    %v2555 = vmul.f32 %v2553, %v2289
    %v2556 = vmul.f32 %v2553, %v2290
    %v2557 = vmul.f32 %v2553, %v2291
    %v2562 = vrot.slane %v2554, 3
    %v2563 = vrot.slane %v2555, 3
    %v2564 = vrot.slane %v2556, 3
    %v2565 = vrot.slane %v2557, 3
    %v2570 = vadd.f32 %v2482, %v2562
    %v2571 = vadd.f32 %v2483, %v2563
    %v2572 = vadd.f32 %v2484, %v2564
    %v2573 = vadd.f32 %v2485, %v2565
    %s2574 = sld [smem:[#allocation2 + $0x6f]]
    %v2575 = vstv %s2574
    %v2576 = vmul.f32 %v2575, %v2288
    %v2577 = vmul.f32 %v2575, %v2289
    %v2578 = vmul.f32 %v2575, %v2290
    %v2579 = vmul.f32 %v2575, %v2291
    %v2584 = vrot.slane %v2576, 3
    %v2585 = vrot.slane %v2577, 3
    %v2586 = vrot.slane %v2578, 3
    %v2587 = vrot.slane %v2579, 3
    %v2592 = vadd.f32 %v2504, %v2584
    %v2593 = vadd.f32 %v2505, %v2585
    %v2594 = vadd.f32 %v2506, %v2586
    %v2595 = vadd.f32 %v2507, %v2587
    %s2596 = scalar_lea.vmem %s1, 7
    %v2597 = vld [vmem:[%s2596] ss:$8 sm:$0x3]
    %2598 = vrot.lane.b32.xlu0 %v54, 112
    %v2599 = vpop.permute.xlu0 %2598
    %2600 = vrot.lane.b32.xlu0 %v59, 112
    %v2601 = vpop.permute.xlu0 %2600
    %2602 = vrot.lane.b32.xlu0 %v55, 112
    %v2603 = vpop.permute.xlu0 %2602
    %2604 = vrot.lane.b32.xlu0 %v60, 112
    %v2605 = vpop.permute.xlu0 %2604
    %vm2606 = vcmask 916480
    %v2607 = vsel %vm2606, %v2599, %v2601
    %v2608 = vsel %vm2606, %v2603, %v2605
    %v2615 = vsel %vm2606, %v2601, %v2599
    %v2616 = vsel %vm2606, %v2605, %v2603
    %v2618 = vlaneseq
    %v2619 = vshrl.u32 %v2618, 7
    %v2620 = vsub.s32 0, %v2619
    %v2621 = vrot.slane %v2597, %v2620
    %v2622 = vlaneseq
    %v2623 = vshrl.u32 %v2622, 7
    %v2624 = vsub.s32 1, %v2623
    %v2625 = vrot.slane %v2597, %v2624
    %v2628 = vmul.f32 %v2607, %v2621
    %v2629 = vmul.f32 %v2615, %v2625
    %v2630 = vmul.f32 %v2608, %v2621
    %v2631 = vmul.f32 %v2616, %v2625
    %s2632 = sld [smem:[#allocation2 + $0x70]]
    %v2633 = vstv %s2632
    %v2634 = vmul.f32 %v2633, %v2628
    %v2635 = vmul.f32 %v2633, %v2629
    %v2636 = vmul.f32 %v2633, %v2630
    %v2637 = vmul.f32 %v2633, %v2631
    %v2638 = vadd.f32 %v2526, %v2634
    %v2639 = vadd.f32 %v2527, %v2635
    %v2640 = vadd.f32 %v2528, %v2636
    %v2641 = vadd.f32 %v2529, %v2637
    %s2642 = sld [smem:[#allocation2 + $0x71]]
    %v2643 = vstv %s2642
    %v2644 = vmul.f32 %v2643, %v2628
    %v2645 = vmul.f32 %v2643, %v2629
    %v2646 = vmul.f32 %v2643, %v2630
    %v2647 = vmul.f32 %v2643, %v2631
    %v2648 = vadd.f32 %v2548, %v2644
    %v2649 = vadd.f32 %v2549, %v2645
    %v2650 = vadd.f32 %v2550, %v2646
    %v2651 = vadd.f32 %v2551, %v2647
    %s2652 = sld [smem:[#allocation2 + $0x72]]
    %v2653 = vstv %s2652
    %v2654 = vmul.f32 %v2653, %v2628
    %v2655 = vmul.f32 %v2653, %v2629
    %v2656 = vmul.f32 %v2653, %v2630
    %v2657 = vmul.f32 %v2653, %v2631
    %v2658 = vadd.f32 %v2570, %v2654
    %v2659 = vadd.f32 %v2571, %v2655
    %v2660 = vadd.f32 %v2572, %v2656
    %v2661 = vadd.f32 %v2573, %v2657
    %s2662 = sld [smem:[#allocation2 + $0x73]]
    %v2663 = vstv %s2662
    %v2664 = vmul.f32 %v2663, %v2628
    %v2665 = vmul.f32 %v2663, %v2629
    %v2666 = vmul.f32 %v2663, %v2630
    %v2667 = vmul.f32 %v2663, %v2631
    %v2668 = vadd.f32 %v2592, %v2664
    %v2669 = vadd.f32 %v2593, %v2665
    %v2670 = vadd.f32 %v2594, %v2666
    %v2671 = vadd.f32 %v2595, %v2667
    %s2672 = sld [smem:[#allocation2 + $0x74]]
    %v2673 = vstv %s2672
    %v2674 = vmul.f32 %v2673, %v2628
    %v2675 = vmul.f32 %v2673, %v2629
    %v2676 = vmul.f32 %v2673, %v2630
    %v2677 = vmul.f32 %v2673, %v2631
    %v2682 = vrot.slane %v2674, 1
    %v2683 = vrot.slane %v2675, 1
    %v2684 = vrot.slane %v2676, 1
    %v2685 = vrot.slane %v2677, 1
    %v2690 = vadd.f32 %v2638, %v2682
    %v2691 = vadd.f32 %v2639, %v2683
    %v2692 = vadd.f32 %v2640, %v2684
    %v2693 = vadd.f32 %v2641, %v2685
    %s2694 = sld [smem:[#allocation2 + $0x75]]
    %v2695 = vstv %s2694
    %v2696 = vmul.f32 %v2695, %v2628
    %v2697 = vmul.f32 %v2695, %v2629
    %v2698 = vmul.f32 %v2695, %v2630
    %v2699 = vmul.f32 %v2695, %v2631
    %v2704 = vrot.slane %v2696, 1
    %v2705 = vrot.slane %v2697, 1
    %v2706 = vrot.slane %v2698, 1
    %v2707 = vrot.slane %v2699, 1
    %v2712 = vadd.f32 %v2648, %v2704
    %v2713 = vadd.f32 %v2649, %v2705
    %v2714 = vadd.f32 %v2650, %v2706
    %v2715 = vadd.f32 %v2651, %v2707
    %s2716 = sld [smem:[#allocation2 + $0x76]]
    %v2717 = vstv %s2716
    %v2718 = vmul.f32 %v2717, %v2628
    %v2719 = vmul.f32 %v2717, %v2629
    %v2720 = vmul.f32 %v2717, %v2630
    %v2721 = vmul.f32 %v2717, %v2631
    %v2726 = vrot.slane %v2718, 1
    %v2727 = vrot.slane %v2719, 1
    %v2728 = vrot.slane %v2720, 1
    %v2729 = vrot.slane %v2721, 1
    %v2734 = vadd.f32 %v2658, %v2726
    %v2735 = vadd.f32 %v2659, %v2727
    %v2736 = vadd.f32 %v2660, %v2728
    %v2737 = vadd.f32 %v2661, %v2729
    %s2738 = sld [smem:[#allocation2 + $0x77]]
    %v2739 = vstv %s2738
    %v2740 = vmul.f32 %v2739, %v2628
    %v2741 = vmul.f32 %v2739, %v2629
    %v2742 = vmul.f32 %v2739, %v2630
    %v2743 = vmul.f32 %v2739, %v2631
    %v2748 = vrot.slane %v2740, 1
    %v2749 = vrot.slane %v2741, 1
    %v2750 = vrot.slane %v2742, 1
    %v2751 = vrot.slane %v2743, 1
    %v2756 = vadd.f32 %v2668, %v2748
    %v2757 = vadd.f32 %v2669, %v2749
    %v2758 = vadd.f32 %v2670, %v2750
    %v2759 = vadd.f32 %v2671, %v2751
    %s2760 = sld [smem:[#allocation2 + $0x78]]
    %v2761 = vstv %s2760
    %v2762 = vmul.f32 %v2761, %v2628
    %v2763 = vmul.f32 %v2761, %v2629
    %v2764 = vmul.f32 %v2761, %v2630
    %v2765 = vmul.f32 %v2761, %v2631
    %v2770 = vrot.slane %v2762, 2
    %v2771 = vrot.slane %v2763, 2
    %v2772 = vrot.slane %v2764, 2
    %v2773 = vrot.slane %v2765, 2
    %v2778 = vadd.f32 %v2690, %v2770
    %v2779 = vadd.f32 %v2691, %v2771
    %v2780 = vadd.f32 %v2692, %v2772
    %v2781 = vadd.f32 %v2693, %v2773
    %s2782 = sld [smem:[#allocation2 + $0x79]]
    %v2783 = vstv %s2782
    %v2784 = vmul.f32 %v2783, %v2628
    %v2785 = vmul.f32 %v2783, %v2629
    %v2786 = vmul.f32 %v2783, %v2630
    %v2787 = vmul.f32 %v2783, %v2631
    %v2792 = vrot.slane %v2784, 2
    %v2793 = vrot.slane %v2785, 2
    %v2794 = vrot.slane %v2786, 2
    %v2795 = vrot.slane %v2787, 2
    %v2800 = vadd.f32 %v2712, %v2792
    %v2801 = vadd.f32 %v2713, %v2793
    %v2802 = vadd.f32 %v2714, %v2794
    %v2803 = vadd.f32 %v2715, %v2795
    %s2804 = sld [smem:[#allocation2 + $0x7a]]
    %v2805 = vstv %s2804
    %v2806 = vmul.f32 %v2805, %v2628
    %v2807 = vmul.f32 %v2805, %v2629
    %v2808 = vmul.f32 %v2805, %v2630
    %v2809 = vmul.f32 %v2805, %v2631
    %v2814 = vrot.slane %v2806, 2
    %v2815 = vrot.slane %v2807, 2
    %v2816 = vrot.slane %v2808, 2
    %v2817 = vrot.slane %v2809, 2
    %v2822 = vadd.f32 %v2734, %v2814
    %v2823 = vadd.f32 %v2735, %v2815
    %v2824 = vadd.f32 %v2736, %v2816
    %v2825 = vadd.f32 %v2737, %v2817
    %s2826 = sld [smem:[#allocation2 + $0x7b]]
    %v2827 = vstv %s2826
    %v2828 = vmul.f32 %v2827, %v2628
    %v2829 = vmul.f32 %v2827, %v2629
    %v2830 = vmul.f32 %v2827, %v2630
    %v2831 = vmul.f32 %v2827, %v2631
    %v2836 = vrot.slane %v2828, 2
    %v2837 = vrot.slane %v2829, 2
    %v2838 = vrot.slane %v2830, 2
    %v2839 = vrot.slane %v2831, 2
    %v2844 = vadd.f32 %v2756, %v2836
    %v2845 = vadd.f32 %v2757, %v2837
    %v2846 = vadd.f32 %v2758, %v2838
    %v2847 = vadd.f32 %v2759, %v2839
    %s2848 = sld [smem:[#allocation2 + $0x7c]]
    %v2849 = vstv %s2848
    %v2850 = vmul.f32 %v2849, %v2628
    %v2851 = vmul.f32 %v2849, %v2629
    %v2852 = vmul.f32 %v2849, %v2630
    %v2853 = vmul.f32 %v2849, %v2631
    %v2858 = vrot.slane %v2850, 3
    %v2859 = vrot.slane %v2851, 3
    %v2860 = vrot.slane %v2852, 3
    %v2861 = vrot.slane %v2853, 3
    %v2866 = vadd.f32 %v2778, %v2858
    %v2867 = vadd.f32 %v2779, %v2859
    %v2868 = vadd.f32 %v2780, %v2860
    %v2869 = vadd.f32 %v2781, %v2861
    %s2870 = sld [smem:[#allocation2 + $0x7d]]
    %v2871 = vstv %s2870
    %v2872 = vmul.f32 %v2871, %v2628
    %v2873 = vmul.f32 %v2871, %v2629
    %v2874 = vmul.f32 %v2871, %v2630
    %v2875 = vmul.f32 %v2871, %v2631
    %v2880 = vrot.slane %v2872, 3
    %v2881 = vrot.slane %v2873, 3
    %v2882 = vrot.slane %v2874, 3
    %v2883 = vrot.slane %v2875, 3
    %v2888 = vadd.f32 %v2800, %v2880
    %v2889 = vadd.f32 %v2801, %v2881
    %v2890 = vadd.f32 %v2802, %v2882
    %v2891 = vadd.f32 %v2803, %v2883
    %s2892 = sld [smem:[#allocation2 + $0x7e]]
    %v2893 = vstv %s2892
    %v2894 = vmul.f32 %v2893, %v2628
    %v2895 = vmul.f32 %v2893, %v2629
    %v2896 = vmul.f32 %v2893, %v2630
    %v2897 = vmul.f32 %v2893, %v2631
    %v2902 = vrot.slane %v2894, 3
    %v2903 = vrot.slane %v2895, 3
    %v2904 = vrot.slane %v2896, 3
    %v2905 = vrot.slane %v2897, 3
    %v2910 = vadd.f32 %v2822, %v2902
    %v2911 = vadd.f32 %v2823, %v2903
    %v2912 = vadd.f32 %v2824, %v2904
    %v2913 = vadd.f32 %v2825, %v2905
    %s2914 = sld [smem:[#allocation2 + $0x7f]]
    %v2915 = vstv %s2914
    %v2916 = vmul.f32 %v2915, %v2628
    %v2917 = vmul.f32 %v2915, %v2629
    %v2918 = vmul.f32 %v2915, %v2630
    %v2919 = vmul.f32 %v2915, %v2631
    %v2924 = vrot.slane %v2916, 3
    %v2925 = vrot.slane %v2917, 3
    %v2926 = vrot.slane %v2918, 3
    %v2927 = vrot.slane %v2919, 3
    %v2932 = vadd.f32 %v2844, %v2924
    %v2933 = vadd.f32 %v2845, %v2925
    %v2934 = vadd.f32 %v2846, %v2926
    %v2935 = vadd.f32 %v2847, %v2927
    %s2936 = scalar_lea.vmem %s1, 16
    %v2937 = vld [vmem:[%s2936] ss:$8 sm:$0x3]
    %2938 = vrot.lane.b32.xlu0 %v54, 111
    %v2939 = vpop.permute.xlu0 %2938
    %2940 = vrot.lane.b32.xlu0 %v59, 111
    %v2941 = vpop.permute.xlu0 %2940
    %2942 = vrot.lane.b32.xlu0 %v55, 111
    %v2943 = vpop.permute.xlu0 %2942
    %2944 = vrot.lane.b32.xlu0 %v60, 111
    %v2945 = vpop.permute.xlu0 %2944
    %vm2946 = vcmask 908288
    %v2947 = vsel %vm2946, %v2939, %v2941
    %v2948 = vsel %vm2946, %v2943, %v2945
    %v2955 = vsel %vm2946, %v2941, %v2939
    %v2956 = vsel %vm2946, %v2945, %v2943
    %v2958 = vlaneseq
    %v2959 = vshrl.u32 %v2958, 7
    %v2960 = vsub.s32 0, %v2959
    %v2961 = vrot.slane %v2937, %v2960
    %v2962 = vlaneseq
    %v2963 = vshrl.u32 %v2962, 7
    %v2964 = vsub.s32 1, %v2963
    %v2965 = vrot.slane %v2937, %v2964
    %v2968 = vmul.f32 %v2947, %v2961
    %v2969 = vmul.f32 %v2955, %v2965
    %v2970 = vmul.f32 %v2948, %v2961
    %v2971 = vmul.f32 %v2956, %v2965
    %s2972 = sld [smem:[#allocation2 + $0x80]]
    %v2973 = vstv %s2972
    %v2974 = vmul.f32 %v2973, %v2968
    %v2975 = vmul.f32 %v2973, %v2969
    %v2976 = vmul.f32 %v2973, %v2970
    %v2977 = vmul.f32 %v2973, %v2971
    %v2978 = vadd.f32 %v2866, %v2974
    %v2979 = vadd.f32 %v2867, %v2975
    %v2980 = vadd.f32 %v2868, %v2976
    %v2981 = vadd.f32 %v2869, %v2977
    %s2982 = sld [smem:[#allocation2 + $0x81]]
    %v2983 = vstv %s2982
    %v2984 = vmul.f32 %v2983, %v2968
    %v2985 = vmul.f32 %v2983, %v2969
    %v2986 = vmul.f32 %v2983, %v2970
    %v2987 = vmul.f32 %v2983, %v2971
    %v2988 = vadd.f32 %v2888, %v2984
    %v2989 = vadd.f32 %v2889, %v2985
    %v2990 = vadd.f32 %v2890, %v2986
    %v2991 = vadd.f32 %v2891, %v2987
    %s2992 = sld [smem:[#allocation2 + $0x82]]
    %v2993 = vstv %s2992
    %v2994 = vmul.f32 %v2993, %v2968
    %v2995 = vmul.f32 %v2993, %v2969
    %v2996 = vmul.f32 %v2993, %v2970
    %v2997 = vmul.f32 %v2993, %v2971
    %v2998 = vadd.f32 %v2910, %v2994
    %v2999 = vadd.f32 %v2911, %v2995
    %v3000 = vadd.f32 %v2912, %v2996
    %v3001 = vadd.f32 %v2913, %v2997
    %s3002 = sld [smem:[#allocation2 + $0x83]]
    %v3003 = vstv %s3002
    %v3004 = vmul.f32 %v3003, %v2968
    %v3005 = vmul.f32 %v3003, %v2969
    %v3006 = vmul.f32 %v3003, %v2970
    %v3007 = vmul.f32 %v3003, %v2971
    %v3008 = vadd.f32 %v2932, %v3004
    %v3009 = vadd.f32 %v2933, %v3005
    %v3010 = vadd.f32 %v2934, %v3006
    %v3011 = vadd.f32 %v2935, %v3007
    %s3012 = sld [smem:[#allocation2 + $0x84]]
    %v3013 = vstv %s3012
    %v3014 = vmul.f32 %v3013, %v2968
    %v3015 = vmul.f32 %v3013, %v2969
    %v3016 = vmul.f32 %v3013, %v2970
    %v3017 = vmul.f32 %v3013, %v2971
    %v3022 = vrot.slane %v3014, 1
    %v3023 = vrot.slane %v3015, 1
    %v3024 = vrot.slane %v3016, 1
    %v3025 = vrot.slane %v3017, 1
    %v3030 = vadd.f32 %v2978, %v3022
    %v3031 = vadd.f32 %v2979, %v3023
    %v3032 = vadd.f32 %v2980, %v3024
    %v3033 = vadd.f32 %v2981, %v3025
    %s3034 = sld [smem:[#allocation2 + $0x85]]
    %v3035 = vstv %s3034
    %v3036 = vmul.f32 %v3035, %v2968
    %v3037 = vmul.f32 %v3035, %v2969
    %v3038 = vmul.f32 %v3035, %v2970
    %v3039 = vmul.f32 %v3035, %v2971
    %v3044 = vrot.slane %v3036, 1
    %v3045 = vrot.slane %v3037, 1
    %v3046 = vrot.slane %v3038, 1
    %v3047 = vrot.slane %v3039, 1
    %v3052 = vadd.f32 %v2988, %v3044
    %v3053 = vadd.f32 %v2989, %v3045
    %v3054 = vadd.f32 %v2990, %v3046
    %v3055 = vadd.f32 %v2991, %v3047
    %s3056 = sld [smem:[#allocation2 + $0x86]]
    %v3057 = vstv %s3056
    %v3058 = vmul.f32 %v3057, %v2968
    %v3059 = vmul.f32 %v3057, %v2969
    %v3060 = vmul.f32 %v3057, %v2970
    %v3061 = vmul.f32 %v3057, %v2971
    %v3066 = vrot.slane %v3058, 1
    %v3067 = vrot.slane %v3059, 1
    %v3068 = vrot.slane %v3060, 1
    %v3069 = vrot.slane %v3061, 1
    %v3074 = vadd.f32 %v2998, %v3066
    %v3075 = vadd.f32 %v2999, %v3067
    %v3076 = vadd.f32 %v3000, %v3068
    %v3077 = vadd.f32 %v3001, %v3069
    %s3078 = sld [smem:[#allocation2 + $0x87]]
    %v3079 = vstv %s3078
    %v3080 = vmul.f32 %v3079, %v2968
    %v3081 = vmul.f32 %v3079, %v2969
    %v3082 = vmul.f32 %v3079, %v2970
    %v3083 = vmul.f32 %v3079, %v2971
    %v3088 = vrot.slane %v3080, 1
    %v3089 = vrot.slane %v3081, 1
    %v3090 = vrot.slane %v3082, 1
    %v3091 = vrot.slane %v3083, 1
    %v3096 = vadd.f32 %v3008, %v3088
    %v3097 = vadd.f32 %v3009, %v3089
    %v3098 = vadd.f32 %v3010, %v3090
    %v3099 = vadd.f32 %v3011, %v3091
    %s3100 = sld [smem:[#allocation2 + $0x88]]
    %v3101 = vstv %s3100
    %v3102 = vmul.f32 %v3101, %v2968
    %v3103 = vmul.f32 %v3101, %v2969
    %v3104 = vmul.f32 %v3101, %v2970
    %v3105 = vmul.f32 %v3101, %v2971
    %v3110 = vrot.slane %v3102, 2
    %v3111 = vrot.slane %v3103, 2
    %v3112 = vrot.slane %v3104, 2
    %v3113 = vrot.slane %v3105, 2
    %v3118 = vadd.f32 %v3030, %v3110
    %v3119 = vadd.f32 %v3031, %v3111
    %v3120 = vadd.f32 %v3032, %v3112
    %v3121 = vadd.f32 %v3033, %v3113
    %s3122 = sld [smem:[#allocation2 + $0x89]]
    %v3123 = vstv %s3122
    %v3124 = vmul.f32 %v3123, %v2968
    %v3125 = vmul.f32 %v3123, %v2969
    %v3126 = vmul.f32 %v3123, %v2970
    %v3127 = vmul.f32 %v3123, %v2971
    %v3132 = vrot.slane %v3124, 2
    %v3133 = vrot.slane %v3125, 2
    %v3134 = vrot.slane %v3126, 2
    %v3135 = vrot.slane %v3127, 2
    %v3140 = vadd.f32 %v3052, %v3132
    %v3141 = vadd.f32 %v3053, %v3133
    %v3142 = vadd.f32 %v3054, %v3134
    %v3143 = vadd.f32 %v3055, %v3135
    %s3144 = sld [smem:[#allocation2 + $0x8a]]
    %v3145 = vstv %s3144
    %v3146 = vmul.f32 %v3145, %v2968
    %v3147 = vmul.f32 %v3145, %v2969
    %v3148 = vmul.f32 %v3145, %v2970
    %v3149 = vmul.f32 %v3145, %v2971
    %v3154 = vrot.slane %v3146, 2
    %v3155 = vrot.slane %v3147, 2
    %v3156 = vrot.slane %v3148, 2
    %v3157 = vrot.slane %v3149, 2
    %v3162 = vadd.f32 %v3074, %v3154
    %v3163 = vadd.f32 %v3075, %v3155
    %v3164 = vadd.f32 %v3076, %v3156
    %v3165 = vadd.f32 %v3077, %v3157
    %s3166 = sld [smem:[#allocation2 + $0x8b]]
    %v3167 = vstv %s3166
    %v3168 = vmul.f32 %v3167, %v2968
    %v3169 = vmul.f32 %v3167, %v2969
    %v3170 = vmul.f32 %v3167, %v2970
    %v3171 = vmul.f32 %v3167, %v2971
    %v3176 = vrot.slane %v3168, 2
    %v3177 = vrot.slane %v3169, 2
    %v3178 = vrot.slane %v3170, 2
    %v3179 = vrot.slane %v3171, 2
    %v3184 = vadd.f32 %v3096, %v3176
    %v3185 = vadd.f32 %v3097, %v3177
    %v3186 = vadd.f32 %v3098, %v3178
    %v3187 = vadd.f32 %v3099, %v3179
    %s3188 = sld [smem:[#allocation2 + $0x8c]]
    %v3189 = vstv %s3188
    %v3190 = vmul.f32 %v3189, %v2968
    %v3191 = vmul.f32 %v3189, %v2969
    %v3192 = vmul.f32 %v3189, %v2970
    %v3193 = vmul.f32 %v3189, %v2971
    %v3198 = vrot.slane %v3190, 3
    %v3199 = vrot.slane %v3191, 3
    %v3200 = vrot.slane %v3192, 3
    %v3201 = vrot.slane %v3193, 3
    %v3206 = vadd.f32 %v3118, %v3198
    %v3207 = vadd.f32 %v3119, %v3199
    %v3208 = vadd.f32 %v3120, %v3200
    %v3209 = vadd.f32 %v3121, %v3201
    %s3210 = sld [smem:[#allocation2 + $0x8d]]
    %v3211 = vstv %s3210
    %v3212 = vmul.f32 %v3211, %v2968
    %v3213 = vmul.f32 %v3211, %v2969
    %v3214 = vmul.f32 %v3211, %v2970
    %v3215 = vmul.f32 %v3211, %v2971
    %v3220 = vrot.slane %v3212, 3
    %v3221 = vrot.slane %v3213, 3
    %v3222 = vrot.slane %v3214, 3
    %v3223 = vrot.slane %v3215, 3
    %v3228 = vadd.f32 %v3140, %v3220
    %v3229 = vadd.f32 %v3141, %v3221
    %v3230 = vadd.f32 %v3142, %v3222
    %v3231 = vadd.f32 %v3143, %v3223
    %s3232 = sld [smem:[#allocation2 + $0x8e]]
    %v3233 = vstv %s3232
    %v3234 = vmul.f32 %v3233, %v2968
    %v3235 = vmul.f32 %v3233, %v2969
    %v3236 = vmul.f32 %v3233, %v2970
    %v3237 = vmul.f32 %v3233, %v2971
    %v3242 = vrot.slane %v3234, 3
    %v3243 = vrot.slane %v3235, 3
    %v3244 = vrot.slane %v3236, 3
    %v3245 = vrot.slane %v3237, 3
    %v3250 = vadd.f32 %v3162, %v3242
    %v3251 = vadd.f32 %v3163, %v3243
    %v3252 = vadd.f32 %v3164, %v3244
    %v3253 = vadd.f32 %v3165, %v3245
    %s3254 = sld [smem:[#allocation2 + $0x8f]]
    %v3255 = vstv %s3254
    %v3256 = vmul.f32 %v3255, %v2968
    %v3257 = vmul.f32 %v3255, %v2969
    %v3258 = vmul.f32 %v3255, %v2970
    %v3259 = vmul.f32 %v3255, %v2971
    %v3264 = vrot.slane %v3256, 3
    %v3265 = vrot.slane %v3257, 3
    %v3266 = vrot.slane %v3258, 3
    %v3267 = vrot.slane %v3259, 3
    %v3272 = vadd.f32 %v3184, %v3264
    %v3273 = vadd.f32 %v3185, %v3265
    %v3274 = vadd.f32 %v3186, %v3266
    %v3275 = vadd.f32 %v3187, %v3267
    %v3280 = vrot.slane %v3228, 7
    %v3281 = vrot.slane %v3229, 7
    %v3282 = vrot.slane %v3230, 7
    %v3283 = vrot.slane %v3231, 7
    %v3292 = vrot.slane %v3250, 6
    %v3293 = vrot.slane %v3251, 6
    %v3294 = vrot.slane %v3252, 6
    %v3295 = vrot.slane %v3253, 6
    %v3304 = vrot.slane %v3272, 5
    %v3305 = vrot.slane %v3273, 5
    %v3306 = vrot.slane %v3274, 5
    %v3307 = vrot.slane %v3275, 5
    %vm3312 = vcmask 1040384
    %v3313 = vsel %vm3312, %v3206, %v3280
    %v3314 = vsel %vm3312, %v3207, %v3281
    %v3315 = vsel %vm3312, %v3208, %v3282
    %v3316 = vsel %vm3312, %v3209, %v3283
    %vm3317 = vcmask 1041408
    %v3318 = vsel %vm3317, %v3313, %v3292
    %v3319 = vsel %vm3317, %v3314, %v3293
    %v3320 = vsel %vm3317, %v3315, %v3294
    %v3321 = vsel %vm3317, %v3316, %v3295
    %vm3322 = vcmask 1042432
    %v3323 = vsel %vm3322, %v3318, %v3304
    %v3324 = vsel %vm3322, %v3319, %v3305
    %v3325 = vsel %vm3322, %v3320, %v3306
    %v3326 = vsel %vm3322, %v3321, %v3307
    %vm3327 = vcmask 1043456
    %v3328 = vsel %vm3327, %v3323, 0.0
    %v3329 = vsel %vm3327, %v3324, 0.0
    %v3330 = vadd.f32 %v3328, %v3329
    %3331 = vadd.xlane.f32.xlu0 %v3330
    %v3332 = vpop.xlane.xlu0 %3331
    %v3333 = vsel %vm3327, %v3325, 0.0
    %v3334 = vsel %vm3327, %v3326, 0.0
    %v3335 = vadd.f32 %v3333, %v3334
    %3336 = vadd.xlane.f32.xlu0 %v3335
    %v3337 = vpop.xlane.xlu0 %3336
    %v3338 = vsel %vm3327, %v3332, 0.0
    %v3339 = vsel %vm3327, %v3337, 0.0
    %v3340 = vadd.f32 %v3338, %v3339
    %v3341 = vmul.f32 %v3323, %v3323
    %v3342 = vmul.f32 %v3324, %v3324
    %v3343 = vmul.f32 %v3325, %v3325
    %v3344 = vmul.f32 %v3326, %v3326
    %v3345 = vsel %vm3327, %v3341, 0.0
    %v3346 = vsel %vm3327, %v3342, 0.0
    %v3347 = vadd.f32 %v3345, %v3346
    %3348 = vadd.xlane.f32.xlu0 %v3347
    %v3349 = vpop.xlane.xlu0 %3348
    %v3350 = vsel %vm3327, %v3343, 0.0
    %v3351 = vsel %vm3327, %v3344, 0.0
    %v3352 = vadd.f32 %v3350, %v3351
    %3353 = vadd.xlane.f32.xlu0 %v3352
    %v3354 = vpop.xlane.xlu0 %3353
    %v3355 = vsel %vm3327, %v3349, 0.0
    %v3356 = vsel %vm3327, %v3354, 0.0
    %v3357 = vadd.f32 %v3355, %v3356
    %v3358 = vmul.f32 %v3340, 0.001953125
    %v3359 = vmul.f32 %v3357, 0.001953125
    %v3360 = vmul.f32 %v3358, %v3358
    %v3361 = vsub.f32 %v3359, %v3360
    %v3362 = vld [vmem:[%s3] sm:$0xf]
    %v3363 = vadd.f32 %v3361, 1e-05
    %v3364 = vrsqrt.pop %v3363
    %v3365 = vmul.f32 %v3362, %v3364
    %v3366 = vld [vmem:[%s4] sm:$0xf]
    %v3367 = vmul.f32 %v3358, %v3365
    %v3368 = vsub.f32 %v3366, %v3367
    %3370 = vset.pattern.permute.xlu0 0
    %3371 = vperm.xlu0 %3370, %v3365
    %v3372 = vpop.permute.xlu0 %3371
    %v3374 = vmul.f32 %v3323, %v3372
    %v3375 = vmul.f32 %v3324, %v3372
    %v3376 = vmul.f32 %v3325, %v3372
    %v3377 = vmul.f32 %v3326, %v3372
    %3379 = vset.pattern.permute.xlu0 0
    %3380 = vperm.xlu0 %3379, %v3368
    %v3381 = vpop.permute.xlu0 %3380
    %v3383 = vadd.f32 %v3374, %v3381
    %v3384 = vadd.f32 %v3375, %v3381
    %v3385 = vadd.f32 %v3376, %v3381
    %v3386 = vadd.f32 %v3377, %v3381
    %vm3387 = vcmp.ge.f32.partialorder %v3383, 0.0
    %vm3388 = vcmp.ge.f32.partialorder %v3384, 0.0
    %vm3389 = vcmp.ge.f32.partialorder %v3385, 0.0
    %vm3390 = vcmp.ge.f32.partialorder %v3386, 0.0
    %v3391 = vmul.f32 %v3383, 0.2
    %v3392 = vmul.f32 %v3384, 0.2
    %v3393 = vmul.f32 %v3385, 0.2
    %v3394 = vmul.f32 %v3386, 0.2
    %v3395 = vsel %vm3387, %v3383, %v3391
    %v3396 = vsel %vm3388, %v3384, %v3392
    %v3397 = vsel %vm3389, %v3385, %v3393
    %v3398 = vsel %vm3390, %v3386, %v3394
    %3401 = vrot.lane.b32.xlu0 %v3396, 17
    %v3402 = vpop.permute.xlu0 %3401
    %3403 = vrot.lane.b32.xlu0 %v3398, 17
    %v3404 = vpop.permute.xlu0 %3403
    %3409 = vrot.lane.b32.xlu0 %v3395, 17
    %v3410 = vpop.permute.xlu0 %3409
    %3411 = vrot.lane.b32.xlu0 %v3397, 17
    %v3412 = vpop.permute.xlu0 %3411
    %v3413 = vsel %vm71, %v3410, %v3402
    %v3414 = vsel %vm71, %v3412, %v3404
    %v3419 = vsel %vm71, %v3402, %v3410
    %v3420 = vsel %vm71, %v3404, %v3412
    %v3421 = vmul.f32 %v3419, %v84
    %v3422 = vmul.f32 %v3413, %v88
    %v3423 = vmul.f32 %v3420, %v84
    %v3424 = vmul.f32 %v3414, %v88
    %s3425 = sld [smem:[#allocation4]]
    %v3426 = vstv %s3425
    %v3427 = vmul.f32 %v3426, %v3421
    %v3428 = vmul.f32 %v3426, %v3422
    %v3429 = vmul.f32 %v3426, %v3423
    %v3430 = vmul.f32 %v3426, %v3424
    %v3431 = vadd.f32 %v3427, 0.0
    %v3432 = vadd.f32 %v3428, 0.0
    %v3433 = vadd.f32 %v3429, 0.0
    %v3434 = vadd.f32 %v3430, 0.0
    %s3435 = sld [smem:[#allocation4 + $0x1]]
    %v3436 = vstv %s3435
    %v3437 = vmul.f32 %v3436, %v3421
    %v3438 = vmul.f32 %v3436, %v3422
    %v3439 = vmul.f32 %v3436, %v3423
    %v3440 = vmul.f32 %v3436, %v3424
    %v3441 = vadd.f32 %v3437, 0.0
    %v3442 = vadd.f32 %v3438, 0.0
    %v3443 = vadd.f32 %v3439, 0.0
    %v3444 = vadd.f32 %v3440, 0.0
    %s3445 = sld [smem:[#allocation4 + $0x2]]
    %v3446 = vstv %s3445
    %v3447 = vmul.f32 %v3446, %v3421
    %v3448 = vmul.f32 %v3446, %v3422
    %v3449 = vmul.f32 %v3446, %v3423
    %v3450 = vmul.f32 %v3446, %v3424
    %v3451 = vadd.f32 %v3447, 0.0
    %v3452 = vadd.f32 %v3448, 0.0
    %v3453 = vadd.f32 %v3449, 0.0
    %v3454 = vadd.f32 %v3450, 0.0
    %s3455 = sld [smem:[#allocation4 + $0x3]]
    %v3456 = vstv %s3455
    %v3457 = vmul.f32 %v3456, %v3421
    %v3458 = vmul.f32 %v3456, %v3422
    %v3459 = vmul.f32 %v3456, %v3423
    %v3460 = vmul.f32 %v3456, %v3424
    %v3461 = vadd.f32 %v3457, 0.0
    %v3462 = vadd.f32 %v3458, 0.0
    %v3463 = vadd.f32 %v3459, 0.0
    %v3464 = vadd.f32 %v3460, 0.0
    %s3465 = sld [smem:[#allocation4 + $0x4]]
    %v3466 = vstv %s3465
    %v3467 = vmul.f32 %v3466, %v3421
    %v3468 = vmul.f32 %v3466, %v3422
    %v3469 = vmul.f32 %v3466, %v3423
    %v3470 = vmul.f32 %v3466, %v3424
    %v3475 = vrot.slane %v3467, 1
    %v3476 = vrot.slane %v3468, 1
    %v3477 = vrot.slane %v3469, 1
    %v3478 = vrot.slane %v3470, 1
    %v3483 = vadd.f32 %v3431, %v3475
    %v3484 = vadd.f32 %v3432, %v3476
    %v3485 = vadd.f32 %v3433, %v3477
    %v3486 = vadd.f32 %v3434, %v3478
    %s3487 = sld [smem:[#allocation4 + $0x5]]
    %v3488 = vstv %s3487
    %v3489 = vmul.f32 %v3488, %v3421
    %v3490 = vmul.f32 %v3488, %v3422
    %v3491 = vmul.f32 %v3488, %v3423
    %v3492 = vmul.f32 %v3488, %v3424
    %v3497 = vrot.slane %v3489, 1
    %v3498 = vrot.slane %v3490, 1
    %v3499 = vrot.slane %v3491, 1
    %v3500 = vrot.slane %v3492, 1
    %v3505 = vadd.f32 %v3441, %v3497
    %v3506 = vadd.f32 %v3442, %v3498
    %v3507 = vadd.f32 %v3443, %v3499
    %v3508 = vadd.f32 %v3444, %v3500
    %s3509 = sld [smem:[#allocation4 + $0x6]]
    %v3510 = vstv %s3509
    %v3511 = vmul.f32 %v3510, %v3421
    %v3512 = vmul.f32 %v3510, %v3422
    %v3513 = vmul.f32 %v3510, %v3423
    %v3514 = vmul.f32 %v3510, %v3424
    %v3519 = vrot.slane %v3511, 1
    %v3520 = vrot.slane %v3512, 1
    %v3521 = vrot.slane %v3513, 1
    %v3522 = vrot.slane %v3514, 1
    %v3527 = vadd.f32 %v3451, %v3519
    %v3528 = vadd.f32 %v3452, %v3520
    %v3529 = vadd.f32 %v3453, %v3521
    %v3530 = vadd.f32 %v3454, %v3522
    %s3531 = sld [smem:[#allocation4 + $0x7]]
    %v3532 = vstv %s3531
    %v3533 = vmul.f32 %v3532, %v3421
    %v3534 = vmul.f32 %v3532, %v3422
    %v3535 = vmul.f32 %v3532, %v3423
    %v3536 = vmul.f32 %v3532, %v3424
    %v3541 = vrot.slane %v3533, 1
    %v3542 = vrot.slane %v3534, 1
    %v3543 = vrot.slane %v3535, 1
    %v3544 = vrot.slane %v3536, 1
    %v3549 = vadd.f32 %v3461, %v3541
    %v3550 = vadd.f32 %v3462, %v3542
    %v3551 = vadd.f32 %v3463, %v3543
    %v3552 = vadd.f32 %v3464, %v3544
    %s3553 = sld [smem:[#allocation4 + $0x8]]
    %v3554 = vstv %s3553
    %v3555 = vmul.f32 %v3554, %v3421
    %v3556 = vmul.f32 %v3554, %v3422
    %v3557 = vmul.f32 %v3554, %v3423
    %v3558 = vmul.f32 %v3554, %v3424
    %v3563 = vrot.slane %v3555, 2
    %v3564 = vrot.slane %v3556, 2
    %v3565 = vrot.slane %v3557, 2
    %v3566 = vrot.slane %v3558, 2
    %v3571 = vadd.f32 %v3483, %v3563
    %v3572 = vadd.f32 %v3484, %v3564
    %v3573 = vadd.f32 %v3485, %v3565
    %v3574 = vadd.f32 %v3486, %v3566
    %s3575 = sld [smem:[#allocation4 + $0x9]]
    %v3576 = vstv %s3575
    %v3577 = vmul.f32 %v3576, %v3421
    %v3578 = vmul.f32 %v3576, %v3422
    %v3579 = vmul.f32 %v3576, %v3423
    %v3580 = vmul.f32 %v3576, %v3424
    %v3585 = vrot.slane %v3577, 2
    %v3586 = vrot.slane %v3578, 2
    %v3587 = vrot.slane %v3579, 2
    %v3588 = vrot.slane %v3580, 2
    %v3593 = vadd.f32 %v3505, %v3585
    %v3594 = vadd.f32 %v3506, %v3586
    %v3595 = vadd.f32 %v3507, %v3587
    %v3596 = vadd.f32 %v3508, %v3588
    %s3597 = sld [smem:[#allocation4 + $0xa]]
    %v3598 = vstv %s3597
    %v3599 = vmul.f32 %v3598, %v3421
    %v3600 = vmul.f32 %v3598, %v3422
    %v3601 = vmul.f32 %v3598, %v3423
    %v3602 = vmul.f32 %v3598, %v3424
    %v3607 = vrot.slane %v3599, 2
    %v3608 = vrot.slane %v3600, 2
    %v3609 = vrot.slane %v3601, 2
    %v3610 = vrot.slane %v3602, 2
    %v3615 = vadd.f32 %v3527, %v3607
    %v3616 = vadd.f32 %v3528, %v3608
    %v3617 = vadd.f32 %v3529, %v3609
    %v3618 = vadd.f32 %v3530, %v3610
    %s3619 = sld [smem:[#allocation4 + $0xb]]
    %v3620 = vstv %s3619
    %v3621 = vmul.f32 %v3620, %v3421
    %v3622 = vmul.f32 %v3620, %v3422
    %v3623 = vmul.f32 %v3620, %v3423
    %v3624 = vmul.f32 %v3620, %v3424
    %v3629 = vrot.slane %v3621, 2
    %v3630 = vrot.slane %v3622, 2
    %v3631 = vrot.slane %v3623, 2
    %v3632 = vrot.slane %v3624, 2
    %v3637 = vadd.f32 %v3549, %v3629
    %v3638 = vadd.f32 %v3550, %v3630
    %v3639 = vadd.f32 %v3551, %v3631
    %v3640 = vadd.f32 %v3552, %v3632
    %s3641 = sld [smem:[#allocation4 + $0xc]]
    %v3642 = vstv %s3641
    %v3643 = vmul.f32 %v3642, %v3421
    %v3644 = vmul.f32 %v3642, %v3422
    %v3645 = vmul.f32 %v3642, %v3423
    %v3646 = vmul.f32 %v3642, %v3424
    %v3651 = vrot.slane %v3643, 3
    %v3652 = vrot.slane %v3644, 3
    %v3653 = vrot.slane %v3645, 3
    %v3654 = vrot.slane %v3646, 3
    %v3659 = vadd.f32 %v3571, %v3651
    %v3660 = vadd.f32 %v3572, %v3652
    %v3661 = vadd.f32 %v3573, %v3653
    %v3662 = vadd.f32 %v3574, %v3654
    %s3663 = sld [smem:[#allocation4 + $0xd]]
    %v3664 = vstv %s3663
    %v3665 = vmul.f32 %v3664, %v3421
    %v3666 = vmul.f32 %v3664, %v3422
    %v3667 = vmul.f32 %v3664, %v3423
    %v3668 = vmul.f32 %v3664, %v3424
    %v3673 = vrot.slane %v3665, 3
    %v3674 = vrot.slane %v3666, 3
    %v3675 = vrot.slane %v3667, 3
    %v3676 = vrot.slane %v3668, 3
    %v3681 = vadd.f32 %v3593, %v3673
    %v3682 = vadd.f32 %v3594, %v3674
    %v3683 = vadd.f32 %v3595, %v3675
    %v3684 = vadd.f32 %v3596, %v3676
    %s3685 = sld [smem:[#allocation4 + $0xe]]
    %v3686 = vstv %s3685
    %v3687 = vmul.f32 %v3686, %v3421
    %v3688 = vmul.f32 %v3686, %v3422
    %v3689 = vmul.f32 %v3686, %v3423
    %v3690 = vmul.f32 %v3686, %v3424
    %v3695 = vrot.slane %v3687, 3
    %v3696 = vrot.slane %v3688, 3
    %v3697 = vrot.slane %v3689, 3
    %v3698 = vrot.slane %v3690, 3
    %v3703 = vadd.f32 %v3615, %v3695
    %v3704 = vadd.f32 %v3616, %v3696
    %v3705 = vadd.f32 %v3617, %v3697
    %v3706 = vadd.f32 %v3618, %v3698
    %s3707 = sld [smem:[#allocation4 + $0xf]]
    %v3708 = vstv %s3707
    %v3709 = vmul.f32 %v3708, %v3421
    %v3710 = vmul.f32 %v3708, %v3422
    %v3711 = vmul.f32 %v3708, %v3423
    %v3712 = vmul.f32 %v3708, %v3424
    %v3717 = vrot.slane %v3709, 3
    %v3718 = vrot.slane %v3710, 3
    %v3719 = vrot.slane %v3711, 3
    %v3720 = vrot.slane %v3712, 3
    %v3725 = vadd.f32 %v3637, %v3717
    %v3726 = vadd.f32 %v3638, %v3718
    %v3727 = vadd.f32 %v3639, %v3719
    %v3728 = vadd.f32 %v3640, %v3720
    %3729 = vrot.lane.b32.xlu0 %v3396, 16
    %v3730 = vpop.permute.xlu0 %3729
    %3731 = vrot.lane.b32.xlu0 %v3398, 16
    %v3732 = vpop.permute.xlu0 %3731
    %3735 = vrot.lane.b32.xlu0 %v3395, 16
    %v3736 = vpop.permute.xlu0 %3735
    %3737 = vrot.lane.b32.xlu0 %v3397, 16
    %v3738 = vpop.permute.xlu0 %3737
    %v3739 = vsel %vm411, %v3736, %v3730
    %v3740 = vsel %vm411, %v3738, %v3732
    %v3745 = vsel %vm411, %v3730, %v3736
    %v3746 = vsel %vm411, %v3732, %v3738
    %v3747 = vmul.f32 %v3745, %v424
    %v3748 = vmul.f32 %v3739, %v428
    %v3749 = vmul.f32 %v3746, %v424
    %v3750 = vmul.f32 %v3740, %v428
    %s3751 = sld [smem:[#allocation4 + $0x10]]
    %v3752 = vstv %s3751
    %v3753 = vmul.f32 %v3752, %v3747
    %v3754 = vmul.f32 %v3752, %v3748
    %v3755 = vmul.f32 %v3752, %v3749
    %v3756 = vmul.f32 %v3752, %v3750
    %v3757 = vadd.f32 %v3659, %v3753
    %v3758 = vadd.f32 %v3660, %v3754
    %v3759 = vadd.f32 %v3661, %v3755
    %v3760 = vadd.f32 %v3662, %v3756
    %s3761 = sld [smem:[#allocation4 + $0x11]]
    %v3762 = vstv %s3761
    %v3763 = vmul.f32 %v3762, %v3747
    %v3764 = vmul.f32 %v3762, %v3748
    %v3765 = vmul.f32 %v3762, %v3749
    %v3766 = vmul.f32 %v3762, %v3750
    %v3767 = vadd.f32 %v3681, %v3763
    %v3768 = vadd.f32 %v3682, %v3764
    %v3769 = vadd.f32 %v3683, %v3765
    %v3770 = vadd.f32 %v3684, %v3766
    %s3771 = sld [smem:[#allocation4 + $0x12]]
    %v3772 = vstv %s3771
    %v3773 = vmul.f32 %v3772, %v3747
    %v3774 = vmul.f32 %v3772, %v3748
    %v3775 = vmul.f32 %v3772, %v3749
    %v3776 = vmul.f32 %v3772, %v3750
    %v3777 = vadd.f32 %v3703, %v3773
    %v3778 = vadd.f32 %v3704, %v3774
    %v3779 = vadd.f32 %v3705, %v3775
    %v3780 = vadd.f32 %v3706, %v3776
    %s3781 = sld [smem:[#allocation4 + $0x13]]
    %v3782 = vstv %s3781
    %v3783 = vmul.f32 %v3782, %v3747
    %v3784 = vmul.f32 %v3782, %v3748
    %v3785 = vmul.f32 %v3782, %v3749
    %v3786 = vmul.f32 %v3782, %v3750
    %v3787 = vadd.f32 %v3725, %v3783
    %v3788 = vadd.f32 %v3726, %v3784
    %v3789 = vadd.f32 %v3727, %v3785
    %v3790 = vadd.f32 %v3728, %v3786
    %s3791 = sld [smem:[#allocation4 + $0x14]]
    %v3792 = vstv %s3791
    %v3793 = vmul.f32 %v3792, %v3747
    %v3794 = vmul.f32 %v3792, %v3748
    %v3795 = vmul.f32 %v3792, %v3749
    %v3796 = vmul.f32 %v3792, %v3750
    %v3801 = vrot.slane %v3793, 1
    %v3802 = vrot.slane %v3794, 1
    %v3803 = vrot.slane %v3795, 1
    %v3804 = vrot.slane %v3796, 1
    %v3809 = vadd.f32 %v3757, %v3801
    %v3810 = vadd.f32 %v3758, %v3802
    %v3811 = vadd.f32 %v3759, %v3803
    %v3812 = vadd.f32 %v3760, %v3804
    %s3813 = sld [smem:[#allocation4 + $0x15]]
    %v3814 = vstv %s3813
    %v3815 = vmul.f32 %v3814, %v3747
    %v3816 = vmul.f32 %v3814, %v3748
    %v3817 = vmul.f32 %v3814, %v3749
    %v3818 = vmul.f32 %v3814, %v3750
    %v3823 = vrot.slane %v3815, 1
    %v3824 = vrot.slane %v3816, 1
    %v3825 = vrot.slane %v3817, 1
    %v3826 = vrot.slane %v3818, 1
    %v3831 = vadd.f32 %v3767, %v3823
    %v3832 = vadd.f32 %v3768, %v3824
    %v3833 = vadd.f32 %v3769, %v3825
    %v3834 = vadd.f32 %v3770, %v3826
    %s3835 = sld [smem:[#allocation4 + $0x16]]
    %v3836 = vstv %s3835
    %v3837 = vmul.f32 %v3836, %v3747
    %v3838 = vmul.f32 %v3836, %v3748
    %v3839 = vmul.f32 %v3836, %v3749
    %v3840 = vmul.f32 %v3836, %v3750
    %v3845 = vrot.slane %v3837, 1
    %v3846 = vrot.slane %v3838, 1
    %v3847 = vrot.slane %v3839, 1
    %v3848 = vrot.slane %v3840, 1
    %v3853 = vadd.f32 %v3777, %v3845
    %v3854 = vadd.f32 %v3778, %v3846
    %v3855 = vadd.f32 %v3779, %v3847
    %v3856 = vadd.f32 %v3780, %v3848
    %s3857 = sld [smem:[#allocation4 + $0x17]]
    %v3858 = vstv %s3857
    %v3859 = vmul.f32 %v3858, %v3747
    %v3860 = vmul.f32 %v3858, %v3748
    %v3861 = vmul.f32 %v3858, %v3749
    %v3862 = vmul.f32 %v3858, %v3750
    %v3867 = vrot.slane %v3859, 1
    %v3868 = vrot.slane %v3860, 1
    %v3869 = vrot.slane %v3861, 1
    %v3870 = vrot.slane %v3862, 1
    %v3875 = vadd.f32 %v3787, %v3867
    %v3876 = vadd.f32 %v3788, %v3868
    %v3877 = vadd.f32 %v3789, %v3869
    %v3878 = vadd.f32 %v3790, %v3870
    %s3879 = sld [smem:[#allocation4 + $0x18]]
    %v3880 = vstv %s3879
    %v3881 = vmul.f32 %v3880, %v3747
    %v3882 = vmul.f32 %v3880, %v3748
    %v3883 = vmul.f32 %v3880, %v3749
    %v3884 = vmul.f32 %v3880, %v3750
    %v3889 = vrot.slane %v3881, 2
    %v3890 = vrot.slane %v3882, 2
    %v3891 = vrot.slane %v3883, 2
    %v3892 = vrot.slane %v3884, 2
    %v3897 = vadd.f32 %v3809, %v3889
    %v3898 = vadd.f32 %v3810, %v3890
    %v3899 = vadd.f32 %v3811, %v3891
    %v3900 = vadd.f32 %v3812, %v3892
    %s3901 = sld [smem:[#allocation4 + $0x19]]
    %v3902 = vstv %s3901
    %v3903 = vmul.f32 %v3902, %v3747
    %v3904 = vmul.f32 %v3902, %v3748
    %v3905 = vmul.f32 %v3902, %v3749
    %v3906 = vmul.f32 %v3902, %v3750
    %v3911 = vrot.slane %v3903, 2
    %v3912 = vrot.slane %v3904, 2
    %v3913 = vrot.slane %v3905, 2
    %v3914 = vrot.slane %v3906, 2
    %v3919 = vadd.f32 %v3831, %v3911
    %v3920 = vadd.f32 %v3832, %v3912
    %v3921 = vadd.f32 %v3833, %v3913
    %v3922 = vadd.f32 %v3834, %v3914
    %s3923 = sld [smem:[#allocation4 + $0x1a]]
    %v3924 = vstv %s3923
    %v3925 = vmul.f32 %v3924, %v3747
    %v3926 = vmul.f32 %v3924, %v3748
    %v3927 = vmul.f32 %v3924, %v3749
    %v3928 = vmul.f32 %v3924, %v3750
    %v3933 = vrot.slane %v3925, 2
    %v3934 = vrot.slane %v3926, 2
    %v3935 = vrot.slane %v3927, 2
    %v3936 = vrot.slane %v3928, 2
    %v3941 = vadd.f32 %v3853, %v3933
    %v3942 = vadd.f32 %v3854, %v3934
    %v3943 = vadd.f32 %v3855, %v3935
    %v3944 = vadd.f32 %v3856, %v3936
    %s3945 = sld [smem:[#allocation4 + $0x1b]]
    %v3946 = vstv %s3945
    %v3947 = vmul.f32 %v3946, %v3747
    %v3948 = vmul.f32 %v3946, %v3748
    %v3949 = vmul.f32 %v3946, %v3749
    %v3950 = vmul.f32 %v3946, %v3750
    %v3955 = vrot.slane %v3947, 2
    %v3956 = vrot.slane %v3948, 2
    %v3957 = vrot.slane %v3949, 2
    %v3958 = vrot.slane %v3950, 2
    %v3963 = vadd.f32 %v3875, %v3955
    %v3964 = vadd.f32 %v3876, %v3956
    %v3965 = vadd.f32 %v3877, %v3957
    %v3966 = vadd.f32 %v3878, %v3958
    %s3967 = sld [smem:[#allocation4 + $0x1c]]
    %v3968 = vstv %s3967
    %v3969 = vmul.f32 %v3968, %v3747
    %v3970 = vmul.f32 %v3968, %v3748
    %v3971 = vmul.f32 %v3968, %v3749
    %v3972 = vmul.f32 %v3968, %v3750
    %v3977 = vrot.slane %v3969, 3
    %v3978 = vrot.slane %v3970, 3
    %v3979 = vrot.slane %v3971, 3
    %v3980 = vrot.slane %v3972, 3
    %v3985 = vadd.f32 %v3897, %v3977
    %v3986 = vadd.f32 %v3898, %v3978
    %v3987 = vadd.f32 %v3899, %v3979
    %v3988 = vadd.f32 %v3900, %v3980
    %s3989 = sld [smem:[#allocation4 + $0x1d]]
    %v3990 = vstv %s3989
    %v3991 = vmul.f32 %v3990, %v3747
    %v3992 = vmul.f32 %v3990, %v3748
    %v3993 = vmul.f32 %v3990, %v3749
    %v3994 = vmul.f32 %v3990, %v3750
    %v3999 = vrot.slane %v3991, 3
    %v4000 = vrot.slane %v3992, 3
    %v4001 = vrot.slane %v3993, 3
    %v4002 = vrot.slane %v3994, 3
    %v4007 = vadd.f32 %v3919, %v3999
    %v4008 = vadd.f32 %v3920, %v4000
    %v4009 = vadd.f32 %v3921, %v4001
    %v4010 = vadd.f32 %v3922, %v4002
    %s4011 = sld [smem:[#allocation4 + $0x1e]]
    %v4012 = vstv %s4011
    %v4013 = vmul.f32 %v4012, %v3747
    %v4014 = vmul.f32 %v4012, %v3748
    %v4015 = vmul.f32 %v4012, %v3749
    %v4016 = vmul.f32 %v4012, %v3750
    %v4021 = vrot.slane %v4013, 3
    %v4022 = vrot.slane %v4014, 3
    %v4023 = vrot.slane %v4015, 3
    %v4024 = vrot.slane %v4016, 3
    %v4029 = vadd.f32 %v3941, %v4021
    %v4030 = vadd.f32 %v3942, %v4022
    %v4031 = vadd.f32 %v3943, %v4023
    %v4032 = vadd.f32 %v3944, %v4024
    %s4033 = sld [smem:[#allocation4 + $0x1f]]
    %v4034 = vstv %s4033
    %v4035 = vmul.f32 %v4034, %v3747
    %v4036 = vmul.f32 %v4034, %v3748
    %v4037 = vmul.f32 %v4034, %v3749
    %v4038 = vmul.f32 %v4034, %v3750
    %v4043 = vrot.slane %v4035, 3
    %v4044 = vrot.slane %v4036, 3
    %v4045 = vrot.slane %v4037, 3
    %v4046 = vrot.slane %v4038, 3
    %v4051 = vadd.f32 %v3963, %v4043
    %v4052 = vadd.f32 %v3964, %v4044
    %v4053 = vadd.f32 %v3965, %v4045
    %v4054 = vadd.f32 %v3966, %v4046
    %4055 = vrot.lane.b32.xlu0 %v3396, 15
    %v4056 = vpop.permute.xlu0 %4055
    %4057 = vrot.lane.b32.xlu0 %v3398, 15
    %v4058 = vpop.permute.xlu0 %4057
    %4061 = vrot.lane.b32.xlu0 %v3395, 15
    %v4062 = vpop.permute.xlu0 %4061
    %4063 = vrot.lane.b32.xlu0 %v3397, 15
    %v4064 = vpop.permute.xlu0 %4063
    %v4065 = vsel %vm751, %v4062, %v4056
    %v4066 = vsel %vm751, %v4064, %v4058
    %v4071 = vsel %vm751, %v4056, %v4062
    %v4072 = vsel %vm751, %v4058, %v4064
    %v4073 = vmul.f32 %v4071, %v764
    %v4074 = vmul.f32 %v4065, %v768
    %v4075 = vmul.f32 %v4072, %v764
    %v4076 = vmul.f32 %v4066, %v768
    %s4077 = sld [smem:[#allocation4 + $0x20]]
    %v4078 = vstv %s4077
    %v4079 = vmul.f32 %v4078, %v4073
    %v4080 = vmul.f32 %v4078, %v4074
    %v4081 = vmul.f32 %v4078, %v4075
    %v4082 = vmul.f32 %v4078, %v4076
    %v4083 = vadd.f32 %v3985, %v4079
    %v4084 = vadd.f32 %v3986, %v4080
    %v4085 = vadd.f32 %v3987, %v4081
    %v4086 = vadd.f32 %v3988, %v4082
    %s4087 = sld [smem:[#allocation4 + $0x21]]
    %v4088 = vstv %s4087
    %v4089 = vmul.f32 %v4088, %v4073
    %v4090 = vmul.f32 %v4088, %v4074
    %v4091 = vmul.f32 %v4088, %v4075
    %v4092 = vmul.f32 %v4088, %v4076
    %v4093 = vadd.f32 %v4007, %v4089
    %v4094 = vadd.f32 %v4008, %v4090
    %v4095 = vadd.f32 %v4009, %v4091
    %v4096 = vadd.f32 %v4010, %v4092
    %s4097 = sld [smem:[#allocation4 + $0x22]]
    %v4098 = vstv %s4097
    %v4099 = vmul.f32 %v4098, %v4073
    %v4100 = vmul.f32 %v4098, %v4074
    %v4101 = vmul.f32 %v4098, %v4075
    %v4102 = vmul.f32 %v4098, %v4076
    %v4103 = vadd.f32 %v4029, %v4099
    %v4104 = vadd.f32 %v4030, %v4100
    %v4105 = vadd.f32 %v4031, %v4101
    %v4106 = vadd.f32 %v4032, %v4102
    %s4107 = sld [smem:[#allocation4 + $0x23]]
    %v4108 = vstv %s4107
    %v4109 = vmul.f32 %v4108, %v4073
    %v4110 = vmul.f32 %v4108, %v4074
    %v4111 = vmul.f32 %v4108, %v4075
    %v4112 = vmul.f32 %v4108, %v4076
    %v4113 = vadd.f32 %v4051, %v4109
    %v4114 = vadd.f32 %v4052, %v4110
    %v4115 = vadd.f32 %v4053, %v4111
    %v4116 = vadd.f32 %v4054, %v4112
    %s4117 = sld [smem:[#allocation4 + $0x24]]
    %v4118 = vstv %s4117
    %v4119 = vmul.f32 %v4118, %v4073
    %v4120 = vmul.f32 %v4118, %v4074
    %v4121 = vmul.f32 %v4118, %v4075
    %v4122 = vmul.f32 %v4118, %v4076
    %v4127 = vrot.slane %v4119, 1
    %v4128 = vrot.slane %v4120, 1
    %v4129 = vrot.slane %v4121, 1
    %v4130 = vrot.slane %v4122, 1
    %v4135 = vadd.f32 %v4083, %v4127
    %v4136 = vadd.f32 %v4084, %v4128
    %v4137 = vadd.f32 %v4085, %v4129
    %v4138 = vadd.f32 %v4086, %v4130
    %s4139 = sld [smem:[#allocation4 + $0x25]]
    %v4140 = vstv %s4139
    %v4141 = vmul.f32 %v4140, %v4073
    %v4142 = vmul.f32 %v4140, %v4074
    %v4143 = vmul.f32 %v4140, %v4075
    %v4144 = vmul.f32 %v4140, %v4076
    %v4149 = vrot.slane %v4141, 1
    %v4150 = vrot.slane %v4142, 1
    %v4151 = vrot.slane %v4143, 1
    %v4152 = vrot.slane %v4144, 1
    %v4157 = vadd.f32 %v4093, %v4149
    %v4158 = vadd.f32 %v4094, %v4150
    %v4159 = vadd.f32 %v4095, %v4151
    %v4160 = vadd.f32 %v4096, %v4152
    %s4161 = sld [smem:[#allocation4 + $0x26]]
    %v4162 = vstv %s4161
    %v4163 = vmul.f32 %v4162, %v4073
    %v4164 = vmul.f32 %v4162, %v4074
    %v4165 = vmul.f32 %v4162, %v4075
    %v4166 = vmul.f32 %v4162, %v4076
    %v4171 = vrot.slane %v4163, 1
    %v4172 = vrot.slane %v4164, 1
    %v4173 = vrot.slane %v4165, 1
    %v4174 = vrot.slane %v4166, 1
    %v4179 = vadd.f32 %v4103, %v4171
    %v4180 = vadd.f32 %v4104, %v4172
    %v4181 = vadd.f32 %v4105, %v4173
    %v4182 = vadd.f32 %v4106, %v4174
    %s4183 = sld [smem:[#allocation4 + $0x27]]
    %v4184 = vstv %s4183
    %v4185 = vmul.f32 %v4184, %v4073
    %v4186 = vmul.f32 %v4184, %v4074
    %v4187 = vmul.f32 %v4184, %v4075
    %v4188 = vmul.f32 %v4184, %v4076
    %v4193 = vrot.slane %v4185, 1
    %v4194 = vrot.slane %v4186, 1
    %v4195 = vrot.slane %v4187, 1
    %v4196 = vrot.slane %v4188, 1
    %v4201 = vadd.f32 %v4113, %v4193
    %v4202 = vadd.f32 %v4114, %v4194
    %v4203 = vadd.f32 %v4115, %v4195
    %v4204 = vadd.f32 %v4116, %v4196
    %s4205 = sld [smem:[#allocation4 + $0x28]]
    %v4206 = vstv %s4205
    %v4207 = vmul.f32 %v4206, %v4073
    %v4208 = vmul.f32 %v4206, %v4074
    %v4209 = vmul.f32 %v4206, %v4075
    %v4210 = vmul.f32 %v4206, %v4076
    %v4215 = vrot.slane %v4207, 2
    %v4216 = vrot.slane %v4208, 2
    %v4217 = vrot.slane %v4209, 2
    %v4218 = vrot.slane %v4210, 2
    %v4223 = vadd.f32 %v4135, %v4215
    %v4224 = vadd.f32 %v4136, %v4216
    %v4225 = vadd.f32 %v4137, %v4217
    %v4226 = vadd.f32 %v4138, %v4218
    %s4227 = sld [smem:[#allocation4 + $0x29]]
    %v4228 = vstv %s4227
    %v4229 = vmul.f32 %v4228, %v4073
    %v4230 = vmul.f32 %v4228, %v4074
    %v4231 = vmul.f32 %v4228, %v4075
    %v4232 = vmul.f32 %v4228, %v4076
    %v4237 = vrot.slane %v4229, 2
    %v4238 = vrot.slane %v4230, 2
    %v4239 = vrot.slane %v4231, 2
    %v4240 = vrot.slane %v4232, 2
    %v4245 = vadd.f32 %v4157, %v4237
    %v4246 = vadd.f32 %v4158, %v4238
    %v4247 = vadd.f32 %v4159, %v4239
    %v4248 = vadd.f32 %v4160, %v4240
    %s4249 = sld [smem:[#allocation4 + $0x2a]]
    %v4250 = vstv %s4249
    %v4251 = vmul.f32 %v4250, %v4073
    %v4252 = vmul.f32 %v4250, %v4074
    %v4253 = vmul.f32 %v4250, %v4075
    %v4254 = vmul.f32 %v4250, %v4076
    %v4259 = vrot.slane %v4251, 2
    %v4260 = vrot.slane %v4252, 2
    %v4261 = vrot.slane %v4253, 2
    %v4262 = vrot.slane %v4254, 2
    %v4267 = vadd.f32 %v4179, %v4259
    %v4268 = vadd.f32 %v4180, %v4260
    %v4269 = vadd.f32 %v4181, %v4261
    %v4270 = vadd.f32 %v4182, %v4262
    %s4271 = sld [smem:[#allocation4 + $0x2b]]
    %v4272 = vstv %s4271
    %v4273 = vmul.f32 %v4272, %v4073
    %v4274 = vmul.f32 %v4272, %v4074
    %v4275 = vmul.f32 %v4272, %v4075
    %v4276 = vmul.f32 %v4272, %v4076
    %v4281 = vrot.slane %v4273, 2
    %v4282 = vrot.slane %v4274, 2
    %v4283 = vrot.slane %v4275, 2
    %v4284 = vrot.slane %v4276, 2
    %v4289 = vadd.f32 %v4201, %v4281
    %v4290 = vadd.f32 %v4202, %v4282
    %v4291 = vadd.f32 %v4203, %v4283
    %v4292 = vadd.f32 %v4204, %v4284
    %s4293 = sld [smem:[#allocation4 + $0x2c]]
    %v4294 = vstv %s4293
    %v4295 = vmul.f32 %v4294, %v4073
    %v4296 = vmul.f32 %v4294, %v4074
    %v4297 = vmul.f32 %v4294, %v4075
    %v4298 = vmul.f32 %v4294, %v4076
    %v4303 = vrot.slane %v4295, 3
    %v4304 = vrot.slane %v4296, 3
    %v4305 = vrot.slane %v4297, 3
    %v4306 = vrot.slane %v4298, 3
    %v4311 = vadd.f32 %v4223, %v4303
    %v4312 = vadd.f32 %v4224, %v4304
    %v4313 = vadd.f32 %v4225, %v4305
    %v4314 = vadd.f32 %v4226, %v4306
    %s4315 = sld [smem:[#allocation4 + $0x2d]]
    %v4316 = vstv %s4315
    %v4317 = vmul.f32 %v4316, %v4073
    %v4318 = vmul.f32 %v4316, %v4074
    %v4319 = vmul.f32 %v4316, %v4075
    %v4320 = vmul.f32 %v4316, %v4076
    %v4325 = vrot.slane %v4317, 3
    %v4326 = vrot.slane %v4318, 3
    %v4327 = vrot.slane %v4319, 3
    %v4328 = vrot.slane %v4320, 3
    %v4333 = vadd.f32 %v4245, %v4325
    %v4334 = vadd.f32 %v4246, %v4326
    %v4335 = vadd.f32 %v4247, %v4327
    %v4336 = vadd.f32 %v4248, %v4328
    %s4337 = sld [smem:[#allocation4 + $0x2e]]
    %v4338 = vstv %s4337
    %v4339 = vmul.f32 %v4338, %v4073
    %v4340 = vmul.f32 %v4338, %v4074
    %v4341 = vmul.f32 %v4338, %v4075
    %v4342 = vmul.f32 %v4338, %v4076
    %v4347 = vrot.slane %v4339, 3
    %v4348 = vrot.slane %v4340, 3
    %v4349 = vrot.slane %v4341, 3
    %v4350 = vrot.slane %v4342, 3
    %v4355 = vadd.f32 %v4267, %v4347
    %v4356 = vadd.f32 %v4268, %v4348
    %v4357 = vadd.f32 %v4269, %v4349
    %v4358 = vadd.f32 %v4270, %v4350
    %s4359 = sld [smem:[#allocation4 + $0x2f]]
    %v4360 = vstv %s4359
    %v4361 = vmul.f32 %v4360, %v4073
    %v4362 = vmul.f32 %v4360, %v4074
    %v4363 = vmul.f32 %v4360, %v4075
    %v4364 = vmul.f32 %v4360, %v4076
    %v4369 = vrot.slane %v4361, 3
    %v4370 = vrot.slane %v4362, 3
    %v4371 = vrot.slane %v4363, 3
    %v4372 = vrot.slane %v4364, 3
    %v4377 = vadd.f32 %v4289, %v4369
    %v4378 = vadd.f32 %v4290, %v4370
    %v4379 = vadd.f32 %v4291, %v4371
    %v4380 = vadd.f32 %v4292, %v4372
    %4381 = vrot.lane.b32.xlu0 %v3396, 1
    %v4382 = vpop.permute.xlu0 %4381
    %4383 = vrot.lane.b32.xlu0 %v3398, 1
    %v4384 = vpop.permute.xlu0 %4383
    %4387 = vrot.lane.b32.xlu0 %v3395, 1
    %v4388 = vpop.permute.xlu0 %4387
    %4389 = vrot.lane.b32.xlu0 %v3397, 1
    %v4390 = vpop.permute.xlu0 %4389
    %v4391 = vsel %vm1091, %v4388, %v4382
    %v4392 = vsel %vm1091, %v4390, %v4384
    %v4397 = vsel %vm1091, %v4382, %v4388
    %v4398 = vsel %vm1091, %v4384, %v4390
    %v4399 = vmul.f32 %v4397, %v1104
    %v4400 = vmul.f32 %v4391, %v1108
    %v4401 = vmul.f32 %v4398, %v1104
    %v4402 = vmul.f32 %v4392, %v1108
    %s4403 = sld [smem:[#allocation4 + $0x30]]
    %v4404 = vstv %s4403
    %v4405 = vmul.f32 %v4404, %v4399
    %v4406 = vmul.f32 %v4404, %v4400
    %v4407 = vmul.f32 %v4404, %v4401
    %v4408 = vmul.f32 %v4404, %v4402
    %v4409 = vadd.f32 %v4311, %v4405
    %v4410 = vadd.f32 %v4312, %v4406
    %v4411 = vadd.f32 %v4313, %v4407
    %v4412 = vadd.f32 %v4314, %v4408
    %s4413 = sld [smem:[#allocation4 + $0x31]]
    %v4414 = vstv %s4413
    %v4415 = vmul.f32 %v4414, %v4399
    %v4416 = vmul.f32 %v4414, %v4400
    %v4417 = vmul.f32 %v4414, %v4401
    %v4418 = vmul.f32 %v4414, %v4402
    %v4419 = vadd.f32 %v4333, %v4415
    %v4420 = vadd.f32 %v4334, %v4416
    %v4421 = vadd.f32 %v4335, %v4417
    %v4422 = vadd.f32 %v4336, %v4418
    %s4423 = sld [smem:[#allocation4 + $0x32]]
    %v4424 = vstv %s4423
    %v4425 = vmul.f32 %v4424, %v4399
    %v4426 = vmul.f32 %v4424, %v4400
    %v4427 = vmul.f32 %v4424, %v4401
    %v4428 = vmul.f32 %v4424, %v4402
    %v4429 = vadd.f32 %v4355, %v4425
    %v4430 = vadd.f32 %v4356, %v4426
    %v4431 = vadd.f32 %v4357, %v4427
    %v4432 = vadd.f32 %v4358, %v4428
    %s4433 = sld [smem:[#allocation4 + $0x33]]
    %v4434 = vstv %s4433
    %v4435 = vmul.f32 %v4434, %v4399
    %v4436 = vmul.f32 %v4434, %v4400
    %v4437 = vmul.f32 %v4434, %v4401
    %v4438 = vmul.f32 %v4434, %v4402
    %v4439 = vadd.f32 %v4377, %v4435
    %v4440 = vadd.f32 %v4378, %v4436
    %v4441 = vadd.f32 %v4379, %v4437
    %v4442 = vadd.f32 %v4380, %v4438
    %s4443 = sld [smem:[#allocation4 + $0x34]]
    %v4444 = vstv %s4443
    %v4445 = vmul.f32 %v4444, %v4399
    %v4446 = vmul.f32 %v4444, %v4400
    %v4447 = vmul.f32 %v4444, %v4401
    %v4448 = vmul.f32 %v4444, %v4402
    %v4453 = vrot.slane %v4445, 1
    %v4454 = vrot.slane %v4446, 1
    %v4455 = vrot.slane %v4447, 1
    %v4456 = vrot.slane %v4448, 1
    %v4461 = vadd.f32 %v4409, %v4453
    %v4462 = vadd.f32 %v4410, %v4454
    %v4463 = vadd.f32 %v4411, %v4455
    %v4464 = vadd.f32 %v4412, %v4456
    %s4465 = sld [smem:[#allocation4 + $0x35]]
    %v4466 = vstv %s4465
    %v4467 = vmul.f32 %v4466, %v4399
    %v4468 = vmul.f32 %v4466, %v4400
    %v4469 = vmul.f32 %v4466, %v4401
    %v4470 = vmul.f32 %v4466, %v4402
    %v4475 = vrot.slane %v4467, 1
    %v4476 = vrot.slane %v4468, 1
    %v4477 = vrot.slane %v4469, 1
    %v4478 = vrot.slane %v4470, 1
    %v4483 = vadd.f32 %v4419, %v4475
    %v4484 = vadd.f32 %v4420, %v4476
    %v4485 = vadd.f32 %v4421, %v4477
    %v4486 = vadd.f32 %v4422, %v4478
    %s4487 = sld [smem:[#allocation4 + $0x36]]
    %v4488 = vstv %s4487
    %v4489 = vmul.f32 %v4488, %v4399
    %v4490 = vmul.f32 %v4488, %v4400
    %v4491 = vmul.f32 %v4488, %v4401
    %v4492 = vmul.f32 %v4488, %v4402
    %v4497 = vrot.slane %v4489, 1
    %v4498 = vrot.slane %v4490, 1
    %v4499 = vrot.slane %v4491, 1
    %v4500 = vrot.slane %v4492, 1
    %v4505 = vadd.f32 %v4429, %v4497
    %v4506 = vadd.f32 %v4430, %v4498
    %v4507 = vadd.f32 %v4431, %v4499
    %v4508 = vadd.f32 %v4432, %v4500
    %s4509 = sld [smem:[#allocation4 + $0x37]]
    %v4510 = vstv %s4509
    %v4511 = vmul.f32 %v4510, %v4399
    %v4512 = vmul.f32 %v4510, %v4400
    %v4513 = vmul.f32 %v4510, %v4401
    %v4514 = vmul.f32 %v4510, %v4402
    %v4519 = vrot.slane %v4511, 1
    %v4520 = vrot.slane %v4512, 1
    %v4521 = vrot.slane %v4513, 1
    %v4522 = vrot.slane %v4514, 1
    %v4527 = vadd.f32 %v4439, %v4519
    %v4528 = vadd.f32 %v4440, %v4520
    %v4529 = vadd.f32 %v4441, %v4521
    %v4530 = vadd.f32 %v4442, %v4522
    %s4531 = sld [smem:[#allocation4 + $0x38]]
    %v4532 = vstv %s4531
    %v4533 = vmul.f32 %v4532, %v4399
    %v4534 = vmul.f32 %v4532, %v4400
    %v4535 = vmul.f32 %v4532, %v4401
    %v4536 = vmul.f32 %v4532, %v4402
    %v4541 = vrot.slane %v4533, 2
    %v4542 = vrot.slane %v4534, 2
    %v4543 = vrot.slane %v4535, 2
    %v4544 = vrot.slane %v4536, 2
    %v4549 = vadd.f32 %v4461, %v4541
    %v4550 = vadd.f32 %v4462, %v4542
    %v4551 = vadd.f32 %v4463, %v4543
    %v4552 = vadd.f32 %v4464, %v4544
    %s4553 = sld [smem:[#allocation4 + $0x39]]
    %v4554 = vstv %s4553
    %v4555 = vmul.f32 %v4554, %v4399
    %v4556 = vmul.f32 %v4554, %v4400
    %v4557 = vmul.f32 %v4554, %v4401
    %v4558 = vmul.f32 %v4554, %v4402
    %v4563 = vrot.slane %v4555, 2
    %v4564 = vrot.slane %v4556, 2
    %v4565 = vrot.slane %v4557, 2
    %v4566 = vrot.slane %v4558, 2
    %v4571 = vadd.f32 %v4483, %v4563
    %v4572 = vadd.f32 %v4484, %v4564
    %v4573 = vadd.f32 %v4485, %v4565
    %v4574 = vadd.f32 %v4486, %v4566
    %s4575 = sld [smem:[#allocation4 + $0x3a]]
    %v4576 = vstv %s4575
    %v4577 = vmul.f32 %v4576, %v4399
    %v4578 = vmul.f32 %v4576, %v4400
    %v4579 = vmul.f32 %v4576, %v4401
    %v4580 = vmul.f32 %v4576, %v4402
    %v4585 = vrot.slane %v4577, 2
    %v4586 = vrot.slane %v4578, 2
    %v4587 = vrot.slane %v4579, 2
    %v4588 = vrot.slane %v4580, 2
    %v4593 = vadd.f32 %v4505, %v4585
    %v4594 = vadd.f32 %v4506, %v4586
    %v4595 = vadd.f32 %v4507, %v4587
    %v4596 = vadd.f32 %v4508, %v4588
    %s4597 = sld [smem:[#allocation4 + $0x3b]]
    %v4598 = vstv %s4597
    %v4599 = vmul.f32 %v4598, %v4399
    %v4600 = vmul.f32 %v4598, %v4400
    %v4601 = vmul.f32 %v4598, %v4401
    %v4602 = vmul.f32 %v4598, %v4402
    %v4607 = vrot.slane %v4599, 2
    %v4608 = vrot.slane %v4600, 2
    %v4609 = vrot.slane %v4601, 2
    %v4610 = vrot.slane %v4602, 2
    %v4615 = vadd.f32 %v4527, %v4607
    %v4616 = vadd.f32 %v4528, %v4608
    %v4617 = vadd.f32 %v4529, %v4609
    %v4618 = vadd.f32 %v4530, %v4610
    %s4619 = sld [smem:[#allocation4 + $0x3c]]
    %v4620 = vstv %s4619
    %v4621 = vmul.f32 %v4620, %v4399
    %v4622 = vmul.f32 %v4620, %v4400
    %v4623 = vmul.f32 %v4620, %v4401
    %v4624 = vmul.f32 %v4620, %v4402
    %v4629 = vrot.slane %v4621, 3
    %v4630 = vrot.slane %v4622, 3
    %v4631 = vrot.slane %v4623, 3
    %v4632 = vrot.slane %v4624, 3
    %v4637 = vadd.f32 %v4549, %v4629
    %v4638 = vadd.f32 %v4550, %v4630
    %v4639 = vadd.f32 %v4551, %v4631
    %v4640 = vadd.f32 %v4552, %v4632
    %s4641 = sld [smem:[#allocation4 + $0x3d]]
    %v4642 = vstv %s4641
    %v4643 = vmul.f32 %v4642, %v4399
    %v4644 = vmul.f32 %v4642, %v4400
    %v4645 = vmul.f32 %v4642, %v4401
    %v4646 = vmul.f32 %v4642, %v4402
    %v4651 = vrot.slane %v4643, 3
    %v4652 = vrot.slane %v4644, 3
    %v4653 = vrot.slane %v4645, 3
    %v4654 = vrot.slane %v4646, 3
    %v4659 = vadd.f32 %v4571, %v4651
    %v4660 = vadd.f32 %v4572, %v4652
    %v4661 = vadd.f32 %v4573, %v4653
    %v4662 = vadd.f32 %v4574, %v4654
    %s4663 = sld [smem:[#allocation4 + $0x3e]]
    %v4664 = vstv %s4663
    %v4665 = vmul.f32 %v4664, %v4399
    %v4666 = vmul.f32 %v4664, %v4400
    %v4667 = vmul.f32 %v4664, %v4401
    %v4668 = vmul.f32 %v4664, %v4402
    %v4673 = vrot.slane %v4665, 3
    %v4674 = vrot.slane %v4666, 3
    %v4675 = vrot.slane %v4667, 3
    %v4676 = vrot.slane %v4668, 3
    %v4681 = vadd.f32 %v4593, %v4673
    %v4682 = vadd.f32 %v4594, %v4674
    %v4683 = vadd.f32 %v4595, %v4675
    %v4684 = vadd.f32 %v4596, %v4676
    %s4685 = sld [smem:[#allocation4 + $0x3f]]
    %v4686 = vstv %s4685
    %v4687 = vmul.f32 %v4686, %v4399
    %v4688 = vmul.f32 %v4686, %v4400
    %v4689 = vmul.f32 %v4686, %v4401
    %v4690 = vmul.f32 %v4686, %v4402
    %v4695 = vrot.slane %v4687, 3
    %v4696 = vrot.slane %v4688, 3
    %v4697 = vrot.slane %v4689, 3
    %v4698 = vrot.slane %v4690, 3
    %v4703 = vadd.f32 %v4615, %v4695
    %v4704 = vadd.f32 %v4616, %v4696
    %v4705 = vadd.f32 %v4617, %v4697
    %v4706 = vadd.f32 %v4618, %v4698
    %v4707 = vmul.f32 %v3395, %v1425
    %v4708 = vmul.f32 %v3396, %v1429
    %v4709 = vmul.f32 %v3397, %v1425
    %v4710 = vmul.f32 %v3398, %v1429
    %s4711 = sld [smem:[#allocation4 + $0x40]]
    %v4712 = vstv %s4711
    %v4713 = vmul.f32 %v4712, %v4707
    %v4714 = vmul.f32 %v4712, %v4708
    %v4715 = vmul.f32 %v4712, %v4709
    %v4716 = vmul.f32 %v4712, %v4710
    %v4717 = vadd.f32 %v4637, %v4713
    %v4718 = vadd.f32 %v4638, %v4714
    %v4719 = vadd.f32 %v4639, %v4715
    %v4720 = vadd.f32 %v4640, %v4716
    %s4721 = sld [smem:[#allocation4 + $0x41]]
    %v4722 = vstv %s4721
    %v4723 = vmul.f32 %v4722, %v4707
    %v4724 = vmul.f32 %v4722, %v4708
    %v4725 = vmul.f32 %v4722, %v4709
    %v4726 = vmul.f32 %v4722, %v4710
    %v4727 = vadd.f32 %v4659, %v4723
    %v4728 = vadd.f32 %v4660, %v4724
    %v4729 = vadd.f32 %v4661, %v4725
    %v4730 = vadd.f32 %v4662, %v4726
    %s4731 = sld [smem:[#allocation4 + $0x42]]
    %v4732 = vstv %s4731
    %v4733 = vmul.f32 %v4732, %v4707
    %v4734 = vmul.f32 %v4732, %v4708
    %v4735 = vmul.f32 %v4732, %v4709
    %v4736 = vmul.f32 %v4732, %v4710
    %v4737 = vadd.f32 %v4681, %v4733
    %v4738 = vadd.f32 %v4682, %v4734
    %v4739 = vadd.f32 %v4683, %v4735
    %v4740 = vadd.f32 %v4684, %v4736
    %s4741 = sld [smem:[#allocation4 + $0x43]]
    %v4742 = vstv %s4741
    %v4743 = vmul.f32 %v4742, %v4707
    %v4744 = vmul.f32 %v4742, %v4708
    %v4745 = vmul.f32 %v4742, %v4709
    %v4746 = vmul.f32 %v4742, %v4710
    %v4747 = vadd.f32 %v4703, %v4743
    %v4748 = vadd.f32 %v4704, %v4744
    %v4749 = vadd.f32 %v4705, %v4745
    %v4750 = vadd.f32 %v4706, %v4746
    %s4751 = sld [smem:[#allocation4 + $0x44]]
    %v4752 = vstv %s4751
    %v4753 = vmul.f32 %v4752, %v4707
    %v4754 = vmul.f32 %v4752, %v4708
    %v4755 = vmul.f32 %v4752, %v4709
    %v4756 = vmul.f32 %v4752, %v4710
    %v4761 = vrot.slane %v4753, 1
    %v4762 = vrot.slane %v4754, 1
    %v4763 = vrot.slane %v4755, 1
    %v4764 = vrot.slane %v4756, 1
    %v4769 = vadd.f32 %v4717, %v4761
    %v4770 = vadd.f32 %v4718, %v4762
    %v4771 = vadd.f32 %v4719, %v4763
    %v4772 = vadd.f32 %v4720, %v4764
    %s4773 = sld [smem:[#allocation4 + $0x45]]
    %v4774 = vstv %s4773
    %v4775 = vmul.f32 %v4774, %v4707
    %v4776 = vmul.f32 %v4774, %v4708
    %v4777 = vmul.f32 %v4774, %v4709
    %v4778 = vmul.f32 %v4774, %v4710
    %v4783 = vrot.slane %v4775, 1
    %v4784 = vrot.slane %v4776, 1
    %v4785 = vrot.slane %v4777, 1
    %v4786 = vrot.slane %v4778, 1
    %v4791 = vadd.f32 %v4727, %v4783
    %v4792 = vadd.f32 %v4728, %v4784
    %v4793 = vadd.f32 %v4729, %v4785
    %v4794 = vadd.f32 %v4730, %v4786
    %s4795 = sld [smem:[#allocation4 + $0x46]]
    %v4796 = vstv %s4795
    %v4797 = vmul.f32 %v4796, %v4707
    %v4798 = vmul.f32 %v4796, %v4708
    %v4799 = vmul.f32 %v4796, %v4709
    %v4800 = vmul.f32 %v4796, %v4710
    %v4805 = vrot.slane %v4797, 1
    %v4806 = vrot.slane %v4798, 1
    %v4807 = vrot.slane %v4799, 1
    %v4808 = vrot.slane %v4800, 1
    %v4813 = vadd.f32 %v4737, %v4805
    %v4814 = vadd.f32 %v4738, %v4806
    %v4815 = vadd.f32 %v4739, %v4807
    %v4816 = vadd.f32 %v4740, %v4808
    %s4817 = sld [smem:[#allocation4 + $0x47]]
    %v4818 = vstv %s4817
    %v4819 = vmul.f32 %v4818, %v4707
    %v4820 = vmul.f32 %v4818, %v4708
    %v4821 = vmul.f32 %v4818, %v4709
    %v4822 = vmul.f32 %v4818, %v4710
    %v4827 = vrot.slane %v4819, 1
    %v4828 = vrot.slane %v4820, 1
    %v4829 = vrot.slane %v4821, 1
    %v4830 = vrot.slane %v4822, 1
    %v4835 = vadd.f32 %v4747, %v4827
    %v4836 = vadd.f32 %v4748, %v4828
    %v4837 = vadd.f32 %v4749, %v4829
    %v4838 = vadd.f32 %v4750, %v4830
    %s4839 = sld [smem:[#allocation4 + $0x48]]
    %v4840 = vstv %s4839
    %v4841 = vmul.f32 %v4840, %v4707
    %v4842 = vmul.f32 %v4840, %v4708
    %v4843 = vmul.f32 %v4840, %v4709
    %v4844 = vmul.f32 %v4840, %v4710
    %v4849 = vrot.slane %v4841, 2
    %v4850 = vrot.slane %v4842, 2
    %v4851 = vrot.slane %v4843, 2
    %v4852 = vrot.slane %v4844, 2
    %v4857 = vadd.f32 %v4769, %v4849
    %v4858 = vadd.f32 %v4770, %v4850
    %v4859 = vadd.f32 %v4771, %v4851
    %v4860 = vadd.f32 %v4772, %v4852
    %s4861 = sld [smem:[#allocation4 + $0x49]]
    %v4862 = vstv %s4861
    %v4863 = vmul.f32 %v4862, %v4707
    %v4864 = vmul.f32 %v4862, %v4708
    %v4865 = vmul.f32 %v4862, %v4709
    %v4866 = vmul.f32 %v4862, %v4710
    %v4871 = vrot.slane %v4863, 2
    %v4872 = vrot.slane %v4864, 2
    %v4873 = vrot.slane %v4865, 2
    %v4874 = vrot.slane %v4866, 2
    %v4879 = vadd.f32 %v4791, %v4871
    %v4880 = vadd.f32 %v4792, %v4872
    %v4881 = vadd.f32 %v4793, %v4873
    %v4882 = vadd.f32 %v4794, %v4874
    %s4883 = sld [smem:[#allocation4 + $0x4a]]
    %v4884 = vstv %s4883
    %v4885 = vmul.f32 %v4884, %v4707
    %v4886 = vmul.f32 %v4884, %v4708
    %v4887 = vmul.f32 %v4884, %v4709
    %v4888 = vmul.f32 %v4884, %v4710
    %v4893 = vrot.slane %v4885, 2
    %v4894 = vrot.slane %v4886, 2
    %v4895 = vrot.slane %v4887, 2
    %v4896 = vrot.slane %v4888, 2
    %v4901 = vadd.f32 %v4813, %v4893
    %v4902 = vadd.f32 %v4814, %v4894
    %v4903 = vadd.f32 %v4815, %v4895
    %v4904 = vadd.f32 %v4816, %v4896
    %s4905 = sld [smem:[#allocation4 + $0x4b]]
    %v4906 = vstv %s4905
    %v4907 = vmul.f32 %v4906, %v4707
    %v4908 = vmul.f32 %v4906, %v4708
    %v4909 = vmul.f32 %v4906, %v4709
    %v4910 = vmul.f32 %v4906, %v4710
    %v4915 = vrot.slane %v4907, 2
    %v4916 = vrot.slane %v4908, 2
    %v4917 = vrot.slane %v4909, 2
    %v4918 = vrot.slane %v4910, 2
    %v4923 = vadd.f32 %v4835, %v4915
    %v4924 = vadd.f32 %v4836, %v4916
    %v4925 = vadd.f32 %v4837, %v4917
    %v4926 = vadd.f32 %v4838, %v4918
    %s4927 = sld [smem:[#allocation4 + $0x4c]]
    %v4928 = vstv %s4927
    %v4929 = vmul.f32 %v4928, %v4707
    %v4930 = vmul.f32 %v4928, %v4708
    %v4931 = vmul.f32 %v4928, %v4709
    %v4932 = vmul.f32 %v4928, %v4710
    %v4937 = vrot.slane %v4929, 3
    %v4938 = vrot.slane %v4930, 3
    %v4939 = vrot.slane %v4931, 3
    %v4940 = vrot.slane %v4932, 3
    %v4945 = vadd.f32 %v4857, %v4937
    %v4946 = vadd.f32 %v4858, %v4938
    %v4947 = vadd.f32 %v4859, %v4939
    %v4948 = vadd.f32 %v4860, %v4940
    %s4949 = sld [smem:[#allocation4 + $0x4d]]
    %v4950 = vstv %s4949
    %v4951 = vmul.f32 %v4950, %v4707
    %v4952 = vmul.f32 %v4950, %v4708
    %v4953 = vmul.f32 %v4950, %v4709
    %v4954 = vmul.f32 %v4950, %v4710
    %v4959 = vrot.slane %v4951, 3
    %v4960 = vrot.slane %v4952, 3
    %v4961 = vrot.slane %v4953, 3
    %v4962 = vrot.slane %v4954, 3
    %v4967 = vadd.f32 %v4879, %v4959
    %v4968 = vadd.f32 %v4880, %v4960
    %v4969 = vadd.f32 %v4881, %v4961
    %v4970 = vadd.f32 %v4882, %v4962
    %s4971 = sld [smem:[#allocation4 + $0x4e]]
    %v4972 = vstv %s4971
    %v4973 = vmul.f32 %v4972, %v4707
    %v4974 = vmul.f32 %v4972, %v4708
    %v4975 = vmul.f32 %v4972, %v4709
    %v4976 = vmul.f32 %v4972, %v4710
    %v4981 = vrot.slane %v4973, 3
    %v4982 = vrot.slane %v4974, 3
    %v4983 = vrot.slane %v4975, 3
    %v4984 = vrot.slane %v4976, 3
    %v4989 = vadd.f32 %v4901, %v4981
    %v4990 = vadd.f32 %v4902, %v4982
    %v4991 = vadd.f32 %v4903, %v4983
    %v4992 = vadd.f32 %v4904, %v4984
    %s4993 = sld [smem:[#allocation4 + $0x4f]]
    %v4994 = vstv %s4993
    %v4995 = vmul.f32 %v4994, %v4707
    %v4996 = vmul.f32 %v4994, %v4708
    %v4997 = vmul.f32 %v4994, %v4709
    %v4998 = vmul.f32 %v4994, %v4710
    %v5003 = vrot.slane %v4995, 3
    %v5004 = vrot.slane %v4996, 3
    %v5005 = vrot.slane %v4997, 3
    %v5006 = vrot.slane %v4998, 3
    %v5011 = vadd.f32 %v4923, %v5003
    %v5012 = vadd.f32 %v4924, %v5004
    %v5013 = vadd.f32 %v4925, %v5005
    %v5014 = vadd.f32 %v4926, %v5006
    %5015 = vrot.lane.b32.xlu0 %v3395, 127
    %v5016 = vpop.permute.xlu0 %5015
    %5017 = vrot.lane.b32.xlu0 %v3396, 127
    %v5018 = vpop.permute.xlu0 %5017
    %5019 = vrot.lane.b32.xlu0 %v3397, 127
    %v5020 = vpop.permute.xlu0 %5019
    %5021 = vrot.lane.b32.xlu0 %v3398, 127
    %v5022 = vpop.permute.xlu0 %5021
    %v5023 = vsel %vm1926, %v5016, %v5018
    %v5024 = vsel %vm1926, %v5020, %v5022
    %v5031 = vsel %vm1926, %v5018, %v5016
    %v5032 = vsel %vm1926, %v5022, %v5020
    %v5033 = vmul.f32 %v5023, %v1941
    %v5034 = vmul.f32 %v5031, %v1945
    %v5035 = vmul.f32 %v5024, %v1941
    %v5036 = vmul.f32 %v5032, %v1945
    %s5037 = sld [smem:[#allocation4 + $0x50]]
    %v5038 = vstv %s5037
    %v5039 = vmul.f32 %v5038, %v5033
    %v5040 = vmul.f32 %v5038, %v5034
    %v5041 = vmul.f32 %v5038, %v5035
    %v5042 = vmul.f32 %v5038, %v5036
    %v5043 = vadd.f32 %v4945, %v5039
    %v5044 = vadd.f32 %v4946, %v5040
    %v5045 = vadd.f32 %v4947, %v5041
    %v5046 = vadd.f32 %v4948, %v5042
    %s5047 = sld [smem:[#allocation4 + $0x51]]
    %v5048 = vstv %s5047
    %v5049 = vmul.f32 %v5048, %v5033
    %v5050 = vmul.f32 %v5048, %v5034
    %v5051 = vmul.f32 %v5048, %v5035
    %v5052 = vmul.f32 %v5048, %v5036
    %v5053 = vadd.f32 %v4967, %v5049
    %v5054 = vadd.f32 %v4968, %v5050
    %v5055 = vadd.f32 %v4969, %v5051
    %v5056 = vadd.f32 %v4970, %v5052
    %s5057 = sld [smem:[#allocation4 + $0x52]]
    %v5058 = vstv %s5057
    %v5059 = vmul.f32 %v5058, %v5033
    %v5060 = vmul.f32 %v5058, %v5034
    %v5061 = vmul.f32 %v5058, %v5035
    %v5062 = vmul.f32 %v5058, %v5036
    %v5063 = vadd.f32 %v4989, %v5059
    %v5064 = vadd.f32 %v4990, %v5060
    %v5065 = vadd.f32 %v4991, %v5061
    %v5066 = vadd.f32 %v4992, %v5062
    %s5067 = sld [smem:[#allocation4 + $0x53]]
    %v5068 = vstv %s5067
    %v5069 = vmul.f32 %v5068, %v5033
    %v5070 = vmul.f32 %v5068, %v5034
    %v5071 = vmul.f32 %v5068, %v5035
    %v5072 = vmul.f32 %v5068, %v5036
    %v5073 = vadd.f32 %v5011, %v5069
    %v5074 = vadd.f32 %v5012, %v5070
    %v5075 = vadd.f32 %v5013, %v5071
    %v5076 = vadd.f32 %v5014, %v5072
    %s5077 = sld [smem:[#allocation4 + $0x54]]
    %v5078 = vstv %s5077
    %v5079 = vmul.f32 %v5078, %v5033
    %v5080 = vmul.f32 %v5078, %v5034
    %v5081 = vmul.f32 %v5078, %v5035
    %v5082 = vmul.f32 %v5078, %v5036
    %v5087 = vrot.slane %v5079, 1
    %v5088 = vrot.slane %v5080, 1
    %v5089 = vrot.slane %v5081, 1
    %v5090 = vrot.slane %v5082, 1
    %v5095 = vadd.f32 %v5043, %v5087
    %v5096 = vadd.f32 %v5044, %v5088
    %v5097 = vadd.f32 %v5045, %v5089
    %v5098 = vadd.f32 %v5046, %v5090
    %s5099 = sld [smem:[#allocation4 + $0x55]]
    %v5100 = vstv %s5099
    %v5101 = vmul.f32 %v5100, %v5033
    %v5102 = vmul.f32 %v5100, %v5034
    %v5103 = vmul.f32 %v5100, %v5035
    %v5104 = vmul.f32 %v5100, %v5036
    %v5109 = vrot.slane %v5101, 1
    %v5110 = vrot.slane %v5102, 1
    %v5111 = vrot.slane %v5103, 1
    %v5112 = vrot.slane %v5104, 1
    %v5117 = vadd.f32 %v5053, %v5109
    %v5118 = vadd.f32 %v5054, %v5110
    %v5119 = vadd.f32 %v5055, %v5111
    %v5120 = vadd.f32 %v5056, %v5112
    %s5121 = sld [smem:[#allocation4 + $0x56]]
    %v5122 = vstv %s5121
    %v5123 = vmul.f32 %v5122, %v5033
    %v5124 = vmul.f32 %v5122, %v5034
    %v5125 = vmul.f32 %v5122, %v5035
    %v5126 = vmul.f32 %v5122, %v5036
    %v5131 = vrot.slane %v5123, 1
    %v5132 = vrot.slane %v5124, 1
    %v5133 = vrot.slane %v5125, 1
    %v5134 = vrot.slane %v5126, 1
    %v5139 = vadd.f32 %v5063, %v5131
    %v5140 = vadd.f32 %v5064, %v5132
    %v5141 = vadd.f32 %v5065, %v5133
    %v5142 = vadd.f32 %v5066, %v5134
    %s5143 = sld [smem:[#allocation4 + $0x57]]
    %v5144 = vstv %s5143
    %v5145 = vmul.f32 %v5144, %v5033
    %v5146 = vmul.f32 %v5144, %v5034
    %v5147 = vmul.f32 %v5144, %v5035
    %v5148 = vmul.f32 %v5144, %v5036
    %v5153 = vrot.slane %v5145, 1
    %v5154 = vrot.slane %v5146, 1
    %v5155 = vrot.slane %v5147, 1
    %v5156 = vrot.slane %v5148, 1
    %v5161 = vadd.f32 %v5073, %v5153
    %v5162 = vadd.f32 %v5074, %v5154
    %v5163 = vadd.f32 %v5075, %v5155
    %v5164 = vadd.f32 %v5076, %v5156
    %s5165 = sld [smem:[#allocation4 + $0x58]]
    %v5166 = vstv %s5165
    %v5167 = vmul.f32 %v5166, %v5033
    %v5168 = vmul.f32 %v5166, %v5034
    %v5169 = vmul.f32 %v5166, %v5035
    %v5170 = vmul.f32 %v5166, %v5036
    %v5175 = vrot.slane %v5167, 2
    %v5176 = vrot.slane %v5168, 2
    %v5177 = vrot.slane %v5169, 2
    %v5178 = vrot.slane %v5170, 2
    %v5183 = vadd.f32 %v5095, %v5175
    %v5184 = vadd.f32 %v5096, %v5176
    %v5185 = vadd.f32 %v5097, %v5177
    %v5186 = vadd.f32 %v5098, %v5178
    %s5187 = sld [smem:[#allocation4 + $0x59]]
    %v5188 = vstv %s5187
    %v5189 = vmul.f32 %v5188, %v5033
    %v5190 = vmul.f32 %v5188, %v5034
    %v5191 = vmul.f32 %v5188, %v5035
    %v5192 = vmul.f32 %v5188, %v5036
    %v5197 = vrot.slane %v5189, 2
    %v5198 = vrot.slane %v5190, 2
    %v5199 = vrot.slane %v5191, 2
    %v5200 = vrot.slane %v5192, 2
    %v5205 = vadd.f32 %v5117, %v5197
    %v5206 = vadd.f32 %v5118, %v5198
    %v5207 = vadd.f32 %v5119, %v5199
    %v5208 = vadd.f32 %v5120, %v5200
    %s5209 = sld [smem:[#allocation4 + $0x5a]]
    %v5210 = vstv %s5209
    %v5211 = vmul.f32 %v5210, %v5033
    %v5212 = vmul.f32 %v5210, %v5034
    %v5213 = vmul.f32 %v5210, %v5035
    %v5214 = vmul.f32 %v5210, %v5036
    %v5219 = vrot.slane %v5211, 2
    %v5220 = vrot.slane %v5212, 2
    %v5221 = vrot.slane %v5213, 2
    %v5222 = vrot.slane %v5214, 2
    %v5227 = vadd.f32 %v5139, %v5219
    %v5228 = vadd.f32 %v5140, %v5220
    %v5229 = vadd.f32 %v5141, %v5221
    %v5230 = vadd.f32 %v5142, %v5222
    %s5231 = sld [smem:[#allocation4 + $0x5b]]
    %v5232 = vstv %s5231
    %v5233 = vmul.f32 %v5232, %v5033
    %v5234 = vmul.f32 %v5232, %v5034
    %v5235 = vmul.f32 %v5232, %v5035
    %v5236 = vmul.f32 %v5232, %v5036
    %v5241 = vrot.slane %v5233, 2
    %v5242 = vrot.slane %v5234, 2
    %v5243 = vrot.slane %v5235, 2
    %v5244 = vrot.slane %v5236, 2
    %v5249 = vadd.f32 %v5161, %v5241
    %v5250 = vadd.f32 %v5162, %v5242
    %v5251 = vadd.f32 %v5163, %v5243
    %v5252 = vadd.f32 %v5164, %v5244
    %s5253 = sld [smem:[#allocation4 + $0x5c]]
    %v5254 = vstv %s5253
    %v5255 = vmul.f32 %v5254, %v5033
    %v5256 = vmul.f32 %v5254, %v5034
    %v5257 = vmul.f32 %v5254, %v5035
    %v5258 = vmul.f32 %v5254, %v5036
    %v5263 = vrot.slane %v5255, 3
    %v5264 = vrot.slane %v5256, 3
    %v5265 = vrot.slane %v5257, 3
    %v5266 = vrot.slane %v5258, 3
    %v5271 = vadd.f32 %v5183, %v5263
    %v5272 = vadd.f32 %v5184, %v5264
    %v5273 = vadd.f32 %v5185, %v5265
    %v5274 = vadd.f32 %v5186, %v5266
    %s5275 = sld [smem:[#allocation4 + $0x5d]]
    %v5276 = vstv %s5275
    %v5277 = vmul.f32 %v5276, %v5033
    %v5278 = vmul.f32 %v5276, %v5034
    %v5279 = vmul.f32 %v5276, %v5035
    %v5280 = vmul.f32 %v5276, %v5036
    %v5285 = vrot.slane %v5277, 3
    %v5286 = vrot.slane %v5278, 3
    %v5287 = vrot.slane %v5279, 3
    %v5288 = vrot.slane %v5280, 3
    %v5293 = vadd.f32 %v5205, %v5285
    %v5294 = vadd.f32 %v5206, %v5286
    %v5295 = vadd.f32 %v5207, %v5287
    %v5296 = vadd.f32 %v5208, %v5288
    %s5297 = sld [smem:[#allocation4 + $0x5e]]
    %v5298 = vstv %s5297
    %v5299 = vmul.f32 %v5298, %v5033
    %v5300 = vmul.f32 %v5298, %v5034
    %v5301 = vmul.f32 %v5298, %v5035
    %v5302 = vmul.f32 %v5298, %v5036
    %v5307 = vrot.slane %v5299, 3
    %v5308 = vrot.slane %v5300, 3
    %v5309 = vrot.slane %v5301, 3
    %v5310 = vrot.slane %v5302, 3
    %v5315 = vadd.f32 %v5227, %v5307
    %v5316 = vadd.f32 %v5228, %v5308
    %v5317 = vadd.f32 %v5229, %v5309
    %v5318 = vadd.f32 %v5230, %v5310
    %s5319 = sld [smem:[#allocation4 + $0x5f]]
    %v5320 = vstv %s5319
    %v5321 = vmul.f32 %v5320, %v5033
    %v5322 = vmul.f32 %v5320, %v5034
    %v5323 = vmul.f32 %v5320, %v5035
    %v5324 = vmul.f32 %v5320, %v5036
    %v5329 = vrot.slane %v5321, 3
    %v5330 = vrot.slane %v5322, 3
    %v5331 = vrot.slane %v5323, 3
    %v5332 = vrot.slane %v5324, 3
    %v5337 = vadd.f32 %v5249, %v5329
    %v5338 = vadd.f32 %v5250, %v5330
    %v5339 = vadd.f32 %v5251, %v5331
    %v5340 = vadd.f32 %v5252, %v5332
    %5341 = vrot.lane.b32.xlu0 %v3395, 113
    %v5342 = vpop.permute.xlu0 %5341
    %5343 = vrot.lane.b32.xlu0 %v3396, 113
    %v5344 = vpop.permute.xlu0 %5343
    %5345 = vrot.lane.b32.xlu0 %v3397, 113
    %v5346 = vpop.permute.xlu0 %5345
    %5347 = vrot.lane.b32.xlu0 %v3398, 113
    %v5348 = vpop.permute.xlu0 %5347
    %v5349 = vsel %vm2266, %v5342, %v5344
    %v5350 = vsel %vm2266, %v5346, %v5348
    %v5357 = vsel %vm2266, %v5344, %v5342
    %v5358 = vsel %vm2266, %v5348, %v5346
    %v5359 = vmul.f32 %v5349, %v2281
    %v5360 = vmul.f32 %v5357, %v2285
    %v5361 = vmul.f32 %v5350, %v2281
    %v5362 = vmul.f32 %v5358, %v2285
    %s5363 = sld [smem:[#allocation4 + $0x60]]
    %v5364 = vstv %s5363
    %v5365 = vmul.f32 %v5364, %v5359
    %v5366 = vmul.f32 %v5364, %v5360
    %v5367 = vmul.f32 %v5364, %v5361
    %v5368 = vmul.f32 %v5364, %v5362
    %v5369 = vadd.f32 %v5271, %v5365
    %v5370 = vadd.f32 %v5272, %v5366
    %v5371 = vadd.f32 %v5273, %v5367
    %v5372 = vadd.f32 %v5274, %v5368
    %s5373 = sld [smem:[#allocation4 + $0x61]]
    %v5374 = vstv %s5373
    %v5375 = vmul.f32 %v5374, %v5359
    %v5376 = vmul.f32 %v5374, %v5360
    %v5377 = vmul.f32 %v5374, %v5361
    %v5378 = vmul.f32 %v5374, %v5362
    %v5379 = vadd.f32 %v5293, %v5375
    %v5380 = vadd.f32 %v5294, %v5376
    %v5381 = vadd.f32 %v5295, %v5377
    %v5382 = vadd.f32 %v5296, %v5378
    %s5383 = sld [smem:[#allocation4 + $0x62]]
    %v5384 = vstv %s5383
    %v5385 = vmul.f32 %v5384, %v5359
    %v5386 = vmul.f32 %v5384, %v5360
    %v5387 = vmul.f32 %v5384, %v5361
    %v5388 = vmul.f32 %v5384, %v5362
    %v5389 = vadd.f32 %v5315, %v5385
    %v5390 = vadd.f32 %v5316, %v5386
    %v5391 = vadd.f32 %v5317, %v5387
    %v5392 = vadd.f32 %v5318, %v5388
    %s5393 = sld [smem:[#allocation4 + $0x63]]
    %v5394 = vstv %s5393
    %v5395 = vmul.f32 %v5394, %v5359
    %v5396 = vmul.f32 %v5394, %v5360
    %v5397 = vmul.f32 %v5394, %v5361
    %v5398 = vmul.f32 %v5394, %v5362
    %v5399 = vadd.f32 %v5337, %v5395
    %v5400 = vadd.f32 %v5338, %v5396
    %v5401 = vadd.f32 %v5339, %v5397
    %v5402 = vadd.f32 %v5340, %v5398
    %s5403 = sld [smem:[#allocation4 + $0x64]]
    %v5404 = vstv %s5403
    %v5405 = vmul.f32 %v5404, %v5359
    %v5406 = vmul.f32 %v5404, %v5360
    %v5407 = vmul.f32 %v5404, %v5361
    %v5408 = vmul.f32 %v5404, %v5362
    %v5413 = vrot.slane %v5405, 1
    %v5414 = vrot.slane %v5406, 1
    %v5415 = vrot.slane %v5407, 1
    %v5416 = vrot.slane %v5408, 1
    %v5421 = vadd.f32 %v5369, %v5413
    %v5422 = vadd.f32 %v5370, %v5414
    %v5423 = vadd.f32 %v5371, %v5415
    %v5424 = vadd.f32 %v5372, %v5416
    %s5425 = sld [smem:[#allocation4 + $0x65]]
    %v5426 = vstv %s5425
    %v5427 = vmul.f32 %v5426, %v5359
    %v5428 = vmul.f32 %v5426, %v5360
    %v5429 = vmul.f32 %v5426, %v5361
    %v5430 = vmul.f32 %v5426, %v5362
    %v5435 = vrot.slane %v5427, 1
    %v5436 = vrot.slane %v5428, 1
    %v5437 = vrot.slane %v5429, 1
    %v5438 = vrot.slane %v5430, 1
    %v5443 = vadd.f32 %v5379, %v5435
    %v5444 = vadd.f32 %v5380, %v5436
    %v5445 = vadd.f32 %v5381, %v5437
    %v5446 = vadd.f32 %v5382, %v5438
    %s5447 = sld [smem:[#allocation4 + $0x66]]
    %v5448 = vstv %s5447
    %v5449 = vmul.f32 %v5448, %v5359
    %v5450 = vmul.f32 %v5448, %v5360
    %v5451 = vmul.f32 %v5448, %v5361
    %v5452 = vmul.f32 %v5448, %v5362
    %v5457 = vrot.slane %v5449, 1
    %v5458 = vrot.slane %v5450, 1
    %v5459 = vrot.slane %v5451, 1
    %v5460 = vrot.slane %v5452, 1
    %v5465 = vadd.f32 %v5389, %v5457
    %v5466 = vadd.f32 %v5390, %v5458
    %v5467 = vadd.f32 %v5391, %v5459
    %v5468 = vadd.f32 %v5392, %v5460
    %s5469 = sld [smem:[#allocation4 + $0x67]]
    %v5470 = vstv %s5469
    %v5471 = vmul.f32 %v5470, %v5359
    %v5472 = vmul.f32 %v5470, %v5360
    %v5473 = vmul.f32 %v5470, %v5361
    %v5474 = vmul.f32 %v5470, %v5362
    %v5479 = vrot.slane %v5471, 1
    %v5480 = vrot.slane %v5472, 1
    %v5481 = vrot.slane %v5473, 1
    %v5482 = vrot.slane %v5474, 1
    %v5487 = vadd.f32 %v5399, %v5479
    %v5488 = vadd.f32 %v5400, %v5480
    %v5489 = vadd.f32 %v5401, %v5481
    %v5490 = vadd.f32 %v5402, %v5482
    %s5491 = sld [smem:[#allocation4 + $0x68]]
    %v5492 = vstv %s5491
    %v5493 = vmul.f32 %v5492, %v5359
    %v5494 = vmul.f32 %v5492, %v5360
    %v5495 = vmul.f32 %v5492, %v5361
    %v5496 = vmul.f32 %v5492, %v5362
    %v5501 = vrot.slane %v5493, 2
    %v5502 = vrot.slane %v5494, 2
    %v5503 = vrot.slane %v5495, 2
    %v5504 = vrot.slane %v5496, 2
    %v5509 = vadd.f32 %v5421, %v5501
    %v5510 = vadd.f32 %v5422, %v5502
    %v5511 = vadd.f32 %v5423, %v5503
    %v5512 = vadd.f32 %v5424, %v5504
    %s5513 = sld [smem:[#allocation4 + $0x69]]
    %v5514 = vstv %s5513
    %v5515 = vmul.f32 %v5514, %v5359
    %v5516 = vmul.f32 %v5514, %v5360
    %v5517 = vmul.f32 %v5514, %v5361
    %v5518 = vmul.f32 %v5514, %v5362
    %v5523 = vrot.slane %v5515, 2
    %v5524 = vrot.slane %v5516, 2
    %v5525 = vrot.slane %v5517, 2
    %v5526 = vrot.slane %v5518, 2
    %v5531 = vadd.f32 %v5443, %v5523
    %v5532 = vadd.f32 %v5444, %v5524
    %v5533 = vadd.f32 %v5445, %v5525
    %v5534 = vadd.f32 %v5446, %v5526
    %s5535 = sld [smem:[#allocation4 + $0x6a]]
    %v5536 = vstv %s5535
    %v5537 = vmul.f32 %v5536, %v5359
    %v5538 = vmul.f32 %v5536, %v5360
    %v5539 = vmul.f32 %v5536, %v5361
    %v5540 = vmul.f32 %v5536, %v5362
    %v5545 = vrot.slane %v5537, 2
    %v5546 = vrot.slane %v5538, 2
    %v5547 = vrot.slane %v5539, 2
    %v5548 = vrot.slane %v5540, 2
    %v5553 = vadd.f32 %v5465, %v5545
    %v5554 = vadd.f32 %v5466, %v5546
    %v5555 = vadd.f32 %v5467, %v5547
    %v5556 = vadd.f32 %v5468, %v5548
    %s5557 = sld [smem:[#allocation4 + $0x6b]]
    %v5558 = vstv %s5557
    %v5559 = vmul.f32 %v5558, %v5359
    %v5560 = vmul.f32 %v5558, %v5360
    %v5561 = vmul.f32 %v5558, %v5361
    %v5562 = vmul.f32 %v5558, %v5362
    %v5567 = vrot.slane %v5559, 2
    %v5568 = vrot.slane %v5560, 2
    %v5569 = vrot.slane %v5561, 2
    %v5570 = vrot.slane %v5562, 2
    %v5575 = vadd.f32 %v5487, %v5567
    %v5576 = vadd.f32 %v5488, %v5568
    %v5577 = vadd.f32 %v5489, %v5569
    %v5578 = vadd.f32 %v5490, %v5570
    %s5579 = sld [smem:[#allocation4 + $0x6c]]
    %v5580 = vstv %s5579
    %v5581 = vmul.f32 %v5580, %v5359
    %v5582 = vmul.f32 %v5580, %v5360
    %v5583 = vmul.f32 %v5580, %v5361
    %v5584 = vmul.f32 %v5580, %v5362
    %v5589 = vrot.slane %v5581, 3
    %v5590 = vrot.slane %v5582, 3
    %v5591 = vrot.slane %v5583, 3
    %v5592 = vrot.slane %v5584, 3
    %v5597 = vadd.f32 %v5509, %v5589
    %v5598 = vadd.f32 %v5510, %v5590
    %v5599 = vadd.f32 %v5511, %v5591
    %v5600 = vadd.f32 %v5512, %v5592
    %s5601 = sld [smem:[#allocation4 + $0x6d]]
    %v5602 = vstv %s5601
    %v5603 = vmul.f32 %v5602, %v5359
    %v5604 = vmul.f32 %v5602, %v5360
    %v5605 = vmul.f32 %v5602, %v5361
    %v5606 = vmul.f32 %v5602, %v5362
    %v5611 = vrot.slane %v5603, 3
    %v5612 = vrot.slane %v5604, 3
    %v5613 = vrot.slane %v5605, 3
    %v5614 = vrot.slane %v5606, 3
    %v5619 = vadd.f32 %v5531, %v5611
    %v5620 = vadd.f32 %v5532, %v5612
    %v5621 = vadd.f32 %v5533, %v5613
    %v5622 = vadd.f32 %v5534, %v5614
    %s5623 = sld [smem:[#allocation4 + $0x6e]]
    %v5624 = vstv %s5623
    %v5625 = vmul.f32 %v5624, %v5359
    %v5626 = vmul.f32 %v5624, %v5360
    %v5627 = vmul.f32 %v5624, %v5361
    %v5628 = vmul.f32 %v5624, %v5362
    %v5633 = vrot.slane %v5625, 3
    %v5634 = vrot.slane %v5626, 3
    %v5635 = vrot.slane %v5627, 3
    %v5636 = vrot.slane %v5628, 3
    %v5641 = vadd.f32 %v5553, %v5633
    %v5642 = vadd.f32 %v5554, %v5634
    %v5643 = vadd.f32 %v5555, %v5635
    %v5644 = vadd.f32 %v5556, %v5636
    %s5645 = sld [smem:[#allocation4 + $0x6f]]
    %v5646 = vstv %s5645
    %v5647 = vmul.f32 %v5646, %v5359
    %v5648 = vmul.f32 %v5646, %v5360
    %v5649 = vmul.f32 %v5646, %v5361
    %v5650 = vmul.f32 %v5646, %v5362
    %v5655 = vrot.slane %v5647, 3
    %v5656 = vrot.slane %v5648, 3
    %v5657 = vrot.slane %v5649, 3
    %v5658 = vrot.slane %v5650, 3
    %v5663 = vadd.f32 %v5575, %v5655
    %v5664 = vadd.f32 %v5576, %v5656
    %v5665 = vadd.f32 %v5577, %v5657
    %v5666 = vadd.f32 %v5578, %v5658
    %5667 = vrot.lane.b32.xlu0 %v3395, 112
    %v5668 = vpop.permute.xlu0 %5667
    %5669 = vrot.lane.b32.xlu0 %v3396, 112
    %v5670 = vpop.permute.xlu0 %5669
    %5671 = vrot.lane.b32.xlu0 %v3397, 112
    %v5672 = vpop.permute.xlu0 %5671
    %5673 = vrot.lane.b32.xlu0 %v3398, 112
    %v5674 = vpop.permute.xlu0 %5673
    %v5675 = vsel %vm2606, %v5668, %v5670
    %v5676 = vsel %vm2606, %v5672, %v5674
    %v5683 = vsel %vm2606, %v5670, %v5668
    %v5684 = vsel %vm2606, %v5674, %v5672
    %v5685 = vmul.f32 %v5675, %v2621
    %v5686 = vmul.f32 %v5683, %v2625
    %v5687 = vmul.f32 %v5676, %v2621
    %v5688 = vmul.f32 %v5684, %v2625
    %s5689 = sld [smem:[#allocation4 + $0x70]]
    %v5690 = vstv %s5689
    %v5691 = vmul.f32 %v5690, %v5685
    %v5692 = vmul.f32 %v5690, %v5686
    %v5693 = vmul.f32 %v5690, %v5687
    %v5694 = vmul.f32 %v5690, %v5688
    %v5695 = vadd.f32 %v5597, %v5691
    %v5696 = vadd.f32 %v5598, %v5692
    %v5697 = vadd.f32 %v5599, %v5693
    %v5698 = vadd.f32 %v5600, %v5694
    %s5699 = sld [smem:[#allocation4 + $0x71]]
    %v5700 = vstv %s5699
    %v5701 = vmul.f32 %v5700, %v5685
    %v5702 = vmul.f32 %v5700, %v5686
    %v5703 = vmul.f32 %v5700, %v5687
    %v5704 = vmul.f32 %v5700, %v5688
    %v5705 = vadd.f32 %v5619, %v5701
    %v5706 = vadd.f32 %v5620, %v5702
    %v5707 = vadd.f32 %v5621, %v5703
    %v5708 = vadd.f32 %v5622, %v5704
    %s5709 = sld [smem:[#allocation4 + $0x72]]
    %v5710 = vstv %s5709
    %v5711 = vmul.f32 %v5710, %v5685
    %v5712 = vmul.f32 %v5710, %v5686
    %v5713 = vmul.f32 %v5710, %v5687
    %v5714 = vmul.f32 %v5710, %v5688
    %v5715 = vadd.f32 %v5641, %v5711
    %v5716 = vadd.f32 %v5642, %v5712
    %v5717 = vadd.f32 %v5643, %v5713
    %v5718 = vadd.f32 %v5644, %v5714
    %s5719 = sld [smem:[#allocation4 + $0x73]]
    %v5720 = vstv %s5719
    %v5721 = vmul.f32 %v5720, %v5685
    %v5722 = vmul.f32 %v5720, %v5686
    %v5723 = vmul.f32 %v5720, %v5687
    %v5724 = vmul.f32 %v5720, %v5688
    %v5725 = vadd.f32 %v5663, %v5721
    %v5726 = vadd.f32 %v5664, %v5722
    %v5727 = vadd.f32 %v5665, %v5723
    %v5728 = vadd.f32 %v5666, %v5724
    %s5729 = sld [smem:[#allocation4 + $0x74]]
    %v5730 = vstv %s5729
    %v5731 = vmul.f32 %v5730, %v5685
    %v5732 = vmul.f32 %v5730, %v5686
    %v5733 = vmul.f32 %v5730, %v5687
    %v5734 = vmul.f32 %v5730, %v5688
    %v5739 = vrot.slane %v5731, 1
    %v5740 = vrot.slane %v5732, 1
    %v5741 = vrot.slane %v5733, 1
    %v5742 = vrot.slane %v5734, 1
    %v5747 = vadd.f32 %v5695, %v5739
    %v5748 = vadd.f32 %v5696, %v5740
    %v5749 = vadd.f32 %v5697, %v5741
    %v5750 = vadd.f32 %v5698, %v5742
    %s5751 = sld [smem:[#allocation4 + $0x75]]
    %v5752 = vstv %s5751
    %v5753 = vmul.f32 %v5752, %v5685
    %v5754 = vmul.f32 %v5752, %v5686
    %v5755 = vmul.f32 %v5752, %v5687
    %v5756 = vmul.f32 %v5752, %v5688
    %v5761 = vrot.slane %v5753, 1
    %v5762 = vrot.slane %v5754, 1
    %v5763 = vrot.slane %v5755, 1
    %v5764 = vrot.slane %v5756, 1
    %v5769 = vadd.f32 %v5705, %v5761
    %v5770 = vadd.f32 %v5706, %v5762
    %v5771 = vadd.f32 %v5707, %v5763
    %v5772 = vadd.f32 %v5708, %v5764
    %s5773 = sld [smem:[#allocation4 + $0x76]]
    %v5774 = vstv %s5773
    %v5775 = vmul.f32 %v5774, %v5685
    %v5776 = vmul.f32 %v5774, %v5686
    %v5777 = vmul.f32 %v5774, %v5687
    %v5778 = vmul.f32 %v5774, %v5688
    %v5783 = vrot.slane %v5775, 1
    %v5784 = vrot.slane %v5776, 1
    %v5785 = vrot.slane %v5777, 1
    %v5786 = vrot.slane %v5778, 1
    %v5791 = vadd.f32 %v5715, %v5783
    %v5792 = vadd.f32 %v5716, %v5784
    %v5793 = vadd.f32 %v5717, %v5785
    %v5794 = vadd.f32 %v5718, %v5786
    %s5795 = sld [smem:[#allocation4 + $0x77]]
    %v5796 = vstv %s5795
    %v5797 = vmul.f32 %v5796, %v5685
    %v5798 = vmul.f32 %v5796, %v5686
    %v5799 = vmul.f32 %v5796, %v5687
    %v5800 = vmul.f32 %v5796, %v5688
    %v5805 = vrot.slane %v5797, 1
    %v5806 = vrot.slane %v5798, 1
    %v5807 = vrot.slane %v5799, 1
    %v5808 = vrot.slane %v5800, 1
    %v5813 = vadd.f32 %v5725, %v5805
    %v5814 = vadd.f32 %v5726, %v5806
    %v5815 = vadd.f32 %v5727, %v5807
    %v5816 = vadd.f32 %v5728, %v5808
    %s5817 = sld [smem:[#allocation4 + $0x78]]
    %v5818 = vstv %s5817
    %v5819 = vmul.f32 %v5818, %v5685
    %v5820 = vmul.f32 %v5818, %v5686
    %v5821 = vmul.f32 %v5818, %v5687
    %v5822 = vmul.f32 %v5818, %v5688
    %v5827 = vrot.slane %v5819, 2
    %v5828 = vrot.slane %v5820, 2
    %v5829 = vrot.slane %v5821, 2
    %v5830 = vrot.slane %v5822, 2
    %v5835 = vadd.f32 %v5747, %v5827
    %v5836 = vadd.f32 %v5748, %v5828
    %v5837 = vadd.f32 %v5749, %v5829
    %v5838 = vadd.f32 %v5750, %v5830
    %s5839 = sld [smem:[#allocation4 + $0x79]]
    %v5840 = vstv %s5839
    %v5841 = vmul.f32 %v5840, %v5685
    %v5842 = vmul.f32 %v5840, %v5686
    %v5843 = vmul.f32 %v5840, %v5687
    %v5844 = vmul.f32 %v5840, %v5688
    %v5849 = vrot.slane %v5841, 2
    %v5850 = vrot.slane %v5842, 2
    %v5851 = vrot.slane %v5843, 2
    %v5852 = vrot.slane %v5844, 2
    %v5857 = vadd.f32 %v5769, %v5849
    %v5858 = vadd.f32 %v5770, %v5850
    %v5859 = vadd.f32 %v5771, %v5851
    %v5860 = vadd.f32 %v5772, %v5852
    %s5861 = sld [smem:[#allocation4 + $0x7a]]
    %v5862 = vstv %s5861
    %v5863 = vmul.f32 %v5862, %v5685
    %v5864 = vmul.f32 %v5862, %v5686
    %v5865 = vmul.f32 %v5862, %v5687
    %v5866 = vmul.f32 %v5862, %v5688
    %v5871 = vrot.slane %v5863, 2
    %v5872 = vrot.slane %v5864, 2
    %v5873 = vrot.slane %v5865, 2
    %v5874 = vrot.slane %v5866, 2
    %v5879 = vadd.f32 %v5791, %v5871
    %v5880 = vadd.f32 %v5792, %v5872
    %v5881 = vadd.f32 %v5793, %v5873
    %v5882 = vadd.f32 %v5794, %v5874
    %s5883 = sld [smem:[#allocation4 + $0x7b]]
    %v5884 = vstv %s5883
    %v5885 = vmul.f32 %v5884, %v5685
    %v5886 = vmul.f32 %v5884, %v5686
    %v5887 = vmul.f32 %v5884, %v5687
    %v5888 = vmul.f32 %v5884, %v5688
    %v5893 = vrot.slane %v5885, 2
    %v5894 = vrot.slane %v5886, 2
    %v5895 = vrot.slane %v5887, 2
    %v5896 = vrot.slane %v5888, 2
    %v5901 = vadd.f32 %v5813, %v5893
    %v5902 = vadd.f32 %v5814, %v5894
    %v5903 = vadd.f32 %v5815, %v5895
    %v5904 = vadd.f32 %v5816, %v5896
    %s5905 = sld [smem:[#allocation4 + $0x7c]]
    %v5906 = vstv %s5905
    %v5907 = vmul.f32 %v5906, %v5685
    %v5908 = vmul.f32 %v5906, %v5686
    %v5909 = vmul.f32 %v5906, %v5687
    %v5910 = vmul.f32 %v5906, %v5688
    %v5915 = vrot.slane %v5907, 3
    %v5916 = vrot.slane %v5908, 3
    %v5917 = vrot.slane %v5909, 3
    %v5918 = vrot.slane %v5910, 3
    %v5923 = vadd.f32 %v5835, %v5915
    %v5924 = vadd.f32 %v5836, %v5916
    %v5925 = vadd.f32 %v5837, %v5917
    %v5926 = vadd.f32 %v5838, %v5918
    %s5927 = sld [smem:[#allocation4 + $0x7d]]
    %v5928 = vstv %s5927
    %v5929 = vmul.f32 %v5928, %v5685
    %v5930 = vmul.f32 %v5928, %v5686
    %v5931 = vmul.f32 %v5928, %v5687
    %v5932 = vmul.f32 %v5928, %v5688
    %v5937 = vrot.slane %v5929, 3
    %v5938 = vrot.slane %v5930, 3
    %v5939 = vrot.slane %v5931, 3
    %v5940 = vrot.slane %v5932, 3
    %v5945 = vadd.f32 %v5857, %v5937
    %v5946 = vadd.f32 %v5858, %v5938
    %v5947 = vadd.f32 %v5859, %v5939
    %v5948 = vadd.f32 %v5860, %v5940
    %s5949 = sld [smem:[#allocation4 + $0x7e]]
    %v5950 = vstv %s5949
    %v5951 = vmul.f32 %v5950, %v5685
    %v5952 = vmul.f32 %v5950, %v5686
    %v5953 = vmul.f32 %v5950, %v5687
    %v5954 = vmul.f32 %v5950, %v5688
    %v5959 = vrot.slane %v5951, 3
    %v5960 = vrot.slane %v5952, 3
    %v5961 = vrot.slane %v5953, 3
    %v5962 = vrot.slane %v5954, 3
    %v5967 = vadd.f32 %v5879, %v5959
    %v5968 = vadd.f32 %v5880, %v5960
    %v5969 = vadd.f32 %v5881, %v5961
    %v5970 = vadd.f32 %v5882, %v5962
    %s5971 = sld [smem:[#allocation4 + $0x7f]]
    %v5972 = vstv %s5971
    %v5973 = vmul.f32 %v5972, %v5685
    %v5974 = vmul.f32 %v5972, %v5686
    %v5975 = vmul.f32 %v5972, %v5687
    %v5976 = vmul.f32 %v5972, %v5688
    %v5981 = vrot.slane %v5973, 3
    %v5982 = vrot.slane %v5974, 3
    %v5983 = vrot.slane %v5975, 3
    %v5984 = vrot.slane %v5976, 3
    %v5989 = vadd.f32 %v5901, %v5981
    %v5990 = vadd.f32 %v5902, %v5982
    %v5991 = vadd.f32 %v5903, %v5983
    %v5992 = vadd.f32 %v5904, %v5984
    %5993 = vrot.lane.b32.xlu0 %v3395, 111
    %v5994 = vpop.permute.xlu0 %5993
    %5995 = vrot.lane.b32.xlu0 %v3396, 111
    %v5996 = vpop.permute.xlu0 %5995
    %5997 = vrot.lane.b32.xlu0 %v3397, 111
    %v5998 = vpop.permute.xlu0 %5997
    %5999 = vrot.lane.b32.xlu0 %v3398, 111
    %v6000 = vpop.permute.xlu0 %5999
    %v6001 = vsel %vm2946, %v5994, %v5996
    %v6002 = vsel %vm2946, %v5998, %v6000
    %v6009 = vsel %vm2946, %v5996, %v5994
    %v6010 = vsel %vm2946, %v6000, %v5998
    %v6011 = vmul.f32 %v6001, %v2961
    %v6012 = vmul.f32 %v6009, %v2965
    %v6013 = vmul.f32 %v6002, %v2961
    %v6014 = vmul.f32 %v6010, %v2965
    %s6015 = sld [smem:[#allocation4 + $0x80]]
    %v6016 = vstv %s6015
    %v6017 = vmul.f32 %v6016, %v6011
    %v6018 = vmul.f32 %v6016, %v6012
    %v6019 = vmul.f32 %v6016, %v6013
    %v6020 = vmul.f32 %v6016, %v6014
    %v6021 = vadd.f32 %v5923, %v6017
    %v6022 = vadd.f32 %v5924, %v6018
    %v6023 = vadd.f32 %v5925, %v6019
    %v6024 = vadd.f32 %v5926, %v6020
    %s6025 = sld [smem:[#allocation4 + $0x81]]
    %v6026 = vstv %s6025
    %v6027 = vmul.f32 %v6026, %v6011
    %v6028 = vmul.f32 %v6026, %v6012
    %v6029 = vmul.f32 %v6026, %v6013
    %v6030 = vmul.f32 %v6026, %v6014
    %v6031 = vadd.f32 %v5945, %v6027
    %v6032 = vadd.f32 %v5946, %v6028
    %v6033 = vadd.f32 %v5947, %v6029
    %v6034 = vadd.f32 %v5948, %v6030
    %s6035 = sld [smem:[#allocation4 + $0x82]]
    %v6036 = vstv %s6035
    %v6037 = vmul.f32 %v6036, %v6011
    %v6038 = vmul.f32 %v6036, %v6012
    %v6039 = vmul.f32 %v6036, %v6013
    %v6040 = vmul.f32 %v6036, %v6014
    %v6041 = vadd.f32 %v5967, %v6037
    %v6042 = vadd.f32 %v5968, %v6038
    %v6043 = vadd.f32 %v5969, %v6039
    %v6044 = vadd.f32 %v5970, %v6040
    %s6045 = sld [smem:[#allocation4 + $0x83]]
    %v6046 = vstv %s6045
    %v6047 = vmul.f32 %v6046, %v6011
    %v6048 = vmul.f32 %v6046, %v6012
    %v6049 = vmul.f32 %v6046, %v6013
    %v6050 = vmul.f32 %v6046, %v6014
    %v6051 = vadd.f32 %v5989, %v6047
    %v6052 = vadd.f32 %v5990, %v6048
    %v6053 = vadd.f32 %v5991, %v6049
    %v6054 = vadd.f32 %v5992, %v6050
    %s6055 = sld [smem:[#allocation4 + $0x84]]
    %v6056 = vstv %s6055
    %v6057 = vmul.f32 %v6056, %v6011
    %v6058 = vmul.f32 %v6056, %v6012
    %v6059 = vmul.f32 %v6056, %v6013
    %v6060 = vmul.f32 %v6056, %v6014
    %v6065 = vrot.slane %v6057, 1
    %v6066 = vrot.slane %v6058, 1
    %v6067 = vrot.slane %v6059, 1
    %v6068 = vrot.slane %v6060, 1
    %v6073 = vadd.f32 %v6021, %v6065
    %v6074 = vadd.f32 %v6022, %v6066
    %v6075 = vadd.f32 %v6023, %v6067
    %v6076 = vadd.f32 %v6024, %v6068
    %s6077 = sld [smem:[#allocation4 + $0x85]]
    %v6078 = vstv %s6077
    %v6079 = vmul.f32 %v6078, %v6011
    %v6080 = vmul.f32 %v6078, %v6012
    %v6081 = vmul.f32 %v6078, %v6013
    %v6082 = vmul.f32 %v6078, %v6014
    %v6087 = vrot.slane %v6079, 1
    %v6088 = vrot.slane %v6080, 1
    %v6089 = vrot.slane %v6081, 1
    %v6090 = vrot.slane %v6082, 1
    %v6095 = vadd.f32 %v6031, %v6087
    %v6096 = vadd.f32 %v6032, %v6088
    %v6097 = vadd.f32 %v6033, %v6089
    %v6098 = vadd.f32 %v6034, %v6090
    %s6099 = sld [smem:[#allocation4 + $0x86]]
    %v6100 = vstv %s6099
    %v6101 = vmul.f32 %v6100, %v6011
    %v6102 = vmul.f32 %v6100, %v6012
    %v6103 = vmul.f32 %v6100, %v6013
    %v6104 = vmul.f32 %v6100, %v6014
    %v6109 = vrot.slane %v6101, 1
    %v6110 = vrot.slane %v6102, 1
    %v6111 = vrot.slane %v6103, 1
    %v6112 = vrot.slane %v6104, 1
    %v6117 = vadd.f32 %v6041, %v6109
    %v6118 = vadd.f32 %v6042, %v6110
    %v6119 = vadd.f32 %v6043, %v6111
    %v6120 = vadd.f32 %v6044, %v6112
    %s6121 = sld [smem:[#allocation4 + $0x87]]
    %v6122 = vstv %s6121
    %v6123 = vmul.f32 %v6122, %v6011
    %v6124 = vmul.f32 %v6122, %v6012
    %v6125 = vmul.f32 %v6122, %v6013
    %v6126 = vmul.f32 %v6122, %v6014
    %v6131 = vrot.slane %v6123, 1
    %v6132 = vrot.slane %v6124, 1
    %v6133 = vrot.slane %v6125, 1
    %v6134 = vrot.slane %v6126, 1
    %v6139 = vadd.f32 %v6051, %v6131
    %v6140 = vadd.f32 %v6052, %v6132
    %v6141 = vadd.f32 %v6053, %v6133
    %v6142 = vadd.f32 %v6054, %v6134
    %s6143 = sld [smem:[#allocation4 + $0x88]]
    %v6144 = vstv %s6143
    %v6145 = vmul.f32 %v6144, %v6011
    %v6146 = vmul.f32 %v6144, %v6012
    %v6147 = vmul.f32 %v6144, %v6013
    %v6148 = vmul.f32 %v6144, %v6014
    %v6153 = vrot.slane %v6145, 2
    %v6154 = vrot.slane %v6146, 2
    %v6155 = vrot.slane %v6147, 2
    %v6156 = vrot.slane %v6148, 2
    %v6161 = vadd.f32 %v6073, %v6153
    %v6162 = vadd.f32 %v6074, %v6154
    %v6163 = vadd.f32 %v6075, %v6155
    %v6164 = vadd.f32 %v6076, %v6156
    %s6165 = sld [smem:[#allocation4 + $0x89]]
    %v6166 = vstv %s6165
    %v6167 = vmul.f32 %v6166, %v6011
    %v6168 = vmul.f32 %v6166, %v6012
    %v6169 = vmul.f32 %v6166, %v6013
    %v6170 = vmul.f32 %v6166, %v6014
    %v6175 = vrot.slane %v6167, 2
    %v6176 = vrot.slane %v6168, 2
    %v6177 = vrot.slane %v6169, 2
    %v6178 = vrot.slane %v6170, 2
    %v6183 = vadd.f32 %v6095, %v6175
    %v6184 = vadd.f32 %v6096, %v6176
    %v6185 = vadd.f32 %v6097, %v6177
    %v6186 = vadd.f32 %v6098, %v6178
    %s6187 = sld [smem:[#allocation4 + $0x8a]]
    %v6188 = vstv %s6187
    %v6189 = vmul.f32 %v6188, %v6011
    %v6190 = vmul.f32 %v6188, %v6012
    %v6191 = vmul.f32 %v6188, %v6013
    %v6192 = vmul.f32 %v6188, %v6014
    %v6197 = vrot.slane %v6189, 2
    %v6198 = vrot.slane %v6190, 2
    %v6199 = vrot.slane %v6191, 2
    %v6200 = vrot.slane %v6192, 2
    %v6205 = vadd.f32 %v6117, %v6197
    %v6206 = vadd.f32 %v6118, %v6198
    %v6207 = vadd.f32 %v6119, %v6199
    %v6208 = vadd.f32 %v6120, %v6200
    %s6209 = sld [smem:[#allocation4 + $0x8b]]
    %v6210 = vstv %s6209
    %v6211 = vmul.f32 %v6210, %v6011
    %v6212 = vmul.f32 %v6210, %v6012
    %v6213 = vmul.f32 %v6210, %v6013
    %v6214 = vmul.f32 %v6210, %v6014
    %v6219 = vrot.slane %v6211, 2
    %v6220 = vrot.slane %v6212, 2
    %v6221 = vrot.slane %v6213, 2
    %v6222 = vrot.slane %v6214, 2
    %v6227 = vadd.f32 %v6139, %v6219
    %v6228 = vadd.f32 %v6140, %v6220
    %v6229 = vadd.f32 %v6141, %v6221
    %v6230 = vadd.f32 %v6142, %v6222
    %s6231 = sld [smem:[#allocation4 + $0x8c]]
    %v6232 = vstv %s6231
    %v6233 = vmul.f32 %v6232, %v6011
    %v6234 = vmul.f32 %v6232, %v6012
    %v6235 = vmul.f32 %v6232, %v6013
    %v6236 = vmul.f32 %v6232, %v6014
    %v6241 = vrot.slane %v6233, 3
    %v6242 = vrot.slane %v6234, 3
    %v6243 = vrot.slane %v6235, 3
    %v6244 = vrot.slane %v6236, 3
    %v6249 = vadd.f32 %v6161, %v6241
    %v6250 = vadd.f32 %v6162, %v6242
    %v6251 = vadd.f32 %v6163, %v6243
    %v6252 = vadd.f32 %v6164, %v6244
    %s6253 = sld [smem:[#allocation4 + $0x8d]]
    %v6254 = vstv %s6253
    %v6255 = vmul.f32 %v6254, %v6011
    %v6256 = vmul.f32 %v6254, %v6012
    %v6257 = vmul.f32 %v6254, %v6013
    %v6258 = vmul.f32 %v6254, %v6014
    %v6263 = vrot.slane %v6255, 3
    %v6264 = vrot.slane %v6256, 3
    %v6265 = vrot.slane %v6257, 3
    %v6266 = vrot.slane %v6258, 3
    %v6271 = vadd.f32 %v6183, %v6263
    %v6272 = vadd.f32 %v6184, %v6264
    %v6273 = vadd.f32 %v6185, %v6265
    %v6274 = vadd.f32 %v6186, %v6266
    %s6275 = sld [smem:[#allocation4 + $0x8e]]
    %v6276 = vstv %s6275
    %v6277 = vmul.f32 %v6276, %v6011
    %v6278 = vmul.f32 %v6276, %v6012
    %v6279 = vmul.f32 %v6276, %v6013
    %v6280 = vmul.f32 %v6276, %v6014
    %v6285 = vrot.slane %v6277, 3
    %v6286 = vrot.slane %v6278, 3
    %v6287 = vrot.slane %v6279, 3
    %v6288 = vrot.slane %v6280, 3
    %v6293 = vadd.f32 %v6205, %v6285
    %v6294 = vadd.f32 %v6206, %v6286
    %v6295 = vadd.f32 %v6207, %v6287
    %v6296 = vadd.f32 %v6208, %v6288
    %s6297 = sld [smem:[#allocation4 + $0x8f]]
    %v6298 = vstv %s6297
    %v6299 = vmul.f32 %v6298, %v6011
    %v6300 = vmul.f32 %v6298, %v6012
    %v6301 = vmul.f32 %v6298, %v6013
    %v6302 = vmul.f32 %v6298, %v6014
    %v6307 = vrot.slane %v6299, 3
    %v6308 = vrot.slane %v6300, 3
    %v6309 = vrot.slane %v6301, 3
    %v6310 = vrot.slane %v6302, 3
    %v6315 = vadd.f32 %v6227, %v6307
    %v6316 = vadd.f32 %v6228, %v6308
    %v6317 = vadd.f32 %v6229, %v6309
    %v6318 = vadd.f32 %v6230, %v6310
    %v6323 = vrot.slane %v6271, 7
    %v6324 = vrot.slane %v6272, 7
    %v6325 = vrot.slane %v6273, 7
    %v6326 = vrot.slane %v6274, 7
    %v6335 = vrot.slane %v6293, 6
    %v6336 = vrot.slane %v6294, 6
    %v6337 = vrot.slane %v6295, 6
    %v6338 = vrot.slane %v6296, 6
    %v6347 = vrot.slane %v6315, 5
    %v6348 = vrot.slane %v6316, 5
    %v6349 = vrot.slane %v6317, 5
    %v6350 = vrot.slane %v6318, 5
    %v6355 = vsel %vm3312, %v6249, %v6323
    %v6356 = vsel %vm3312, %v6250, %v6324
    %v6357 = vsel %vm3312, %v6251, %v6325
    %v6358 = vsel %vm3312, %v6252, %v6326
    %v6359 = vsel %vm3317, %v6355, %v6335
    %v6360 = vsel %vm3317, %v6356, %v6336
    %v6361 = vsel %vm3317, %v6357, %v6337
    %v6362 = vsel %vm3317, %v6358, %v6338
    %v6363 = vsel %vm3322, %v6359, %v6347
    %v6364 = vsel %vm3322, %v6360, %v6348
    %v6365 = vsel %vm3322, %v6361, %v6349
    %v6366 = vsel %vm3322, %v6362, %v6350
    %v6367 = vsel %vm3327, %v6363, 0.0
    %v6368 = vsel %vm3327, %v6364, 0.0
    %v6369 = vadd.f32 %v6367, %v6368
    %6370 = vadd.xlane.f32.xlu0 %v6369
    %v6371 = vpop.xlane.xlu0 %6370
    %v6372 = vsel %vm3327, %v6365, 0.0
    %v6373 = vsel %vm3327, %v6366, 0.0
    %v6374 = vadd.f32 %v6372, %v6373
    %6375 = vadd.xlane.f32.xlu0 %v6374
    %v6376 = vpop.xlane.xlu0 %6375
    %v6377 = vsel %vm3327, %v6371, 0.0
    %v6378 = vsel %vm3327, %v6376, 0.0
    %v6379 = vadd.f32 %v6377, %v6378
    %v6380 = vmul.f32 %v6363, %v6363
    %v6381 = vmul.f32 %v6364, %v6364
    %v6382 = vmul.f32 %v6365, %v6365
    %v6383 = vmul.f32 %v6366, %v6366
    %v6384 = vsel %vm3327, %v6380, 0.0
    %v6385 = vsel %vm3327, %v6381, 0.0
    %v6386 = vadd.f32 %v6384, %v6385
    %6387 = vadd.xlane.f32.xlu0 %v6386
    %v6388 = vpop.xlane.xlu0 %6387
    %v6389 = vsel %vm3327, %v6382, 0.0
    %v6390 = vsel %vm3327, %v6383, 0.0
    %v6391 = vadd.f32 %v6389, %v6390
    %6392 = vadd.xlane.f32.xlu0 %v6391
    %v6393 = vpop.xlane.xlu0 %6392
    %v6394 = vsel %vm3327, %v6388, 0.0
    %v6395 = vsel %vm3327, %v6393, 0.0
    %v6396 = vadd.f32 %v6394, %v6395
    %v6397 = vmul.f32 %v6379, 0.001953125
    %v6398 = vmul.f32 %v6396, 0.001953125
    %v6399 = vmul.f32 %v6397, %v6397
    %v6400 = vsub.f32 %v6398, %v6399
    %v6401 = vld [vmem:[%s6] sm:$0xf]
    %v6402 = vadd.f32 %v6400, 1e-05
    %v6403 = vrsqrt.pop %v6402
    %v6404 = vmul.f32 %v6401, %v6403
    %v6405 = vld [vmem:[%s7] sm:$0xf]
    %v6406 = vmul.f32 %v6397, %v6404
    %v6407 = vsub.f32 %v6405, %v6406
    %6409 = vset.pattern.permute.xlu0 0
    %6410 = vperm.xlu0 %6409, %v6404
    %v6411 = vpop.permute.xlu0 %6410
    %v6413 = vmul.f32 %v6363, %v6411
    %v6414 = vmul.f32 %v6364, %v6411
    %v6415 = vmul.f32 %v6365, %v6411
    %v6416 = vmul.f32 %v6366, %v6411
    %6418 = vset.pattern.permute.xlu0 0
    %6419 = vperm.xlu0 %6418, %v6407
    %v6420 = vpop.permute.xlu0 %6419
    %v6422 = vadd.f32 %v6413, %v6420
    %v6423 = vadd.f32 %v6414, %v6420
    %v6424 = vadd.f32 %v6415, %v6420
    %v6425 = vadd.f32 %v6416, %v6420
    %v6428 = vadd.f32 %v6422, %v54
    %v6429 = vadd.f32 %v6423, %v59
    %v6430 = vadd.f32 %v6424, %v55
    %v6431 = vadd.f32 %v6425, %v60
    %v6436 = vcombine.low %v6428, %v6429
    %v6437 = vcombine.low %v6430, %v6431
    %6440 = vst [vmem:[%s8] sm:$0xff] %v6436
    %6441 = vst [vmem:[%s8 + $0x8] sm:$0xff] %v6437
    // Predicated region
    $region42: #{residual_block.1} parent=1 // pred_check
      _
    $region43: #{residual_block.1} parent=1 // pred_check_branch
      %6443 = sbr.rel (0) target = $region45
    $region44: #{residual_block.1} parent=1 // pred_region
      _
    $region45: #{residual_block.1} parent=1 // pred_fallthru
      _
    // Predicated region
    $region46: #{residual_block.1} parent=1 // pred_check
      _
    $region47: #{residual_block.1} parent=1 // pred_check_branch
      %6445 = sbr.rel (0) target = $region49
    $region48: #{residual_block.1} parent=1 // pred_region
      _
    $region49: #{residual_block.1} parent=1 // pred_fallthru
      _
    %6446 = vsyncpa [#allocation3], 1
    %6447 = vsyncpa [#allocation5], 1

</llo_original>
